<compile_context>
chip_gen: v7x
topology: tpu7x:2x2x1
jax: 0.10.0
libtpu: 0.0.40
codegen_flags: <defaults>
</compile_context>

<pallas_src>
import math
import functools

import jax
import jax.numpy as jnp
from jax import lax
from jax.experimental import pallas as pl
from jax.experimental.pallas import tpu as pltpu

EPS = 1e-5            # layer_norm_eps of the torch module
NEG_BIG = -1e30       # finite stand-in for -inf (avoids exp(-inf - -inf) NaN risk)
WDTYPE = jnp.bfloat16  # MXU operand dtype for all weight matrices


# --------------------------- in-kernel helpers ---------------------------

def _layer_norm_f32(x, g, b):
    mu = jnp.mean(x, axis=-1, keepdims=True)
    xc = x - mu
    var = jnp.mean(xc * xc, axis=-1, keepdims=True)
    return xc * lax.rsqrt(var + EPS) * g + b


def _softmax_rows(s):
    m = jnp.max(s, axis=-1, keepdims=True)
    p = jnp.exp(s - m)
    denom = jnp.sum(p, axis=-1, keepdims=True)
    # approx reciprocal runs on the EUP slot; ~1e-3 rel. error tolerance.
    return p * pl.reciprocal(denom, approx=True)


def _mha_core(q, k, v, wo, bo, *, nhead, causal):
    """q:(Sq,D), k/v:(Sk,D) f32 post-projection -> (Sq,D) f32 attention output."""
    Sq, D = q.shape
    Sk = k.shape[0]
    Dh = D // nhead
    scale = 1.0 / math.sqrt(Dh)

    if causal:
        row = lax.broadcasted_iota(jnp.int32, (Sq, Sk), 0)
        col = lax.broadcasted_iota(jnp.int32, (Sq, Sk), 1)
        neg = jnp.where(col > row, NEG_BIG, 0.0).astype(jnp.float32)

    heads = []
    for h in range(nhead):                      # static unroll, nhead is small
        sl = slice(h * Dh, (h + 1) * Dh)
        qh, kh, vh = q[:, sl], k[:, sl], v[:, sl]
        # scores = q @ k^T (NT matmul via dot_general, no explicit transpose)
        s = lax.dot_general(qh, kh, (((1,), (1,)), ((), ())),
                            preferred_element_type=jnp.float32) * scale
        if causal:
            s = s + neg
        p = _softmax_rows(s)
        heads.append(jnp.dot(p, vh, preferred_element_type=jnp.float32))
    o = jnp.concatenate(heads, axis=-1)         # (Sq, D)
    # single concatenated output projection (contraction over full D)
    return jnp.dot(o.astype(wo.dtype), wo,
                   preferred_element_type=jnp.float32) + bo


def _self_attn_ln(x, wqkv, bqkv, wo, bo, g, b, *, nhead, causal):
    """Fused QKV matmul -> MHA -> out-proj -> residual -> LayerNorm."""
    D = x.shape[-1]
    qkv = jnp.dot(x.astype(wqkv.dtype), wqkv,
                  preferred_element_type=jnp.float32) + bqkv       # (S, 3D)
    a = _mha_core(qkv[:, :D], qkv[:, D:2 * D], qkv[:, 2 * D:],
                  wo, bo, nhead=nhead, causal=causal)
    return _layer_norm_f32(x + a, g, b)


def _cross_attn_ln(x, mem, wq, bq, wkv, bkv, wo, bo, g, b, *, nhead):
    D = x.shape[-1]
    q = jnp.dot(x.astype(wq.dtype), wq,
                preferred_element_type=jnp.float32) + bq           # (St, D)
    kv = jnp.dot(mem.astype(wkv.dtype), wkv,
                 preferred_element_type=jnp.float32) + bkv         # (Ss, 2D)
    a = _mha_core(q, kv[:, :D], kv[:, D:], wo, bo, nhead=nhead, causal=False)
    return _layer_norm_f32(x + a, g, b)


def _ffn_ln(x, w1, b1, w2, b2, g, b):
    h = jnp.dot(x.astype(w1.dtype), w1,
                preferred_element_type=jnp.float32) + b1
    h = jnp.maximum(h, 0.0)
    y = jnp.dot(h.astype(w2.dtype), w2,
                preferred_element_type=jnp.float32) + b2
    return _layer_norm_f32(x + y, g, b)


# ------------------------------ Pallas kernels ------------------------------

def _encoder_kernel(src_ref,
                    wqkv, bqkv, wo, bo, g1, b1,
                    w1, fb1, w2, fb2, g2, b2,
                    ng, nb,
                    mem_ref, *, nlayers, nhead):
    """All encoder layers (causal self-attn + FFN, post-norm) + final LN."""
    x = src_ref[...]                                               # (Ss, D) f32
    for l in range(nlayers):                                       # static unroll
        x = _self_attn_ln(x, wqkv[l], bqkv[l], wo[l], bo[l], g1[l], b1[l],
                          nhead=nhead, causal=True)
        x = _ffn_ln(x, w1[l], fb1[l], w2[l], fb2[l], g2[l], b2[l])
    mem_ref[...] = _layer_norm_f32(x, ng[...], nb[...])


def _decoder_kernel(tgt_ref, mem_ref,
                    sa_wqkv, sa_bqkv, sa_wo, sa_bo, sa_g, sa_b,
                    ca_wq, ca_bq, ca_wkv, ca_bkv, ca_wo, ca_bo, ca_g, ca_b,
                    w1, fb1, w2, fb2, ff_g, ff_b,
                    ng, nb,
                    out_ref, *, nlayers, nhead):
    """All decoder layers (causal self-attn, cross-attn, FFN) + final LN."""
    y = tgt_ref[...]                                               # (St, D) f32
    mem = mem_ref[...]                                             # (Ss, D) f32
    for l in range(nlayers):                                       # static unroll
        y = _self_attn_ln(y, sa_wqkv[l], sa_bqkv[l], sa_wo[l], sa_bo[l],
                          sa_g[l], sa_b[l], nhead=nhead, causal=True)
        y = _cross_attn_ln(y, mem, ca_wq[l], ca_bq[l], ca_wkv[l], ca_bkv[l],
                           ca_wo[l], ca_bo[l], ca_g[l], ca_b[l], nhead=nhead)
        y = _ffn_ln(y, w1[l], fb1[l], w2[l], fb2[l], ff_g[l], ff_b[l])
    out_ref[...] = _layer_norm_f32(y, ng[...], nb[...])


# ------------------------------ model forward ------------------------------

def _wspec(a):
    """Full-array BlockSpec (constant block index) for weight inputs."""
    nd = a.ndim
    return pl.BlockSpec(a.shape, lambda *_, nd=nd: (0,) * nd)


def transformer_forward(params, tgt, src, *, nhead):
    """src:(1,Ss,D)  tgt:(B,St,D)  ->  (B,St,D), matching torch.nn.Transformer
    (batch_first=True) with causal src/tgt masks and eval-mode dropout."""
    B, St, D = tgt.shape
    _, Ss, _ = src.shape
    enc_args = params["enc"]
    dec_args = params["dec"]
    nlayers_e = enc_args[0].shape[0]
    nlayers_d = dec_args[0].shape[0]

    # Encoder: one launch, batch-1 src (repeated rows are identical).
    memory = pl.pallas_call(
        functools.partial(_encoder_kernel, nlayers=nlayers_e, nhead=nhead),
        grid=(1,),
        in_specs=[pl.BlockSpec((None, Ss, D), lambda i: (0, 0, 0))]
                 + [_wspec(a) for a in enc_args],
        out_specs=pl.BlockSpec((None, Ss, D), lambda i: (0, 0, 0)),
        out_shape=jax.ShapeDtypeStruct((1, Ss, D), jnp.float32),
        compiler_params=pltpu.CompilerParams(
            dimension_semantics=("arbitrary",)),
    )(src, *enc_args)

    # Decoder: one launch, grid over batch (parallel -> megacore on v7x),
    # cross-attention reads memory batch 0 for every decoder batch element.
    out = pl.pallas_call(
        functools.partial(_decoder_kernel, nlayers=nlayers_d, nhead=nhead),
        grid=(B,),
        in_specs=[pl.BlockSpec((None, St, D), lambda b: (b, 0, 0)),
                  pl.BlockSpec((None, Ss, D), lambda b: (0, 0, 0))]
                 + [_wspec(a) for a in dec_args],
        out_specs=pl.BlockSpec((None, St, D), lambda b: (b, 0, 0)),
        out_shape=jax.ShapeDtypeStruct((B, St, D), jnp.float32),
        compiler_params=pltpu.CompilerParams(
            dimension_semantics=("parallel",)),
    )(tgt, memory, *dec_args)
    return out


# ------------------------------ parameter init ------------------------------

def _uniform(key, shape, bound):
    return jax.random.uniform(key, shape, jnp.float32, -bound, bound)


def _init_enc_layer(key, d, d_hid):
    k = jax.random.split(key, 6)
    bd = 1.0 / math.sqrt(d)
    bh = 1.0 / math.sqrt(d_hid)
    return dict(
        wqkv=_uniform(k[0], (d, 3 * d), bd).astype(WDTYPE),
        bqkv=jnp.zeros((1, 3 * d), jnp.float32),        # torch zero-inits in_proj_bias
        wo=_uniform(k[1], (d, d), bd).astype(WDTYPE),
        bo=jnp.zeros((1, d), jnp.float32),              # torch zero-inits out_proj.bias
        g1=jnp.ones((1, d), jnp.float32), b1=jnp.zeros((1, d), jnp.float32),
        w1=_uniform(k[2], (d, d_hid), bd).astype(WDTYPE),
        fb1=_uniform(k[3], (1, d_hid), bd),
        w2=_uniform(k[4], (d_hid, d), bh).astype(WDTYPE),
        fb2=_uniform(k[5], (1, d), bh),
        g2=jnp.ones((1, d), jnp.float32), b2=jnp.zeros((1, d), jnp.float32),
    )


def _init_dec_layer(key, d, d_hid):
    k = jax.random.split(key, 9)
    bd = 1.0 / math.sqrt(d)
    bh = 1.0 / math.sqrt(d_hid)
    return dict(
        sa_wqkv=_uniform(k[0], (d, 3 * d), bd).astype(WDTYPE),
        sa_bqkv=jnp.zeros((1, 3 * d), jnp.float32),
        sa_wo=_uniform(k[1], (d, d), bd).astype(WDTYPE),
        sa_bo=jnp.zeros((1, d), jnp.float32),
        sa_g=jnp.ones((1, d), jnp.float32), sa_b=jnp.zeros((1, d), jnp.float32),
        ca_wq=_uniform(k[2], (d, d), bd).astype(WDTYPE),
        ca_bq=jnp.zeros((1, d), jnp.float32),
        ca_wkv=_uniform(k[3], (d, 2 * d), bd).astype(WDTYPE),
        ca_bkv=jnp.zeros((1, 2 * d), jnp.float32),
        ca_wo=_uniform(k[4], (d, d), bd).astype(WDTYPE),
        ca_bo=jnp.zeros((1, d), jnp.float32),
        ca_g=jnp.ones((1, d), jnp.float32), ca_b=jnp.zeros((1, d), jnp.float32),
        w1=_uniform(k[5], (d, d_hid), bd).astype(WDTYPE),
        fb1=_uniform(k[6], (1, d_hid), bd),
        w2=_uniform(k[7], (d_hid, d), bh).astype(WDTYPE),
        fb2=_uniform(k[8], (1, d), bh),
        ff_g=jnp.ones((1, d), jnp.float32), ff_b=jnp.zeros((1, d), jnp.float32),
    )


_ENC_FIELDS = ("wqkv", "bqkv", "wo", "bo", "g1", "b1",
               "w1", "fb1", "w2", "fb2", "g2", "b2")
_DEC_FIELDS = ("sa_wqkv", "sa_bqkv", "sa_wo", "sa_bo", "sa_g", "sa_b",
               "ca_wq", "ca_bq", "ca_wkv", "ca_bkv", "ca_wo", "ca_bo",
               "ca_g", "ca_b",
               "w1", "fb1", "w2", "fb2", "ff_g", "ff_b")


def init_params(key, d_model, d_hid, nhead, nlayers_e, nlayers_d):
    del nhead  # head split is done with static lane slices inside the kernel
    ke, kd = jax.random.split(key)
    enc_layers = [_init_enc_layer(k, d_model, d_hid)
                  for k in jax.random.split(ke, nlayers_e)]
    dec_layers = [_init_dec_layer(k, d_model, d_hid)
                  for k in jax.random.split(kd, nlayers_d)]
    # Stack per-layer params along a leading layer axis (static in-kernel index).
    enc = tuple(jnp.stack([lp[f] for lp in enc_layers]) for f in _ENC_FIELDS)
    dec = tuple(jnp.stack([lp[f] for lp in dec_layers]) for f in _DEC_FIELDS)
    enc = enc + (jnp.ones((1, d_model), jnp.float32),
                 jnp.zeros((1, d_model), jnp.float32))   # final encoder LN
    dec = dec + (jnp.ones((1, d_model), jnp.float32),
                 jnp.zeros((1, d_model), jnp.float32))   # final decoder LN
    return {"enc": enc, "dec": dec}


# ----------------------------------- main -----------------------------------

if __name__ == "__main__":
    # Small-but-consistent hyperparameters (torch defaults d_model=6, 64+16
    # layers, d_hid=128 scaled down for a quick run; d_model rounded to 8).
    D_MODEL, NHEAD, D_HID = 8, 2, 32
    NLAYERS_E, NLAYERS_D = 2, 2
    BATCH, SRC_SEQ, TGT_SEQ = 2, 16, 8          # tgt seq == "window" (ntoken)

    root = jax.random.PRNGKey(0)
    k_par, k_src, k_tgt = jax.random.split(root, 3)

    params = init_params(k_par, D_MODEL, D_HID, NHEAD, NLAYERS_E, NLAYERS_D)
    src = jax.random.normal(k_src, (1, SRC_SEQ, D_MODEL), jnp.float32)      # (1, seq_src, d_model)
    tgt = jax.random.normal(k_tgt, (BATCH, TGT_SEQ, D_MODEL), jnp.float32)  # (batch, window, d_model)

    fwd = jax.jit(functools.partial(transformer_forward, nhead=NHEAD))
    out = jax.block_until_ready(fwd(params, tgt, src))

    assert out.shape == (BATCH, TGT_SEQ, D_MODEL), out.shape
    assert bool(jnp.all(jnp.isfinite(out)))
    print("KERNEL_OK")
</pallas_src>

<mosaic_0001>
module attributes {stable_mosaic.version = 11 : i64} {
  func.func @_decoder_kernel(%arg0: i32, %arg1: memref<1x8x8xf32, #tpu.memory_space<vmem>>, %arg2: memref<1x16x8xf32, #tpu.memory_space<vmem>>, %arg3: memref<2x8x24xbf16, #tpu.memory_space<vmem>>, %arg4: memref<2x1x24xf32, #tpu.memory_space<vmem>>, %arg5: memref<2x8x8xbf16, #tpu.memory_space<vmem>>, %arg6: memref<2x1x8xf32, #tpu.memory_space<vmem>>, %arg7: memref<2x1x8xf32, #tpu.memory_space<vmem>>, %arg8: memref<2x1x8xf32, #tpu.memory_space<vmem>>, %arg9: memref<2x8x8xbf16, #tpu.memory_space<vmem>>, %arg10: memref<2x1x8xf32, #tpu.memory_space<vmem>>, %arg11: memref<2x8x16xbf16, #tpu.memory_space<vmem>>, %arg12: memref<2x1x16xf32, #tpu.memory_space<vmem>>, %arg13: memref<2x8x8xbf16, #tpu.memory_space<vmem>>, %arg14: memref<2x1x8xf32, #tpu.memory_space<vmem>>, %arg15: memref<2x1x8xf32, #tpu.memory_space<vmem>>, %arg16: memref<2x1x8xf32, #tpu.memory_space<vmem>>, %arg17: memref<2x8x32xbf16, #tpu.memory_space<vmem>>, %arg18: memref<2x1x32xf32, #tpu.memory_space<vmem>>, %arg19: memref<2x32x8xbf16, #tpu.memory_space<vmem>>, %arg20: memref<2x1x8xf32, #tpu.memory_space<vmem>>, %arg21: memref<2x1x8xf32, #tpu.memory_space<vmem>>, %arg22: memref<2x1x8xf32, #tpu.memory_space<vmem>>, %arg23: memref<1x8xf32, #tpu.memory_space<vmem>>, %arg24: memref<1x8xf32, #tpu.memory_space<vmem>>, %arg25: memref<1x8x8xf32, #tpu.memory_space<vmem>>) attributes {dimension_semantics = [#tpu.dimension_semantics<parallel>], iteration_bounds = array<i64: 2>, scalar_prefetch = 0 : i64, scratch_operands = 0 : i64, tpu.core_type = #tpu.core_type<tc>, window_params = [{transform_indices = @transform_0, window_bounds = array<i64: 1, 8, 8>}, {pipeline_mode = #tpu.pipeline_mode<synchronous>, transform_indices = @transform_1, window_bounds = array<i64: 1, 16, 8>}, {pipeline_mode = #tpu.pipeline_mode<synchronous>, transform_indices = @transform_2, window_bounds = array<i64: 2, 8, 24>}, {pipeline_mode = #tpu.pipeline_mode<synchronous>, transform_indices = @transform_3, window_bounds = array<i64: 2, 1, 24>}, {pipeline_mode = #tpu.pipeline_mode<synchronous>, transform_indices = @transform_4, window_bounds = array<i64: 2, 8, 8>}, {pipeline_mode = #tpu.pipeline_mode<synchronous>, transform_indices = @transform_5, window_bounds = array<i64: 2, 1, 8>}, {pipeline_mode = #tpu.pipeline_mode<synchronous>, transform_indices = @transform_6, window_bounds = array<i64: 2, 1, 8>}, {pipeline_mode = #tpu.pipeline_mode<synchronous>, transform_indices = @transform_7, window_bounds = array<i64: 2, 1, 8>}, {pipeline_mode = #tpu.pipeline_mode<synchronous>, transform_indices = @transform_8, window_bounds = array<i64: 2, 8, 8>}, {pipeline_mode = #tpu.pipeline_mode<synchronous>, transform_indices = @transform_9, window_bounds = array<i64: 2, 1, 8>}, {pipeline_mode = #tpu.pipeline_mode<synchronous>, transform_indices = @transform_10, window_bounds = array<i64: 2, 8, 16>}, {pipeline_mode = #tpu.pipeline_mode<synchronous>, transform_indices = @transform_11, window_bounds = array<i64: 2, 1, 16>}, {pipeline_mode = #tpu.pipeline_mode<synchronous>, transform_indices = @transform_12, window_bounds = array<i64: 2, 8, 8>}, {pipeline_mode = #tpu.pipeline_mode<synchronous>, transform_indices = @transform_13, window_bounds = array<i64: 2, 1, 8>}, {pipeline_mode = #tpu.pipeline_mode<synchronous>, transform_indices = @transform_14, window_bounds = array<i64: 2, 1, 8>}, {pipeline_mode = #tpu.pipeline_mode<synchronous>, transform_indices = @transform_15, window_bounds = array<i64: 2, 1, 8>}, {pipeline_mode = #tpu.pipeline_mode<synchronous>, transform_indices = @transform_16, window_bounds = array<i64: 2, 8, 32>}, {pipeline_mode = #tpu.pipeline_mode<synchronous>, transform_indices = @transform_17, window_bounds = array<i64: 2, 1, 32>}, {pipeline_mode = #tpu.pipeline_mode<synchronous>, transform_indices = @transform_18, window_bounds = array<i64: 2, 32, 8>}, {pipeline_mode = #tpu.pipeline_mode<synchronous>, transform_indices = @transform_19, window_bounds = array<i64: 2, 1, 8>}, {pipeline_mode = #tpu.pipeline_mode<synchronous>, transform_indices = @transform_20, window_bounds = array<i64: 2, 1, 8>}, {pipeline_mode = #tpu.pipeline_mode<synchronous>, transform_indices = @transform_21, window_bounds = array<i64: 2, 1, 8>}, {pipeline_mode = #tpu.pipeline_mode<synchronous>, transform_indices = @transform_22, window_bounds = array<i64: 1, 8>}, {pipeline_mode = #tpu.pipeline_mode<synchronous>, transform_indices = @transform_23, window_bounds = array<i64: 1, 8>}, {transform_indices = @transform_24, window_bounds = array<i64: 1, 8, 8>}]} {
    %c0 = arith.constant 0 : index
    %c0_0 = arith.constant 0 : index
    %c0_1 = arith.constant 0 : index
    %0 = vector.load %arg1[%c0, %c0_0, %c0_1] : memref<1x8x8xf32, #tpu.memory_space<vmem>>, vector<1x8x8xf32>
    %1 = vector.shape_cast %0 : vector<1x8x8xf32> to vector<8x8xf32>
    %c0_2 = arith.constant 0 : index
    %c0_3 = arith.constant 0 : index
    %c0_4 = arith.constant 0 : index
    %2 = vector.load %arg2[%c0_2, %c0_3, %c0_4] : memref<1x16x8xf32, #tpu.memory_space<vmem>>, vector<1x16x8xf32>
    %3 = vector.shape_cast %2 : vector<1x16x8xf32> to vector<16x8xf32>
    %c0_5 = arith.constant 0 : index
    %c0_6 = arith.constant 0 : index
    %c0_7 = arith.constant 0 : index
    %4 = vector.load %arg3[%c0_5, %c0_6, %c0_7] : memref<2x8x24xbf16, #tpu.memory_space<vmem>>, vector<1x8x24xbf16>
    %5 = vector.shape_cast %4 : vector<1x8x24xbf16> to vector<8x24xbf16>
    %c0_8 = arith.constant 0 : index
    %c0_9 = arith.constant 0 : index
    %c0_10 = arith.constant 0 : index
    %6 = vector.load %arg4[%c0_8, %c0_9, %c0_10] : memref<2x1x24xf32, #tpu.memory_space<vmem>>, vector<1x1x24xf32>
    %7 = vector.shape_cast %6 : vector<1x1x24xf32> to vector<1x24xf32>
    %c0_11 = arith.constant 0 : index
    %c0_12 = arith.constant 0 : index
    %c0_13 = arith.constant 0 : index
    %8 = vector.load %arg5[%c0_11, %c0_12, %c0_13] : memref<2x8x8xbf16, #tpu.memory_space<vmem>>, vector<1x8x8xbf16>
    %9 = vector.shape_cast %8 : vector<1x8x8xbf16> to vector<8x8xbf16>
    %c0_14 = arith.constant 0 : index
    %c0_15 = arith.constant 0 : index
    %c0_16 = arith.constant 0 : index
    %10 = vector.load %arg6[%c0_14, %c0_15, %c0_16] : memref<2x1x8xf32, #tpu.memory_space<vmem>>, vector<1x1x8xf32>
    %11 = vector.shape_cast %10 : vector<1x1x8xf32> to vector<1x8xf32>
    %c0_17 = arith.constant 0 : index
    %c0_18 = arith.constant 0 : index
    %c0_19 = arith.constant 0 : index
    %12 = vector.load %arg7[%c0_17, %c0_18, %c0_19] : memref<2x1x8xf32, #tpu.memory_space<vmem>>, vector<1x1x8xf32>
    %13 = vector.shape_cast %12 : vector<1x1x8xf32> to vector<1x8xf32>
    %c0_20 = arith.constant 0 : index
    %c0_21 = arith.constant 0 : index
    %c0_22 = arith.constant 0 : index
    %14 = vector.load %arg8[%c0_20, %c0_21, %c0_22] : memref<2x1x8xf32, #tpu.memory_space<vmem>>, vector<1x1x8xf32>
    %15 = vector.shape_cast %14 : vector<1x1x8xf32> to vector<1x8xf32>
    %16 = arith.truncf %1 : vector<8x8xf32> to vector<8x8xbf16>
    %cst = arith.constant dense<0.000000e+00> : vector<8x24xf32>
    %17 = tpu.matmul %16, %5, %cst {dimension_numbers = #tpu.dot_dimension_numbers<[1], [0], [0], [1], [0, 0, 1, 1], [], []>} : vector<8x8xbf16>, vector<8x24xbf16>, vector<8x24xf32> -> vector<8x24xf32>
    %18 = vector.broadcast %7 : vector<1x24xf32> to vector<8x24xf32>
    %19 = arith.addf %17, %18 : vector<8x24xf32>
    %20 = vector.extract_strided_slice %19 {offsets = [0, 0], sizes = [8, 8], strides = [1, 1]} : vector<8x24xf32> to vector<8x8xf32>
    %21 = vector.extract_strided_slice %19 {offsets = [0, 8], sizes = [8, 8], strides = [1, 1]} : vector<8x24xf32> to vector<8x8xf32>
    %22 = vector.extract_strided_slice %19 {offsets = [0, 16], sizes = [8, 8], strides = [1, 1]} : vector<8x24xf32> to vector<8x8xf32>
    %23 = tpu.iota {dimensions = array<i32: 0>} : vector<8x8xi32>
    %24 = tpu.iota {dimensions = array<i32: 1>} : vector<8x8xi32>
    %25 = arith.cmpi sgt, %24, %23 : vector<8x8xi32>
    %cst_23 = arith.constant -1.000000e+30 : f32
    %cst_24 = arith.constant 0.000000e+00 : f32
    %26 = vector.broadcast %cst_23 : f32 to vector<8x8xf32>
    %27 = vector.broadcast %cst_24 : f32 to vector<8x8xf32>
    %28 = arith.select %25, %26, %27 : vector<8x8xi1>, vector<8x8xf32>
    %29 = vector.extract_strided_slice %20 {offsets = [0, 0], sizes = [8, 4], strides = [1, 1]} : vector<8x8xf32> to vector<8x4xf32>
    %30 = vector.extract_strided_slice %21 {offsets = [0, 0], sizes = [8, 4], strides = [1, 1]} : vector<8x8xf32> to vector<8x4xf32>
    %31 = vector.extract_strided_slice %22 {offsets = [0, 0], sizes = [8, 4], strides = [1, 1]} : vector<8x8xf32> to vector<8x4xf32>
    %cst_25 = arith.constant dense<0.000000e+00> : vector<8x8xf32>
    %32 = tpu.matmul %29, %30, %cst_25 {dimension_numbers = #tpu.dot_dimension_numbers<[1], [1], [0], [0], [0, 0, 1, 0], [], []>} : vector<8x4xf32>, vector<8x4xf32>, vector<8x8xf32> -> vector<8x8xf32>
    %cst_26 = arith.constant 5.000000e-01 : f32
    %33 = vector.broadcast %cst_26 : f32 to vector<8x8xf32>
    %34 = arith.mulf %32, %33 : vector<8x8xf32>
    %35 = arith.addf %34, %28 : vector<8x8xf32>
    %cst_27 = arith.constant dense<0xFF800000> : vector<8xf32>
    %36 = vector.multi_reduction <maximumf>, %35, %cst_27 [1] : vector<8x8xf32> to vector<8xf32>
    %37 = vector.shape_cast %36 : vector<8xf32> to vector<8x1xf32>
    %38 = vector.broadcast %37 : vector<8x1xf32> to vector<8x8xf32>
    %39 = arith.subf %35, %38 : vector<8x8xf32>
    %40 = math.exp %39 : vector<8x8xf32>
    %cst_28 = arith.constant dense<0.000000e+00> : vector<8xf32>
    %41 = vector.multi_reduction <add>, %40, %cst_28 [1] : vector<8x8xf32> to vector<8xf32>
    %42 = vector.shape_cast %41 : vector<8xf32> to vector<8x1xf32>
    %43 = tpu.reciprocal %42 {approx = true} : vector<8x1xf32> -> vector<8x1xf32>
    %44 = vector.broadcast %43 : vector<8x1xf32> to vector<8x8xf32>
    %45 = arith.mulf %40, %44 : vector<8x8xf32>
    %cst_29 = arith.constant dense<0.000000e+00> : vector<8x4xf32>
    %46 = tpu.matmul %45, %31, %cst_29 {dimension_numbers = #tpu.dot_dimension_numbers<[1], [0], [0], [1], [0, 0, 1, 1], [], []>} : vector<8x8xf32>, vector<8x4xf32>, vector<8x4xf32> -> vector<8x4xf32>
    %47 = vector.extract_strided_slice %20 {offsets = [0, 4], sizes = [8, 4], strides = [1, 1]} : vector<8x8xf32> to vector<8x4xf32>
    %48 = vector.extract_strided_slice %21 {offsets = [0, 4], sizes = [8, 4], strides = [1, 1]} : vector<8x8xf32> to vector<8x4xf32>
    %49 = vector.extract_strided_slice %22 {offsets = [0, 4], sizes = [8, 4], strides = [1, 1]} : vector<8x8xf32> to vector<8x4xf32>
    %cst_30 = arith.constant dense<0.000000e+00> : vector<8x8xf32>
    %50 = tpu.matmul %47, %48, %cst_30 {dimension_numbers = #tpu.dot_dimension_numbers<[1], [1], [0], [0], [0, 0, 1, 0], [], []>} : vector<8x4xf32>, vector<8x4xf32>, vector<8x8xf32> -> vector<8x8xf32>
    %cst_31 = arith.constant 5.000000e-01 : f32
    %51 = vector.broadcast %cst_31 : f32 to vector<8x8xf32>
    %52 = arith.mulf %50, %51 : vector<8x8xf32>
    %53 = arith.addf %52, %28 : vector<8x8xf32>
    %cst_32 = arith.constant dense<0xFF800000> : vector<8xf32>
    %54 = vector.multi_reduction <maximumf>, %53, %cst_32 [1] : vector<8x8xf32> to vector<8xf32>
    %55 = vector.shape_cast %54 : vector<8xf32> to vector<8x1xf32>
    %56 = vector.broadcast %55 : vector<8x1xf32> to vector<8x8xf32>
    %57 = arith.subf %53, %56 : vector<8x8xf32>
    %58 = math.exp %57 : vector<8x8xf32>
    %cst_33 = arith.constant dense<0.000000e+00> : vector<8xf32>
    %59 = vector.multi_reduction <add>, %58, %cst_33 [1] : vector<8x8xf32> to vector<8xf32>
    %60 = vector.shape_cast %59 : vector<8xf32> to vector<8x1xf32>
    %61 = tpu.reciprocal %60 {approx = true} : vector<8x1xf32> -> vector<8x1xf32>
    %62 = vector.broadcast %61 : vector<8x1xf32> to vector<8x8xf32>
    %63 = arith.mulf %58, %62 : vector<8x8xf32>
    %cst_34 = arith.constant dense<0.000000e+00> : vector<8x4xf32>
    %64 = tpu.matmul %63, %49, %cst_34 {dimension_numbers = #tpu.dot_dimension_numbers<[1], [0], [0], [1], [0, 0, 1, 1], [], []>} : vector<8x8xf32>, vector<8x4xf32>, vector<8x4xf32> -> vector<8x4xf32>
    %65 = tpu.concatenate %46, %64 in 1 : vector<8x4xf32>, vector<8x4xf32> -> vector<8x8xf32>
    %66 = arith.truncf %65 : vector<8x8xf32> to vector<8x8xbf16>
    %cst_35 = arith.constant dense<0.000000e+00> : vector<8x8xf32>
    %67 = tpu.matmul %66, %9, %cst_35 {dimension_numbers = #tpu.dot_dimension_numbers<[1], [0], [0], [1], [0, 0, 1, 1], [], []>} : vector<8x8xbf16>, vector<8x8xbf16>, vector<8x8xf32> -> vector<8x8xf32>
    %68 = vector.broadcast %11 : vector<1x8xf32> to vector<8x8xf32>
    %69 = arith.addf %67, %68 : vector<8x8xf32>
    %70 = arith.addf %1, %69 : vector<8x8xf32>
    %cst_36 = arith.constant dense<0.000000e+00> : vector<8xf32>
    %71 = vector.multi_reduction <add>, %70, %cst_36 [1] : vector<8x8xf32> to vector<8xf32>
    %72 = vector.shape_cast %71 : vector<8xf32> to vector<8x1xf32>
    %cst_37 = arith.constant 8.000000e+00 : f32
    %73 = vector.broadcast %cst_37 : f32 to vector<8x1xf32>
    %74 = arith.divf %72, %73 : vector<8x1xf32>
    %75 = vector.broadcast %74 : vector<8x1xf32> to vector<8x8xf32>
    %76 = arith.subf %70, %75 : vector<8x8xf32>
    %77 = arith.mulf %76, %76 : vector<8x8xf32>
    %cst_38 = arith.constant dense<0.000000e+00> : vector<8xf32>
    %78 = vector.multi_reduction <add>, %77, %cst_38 [1] : vector<8x8xf32> to vector<8xf32>
    %79 = vector.shape_cast %78 : vector<8xf32> to vector<8x1xf32>
    %cst_39 = arith.constant 8.000000e+00 : f32
    %80 = vector.broadcast %cst_39 : f32 to vector<8x1xf32>
    %81 = arith.divf %79, %80 : vector<8x1xf32>
    %cst_40 = arith.constant 9.99999974E-6 : f32
    %82 = vector.broadcast %cst_40 : f32 to vector<8x1xf32>
    %83 = arith.addf %81, %82 : vector<8x1xf32>
    %84 = math.rsqrt %83 : vector<8x1xf32>
    %85 = vector.broadcast %84 : vector<8x1xf32> to vector<8x8xf32>
    %86 = arith.mulf %76, %85 : vector<8x8xf32>
    %87 = vector.broadcast %13 : vector<1x8xf32> to vector<8x8xf32>
    %88 = arith.mulf %86, %87 : vector<8x8xf32>
    %89 = vector.broadcast %15 : vector<1x8xf32> to vector<8x8xf32>
    %90 = arith.addf %88, %89 : vector<8x8xf32>
    %c0_41 = arith.constant 0 : index
    %c0_42 = arith.constant 0 : index
    %c0_43 = arith.constant 0 : index
    %91 = vector.load %arg9[%c0_41, %c0_42, %c0_43] : memref<2x8x8xbf16, #tpu.memory_space<vmem>>, vector<1x8x8xbf16>
    %92 = vector.shape_cast %91 : vector<1x8x8xbf16> to vector<8x8xbf16>
    %c0_44 = arith.constant 0 : index
    %c0_45 = arith.constant 0 : index
    %c0_46 = arith.constant 0 : index
    %93 = vector.load %arg10[%c0_44, %c0_45, %c0_46] : memref<2x1x8xf32, #tpu.memory_space<vmem>>, vector<1x1x8xf32>
    %94 = vector.shape_cast %93 : vector<1x1x8xf32> to vector<1x8xf32>
    %c0_47 = arith.constant 0 : index
    %c0_48 = arith.constant 0 : index
    %c0_49 = arith.constant 0 : index
    %95 = vector.load %arg11[%c0_47, %c0_48, %c0_49] : memref<2x8x16xbf16, #tpu.memory_space<vmem>>, vector<1x8x16xbf16>
    %96 = vector.shape_cast %95 : vector<1x8x16xbf16> to vector<8x16xbf16>
    %c0_50 = arith.constant 0 : index
    %c0_51 = arith.constant 0 : index
    %c0_52 = arith.constant 0 : index
    %97 = vector.load %arg12[%c0_50, %c0_51, %c0_52] : memref<2x1x16xf32, #tpu.memory_space<vmem>>, vector<1x1x16xf32>
    %98 = vector.shape_cast %97 : vector<1x1x16xf32> to vector<1x16xf32>
    %c0_53 = arith.constant 0 : index
    %c0_54 = arith.constant 0 : index
    %c0_55 = arith.constant 0 : index
    %99 = vector.load %arg13[%c0_53, %c0_54, %c0_55] : memref<2x8x8xbf16, #tpu.memory_space<vmem>>, vector<1x8x8xbf16>
    %100 = vector.shape_cast %99 : vector<1x8x8xbf16> to vector<8x8xbf16>
    %c0_56 = arith.constant 0 : index
    %c0_57 = arith.constant 0 : index
    %c0_58 = arith.constant 0 : index
    %101 = vector.load %arg14[%c0_56, %c0_57, %c0_58] : memref<2x1x8xf32, #tpu.memory_space<vmem>>, vector<1x1x8xf32>
    %102 = vector.shape_cast %101 : vector<1x1x8xf32> to vector<1x8xf32>
    %c0_59 = arith.constant 0 : index
    %c0_60 = arith.constant 0 : index
    %c0_61 = arith.constant 0 : index
    %103 = vector.load %arg15[%c0_59, %c0_60, %c0_61] : memref<2x1x8xf32, #tpu.memory_space<vmem>>, vector<1x1x8xf32>
    %104 = vector.shape_cast %103 : vector<1x1x8xf32> to vector<1x8xf32>
    %c0_62 = arith.constant 0 : index
    %c0_63 = arith.constant 0 : index
    %c0_64 = arith.constant 0 : index
    %105 = vector.load %arg16[%c0_62, %c0_63, %c0_64] : memref<2x1x8xf32, #tpu.memory_space<vmem>>, vector<1x1x8xf32>
    %106 = vector.shape_cast %105 : vector<1x1x8xf32> to vector<1x8xf32>
    %107 = arith.truncf %90 : vector<8x8xf32> to vector<8x8xbf16>
    %cst_65 = arith.constant dense<0.000000e+00> : vector<8x8xf32>
    %108 = tpu.matmul %107, %92, %cst_65 {dimension_numbers = #tpu.dot_dimension_numbers<[1], [0], [0], [1], [0, 0, 1, 1], [], []>} : vector<8x8xbf16>, vector<8x8xbf16>, vector<8x8xf32> -> vector<8x8xf32>
    %109 = vector.broadcast %94 : vector<1x8xf32> to vector<8x8xf32>
    %110 = arith.addf %108, %109 : vector<8x8xf32>
    %111 = arith.truncf %3 : vector<16x8xf32> to vector<16x8xbf16>
    %cst_66 = arith.constant dense<0.000000e+00> : vector<16x16xf32>
    %112 = tpu.matmul %111, %96, %cst_66 {dimension_numbers = #tpu.dot_dimension_numbers<[1], [0], [0], [1], [0, 0, 1, 1], [], []>} : vector<16x8xbf16>, vector<8x16xbf16>, vector<16x16xf32> -> vector<16x16xf32>
    %113 = vector.broadcast %98 : vector<1x16xf32> to vector<16x16xf32>
    %114 = arith.addf %112, %113 : vector<16x16xf32>
    %115 = vector.extract_strided_slice %114 {offsets = [0, 0], sizes = [16, 8], strides = [1, 1]} : vector<16x16xf32> to vector<16x8xf32>
    %116 = vector.extract_strided_slice %114 {offsets = [0, 8], sizes = [16, 8], strides = [1, 1]} : vector<16x16xf32> to vector<16x8xf32>
    %117 = vector.extract_strided_slice %110 {offsets = [0, 0], sizes = [8, 4], strides = [1, 1]} : vector<8x8xf32> to vector<8x4xf32>
    %118 = vector.extract_strided_slice %115 {offsets = [0, 0], sizes = [16, 4], strides = [1, 1]} : vector<16x8xf32> to vector<16x4xf32>
    %119 = vector.extract_strided_slice %116 {offsets = [0, 0], sizes = [16, 4], strides = [1, 1]} : vector<16x8xf32> to vector<16x4xf32>
    %cst_67 = arith.constant dense<0.000000e+00> : vector<8x16xf32>
    %120 = tpu.matmul %117, %118, %cst_67 {dimension_numbers = #tpu.dot_dimension_numbers<[1], [1], [0], [0], [0, 0, 1, 0], [], []>} : vector<8x4xf32>, vector<16x4xf32>, vector<8x16xf32> -> vector<8x16xf32>
    %cst_68 = arith.constant 5.000000e-01 : f32
    %121 = vector.broadcast %cst_68 : f32 to vector<8x16xf32>
    %122 = arith.mulf %120, %121 : vector<8x16xf32>
    %cst_69 = arith.constant dense<0xFF800000> : vector<8xf32>
    %123 = vector.multi_reduction <maximumf>, %122, %cst_69 [1] : vector<8x16xf32> to vector<8xf32>
    %124 = vector.shape_cast %123 : vector<8xf32> to vector<8x1xf32>
    %125 = vector.broadcast %124 : vector<8x1xf32> to vector<8x16xf32>
    %126 = arith.subf %122, %125 : vector<8x16xf32>
    %127 = math.exp %126 : vector<8x16xf32>
    %cst_70 = arith.constant dense<0.000000e+00> : vector<8xf32>
    %128 = vector.multi_reduction <add>, %127, %cst_70 [1] : vector<8x16xf32> to vector<8xf32>
    %129 = vector.shape_cast %128 : vector<8xf32> to vector<8x1xf32>
    %130 = tpu.reciprocal %129 {approx = true} : vector<8x1xf32> -> vector<8x1xf32>
    %131 = vector.broadcast %130 : vector<8x1xf32> to vector<8x16xf32>
    %132 = arith.mulf %127, %131 : vector<8x16xf32>
    %cst_71 = arith.constant dense<0.000000e+00> : vector<8x4xf32>
    %133 = tpu.matmul %132, %119, %cst_71 {dimension_numbers = #tpu.dot_dimension_numbers<[1], [0], [0], [1], [0, 0, 1, 1], [], []>} : vector<8x16xf32>, vector<16x4xf32>, vector<8x4xf32> -> vector<8x4xf32>
    %134 = vector.extract_strided_slice %110 {offsets = [0, 4], sizes = [8, 4], strides = [1, 1]} : vector<8x8xf32> to vector<8x4xf32>
    %135 = vector.extract_strided_slice %115 {offsets = [0, 4], sizes = [16, 4], strides = [1, 1]} : vector<16x8xf32> to vector<16x4xf32>
    %136 = vector.extract_strided_slice %116 {offsets = [0, 4], sizes = [16, 4], strides = [1, 1]} : vector<16x8xf32> to vector<16x4xf32>
    %cst_72 = arith.constant dense<0.000000e+00> : vector<8x16xf32>
    %137 = tpu.matmul %134, %135, %cst_72 {dimension_numbers = #tpu.dot_dimension_numbers<[1], [1], [0], [0], [0, 0, 1, 0], [], []>} : vector<8x4xf32>, vector<16x4xf32>, vector<8x16xf32> -> vector<8x16xf32>
    %cst_73 = arith.constant 5.000000e-01 : f32
    %138 = vector.broadcast %cst_73 : f32 to vector<8x16xf32>
    %139 = arith.mulf %137, %138 : vector<8x16xf32>
    %cst_74 = arith.constant dense<0xFF800000> : vector<8xf32>
    %140 = vector.multi_reduction <maximumf>, %139, %cst_74 [1] : vector<8x16xf32> to vector<8xf32>
    %141 = vector.shape_cast %140 : vector<8xf32> to vector<8x1xf32>
    %142 = vector.broadcast %141 : vector<8x1xf32> to vector<8x16xf32>
    %143 = arith.subf %139, %142 : vector<8x16xf32>
    %144 = math.exp %143 : vector<8x16xf32>
    %cst_75 = arith.constant dense<0.000000e+00> : vector<8xf32>
    %145 = vector.multi_reduction <add>, %144, %cst_75 [1] : vector<8x16xf32> to vector<8xf32>
    %146 = vector.shape_cast %145 : vector<8xf32> to vector<8x1xf32>
    %147 = tpu.reciprocal %146 {approx = true} : vector<8x1xf32> -> vector<8x1xf32>
    %148 = vector.broadcast %147 : vector<8x1xf32> to vector<8x16xf32>
    %149 = arith.mulf %144, %148 : vector<8x16xf32>
    %cst_76 = arith.constant dense<0.000000e+00> : vector<8x4xf32>
    %150 = tpu.matmul %149, %136, %cst_76 {dimension_numbers = #tpu.dot_dimension_numbers<[1], [0], [0], [1], [0, 0, 1, 1], [], []>} : vector<8x16xf32>, vector<16x4xf32>, vector<8x4xf32> -> vector<8x4xf32>
    %151 = tpu.concatenate %133, %150 in 1 : vector<8x4xf32>, vector<8x4xf32> -> vector<8x8xf32>
    %152 = arith.truncf %151 : vector<8x8xf32> to vector<8x8xbf16>
    %cst_77 = arith.constant dense<0.000000e+00> : vector<8x8xf32>
    %153 = tpu.matmul %152, %100, %cst_77 {dimension_numbers = #tpu.dot_dimension_numbers<[1], [0], [0], [1], [0, 0, 1, 1], [], []>} : vector<8x8xbf16>, vector<8x8xbf16>, vector<8x8xf32> -> vector<8x8xf32>
    %154 = vector.broadcast %102 : vector<1x8xf32> to vector<8x8xf32>
    %155 = arith.addf %153, %154 : vector<8x8xf32>
    %156 = arith.addf %90, %155 : vector<8x8xf32>
    %cst_78 = arith.constant dense<0.000000e+00> : vector<8xf32>
    %157 = vector.multi_reduction <add>, %156, %cst_78 [1] : vector<8x8xf32> to vector<8xf32>
    %158 = vector.shape_cast %157 : vector<8xf32> to vector<8x1xf32>
    %cst_79 = arith.constant 8.000000e+00 : f32
    %159 = vector.broadcast %cst_79 : f32 to vector<8x1xf32>
    %160 = arith.divf %158, %159 : vector<8x1xf32>
    %161 = vector.broadcast %160 : vector<8x1xf32> to vector<8x8xf32>
    %162 = arith.subf %156, %161 : vector<8x8xf32>
    %163 = arith.mulf %162, %162 : vector<8x8xf32>
    %cst_80 = arith.constant dense<0.000000e+00> : vector<8xf32>
    %164 = vector.multi_reduction <add>, %163, %cst_80 [1] : vector<8x8xf32> to vector<8xf32>
    %165 = vector.shape_cast %164 : vector<8xf32> to vector<8x1xf32>
    %cst_81 = arith.constant 8.000000e+00 : f32
    %166 = vector.broadcast %cst_81 : f32 to vector<8x1xf32>
    %167 = arith.divf %165, %166 : vector<8x1xf32>
    %cst_82 = arith.constant 9.99999974E-6 : f32
    %168 = vector.broadcast %cst_82 : f32 to vector<8x1xf32>
    %169 = arith.addf %167, %168 : vector<8x1xf32>
    %170 = math.rsqrt %169 : vector<8x1xf32>
    %171 = vector.broadcast %170 : vector<8x1xf32> to vector<8x8xf32>
    %172 = arith.mulf %162, %171 : vector<8x8xf32>
    %173 = vector.broadcast %104 : vector<1x8xf32> to vector<8x8xf32>
    %174 = arith.mulf %172, %173 : vector<8x8xf32>
    %175 = vector.broadcast %106 : vector<1x8xf32> to vector<8x8xf32>
    %176 = arith.addf %174, %175 : vector<8x8xf32>
    %c0_83 = arith.constant 0 : index
    %c0_84 = arith.constant 0 : index
    %c0_85 = arith.constant 0 : index
    %177 = vector.load %arg17[%c0_83, %c0_84, %c0_85] : memref<2x8x32xbf16, #tpu.memory_space<vmem>>, vector<1x8x32xbf16>
    %178 = vector.shape_cast %177 : vector<1x8x32xbf16> to vector<8x32xbf16>
    %c0_86 = arith.constant 0 : index
    %c0_87 = arith.constant 0 : index
    %c0_88 = arith.constant 0 : index
    %179 = vector.load %arg18[%c0_86, %c0_87, %c0_88] : memref<2x1x32xf32, #tpu.memory_space<vmem>>, vector<1x1x32xf32>
    %180 = vector.shape_cast %179 : vector<1x1x32xf32> to vector<1x32xf32>
    %c0_89 = arith.constant 0 : index
    %c0_90 = arith.constant 0 : index
    %c0_91 = arith.constant 0 : index
    %181 = vector.load %arg19[%c0_89, %c0_90, %c0_91] : memref<2x32x8xbf16, #tpu.memory_space<vmem>>, vector<1x32x8xbf16>
    %182 = vector.shape_cast %181 : vector<1x32x8xbf16> to vector<32x8xbf16>
    %c0_92 = arith.constant 0 : index
    %c0_93 = arith.constant 0 : index
    %c0_94 = arith.constant 0 : index
    %183 = vector.load %arg20[%c0_92, %c0_93, %c0_94] : memref<2x1x8xf32, #tpu.memory_space<vmem>>, vector<1x1x8xf32>
    %184 = vector.shape_cast %183 : vector<1x1x8xf32> to vector<1x8xf32>
    %c0_95 = arith.constant 0 : index
    %c0_96 = arith.constant 0 : index
    %c0_97 = arith.constant 0 : index
    %185 = vector.load %arg21[%c0_95, %c0_96, %c0_97] : memref<2x1x8xf32, #tpu.memory_space<vmem>>, vector<1x1x8xf32>
    %186 = vector.shape_cast %185 : vector<1x1x8xf32> to vector<1x8xf32>
    %c0_98 = arith.constant 0 : index
    %c0_99 = arith.constant 0 : index
    %c0_100 = arith.constant 0 : index
    %187 = vector.load %arg22[%c0_98, %c0_99, %c0_100] : memref<2x1x8xf32, #tpu.memory_space<vmem>>, vector<1x1x8xf32>
    %188 = vector.shape_cast %187 : vector<1x1x8xf32> to vector<1x8xf32>
    %189 = arith.truncf %176 : vector<8x8xf32> to vector<8x8xbf16>
    %cst_101 = arith.constant dense<0.000000e+00> : vector<8x32xf32>
    %190 = tpu.matmul %189, %178, %cst_101 {dimension_numbers = #tpu.dot_dimension_numbers<[1], [0], [0], [1], [0, 0, 1, 1], [], []>} : vector<8x8xbf16>, vector<8x32xbf16>, vector<8x32xf32> -> vector<8x32xf32>
    %191 = vector.broadcast %180 : vector<1x32xf32> to vector<8x32xf32>
    %192 = arith.addf %190, %191 : vector<8x32xf32>
    %cst_102 = arith.constant 0.000000e+00 : f32
    %193 = vector.broadcast %cst_102 : f32 to vector<8x32xf32>
    %194 = arith.maximumf %192, %193 : vector<8x32xf32>
    %195 = arith.truncf %194 : vector<8x32xf32> to vector<8x32xbf16>
    %cst_103 = arith.constant dense<0.000000e+00> : vector<8x8xf32>
    %196 = tpu.matmul %195, %182, %cst_103 {dimension_numbers = #tpu.dot_dimension_numbers<[1], [0], [0], [1], [0, 0, 1, 1], [], []>} : vector<8x32xbf16>, vector<32x8xbf16>, vector<8x8xf32> -> vector<8x8xf32>
    %197 = vector.broadcast %184 : vector<1x8xf32> to vector<8x8xf32>
    %198 = arith.addf %196, %197 : vector<8x8xf32>
    %199 = arith.addf %176, %198 : vector<8x8xf32>
    %cst_104 = arith.constant dense<0.000000e+00> : vector<8xf32>
    %200 = vector.multi_reduction <add>, %199, %cst_104 [1] : vector<8x8xf32> to vector<8xf32>
    %201 = vector.shape_cast %200 : vector<8xf32> to vector<8x1xf32>
    %cst_105 = arith.constant 8.000000e+00 : f32
    %202 = vector.broadcast %cst_105 : f32 to vector<8x1xf32>
    %203 = arith.divf %201, %202 : vector<8x1xf32>
    %204 = vector.broadcast %203 : vector<8x1xf32> to vector<8x8xf32>
    %205 = arith.subf %199, %204 : vector<8x8xf32>
    %206 = arith.mulf %205, %205 : vector<8x8xf32>
    %cst_106 = arith.constant dense<0.000000e+00> : vector<8xf32>
    %207 = vector.multi_reduction <add>, %206, %cst_106 [1] : vector<8x8xf32> to vector<8xf32>
    %208 = vector.shape_cast %207 : vector<8xf32> to vector<8x1xf32>
    %cst_107 = arith.constant 8.000000e+00 : f32
    %209 = vector.broadcast %cst_107 : f32 to vector<8x1xf32>
    %210 = arith.divf %208, %209 : vector<8x1xf32>
    %cst_108 = arith.constant 9.99999974E-6 : f32
    %211 = vector.broadcast %cst_108 : f32 to vector<8x1xf32>
    %212 = arith.addf %210, %211 : vector<8x1xf32>
    %213 = math.rsqrt %212 : vector<8x1xf32>
    %214 = vector.broadcast %213 : vector<8x1xf32> to vector<8x8xf32>
    %215 = arith.mulf %205, %214 : vector<8x8xf32>
    %216 = vector.broadcast %186 : vector<1x8xf32> to vector<8x8xf32>
    %217 = arith.mulf %215, %216 : vector<8x8xf32>
    %218 = vector.broadcast %188 : vector<1x8xf32> to vector<8x8xf32>
    %219 = arith.addf %217, %218 : vector<8x8xf32>
    %c1 = arith.constant 1 : index
    %c0_109 = arith.constant 0 : index
    %c0_110 = arith.constant 0 : index
    %220 = vector.load %arg3[%c1, %c0_109, %c0_110] : memref<2x8x24xbf16, #tpu.memory_space<vmem>>, vector<1x8x24xbf16>
    %221 = vector.shape_cast %220 : vector<1x8x24xbf16> to vector<8x24xbf16>
    %c1_111 = arith.constant 1 : index
    %c0_112 = arith.constant 0 : index
    %c0_113 = arith.constant 0 : index
    %222 = vector.load %arg4[%c1_111, %c0_112, %c0_113] : memref<2x1x24xf32, #tpu.memory_space<vmem>>, vector<1x1x24xf32>
    %223 = vector.shape_cast %222 : vector<1x1x24xf32> to vector<1x24xf32>
    %c1_114 = arith.constant 1 : index
    %c0_115 = arith.constant 0 : index
    %c0_116 = arith.constant 0 : index
    %224 = vector.load %arg5[%c1_114, %c0_115, %c0_116] : memref<2x8x8xbf16, #tpu.memory_space<vmem>>, vector<1x8x8xbf16>
    %225 = vector.shape_cast %224 : vector<1x8x8xbf16> to vector<8x8xbf16>
    %c1_117 = arith.constant 1 : index
    %c0_118 = arith.constant 0 : index
    %c0_119 = arith.constant 0 : index
    %226 = vector.load %arg6[%c1_117, %c0_118, %c0_119] : memref<2x1x8xf32, #tpu.memory_space<vmem>>, vector<1x1x8xf32>
    %227 = vector.shape_cast %226 : vector<1x1x8xf32> to vector<1x8xf32>
    %c1_120 = arith.constant 1 : index
    %c0_121 = arith.constant 0 : index
    %c0_122 = arith.constant 0 : index
    %228 = vector.load %arg7[%c1_120, %c0_121, %c0_122] : memref<2x1x8xf32, #tpu.memory_space<vmem>>, vector<1x1x8xf32>
    %229 = vector.shape_cast %228 : vector<1x1x8xf32> to vector<1x8xf32>
    %c1_123 = arith.constant 1 : index
    %c0_124 = arith.constant 0 : index
    %c0_125 = arith.constant 0 : index
    %230 = vector.load %arg8[%c1_123, %c0_124, %c0_125] : memref<2x1x8xf32, #tpu.memory_space<vmem>>, vector<1x1x8xf32>
    %231 = vector.shape_cast %230 : vector<1x1x8xf32> to vector<1x8xf32>
    %232 = arith.truncf %219 : vector<8x8xf32> to vector<8x8xbf16>
    %cst_126 = arith.constant dense<0.000000e+00> : vector<8x24xf32>
    %233 = tpu.matmul %232, %221, %cst_126 {dimension_numbers = #tpu.dot_dimension_numbers<[1], [0], [0], [1], [0, 0, 1, 1], [], []>} : vector<8x8xbf16>, vector<8x24xbf16>, vector<8x24xf32> -> vector<8x24xf32>
    %234 = vector.broadcast %223 : vector<1x24xf32> to vector<8x24xf32>
    %235 = arith.addf %233, %234 : vector<8x24xf32>
    %236 = vector.extract_strided_slice %235 {offsets = [0, 0], sizes = [8, 8], strides = [1, 1]} : vector<8x24xf32> to vector<8x8xf32>
    %237 = vector.extract_strided_slice %235 {offsets = [0, 8], sizes = [8, 8], strides = [1, 1]} : vector<8x24xf32> to vector<8x8xf32>
    %238 = vector.extract_strided_slice %235 {offsets = [0, 16], sizes = [8, 8], strides = [1, 1]} : vector<8x24xf32> to vector<8x8xf32>
    %239 = tpu.iota {dimensions = array<i32: 0>} : vector<8x8xi32>
    %240 = tpu.iota {dimensions = array<i32: 1>} : vector<8x8xi32>
    %241 = arith.cmpi sgt, %240, %239 : vector<8x8xi32>
    %cst_127 = arith.constant -1.000000e+30 : f32
    %cst_128 = arith.constant 0.000000e+00 : f32
    %242 = vector.broadcast %cst_127 : f32 to vector<8x8xf32>
    %243 = vector.broadcast %cst_128 : f32 to vector<8x8xf32>
    %244 = arith.select %241, %242, %243 : vector<8x8xi1>, vector<8x8xf32>
    %245 = vector.extract_strided_slice %236 {offsets = [0, 0], sizes = [8, 4], strides = [1, 1]} : vector<8x8xf32> to vector<8x4xf32>
    %246 = vector.extract_strided_slice %237 {offsets = [0, 0], sizes = [8, 4], strides = [1, 1]} : vector<8x8xf32> to vector<8x4xf32>
    %247 = vector.extract_strided_slice %238 {offsets = [0, 0], sizes = [8, 4], strides = [1, 1]} : vector<8x8xf32> to vector<8x4xf32>
    %cst_129 = arith.constant dense<0.000000e+00> : vector<8x8xf32>
    %248 = tpu.matmul %245, %246, %cst_129 {dimension_numbers = #tpu.dot_dimension_numbers<[1], [1], [0], [0], [0, 0, 1, 0], [], []>} : vector<8x4xf32>, vector<8x4xf32>, vector<8x8xf32> -> vector<8x8xf32>
    %cst_130 = arith.constant 5.000000e-01 : f32
    %249 = vector.broadcast %cst_130 : f32 to vector<8x8xf32>
    %250 = arith.mulf %248, %249 : vector<8x8xf32>
    %251 = arith.addf %250, %244 : vector<8x8xf32>
    %cst_131 = arith.constant dense<0xFF800000> : vector<8xf32>
    %252 = vector.multi_reduction <maximumf>, %251, %cst_131 [1] : vector<8x8xf32> to vector<8xf32>
    %253 = vector.shape_cast %252 : vector<8xf32> to vector<8x1xf32>
    %254 = vector.broadcast %253 : vector<8x1xf32> to vector<8x8xf32>
    %255 = arith.subf %251, %254 : vector<8x8xf32>
    %256 = math.exp %255 : vector<8x8xf32>
    %cst_132 = arith.constant dense<0.000000e+00> : vector<8xf32>
    %257 = vector.multi_reduction <add>, %256, %cst_132 [1] : vector<8x8xf32> to vector<8xf32>
    %258 = vector.shape_cast %257 : vector<8xf32> to vector<8x1xf32>
    %259 = tpu.reciprocal %258 {approx = true} : vector<8x1xf32> -> vector<8x1xf32>
    %260 = vector.broadcast %259 : vector<8x1xf32> to vector<8x8xf32>
    %261 = arith.mulf %256, %260 : vector<8x8xf32>
    %cst_133 = arith.constant dense<0.000000e+00> : vector<8x4xf32>
    %262 = tpu.matmul %261, %247, %cst_133 {dimension_numbers = #tpu.dot_dimension_numbers<[1], [0], [0], [1], [0, 0, 1, 1], [], []>} : vector<8x8xf32>, vector<8x4xf32>, vector<8x4xf32> -> vector<8x4xf32>
    %263 = vector.extract_strided_slice %236 {offsets = [0, 4], sizes = [8, 4], strides = [1, 1]} : vector<8x8xf32> to vector<8x4xf32>
    %264 = vector.extract_strided_slice %237 {offsets = [0, 4], sizes = [8, 4], strides = [1, 1]} : vector<8x8xf32> to vector<8x4xf32>
    %265 = vector.extract_strided_slice %238 {offsets = [0, 4], sizes = [8, 4], strides = [1, 1]} : vector<8x8xf32> to vector<8x4xf32>
    %cst_134 = arith.constant dense<0.000000e+00> : vector<8x8xf32>
    %266 = tpu.matmul %263, %264, %cst_134 {dimension_numbers = #tpu.dot_dimension_numbers<[1], [1], [0], [0], [0, 0, 1, 0], [], []>} : vector<8x4xf32>, vector<8x4xf32>, vector<8x8xf32> -> vector<8x8xf32>
    %cst_135 = arith.constant 5.000000e-01 : f32
    %267 = vector.broadcast %cst_135 : f32 to vector<8x8xf32>
    %268 = arith.mulf %266, %267 : vector<8x8xf32>
    %269 = arith.addf %268, %244 : vector<8x8xf32>
    %cst_136 = arith.constant dense<0xFF800000> : vector<8xf32>
    %270 = vector.multi_reduction <maximumf>, %269, %cst_136 [1] : vector<8x8xf32> to vector<8xf32>
    %271 = vector.shape_cast %270 : vector<8xf32> to vector<8x1xf32>
    %272 = vector.broadcast %271 : vector<8x1xf32> to vector<8x8xf32>
    %273 = arith.subf %269, %272 : vector<8x8xf32>
    %274 = math.exp %273 : vector<8x8xf32>
    %cst_137 = arith.constant dense<0.000000e+00> : vector<8xf32>
    %275 = vector.multi_reduction <add>, %274, %cst_137 [1] : vector<8x8xf32> to vector<8xf32>
    %276 = vector.shape_cast %275 : vector<8xf32> to vector<8x1xf32>
    %277 = tpu.reciprocal %276 {approx = true} : vector<8x1xf32> -> vector<8x1xf32>
    %278 = vector.broadcast %277 : vector<8x1xf32> to vector<8x8xf32>
    %279 = arith.mulf %274, %278 : vector<8x8xf32>
    %cst_138 = arith.constant dense<0.000000e+00> : vector<8x4xf32>
    %280 = tpu.matmul %279, %265, %cst_138 {dimension_numbers = #tpu.dot_dimension_numbers<[1], [0], [0], [1], [0, 0, 1, 1], [], []>} : vector<8x8xf32>, vector<8x4xf32>, vector<8x4xf32> -> vector<8x4xf32>
    %281 = tpu.concatenate %262, %280 in 1 : vector<8x4xf32>, vector<8x4xf32> -> vector<8x8xf32>
    %282 = arith.truncf %281 : vector<8x8xf32> to vector<8x8xbf16>
    %cst_139 = arith.constant dense<0.000000e+00> : vector<8x8xf32>
    %283 = tpu.matmul %282, %225, %cst_139 {dimension_numbers = #tpu.dot_dimension_numbers<[1], [0], [0], [1], [0, 0, 1, 1], [], []>} : vector<8x8xbf16>, vector<8x8xbf16>, vector<8x8xf32> -> vector<8x8xf32>
    %284 = vector.broadcast %227 : vector<1x8xf32> to vector<8x8xf32>
    %285 = arith.addf %283, %284 : vector<8x8xf32>
    %286 = arith.addf %219, %285 : vector<8x8xf32>
    %cst_140 = arith.constant dense<0.000000e+00> : vector<8xf32>
    %287 = vector.multi_reduction <add>, %286, %cst_140 [1] : vector<8x8xf32> to vector<8xf32>
    %288 = vector.shape_cast %287 : vector<8xf32> to vector<8x1xf32>
    %cst_141 = arith.constant 8.000000e+00 : f32
    %289 = vector.broadcast %cst_141 : f32 to vector<8x1xf32>
    %290 = arith.divf %288, %289 : vector<8x1xf32>
    %291 = vector.broadcast %290 : vector<8x1xf32> to vector<8x8xf32>
    %292 = arith.subf %286, %291 : vector<8x8xf32>
    %293 = arith.mulf %292, %292 : vector<8x8xf32>
    %cst_142 = arith.constant dense<0.000000e+00> : vector<8xf32>
    %294 = vector.multi_reduction <add>, %293, %cst_142 [1] : vector<8x8xf32> to vector<8xf32>
    %295 = vector.shape_cast %294 : vector<8xf32> to vector<8x1xf32>
    %cst_143 = arith.constant 8.000000e+00 : f32
    %296 = vector.broadcast %cst_143 : f32 to vector<8x1xf32>
    %297 = arith.divf %295, %296 : vector<8x1xf32>
    %cst_144 = arith.constant 9.99999974E-6 : f32
    %298 = vector.broadcast %cst_144 : f32 to vector<8x1xf32>
    %299 = arith.addf %297, %298 : vector<8x1xf32>
    %300 = math.rsqrt %299 : vector<8x1xf32>
    %301 = vector.broadcast %300 : vector<8x1xf32> to vector<8x8xf32>
    %302 = arith.mulf %292, %301 : vector<8x8xf32>
    %303 = vector.broadcast %229 : vector<1x8xf32> to vector<8x8xf32>
    %304 = arith.mulf %302, %303 : vector<8x8xf32>
    %305 = vector.broadcast %231 : vector<1x8xf32> to vector<8x8xf32>
    %306 = arith.addf %304, %305 : vector<8x8xf32>
    %c1_145 = arith.constant 1 : index
    %c0_146 = arith.constant 0 : index
    %c0_147 = arith.constant 0 : index
    %307 = vector.load %arg9[%c1_145, %c0_146, %c0_147] : memref<2x8x8xbf16, #tpu.memory_space<vmem>>, vector<1x8x8xbf16>
    %308 = vector.shape_cast %307 : vector<1x8x8xbf16> to vector<8x8xbf16>
    %c1_148 = arith.constant 1 : index
    %c0_149 = arith.constant 0 : index
    %c0_150 = arith.constant 0 : index
    %309 = vector.load %arg10[%c1_148, %c0_149, %c0_150] : memref<2x1x8xf32, #tpu.memory_space<vmem>>, vector<1x1x8xf32>
    %310 = vector.shape_cast %309 : vector<1x1x8xf32> to vector<1x8xf32>
    %c1_151 = arith.constant 1 : index
    %c0_152 = arith.constant 0 : index
    %c0_153 = arith.constant 0 : index
    %311 = vector.load %arg11[%c1_151, %c0_152, %c0_153] : memref<2x8x16xbf16, #tpu.memory_space<vmem>>, vector<1x8x16xbf16>
    %312 = vector.shape_cast %311 : vector<1x8x16xbf16> to vector<8x16xbf16>
    %c1_154 = arith.constant 1 : index
    %c0_155 = arith.constant 0 : index
    %c0_156 = arith.constant 0 : index
    %313 = vector.load %arg12[%c1_154, %c0_155, %c0_156] : memref<2x1x16xf32, #tpu.memory_space<vmem>>, vector<1x1x16xf32>
    %314 = vector.shape_cast %313 : vector<1x1x16xf32> to vector<1x16xf32>
    %c1_157 = arith.constant 1 : index
    %c0_158 = arith.constant 0 : index
    %c0_159 = arith.constant 0 : index
    %315 = vector.load %arg13[%c1_157, %c0_158, %c0_159] : memref<2x8x8xbf16, #tpu.memory_space<vmem>>, vector<1x8x8xbf16>
    %316 = vector.shape_cast %315 : vector<1x8x8xbf16> to vector<8x8xbf16>
    %c1_160 = arith.constant 1 : index
    %c0_161 = arith.constant 0 : index
    %c0_162 = arith.constant 0 : index
    %317 = vector.load %arg14[%c1_160, %c0_161, %c0_162] : memref<2x1x8xf32, #tpu.memory_space<vmem>>, vector<1x1x8xf32>
    %318 = vector.shape_cast %317 : vector<1x1x8xf32> to vector<1x8xf32>
    %c1_163 = arith.constant 1 : index
    %c0_164 = arith.constant 0 : index
    %c0_165 = arith.constant 0 : index
    %319 = vector.load %arg15[%c1_163, %c0_164, %c0_165] : memref<2x1x8xf32, #tpu.memory_space<vmem>>, vector<1x1x8xf32>
    %320 = vector.shape_cast %319 : vector<1x1x8xf32> to vector<1x8xf32>
    %c1_166 = arith.constant 1 : index
    %c0_167 = arith.constant 0 : index
    %c0_168 = arith.constant 0 : index
    %321 = vector.load %arg16[%c1_166, %c0_167, %c0_168] : memref<2x1x8xf32, #tpu.memory_space<vmem>>, vector<1x1x8xf32>
    %322 = vector.shape_cast %321 : vector<1x1x8xf32> to vector<1x8xf32>
    %323 = arith.truncf %306 : vector<8x8xf32> to vector<8x8xbf16>
    %cst_169 = arith.constant dense<0.000000e+00> : vector<8x8xf32>
    %324 = tpu.matmul %323, %308, %cst_169 {dimension_numbers = #tpu.dot_dimension_numbers<[1], [0], [0], [1], [0, 0, 1, 1], [], []>} : vector<8x8xbf16>, vector<8x8xbf16>, vector<8x8xf32> -> vector<8x8xf32>
    %325 = vector.broadcast %310 : vector<1x8xf32> to vector<8x8xf32>
    %326 = arith.addf %324, %325 : vector<8x8xf32>
    %327 = arith.truncf %3 : vector<16x8xf32> to vector<16x8xbf16>
    %cst_170 = arith.constant dense<0.000000e+00> : vector<16x16xf32>
    %328 = tpu.matmul %327, %312, %cst_170 {dimension_numbers = #tpu.dot_dimension_numbers<[1], [0], [0], [1], [0, 0, 1, 1], [], []>} : vector<16x8xbf16>, vector<8x16xbf16>, vector<16x16xf32> -> vector<16x16xf32>
    %329 = vector.broadcast %314 : vector<1x16xf32> to vector<16x16xf32>
    %330 = arith.addf %328, %329 : vector<16x16xf32>
    %331 = vector.extract_strided_slice %330 {offsets = [0, 0], sizes = [16, 8], strides = [1, 1]} : vector<16x16xf32> to vector<16x8xf32>
    %332 = vector.extract_strided_slice %330 {offsets = [0, 8], sizes = [16, 8], strides = [1, 1]} : vector<16x16xf32> to vector<16x8xf32>
    %333 = vector.extract_strided_slice %326 {offsets = [0, 0], sizes = [8, 4], strides = [1, 1]} : vector<8x8xf32> to vector<8x4xf32>
    %334 = vector.extract_strided_slice %331 {offsets = [0, 0], sizes = [16, 4], strides = [1, 1]} : vector<16x8xf32> to vector<16x4xf32>
    %335 = vector.extract_strided_slice %332 {offsets = [0, 0], sizes = [16, 4], strides = [1, 1]} : vector<16x8xf32> to vector<16x4xf32>
    %cst_171 = arith.constant dense<0.000000e+00> : vector<8x16xf32>
    %336 = tpu.matmul %333, %334, %cst_171 {dimension_numbers = #tpu.dot_dimension_numbers<[1], [1], [0], [0], [0, 0, 1, 0], [], []>} : vector<8x4xf32>, vector<16x4xf32>, vector<8x16xf32> -> vector<8x16xf32>
    %cst_172 = arith.constant 5.000000e-01 : f32
    %337 = vector.broadcast %cst_172 : f32 to vector<8x16xf32>
    %338 = arith.mulf %336, %337 : vector<8x16xf32>
    %cst_173 = arith.constant dense<0xFF800000> : vector<8xf32>
    %339 = vector.multi_reduction <maximumf>, %338, %cst_173 [1] : vector<8x16xf32> to vector<8xf32>
    %340 = vector.shape_cast %339 : vector<8xf32> to vector<8x1xf32>
    %341 = vector.broadcast %340 : vector<8x1xf32> to vector<8x16xf32>
    %342 = arith.subf %338, %341 : vector<8x16xf32>
    %343 = math.exp %342 : vector<8x16xf32>
    %cst_174 = arith.constant dense<0.000000e+00> : vector<8xf32>
    %344 = vector.multi_reduction <add>, %343, %cst_174 [1] : vector<8x16xf32> to vector<8xf32>
    %345 = vector.shape_cast %344 : vector<8xf32> to vector<8x1xf32>
    %346 = tpu.reciprocal %345 {approx = true} : vector<8x1xf32> -> vector<8x1xf32>
    %347 = vector.broadcast %346 : vector<8x1xf32> to vector<8x16xf32>
    %348 = arith.mulf %343, %347 : vector<8x16xf32>
    %cst_175 = arith.constant dense<0.000000e+00> : vector<8x4xf32>
    %349 = tpu.matmul %348, %335, %cst_175 {dimension_numbers = #tpu.dot_dimension_numbers<[1], [0], [0], [1], [0, 0, 1, 1], [], []>} : vector<8x16xf32>, vector<16x4xf32>, vector<8x4xf32> -> vector<8x4xf32>
    %350 = vector.extract_strided_slice %326 {offsets = [0, 4], sizes = [8, 4], strides = [1, 1]} : vector<8x8xf32> to vector<8x4xf32>
    %351 = vector.extract_strided_slice %331 {offsets = [0, 4], sizes = [16, 4], strides = [1, 1]} : vector<16x8xf32> to vector<16x4xf32>
    %352 = vector.extract_strided_slice %332 {offsets = [0, 4], sizes = [16, 4], strides = [1, 1]} : vector<16x8xf32> to vector<16x4xf32>
    %cst_176 = arith.constant dense<0.000000e+00> : vector<8x16xf32>
    %353 = tpu.matmul %350, %351, %cst_176 {dimension_numbers = #tpu.dot_dimension_numbers<[1], [1], [0], [0], [0, 0, 1, 0], [], []>} : vector<8x4xf32>, vector<16x4xf32>, vector<8x16xf32> -> vector<8x16xf32>
    %cst_177 = arith.constant 5.000000e-01 : f32
    %354 = vector.broadcast %cst_177 : f32 to vector<8x16xf32>
    %355 = arith.mulf %353, %354 : vector<8x16xf32>
    %cst_178 = arith.constant dense<0xFF800000> : vector<8xf32>
    %356 = vector.multi_reduction <maximumf>, %355, %cst_178 [1] : vector<8x16xf32> to vector<8xf32>
    %357 = vector.shape_cast %356 : vector<8xf32> to vector<8x1xf32>
    %358 = vector.broadcast %357 : vector<8x1xf32> to vector<8x16xf32>
    %359 = arith.subf %355, %358 : vector<8x16xf32>
    %360 = math.exp %359 : vector<8x16xf32>
    %cst_179 = arith.constant dense<0.000000e+00> : vector<8xf32>
    %361 = vector.multi_reduction <add>, %360, %cst_179 [1] : vector<8x16xf32> to vector<8xf32>
    %362 = vector.shape_cast %361 : vector<8xf32> to vector<8x1xf32>
    %363 = tpu.reciprocal %362 {approx = true} : vector<8x1xf32> -> vector<8x1xf32>
    %364 = vector.broadcast %363 : vector<8x1xf32> to vector<8x16xf32>
    %365 = arith.mulf %360, %364 : vector<8x16xf32>
    %cst_180 = arith.constant dense<0.000000e+00> : vector<8x4xf32>
    %366 = tpu.matmul %365, %352, %cst_180 {dimension_numbers = #tpu.dot_dimension_numbers<[1], [0], [0], [1], [0, 0, 1, 1], [], []>} : vector<8x16xf32>, vector<16x4xf32>, vector<8x4xf32> -> vector<8x4xf32>
    %367 = tpu.concatenate %349, %366 in 1 : vector<8x4xf32>, vector<8x4xf32> -> vector<8x8xf32>
    %368 = arith.truncf %367 : vector<8x8xf32> to vector<8x8xbf16>
    %cst_181 = arith.constant dense<0.000000e+00> : vector<8x8xf32>
    %369 = tpu.matmul %368, %316, %cst_181 {dimension_numbers = #tpu.dot_dimension_numbers<[1], [0], [0], [1], [0, 0, 1, 1], [], []>} : vector<8x8xbf16>, vector<8x8xbf16>, vector<8x8xf32> -> vector<8x8xf32>
    %370 = vector.broadcast %318 : vector<1x8xf32> to vector<8x8xf32>
    %371 = arith.addf %369, %370 : vector<8x8xf32>
    %372 = arith.addf %306, %371 : vector<8x8xf32>
    %cst_182 = arith.constant dense<0.000000e+00> : vector<8xf32>
    %373 = vector.multi_reduction <add>, %372, %cst_182 [1] : vector<8x8xf32> to vector<8xf32>
    %374 = vector.shape_cast %373 : vector<8xf32> to vector<8x1xf32>
    %cst_183 = arith.constant 8.000000e+00 : f32
    %375 = vector.broadcast %cst_183 : f32 to vector<8x1xf32>
    %376 = arith.divf %374, %375 : vector<8x1xf32>
    %377 = vector.broadcast %376 : vector<8x1xf32> to vector<8x8xf32>
    %378 = arith.subf %372, %377 : vector<8x8xf32>
    %379 = arith.mulf %378, %378 : vector<8x8xf32>
    %cst_184 = arith.constant dense<0.000000e+00> : vector<8xf32>
    %380 = vector.multi_reduction <add>, %379, %cst_184 [1] : vector<8x8xf32> to vector<8xf32>
    %381 = vector.shape_cast %380 : vector<8xf32> to vector<8x1xf32>
    %cst_185 = arith.constant 8.000000e+00 : f32
    %382 = vector.broadcast %cst_185 : f32 to vector<8x1xf32>
    %383 = arith.divf %381, %382 : vector<8x1xf32>
    %cst_186 = arith.constant 9.99999974E-6 : f32
    %384 = vector.broadcast %cst_186 : f32 to vector<8x1xf32>
    %385 = arith.addf %383, %384 : vector<8x1xf32>
    %386 = math.rsqrt %385 : vector<8x1xf32>
    %387 = vector.broadcast %386 : vector<8x1xf32> to vector<8x8xf32>
    %388 = arith.mulf %378, %387 : vector<8x8xf32>
    %389 = vector.broadcast %320 : vector<1x8xf32> to vector<8x8xf32>
    %390 = arith.mulf %388, %389 : vector<8x8xf32>
    %391 = vector.broadcast %322 : vector<1x8xf32> to vector<8x8xf32>
    %392 = arith.addf %390, %391 : vector<8x8xf32>
    %c1_187 = arith.constant 1 : index
    %c0_188 = arith.constant 0 : index
    %c0_189 = arith.constant 0 : index
    %393 = vector.load %arg17[%c1_187, %c0_188, %c0_189] : memref<2x8x32xbf16, #tpu.memory_space<vmem>>, vector<1x8x32xbf16>
    %394 = vector.shape_cast %393 : vector<1x8x32xbf16> to vector<8x32xbf16>
    %c1_190 = arith.constant 1 : index
    %c0_191 = arith.constant 0 : index
    %c0_192 = arith.constant 0 : index
    %395 = vector.load %arg18[%c1_190, %c0_191, %c0_192] : memref<2x1x32xf32, #tpu.memory_space<vmem>>, vector<1x1x32xf32>
    %396 = vector.shape_cast %395 : vector<1x1x32xf32> to vector<1x32xf32>
    %c1_193 = arith.constant 1 : index
    %c0_194 = arith.constant 0 : index
    %c0_195 = arith.constant 0 : index
    %397 = vector.load %arg19[%c1_193, %c0_194, %c0_195] : memref<2x32x8xbf16, #tpu.memory_space<vmem>>, vector<1x32x8xbf16>
    %398 = vector.shape_cast %397 : vector<1x32x8xbf16> to vector<32x8xbf16>
    %c1_196 = arith.constant 1 : index
    %c0_197 = arith.constant 0 : index
    %c0_198 = arith.constant 0 : index
    %399 = vector.load %arg20[%c1_196, %c0_197, %c0_198] : memref<2x1x8xf32, #tpu.memory_space<vmem>>, vector<1x1x8xf32>
    %400 = vector.shape_cast %399 : vector<1x1x8xf32> to vector<1x8xf32>
    %c1_199 = arith.constant 1 : index
    %c0_200 = arith.constant 0 : index
    %c0_201 = arith.constant 0 : index
    %401 = vector.load %arg21[%c1_199, %c0_200, %c0_201] : memref<2x1x8xf32, #tpu.memory_space<vmem>>, vector<1x1x8xf32>
    %402 = vector.shape_cast %401 : vector<1x1x8xf32> to vector<1x8xf32>
    %c1_202 = arith.constant 1 : index
    %c0_203 = arith.constant 0 : index
    %c0_204 = arith.constant 0 : index
    %403 = vector.load %arg22[%c1_202, %c0_203, %c0_204] : memref<2x1x8xf32, #tpu.memory_space<vmem>>, vector<1x1x8xf32>
    %404 = vector.shape_cast %403 : vector<1x1x8xf32> to vector<1x8xf32>
    %405 = arith.truncf %392 : vector<8x8xf32> to vector<8x8xbf16>
    %cst_205 = arith.constant dense<0.000000e+00> : vector<8x32xf32>
    %406 = tpu.matmul %405, %394, %cst_205 {dimension_numbers = #tpu.dot_dimension_numbers<[1], [0], [0], [1], [0, 0, 1, 1], [], []>} : vector<8x8xbf16>, vector<8x32xbf16>, vector<8x32xf32> -> vector<8x32xf32>
    %407 = vector.broadcast %396 : vector<1x32xf32> to vector<8x32xf32>
    %408 = arith.addf %406, %407 : vector<8x32xf32>
    %cst_206 = arith.constant 0.000000e+00 : f32
    %409 = vector.broadcast %cst_206 : f32 to vector<8x32xf32>
    %410 = arith.maximumf %408, %409 : vector<8x32xf32>
    %411 = arith.truncf %410 : vector<8x32xf32> to vector<8x32xbf16>
    %cst_207 = arith.constant dense<0.000000e+00> : vector<8x8xf32>
    %412 = tpu.matmul %411, %398, %cst_207 {dimension_numbers = #tpu.dot_dimension_numbers<[1], [0], [0], [1], [0, 0, 1, 1], [], []>} : vector<8x32xbf16>, vector<32x8xbf16>, vector<8x8xf32> -> vector<8x8xf32>
    %413 = vector.broadcast %400 : vector<1x8xf32> to vector<8x8xf32>
    %414 = arith.addf %412, %413 : vector<8x8xf32>
    %415 = arith.addf %392, %414 : vector<8x8xf32>
    %cst_208 = arith.constant dense<0.000000e+00> : vector<8xf32>
    %416 = vector.multi_reduction <add>, %415, %cst_208 [1] : vector<8x8xf32> to vector<8xf32>
    %417 = vector.shape_cast %416 : vector<8xf32> to vector<8x1xf32>
    %cst_209 = arith.constant 8.000000e+00 : f32
    %418 = vector.broadcast %cst_209 : f32 to vector<8x1xf32>
    %419 = arith.divf %417, %418 : vector<8x1xf32>
    %420 = vector.broadcast %419 : vector<8x1xf32> to vector<8x8xf32>
    %421 = arith.subf %415, %420 : vector<8x8xf32>
    %422 = arith.mulf %421, %421 : vector<8x8xf32>
    %cst_210 = arith.constant dense<0.000000e+00> : vector<8xf32>
    %423 = vector.multi_reduction <add>, %422, %cst_210 [1] : vector<8x8xf32> to vector<8xf32>
    %424 = vector.shape_cast %423 : vector<8xf32> to vector<8x1xf32>
    %cst_211 = arith.constant 8.000000e+00 : f32
    %425 = vector.broadcast %cst_211 : f32 to vector<8x1xf32>
    %426 = arith.divf %424, %425 : vector<8x1xf32>
    %cst_212 = arith.constant 9.99999974E-6 : f32
    %427 = vector.broadcast %cst_212 : f32 to vector<8x1xf32>
    %428 = arith.addf %426, %427 : vector<8x1xf32>
    %429 = math.rsqrt %428 : vector<8x1xf32>
    %430 = vector.broadcast %429 : vector<8x1xf32> to vector<8x8xf32>
    %431 = arith.mulf %421, %430 : vector<8x8xf32>
    %432 = vector.broadcast %402 : vector<1x8xf32> to vector<8x8xf32>
    %433 = arith.mulf %431, %432 : vector<8x8xf32>
    %434 = vector.broadcast %404 : vector<1x8xf32> to vector<8x8xf32>
    %435 = arith.addf %433, %434 : vector<8x8xf32>
    %c0_213 = arith.constant 0 : index
    %c0_214 = arith.constant 0 : index
    %436 = vector.load %arg23[%c0_213, %c0_214] : memref<1x8xf32, #tpu.memory_space<vmem>>, vector<1x8xf32>
    %c0_215 = arith.constant 0 : index
    %c0_216 = arith.constant 0 : index
    %437 = vector.load %arg24[%c0_215, %c0_216] : memref<1x8xf32, #tpu.memory_space<vmem>>, vector<1x8xf32>
    %cst_217 = arith.constant dense<0.000000e+00> : vector<8xf32>
    %438 = vector.multi_reduction <add>, %435, %cst_217 [1] : vector<8x8xf32> to vector<8xf32>
    %439 = vector.shape_cast %438 : vector<8xf32> to vector<8x1xf32>
    %cst_218 = arith.constant 8.000000e+00 : f32
    %440 = vector.broadcast %cst_218 : f32 to vector<8x1xf32>
    %441 = arith.divf %439, %440 : vector<8x1xf32>
    %442 = vector.broadcast %441 : vector<8x1xf32> to vector<8x8xf32>
    %443 = arith.subf %435, %442 : vector<8x8xf32>
    %444 = arith.mulf %443, %443 : vector<8x8xf32>
    %cst_219 = arith.constant dense<0.000000e+00> : vector<8xf32>
    %445 = vector.multi_reduction <add>, %444, %cst_219 [1] : vector<8x8xf32> to vector<8xf32>
    %446 = vector.shape_cast %445 : vector<8xf32> to vector<8x1xf32>
    %cst_220 = arith.constant 8.000000e+00 : f32
    %447 = vector.broadcast %cst_220 : f32 to vector<8x1xf32>
    %448 = arith.divf %446, %447 : vector<8x1xf32>
    %cst_221 = arith.constant 9.99999974E-6 : f32
    %449 = vector.broadcast %cst_221 : f32 to vector<8x1xf32>
    %450 = arith.addf %448, %449 : vector<8x1xf32>
    %451 = math.rsqrt %450 : vector<8x1xf32>
    %452 = vector.broadcast %451 : vector<8x1xf32> to vector<8x8xf32>
    %453 = arith.mulf %443, %452 : vector<8x8xf32>
    %454 = vector.broadcast %436 : vector<1x8xf32> to vector<8x8xf32>
    %455 = arith.mulf %453, %454 : vector<8x8xf32>
    %456 = vector.broadcast %437 : vector<1x8xf32> to vector<8x8xf32>
    %457 = arith.addf %455, %456 : vector<8x8xf32>
    %c0_222 = arith.constant 0 : index
    %c0_223 = arith.constant 0 : index
    %c0_224 = arith.constant 0 : index
    %458 = vector.load %arg25[%c0_222, %c0_223, %c0_224] : memref<1x8x8xf32, #tpu.memory_space<vmem>>, vector<1x8x8xf32>
    %459 = vector.shape_cast %458 : vector<1x8x8xf32> to vector<8x8xf32>
    %460 = vector.shape_cast %457 : vector<8x8xf32> to vector<1x8x8xf32>
    tpu.vector_store %arg25[%c0_222, %c0_223, %c0_224], %460 {strides = array<i32>} : memref<1x8x8xf32, #tpu.memory_space<vmem>>, vector<1x8x8xf32>,
    return
  }
  func.func @transform_0(%arg0: i32) -> (i32, i32, i32) {
    %c0_i32 = arith.constant 0 : i32
    %c0_i32_0 = arith.constant 0 : i32
    %c0_i32_1 = arith.constant 0 : i32
    return %arg0, %c0_i32, %c0_i32_0 : i32, i32, i32
  }
  func.func @transform_1(%arg0: i32) -> (i32, i32, i32) {
    %c0_i32 = arith.constant 0 : i32
    %c0_i32_0 = arith.constant 0 : i32
    %c0_i32_1 = arith.constant 0 : i32
    %c0_i32_2 = arith.constant 0 : i32
    return %c0_i32, %c0_i32_0, %c0_i32_1 : i32, i32, i32
  }
  func.func @transform_2(%arg0: i32) -> (i32, i32, i32) {
    %c0_i32 = arith.constant 0 : i32
    %c0_i32_0 = arith.constant 0 : i32
    %c0_i32_1 = arith.constant 0 : i32
    %c0_i32_2 = arith.constant 0 : i32
    return %c0_i32, %c0_i32_0, %c0_i32_1 : i32, i32, i32
  }
  func.func @transform_3(%arg0: i32) -> (i32, i32, i32) {
    %c0_i32 = arith.constant 0 : i32
    %c0_i32_0 = arith.constant 0 : i32
    %c0_i32_1 = arith.constant 0 : i32
    %c0_i32_2 = arith.constant 0 : i32
    return %c0_i32, %c0_i32_0, %c0_i32_1 : i32, i32, i32
  }
  func.func @transform_4(%arg0: i32) -> (i32, i32, i32) {
    %c0_i32 = arith.constant 0 : i32
    %c0_i32_0 = arith.constant 0 : i32
    %c0_i32_1 = arith.constant 0 : i32
    %c0_i32_2 = arith.constant 0 : i32
    return %c0_i32, %c0_i32_0, %c0_i32_1 : i32, i32, i32
  }
  func.func @transform_5(%arg0: i32) -> (i32, i32, i32) {
    %c0_i32 = arith.constant 0 : i32
    %c0_i32_0 = arith.constant 0 : i32
    %c0_i32_1 = arith.constant 0 : i32
    %c0_i32_2 = arith.constant 0 : i32
    return %c0_i32, %c0_i32_0, %c0_i32_1 : i32, i32, i32
  }
  func.func @transform_6(%arg0: i32) -> (i32, i32, i32) {
    %c0_i32 = arith.constant 0 : i32
    %c0_i32_0 = arith.constant 0 : i32
    %c0_i32_1 = arith.constant 0 : i32
    %c0_i32_2 = arith.constant 0 : i32
    return %c0_i32, %c0_i32_0, %c0_i32_1 : i32, i32, i32
  }
  func.func @transform_7(%arg0: i32) -> (i32, i32, i32) {
    %c0_i32 = arith.constant 0 : i32
    %c0_i32_0 = arith.constant 0 : i32
    %c0_i32_1 = arith.constant 0 : i32
    %c0_i32_2 = arith.constant 0 : i32
    return %c0_i32, %c0_i32_0, %c0_i32_1 : i32, i32, i32
  }
  func.func @transform_8(%arg0: i32) -> (i32, i32, i32) {
    %c0_i32 = arith.constant 0 : i32
    %c0_i32_0 = arith.constant 0 : i32
    %c0_i32_1 = arith.constant 0 : i32
    %c0_i32_2 = arith.constant 0 : i32
    return %c0_i32, %c0_i32_0, %c0_i32_1 : i32, i32, i32
  }
  func.func @transform_9(%arg0: i32) -> (i32, i32, i32) {
    %c0_i32 = arith.constant 0 : i32
    %c0_i32_0 = arith.constant 0 : i32
    %c0_i32_1 = arith.constant 0 : i32
    %c0_i32_2 = arith.constant 0 : i32
    return %c0_i32, %c0_i32_0, %c0_i32_1 : i32, i32, i32
  }
  func.func @transform_10(%arg0: i32) -> (i32, i32, i32) {
    %c0_i32 = arith.constant 0 : i32
    %c0_i32_0 = arith.constant 0 : i32
    %c0_i32_1 = arith.constant 0 : i32
    %c0_i32_2 = arith.constant 0 : i32
    return %c0_i32, %c0_i32_0, %c0_i32_1 : i32, i32, i32
  }
  func.func @transform_11(%arg0: i32) -> (i32, i32, i32) {
    %c0_i32 = arith.constant 0 : i32
    %c0_i32_0 = arith.constant 0 : i32
    %c0_i32_1 = arith.constant 0 : i32
    %c0_i32_2 = arith.constant 0 : i32
    return %c0_i32, %c0_i32_0, %c0_i32_1 : i32, i32, i32
  }
  func.func @transform_12(%arg0: i32) -> (i32, i32, i32) {
    %c0_i32 = arith.constant 0 : i32
    %c0_i32_0 = arith.constant 0 : i32
    %c0_i32_1 = arith.constant 0 : i32
    %c0_i32_2 = arith.constant 0 : i32
    return %c0_i32, %c0_i32_0, %c0_i32_1 : i32, i32, i32
  }
  func.func @transform_13(%arg0: i32) -> (i32, i32, i32) {
    %c0_i32 = arith.constant 0 : i32
    %c0_i32_0 = arith.constant 0 : i32
    %c0_i32_1 = arith.constant 0 : i32
    %c0_i32_2 = arith.constant 0 : i32
    return %c0_i32, %c0_i32_0, %c0_i32_1 : i32, i32, i32
  }
  func.func @transform_14(%arg0: i32) -> (i32, i32, i32) {
    %c0_i32 = arith.constant 0 : i32
    %c0_i32_0 = arith.constant 0 : i32
    %c0_i32_1 = arith.constant 0 : i32
    %c0_i32_2 = arith.constant 0 : i32
    return %c0_i32, %c0_i32_0, %c0_i32_1 : i32, i32, i32
  }
  func.func @transform_15(%arg0: i32) -> (i32, i32, i32) {
    %c0_i32 = arith.constant 0 : i32
    %c0_i32_0 = arith.constant 0 : i32
    %c0_i32_1 = arith.constant 0 : i32
    %c0_i32_2 = arith.constant 0 : i32
    return %c0_i32, %c0_i32_0, %c0_i32_1 : i32, i32, i32
  }
  func.func @transform_16(%arg0: i32) -> (i32, i32, i32) {
    %c0_i32 = arith.constant 0 : i32
    %c0_i32_0 = arith.constant 0 : i32
    %c0_i32_1 = arith.constant 0 : i32
    %c0_i32_2 = arith.constant 0 : i32
    return %c0_i32, %c0_i32_0, %c0_i32_1 : i32, i32, i32
  }
  func.func @transform_17(%arg0: i32) -> (i32, i32, i32) {
    %c0_i32 = arith.constant 0 : i32
    %c0_i32_0 = arith.constant 0 : i32
    %c0_i32_1 = arith.constant 0 : i32
    %c0_i32_2 = arith.constant 0 : i32
    return %c0_i32, %c0_i32_0, %c0_i32_1 : i32, i32, i32
  }
  func.func @transform_18(%arg0: i32) -> (i32, i32, i32) {
    %c0_i32 = arith.constant 0 : i32
    %c0_i32_0 = arith.constant 0 : i32
    %c0_i32_1 = arith.constant 0 : i32
    %c0_i32_2 = arith.constant 0 : i32
    return %c0_i32, %c0_i32_0, %c0_i32_1 : i32, i32, i32
  }
  func.func @transform_19(%arg0: i32) -> (i32, i32, i32) {
    %c0_i32 = arith.constant 0 : i32
    %c0_i32_0 = arith.constant 0 : i32
    %c0_i32_1 = arith.constant 0 : i32
    %c0_i32_2 = arith.constant 0 : i32
    return %c0_i32, %c0_i32_0, %c0_i32_1 : i32, i32, i32
  }
  func.func @transform_20(%arg0: i32) -> (i32, i32, i32) {
    %c0_i32 = arith.constant 0 : i32
    %c0_i32_0 = arith.constant 0 : i32
    %c0_i32_1 = arith.constant 0 : i32
    %c0_i32_2 = arith.constant 0 : i32
    return %c0_i32, %c0_i32_0, %c0_i32_1 : i32, i32, i32
  }
  func.func @transform_21(%arg0: i32) -> (i32, i32, i32) {
    %c0_i32 = arith.constant 0 : i32
    %c0_i32_0 = arith.constant 0 : i32
    %c0_i32_1 = arith.constant 0 : i32
    %c0_i32_2 = arith.constant 0 : i32
    return %c0_i32, %c0_i32_0, %c0_i32_1 : i32, i32, i32
  }
  func.func @transform_22(%arg0: i32) -> (i32, i32) {
    %c0_i32 = arith.constant 0 : i32
    %c0_i32_0 = arith.constant 0 : i32
    %c0_i32_1 = arith.constant 0 : i32
    return %c0_i32, %c0_i32_0 : i32, i32
  }
  func.func @transform_23(%arg0: i32) -> (i32, i32) {
    %c0_i32 = arith.constant 0 : i32
    %c0_i32_0 = arith.constant 0 : i32
    %c0_i32_1 = arith.constant 0 : i32
    return %c0_i32, %c0_i32_0 : i32, i32
  }
  func.func @transform_24(%arg0: i32) -> (i32, i32, i32) {
    %c0_i32 = arith.constant 0 : i32
    %c0_i32_0 = arith.constant 0 : i32
    %c0_i32_1 = arith.constant 0 : i32
    return %arg0, %c0_i32, %c0_i32_0 : i32, i32, i32
  }
}

module attributes {stable_mosaic.version = 11 : i64} {
  func.func @_encoder_kernel(%arg0: i32, %arg1: memref<1x16x8xf32, #tpu.memory_space<vmem>>, %arg2: memref<2x8x24xbf16, #tpu.memory_space<vmem>>, %arg3: memref<2x1x24xf32, #tpu.memory_space<vmem>>, %arg4: memref<2x8x8xbf16, #tpu.memory_space<vmem>>, %arg5: memref<2x1x8xf32, #tpu.memory_space<vmem>>, %arg6: memref<2x1x8xf32, #tpu.memory_space<vmem>>, %arg7: memref<2x1x8xf32, #tpu.memory_space<vmem>>, %arg8: memref<2x8x32xbf16, #tpu.memory_space<vmem>>, %arg9: memref<2x1x32xf32, #tpu.memory_space<vmem>>, %arg10: memref<2x32x8xbf16, #tpu.memory_space<vmem>>, %arg11: memref<2x1x8xf32, #tpu.memory_space<vmem>>, %arg12: memref<2x1x8xf32, #tpu.memory_space<vmem>>, %arg13: memref<2x1x8xf32, #tpu.memory_space<vmem>>, %arg14: memref<1x8xf32, #tpu.memory_space<vmem>>, %arg15: memref<1x8xf32, #tpu.memory_space<vmem>>, %arg16: memref<1x16x8xf32, #tpu.memory_space<vmem>>) attributes {dimension_semantics = [#tpu.dimension_semantics<arbitrary>], iteration_bounds = array<i64: 1>, scalar_prefetch = 0 : i64, scratch_operands = 0 : i64, tpu.core_type = #tpu.core_type<tc>, window_params = [{pipeline_mode = #tpu.pipeline_mode<synchronous>, transform_indices = @transform_0, window_bounds = array<i64: 1, 16, 8>}, {pipeline_mode = #tpu.pipeline_mode<synchronous>, transform_indices = @transform_1, window_bounds = array<i64: 2, 8, 24>}, {pipeline_mode = #tpu.pipeline_mode<synchronous>, transform_indices = @transform_2, window_bounds = array<i64: 2, 1, 24>}, {pipeline_mode = #tpu.pipeline_mode<synchronous>, transform_indices = @transform_3, window_bounds = array<i64: 2, 8, 8>}, {pipeline_mode = #tpu.pipeline_mode<synchronous>, transform_indices = @transform_4, window_bounds = array<i64: 2, 1, 8>}, {pipeline_mode = #tpu.pipeline_mode<synchronous>, transform_indices = @transform_5, window_bounds = array<i64: 2, 1, 8>}, {pipeline_mode = #tpu.pipeline_mode<synchronous>, transform_indices = @transform_6, window_bounds = array<i64: 2, 1, 8>}, {pipeline_mode = #tpu.pipeline_mode<synchronous>, transform_indices = @transform_7, window_bounds = array<i64: 2, 8, 32>}, {pipeline_mode = #tpu.pipeline_mode<synchronous>, transform_indices = @transform_8, window_bounds = array<i64: 2, 1, 32>}, {pipeline_mode = #tpu.pipeline_mode<synchronous>, transform_indices = @transform_9, window_bounds = array<i64: 2, 32, 8>}, {pipeline_mode = #tpu.pipeline_mode<synchronous>, transform_indices = @transform_10, window_bounds = array<i64: 2, 1, 8>}, {pipeline_mode = #tpu.pipeline_mode<synchronous>, transform_indices = @transform_11, window_bounds = array<i64: 2, 1, 8>}, {pipeline_mode = #tpu.pipeline_mode<synchronous>, transform_indices = @transform_12, window_bounds = array<i64: 2, 1, 8>}, {pipeline_mode = #tpu.pipeline_mode<synchronous>, transform_indices = @transform_13, window_bounds = array<i64: 1, 8>}, {pipeline_mode = #tpu.pipeline_mode<synchronous>, transform_indices = @transform_14, window_bounds = array<i64: 1, 8>}, {pipeline_mode = #tpu.pipeline_mode<synchronous>, transform_indices = @transform_15, window_bounds = array<i64: 1, 16, 8>}]} {
    %c0 = arith.constant 0 : index
    %c0_0 = arith.constant 0 : index
    %c0_1 = arith.constant 0 : index
    %0 = vector.load %arg1[%c0, %c0_0, %c0_1] : memref<1x16x8xf32, #tpu.memory_space<vmem>>, vector<1x16x8xf32>
    %1 = vector.shape_cast %0 : vector<1x16x8xf32> to vector<16x8xf32>
    %c0_2 = arith.constant 0 : index
    %c0_3 = arith.constant 0 : index
    %c0_4 = arith.constant 0 : index
    %2 = vector.load %arg2[%c0_2, %c0_3, %c0_4] : memref<2x8x24xbf16, #tpu.memory_space<vmem>>, vector<1x8x24xbf16>
    %3 = vector.shape_cast %2 : vector<1x8x24xbf16> to vector<8x24xbf16>
    %c0_5 = arith.constant 0 : index
    %c0_6 = arith.constant 0 : index
    %c0_7 = arith.constant 0 : index
    %4 = vector.load %arg3[%c0_5, %c0_6, %c0_7] : memref<2x1x24xf32, #tpu.memory_space<vmem>>, vector<1x1x24xf32>
    %5 = vector.shape_cast %4 : vector<1x1x24xf32> to vector<1x24xf32>
    %c0_8 = arith.constant 0 : index
    %c0_9 = arith.constant 0 : index
    %c0_10 = arith.constant 0 : index
    %6 = vector.load %arg4[%c0_8, %c0_9, %c0_10] : memref<2x8x8xbf16, #tpu.memory_space<vmem>>, vector<1x8x8xbf16>
    %7 = vector.shape_cast %6 : vector<1x8x8xbf16> to vector<8x8xbf16>
    %c0_11 = arith.constant 0 : index
    %c0_12 = arith.constant 0 : index
    %c0_13 = arith.constant 0 : index
    %8 = vector.load %arg5[%c0_11, %c0_12, %c0_13] : memref<2x1x8xf32, #tpu.memory_space<vmem>>, vector<1x1x8xf32>
    %9 = vector.shape_cast %8 : vector<1x1x8xf32> to vector<1x8xf32>
    %c0_14 = arith.constant 0 : index
    %c0_15 = arith.constant 0 : index
    %c0_16 = arith.constant 0 : index
    %10 = vector.load %arg6[%c0_14, %c0_15, %c0_16] : memref<2x1x8xf32, #tpu.memory_space<vmem>>, vector<1x1x8xf32>
    %11 = vector.shape_cast %10 : vector<1x1x8xf32> to vector<1x8xf32>
    %c0_17 = arith.constant 0 : index
    %c0_18 = arith.constant 0 : index
    %c0_19 = arith.constant 0 : index
    %12 = vector.load %arg7[%c0_17, %c0_18, %c0_19] : memref<2x1x8xf32, #tpu.memory_space<vmem>>, vector<1x1x8xf32>
    %13 = vector.shape_cast %12 : vector<1x1x8xf32> to vector<1x8xf32>
    %14 = arith.truncf %1 : vector<16x8xf32> to vector<16x8xbf16>
    %cst = arith.constant dense<0.000000e+00> : vector<16x24xf32>
    %15 = tpu.matmul %14, %3, %cst {dimension_numbers = #tpu.dot_dimension_numbers<[1], [0], [0], [1], [0, 0, 1, 1], [], []>} : vector<16x8xbf16>, vector<8x24xbf16>, vector<16x24xf32> -> vector<16x24xf32>
    %16 = vector.broadcast %5 : vector<1x24xf32> to vector<16x24xf32>
    %17 = arith.addf %15, %16 : vector<16x24xf32>
    %18 = vector.extract_strided_slice %17 {offsets = [0, 0], sizes = [16, 8], strides = [1, 1]} : vector<16x24xf32> to vector<16x8xf32>
    %19 = vector.extract_strided_slice %17 {offsets = [0, 8], sizes = [16, 8], strides = [1, 1]} : vector<16x24xf32> to vector<16x8xf32>
    %20 = vector.extract_strided_slice %17 {offsets = [0, 16], sizes = [16, 8], strides = [1, 1]} : vector<16x24xf32> to vector<16x8xf32>
    %21 = tpu.iota {dimensions = array<i32: 0>} : vector<16x16xi32>
    %22 = tpu.iota {dimensions = array<i32: 1>} : vector<16x16xi32>
    %23 = arith.cmpi sgt, %22, %21 : vector<16x16xi32>
    %cst_20 = arith.constant -1.000000e+30 : f32
    %cst_21 = arith.constant 0.000000e+00 : f32
    %24 = vector.broadcast %cst_20 : f32 to vector<16x16xf32>
    %25 = vector.broadcast %cst_21 : f32 to vector<16x16xf32>
    %26 = arith.select %23, %24, %25 : vector<16x16xi1>, vector<16x16xf32>
    %27 = vector.extract_strided_slice %18 {offsets = [0, 0], sizes = [16, 4], strides = [1, 1]} : vector<16x8xf32> to vector<16x4xf32>
    %28 = vector.extract_strided_slice %19 {offsets = [0, 0], sizes = [16, 4], strides = [1, 1]} : vector<16x8xf32> to vector<16x4xf32>
    %29 = vector.extract_strided_slice %20 {offsets = [0, 0], sizes = [16, 4], strides = [1, 1]} : vector<16x8xf32> to vector<16x4xf32>
    %cst_22 = arith.constant dense<0.000000e+00> : vector<16x16xf32>
    %30 = tpu.matmul %27, %28, %cst_22 {dimension_numbers = #tpu.dot_dimension_numbers<[1], [1], [0], [0], [0, 0, 1, 0], [], []>} : vector<16x4xf32>, vector<16x4xf32>, vector<16x16xf32> -> vector<16x16xf32>
    %cst_23 = arith.constant 5.000000e-01 : f32
    %31 = vector.broadcast %cst_23 : f32 to vector<16x16xf32>
    %32 = arith.mulf %30, %31 : vector<16x16xf32>
    %33 = arith.addf %32, %26 : vector<16x16xf32>
    %cst_24 = arith.constant dense<0xFF800000> : vector<16xf32>
    %34 = vector.multi_reduction <maximumf>, %33, %cst_24 [1] : vector<16x16xf32> to vector<16xf32>
    %35 = vector.shape_cast %34 : vector<16xf32> to vector<16x1xf32>
    %36 = vector.broadcast %35 : vector<16x1xf32> to vector<16x16xf32>
    %37 = arith.subf %33, %36 : vector<16x16xf32>
    %38 = math.exp %37 : vector<16x16xf32>
    %cst_25 = arith.constant dense<0.000000e+00> : vector<16xf32>
    %39 = vector.multi_reduction <add>, %38, %cst_25 [1] : vector<16x16xf32> to vector<16xf32>
    %40 = vector.shape_cast %39 : vector<16xf32> to vector<16x1xf32>
    %41 = tpu.reciprocal %40 {approx = true} : vector<16x1xf32> -> vector<16x1xf32>
    %42 = vector.broadcast %41 : vector<16x1xf32> to vector<16x16xf32>
    %43 = arith.mulf %38, %42 : vector<16x16xf32>
    %cst_26 = arith.constant dense<0.000000e+00> : vector<16x4xf32>
    %44 = tpu.matmul %43, %29, %cst_26 {dimension_numbers = #tpu.dot_dimension_numbers<[1], [0], [0], [1], [0, 0, 1, 1], [], []>} : vector<16x16xf32>, vector<16x4xf32>, vector<16x4xf32> -> vector<16x4xf32>
    %45 = vector.extract_strided_slice %18 {offsets = [0, 4], sizes = [16, 4], strides = [1, 1]} : vector<16x8xf32> to vector<16x4xf32>
    %46 = vector.extract_strided_slice %19 {offsets = [0, 4], sizes = [16, 4], strides = [1, 1]} : vector<16x8xf32> to vector<16x4xf32>
    %47 = vector.extract_strided_slice %20 {offsets = [0, 4], sizes = [16, 4], strides = [1, 1]} : vector<16x8xf32> to vector<16x4xf32>
    %cst_27 = arith.constant dense<0.000000e+00> : vector<16x16xf32>
    %48 = tpu.matmul %45, %46, %cst_27 {dimension_numbers = #tpu.dot_dimension_numbers<[1], [1], [0], [0], [0, 0, 1, 0], [], []>} : vector<16x4xf32>, vector<16x4xf32>, vector<16x16xf32> -> vector<16x16xf32>
    %cst_28 = arith.constant 5.000000e-01 : f32
    %49 = vector.broadcast %cst_28 : f32 to vector<16x16xf32>
    %50 = arith.mulf %48, %49 : vector<16x16xf32>
    %51 = arith.addf %50, %26 : vector<16x16xf32>
    %cst_29 = arith.constant dense<0xFF800000> : vector<16xf32>
    %52 = vector.multi_reduction <maximumf>, %51, %cst_29 [1] : vector<16x16xf32> to vector<16xf32>
    %53 = vector.shape_cast %52 : vector<16xf32> to vector<16x1xf32>
    %54 = vector.broadcast %53 : vector<16x1xf32> to vector<16x16xf32>
    %55 = arith.subf %51, %54 : vector<16x16xf32>
    %56 = math.exp %55 : vector<16x16xf32>
    %cst_30 = arith.constant dense<0.000000e+00> : vector<16xf32>
    %57 = vector.multi_reduction <add>, %56, %cst_30 [1] : vector<16x16xf32> to vector<16xf32>
    %58 = vector.shape_cast %57 : vector<16xf32> to vector<16x1xf32>
    %59 = tpu.reciprocal %58 {approx = true} : vector<16x1xf32> -> vector<16x1xf32>
    %60 = vector.broadcast %59 : vector<16x1xf32> to vector<16x16xf32>
    %61 = arith.mulf %56, %60 : vector<16x16xf32>
    %cst_31 = arith.constant dense<0.000000e+00> : vector<16x4xf32>
    %62 = tpu.matmul %61, %47, %cst_31 {dimension_numbers = #tpu.dot_dimension_numbers<[1], [0], [0], [1], [0, 0, 1, 1], [], []>} : vector<16x16xf32>, vector<16x4xf32>, vector<16x4xf32> -> vector<16x4xf32>
    %63 = tpu.concatenate %44, %62 in 1 : vector<16x4xf32>, vector<16x4xf32> -> vector<16x8xf32>
    %64 = arith.truncf %63 : vector<16x8xf32> to vector<16x8xbf16>
    %cst_32 = arith.constant dense<0.000000e+00> : vector<16x8xf32>
    %65 = tpu.matmul %64, %7, %cst_32 {dimension_numbers = #tpu.dot_dimension_numbers<[1], [0], [0], [1], [0, 0, 1, 1], [], []>} : vector<16x8xbf16>, vector<8x8xbf16>, vector<16x8xf32> -> vector<16x8xf32>
    %66 = vector.broadcast %9 : vector<1x8xf32> to vector<16x8xf32>
    %67 = arith.addf %65, %66 : vector<16x8xf32>
    %68 = arith.addf %1, %67 : vector<16x8xf32>
    %cst_33 = arith.constant dense<0.000000e+00> : vector<16xf32>
    %69 = vector.multi_reduction <add>, %68, %cst_33 [1] : vector<16x8xf32> to vector<16xf32>
    %70 = vector.shape_cast %69 : vector<16xf32> to vector<16x1xf32>
    %cst_34 = arith.constant 8.000000e+00 : f32
    %71 = vector.broadcast %cst_34 : f32 to vector<16x1xf32>
    %72 = arith.divf %70, %71 : vector<16x1xf32>
    %73 = vector.broadcast %72 : vector<16x1xf32> to vector<16x8xf32>
    %74 = arith.subf %68, %73 : vector<16x8xf32>
    %75 = arith.mulf %74, %74 : vector<16x8xf32>
    %cst_35 = arith.constant dense<0.000000e+00> : vector<16xf32>
    %76 = vector.multi_reduction <add>, %75, %cst_35 [1] : vector<16x8xf32> to vector<16xf32>
    %77 = vector.shape_cast %76 : vector<16xf32> to vector<16x1xf32>
    %cst_36 = arith.constant 8.000000e+00 : f32
    %78 = vector.broadcast %cst_36 : f32 to vector<16x1xf32>
    %79 = arith.divf %77, %78 : vector<16x1xf32>
    %cst_37 = arith.constant 9.99999974E-6 : f32
    %80 = vector.broadcast %cst_37 : f32 to vector<16x1xf32>
    %81 = arith.addf %79, %80 : vector<16x1xf32>
    %82 = math.rsqrt %81 : vector<16x1xf32>
    %83 = vector.broadcast %82 : vector<16x1xf32> to vector<16x8xf32>
    %84 = arith.mulf %74, %83 : vector<16x8xf32>
    %85 = vector.broadcast %11 : vector<1x8xf32> to vector<16x8xf32>
    %86 = arith.mulf %84, %85 : vector<16x8xf32>
    %87 = vector.broadcast %13 : vector<1x8xf32> to vector<16x8xf32>
    %88 = arith.addf %86, %87 : vector<16x8xf32>
    %c0_38 = arith.constant 0 : index
    %c0_39 = arith.constant 0 : index
    %c0_40 = arith.constant 0 : index
    %89 = vector.load %arg8[%c0_38, %c0_39, %c0_40] : memref<2x8x32xbf16, #tpu.memory_space<vmem>>, vector<1x8x32xbf16>
    %90 = vector.shape_cast %89 : vector<1x8x32xbf16> to vector<8x32xbf16>
    %c0_41 = arith.constant 0 : index
    %c0_42 = arith.constant 0 : index
    %c0_43 = arith.constant 0 : index
    %91 = vector.load %arg9[%c0_41, %c0_42, %c0_43] : memref<2x1x32xf32, #tpu.memory_space<vmem>>, vector<1x1x32xf32>
    %92 = vector.shape_cast %91 : vector<1x1x32xf32> to vector<1x32xf32>
    %c0_44 = arith.constant 0 : index
    %c0_45 = arith.constant 0 : index
    %c0_46 = arith.constant 0 : index
    %93 = vector.load %arg10[%c0_44, %c0_45, %c0_46] : memref<2x32x8xbf16, #tpu.memory_space<vmem>>, vector<1x32x8xbf16>
    %94 = vector.shape_cast %93 : vector<1x32x8xbf16> to vector<32x8xbf16>
    %c0_47 = arith.constant 0 : index
    %c0_48 = arith.constant 0 : index
    %c0_49 = arith.constant 0 : index
    %95 = vector.load %arg11[%c0_47, %c0_48, %c0_49] : memref<2x1x8xf32, #tpu.memory_space<vmem>>, vector<1x1x8xf32>
    %96 = vector.shape_cast %95 : vector<1x1x8xf32> to vector<1x8xf32>
    %c0_50 = arith.constant 0 : index
    %c0_51 = arith.constant 0 : index
    %c0_52 = arith.constant 0 : index
    %97 = vector.load %arg12[%c0_50, %c0_51, %c0_52] : memref<2x1x8xf32, #tpu.memory_space<vmem>>, vector<1x1x8xf32>
    %98 = vector.shape_cast %97 : vector<1x1x8xf32> to vector<1x8xf32>
    %c0_53 = arith.constant 0 : index
    %c0_54 = arith.constant 0 : index
    %c0_55 = arith.constant 0 : index
    %99 = vector.load %arg13[%c0_53, %c0_54, %c0_55] : memref<2x1x8xf32, #tpu.memory_space<vmem>>, vector<1x1x8xf32>
    %100 = vector.shape_cast %99 : vector<1x1x8xf32> to vector<1x8xf32>
    %101 = arith.truncf %88 : vector<16x8xf32> to vector<16x8xbf16>
    %cst_56 = arith.constant dense<0.000000e+00> : vector<16x32xf32>
    %102 = tpu.matmul %101, %90, %cst_56 {dimension_numbers = #tpu.dot_dimension_numbers<[1], [0], [0], [1], [0, 0, 1, 1], [], []>} : vector<16x8xbf16>, vector<8x32xbf16>, vector<16x32xf32> -> vector<16x32xf32>
    %103 = vector.broadcast %92 : vector<1x32xf32> to vector<16x32xf32>
    %104 = arith.addf %102, %103 : vector<16x32xf32>
    %cst_57 = arith.constant 0.000000e+00 : f32
    %105 = vector.broadcast %cst_57 : f32 to vector<16x32xf32>
    %106 = arith.maximumf %104, %105 : vector<16x32xf32>
    %107 = arith.truncf %106 : vector<16x32xf32> to vector<16x32xbf16>
    %cst_58 = arith.constant dense<0.000000e+00> : vector<16x8xf32>
    %108 = tpu.matmul %107, %94, %cst_58 {dimension_numbers = #tpu.dot_dimension_numbers<[1], [0], [0], [1], [0, 0, 1, 1], [], []>} : vector<16x32xbf16>, vector<32x8xbf16>, vector<16x8xf32> -> vector<16x8xf32>
    %109 = vector.broadcast %96 : vector<1x8xf32> to vector<16x8xf32>
    %110 = arith.addf %108, %109 : vector<16x8xf32>
    %111 = arith.addf %88, %110 : vector<16x8xf32>
    %cst_59 = arith.constant dense<0.000000e+00> : vector<16xf32>
    %112 = vector.multi_reduction <add>, %111, %cst_59 [1] : vector<16x8xf32> to vector<16xf32>
    %113 = vector.shape_cast %112 : vector<16xf32> to vector<16x1xf32>
    %cst_60 = arith.constant 8.000000e+00 : f32
    %114 = vector.broadcast %cst_60 : f32 to vector<16x1xf32>
    %115 = arith.divf %113, %114 : vector<16x1xf32>
    %116 = vector.broadcast %115 : vector<16x1xf32> to vector<16x8xf32>
    %117 = arith.subf %111, %116 : vector<16x8xf32>
    %118 = arith.mulf %117, %117 : vector<16x8xf32>
    %cst_61 = arith.constant dense<0.000000e+00> : vector<16xf32>
    %119 = vector.multi_reduction <add>, %118, %cst_61 [1] : vector<16x8xf32> to vector<16xf32>
    %120 = vector.shape_cast %119 : vector<16xf32> to vector<16x1xf32>
    %cst_62 = arith.constant 8.000000e+00 : f32
    %121 = vector.broadcast %cst_62 : f32 to vector<16x1xf32>
    %122 = arith.divf %120, %121 : vector<16x1xf32>
    %cst_63 = arith.constant 9.99999974E-6 : f32
    %123 = vector.broadcast %cst_63 : f32 to vector<16x1xf32>
    %124 = arith.addf %122, %123 : vector<16x1xf32>
    %125 = math.rsqrt %124 : vector<16x1xf32>
    %126 = vector.broadcast %125 : vector<16x1xf32> to vector<16x8xf32>
    %127 = arith.mulf %117, %126 : vector<16x8xf32>
    %128 = vector.broadcast %98 : vector<1x8xf32> to vector<16x8xf32>
    %129 = arith.mulf %127, %128 : vector<16x8xf32>
    %130 = vector.broadcast %100 : vector<1x8xf32> to vector<16x8xf32>
    %131 = arith.addf %129, %130 : vector<16x8xf32>
    %c1 = arith.constant 1 : index
    %c0_64 = arith.constant 0 : index
    %c0_65 = arith.constant 0 : index
    %132 = vector.load %arg2[%c1, %c0_64, %c0_65] : memref<2x8x24xbf16, #tpu.memory_space<vmem>>, vector<1x8x24xbf16>
    %133 = vector.shape_cast %132 : vector<1x8x24xbf16> to vector<8x24xbf16>
    %c1_66 = arith.constant 1 : index
    %c0_67 = arith.constant 0 : index
    %c0_68 = arith.constant 0 : index
    %134 = vector.load %arg3[%c1_66, %c0_67, %c0_68] : memref<2x1x24xf32, #tpu.memory_space<vmem>>, vector<1x1x24xf32>
    %135 = vector.shape_cast %134 : vector<1x1x24xf32> to vector<1x24xf32>
    %c1_69 = arith.constant 1 : index
    %c0_70 = arith.constant 0 : index
    %c0_71 = arith.constant 0 : index
    %136 = vector.load %arg4[%c1_69, %c0_70, %c0_71] : memref<2x8x8xbf16, #tpu.memory_space<vmem>>, vector<1x8x8xbf16>
    %137 = vector.shape_cast %136 : vector<1x8x8xbf16> to vector<8x8xbf16>
    %c1_72 = arith.constant 1 : index
    %c0_73 = arith.constant 0 : index
    %c0_74 = arith.constant 0 : index
    %138 = vector.load %arg5[%c1_72, %c0_73, %c0_74] : memref<2x1x8xf32, #tpu.memory_space<vmem>>, vector<1x1x8xf32>
    %139 = vector.shape_cast %138 : vector<1x1x8xf32> to vector<1x8xf32>
    %c1_75 = arith.constant 1 : index
    %c0_76 = arith.constant 0 : index
    %c0_77 = arith.constant 0 : index
    %140 = vector.load %arg6[%c1_75, %c0_76, %c0_77] : memref<2x1x8xf32, #tpu.memory_space<vmem>>, vector<1x1x8xf32>
    %141 = vector.shape_cast %140 : vector<1x1x8xf32> to vector<1x8xf32>
    %c1_78 = arith.constant 1 : index
    %c0_79 = arith.constant 0 : index
    %c0_80 = arith.constant 0 : index
    %142 = vector.load %arg7[%c1_78, %c0_79, %c0_80] : memref<2x1x8xf32, #tpu.memory_space<vmem>>, vector<1x1x8xf32>
    %143 = vector.shape_cast %142 : vector<1x1x8xf32> to vector<1x8xf32>
    %144 = arith.truncf %131 : vector<16x8xf32> to vector<16x8xbf16>
    %cst_81 = arith.constant dense<0.000000e+00> : vector<16x24xf32>
    %145 = tpu.matmul %144, %133, %cst_81 {dimension_numbers = #tpu.dot_dimension_numbers<[1], [0], [0], [1], [0, 0, 1, 1], [], []>} : vector<16x8xbf16>, vector<8x24xbf16>, vector<16x24xf32> -> vector<16x24xf32>
    %146 = vector.broadcast %135 : vector<1x24xf32> to vector<16x24xf32>
    %147 = arith.addf %145, %146 : vector<16x24xf32>
    %148 = vector.extract_strided_slice %147 {offsets = [0, 0], sizes = [16, 8], strides = [1, 1]} : vector<16x24xf32> to vector<16x8xf32>
    %149 = vector.extract_strided_slice %147 {offsets = [0, 8], sizes = [16, 8], strides = [1, 1]} : vector<16x24xf32> to vector<16x8xf32>
    %150 = vector.extract_strided_slice %147 {offsets = [0, 16], sizes = [16, 8], strides = [1, 1]} : vector<16x24xf32> to vector<16x8xf32>
    %151 = tpu.iota {dimensions = array<i32: 0>} : vector<16x16xi32>
    %152 = tpu.iota {dimensions = array<i32: 1>} : vector<16x16xi32>
    %153 = arith.cmpi sgt, %152, %151 : vector<16x16xi32>
    %cst_82 = arith.constant -1.000000e+30 : f32
    %cst_83 = arith.constant 0.000000e+00 : f32
    %154 = vector.broadcast %cst_82 : f32 to vector<16x16xf32>
    %155 = vector.broadcast %cst_83 : f32 to vector<16x16xf32>
    %156 = arith.select %153, %154, %155 : vector<16x16xi1>, vector<16x16xf32>
    %157 = vector.extract_strided_slice %148 {offsets = [0, 0], sizes = [16, 4], strides = [1, 1]} : vector<16x8xf32> to vector<16x4xf32>
    %158 = vector.extract_strided_slice %149 {offsets = [0, 0], sizes = [16, 4], strides = [1, 1]} : vector<16x8xf32> to vector<16x4xf32>
    %159 = vector.extract_strided_slice %150 {offsets = [0, 0], sizes = [16, 4], strides = [1, 1]} : vector<16x8xf32> to vector<16x4xf32>
    %cst_84 = arith.constant dense<0.000000e+00> : vector<16x16xf32>
    %160 = tpu.matmul %157, %158, %cst_84 {dimension_numbers = #tpu.dot_dimension_numbers<[1], [1], [0], [0], [0, 0, 1, 0], [], []>} : vector<16x4xf32>, vector<16x4xf32>, vector<16x16xf32> -> vector<16x16xf32>
    %cst_85 = arith.constant 5.000000e-01 : f32
    %161 = vector.broadcast %cst_85 : f32 to vector<16x16xf32>
    %162 = arith.mulf %160, %161 : vector<16x16xf32>
    %163 = arith.addf %162, %156 : vector<16x16xf32>
    %cst_86 = arith.constant dense<0xFF800000> : vector<16xf32>
    %164 = vector.multi_reduction <maximumf>, %163, %cst_86 [1] : vector<16x16xf32> to vector<16xf32>
    %165 = vector.shape_cast %164 : vector<16xf32> to vector<16x1xf32>
    %166 = vector.broadcast %165 : vector<16x1xf32> to vector<16x16xf32>
    %167 = arith.subf %163, %166 : vector<16x16xf32>
    %168 = math.exp %167 : vector<16x16xf32>
    %cst_87 = arith.constant dense<0.000000e+00> : vector<16xf32>
    %169 = vector.multi_reduction <add>, %168, %cst_87 [1] : vector<16x16xf32> to vector<16xf32>
    %170 = vector.shape_cast %169 : vector<16xf32> to vector<16x1xf32>
    %171 = tpu.reciprocal %170 {approx = true} : vector<16x1xf32> -> vector<16x1xf32>
    %172 = vector.broadcast %171 : vector<16x1xf32> to vector<16x16xf32>
    %173 = arith.mulf %168, %172 : vector<16x16xf32>
    %cst_88 = arith.constant dense<0.000000e+00> : vector<16x4xf32>
    %174 = tpu.matmul %173, %159, %cst_88 {dimension_numbers = #tpu.dot_dimension_numbers<[1], [0], [0], [1], [0, 0, 1, 1], [], []>} : vector<16x16xf32>, vector<16x4xf32>, vector<16x4xf32> -> vector<16x4xf32>
    %175 = vector.extract_strided_slice %148 {offsets = [0, 4], sizes = [16, 4], strides = [1, 1]} : vector<16x8xf32> to vector<16x4xf32>
    %176 = vector.extract_strided_slice %149 {offsets = [0, 4], sizes = [16, 4], strides = [1, 1]} : vector<16x8xf32> to vector<16x4xf32>
    %177 = vector.extract_strided_slice %150 {offsets = [0, 4], sizes = [16, 4], strides = [1, 1]} : vector<16x8xf32> to vector<16x4xf32>
    %cst_89 = arith.constant dense<0.000000e+00> : vector<16x16xf32>
    %178 = tpu.matmul %175, %176, %cst_89 {dimension_numbers = #tpu.dot_dimension_numbers<[1], [1], [0], [0], [0, 0, 1, 0], [], []>} : vector<16x4xf32>, vector<16x4xf32>, vector<16x16xf32> -> vector<16x16xf32>
    %cst_90 = arith.constant 5.000000e-01 : f32
    %179 = vector.broadcast %cst_90 : f32 to vector<16x16xf32>
    %180 = arith.mulf %178, %179 : vector<16x16xf32>
    %181 = arith.addf %180, %156 : vector<16x16xf32>
    %cst_91 = arith.constant dense<0xFF800000> : vector<16xf32>
    %182 = vector.multi_reduction <maximumf>, %181, %cst_91 [1] : vector<16x16xf32> to vector<16xf32>
    %183 = vector.shape_cast %182 : vector<16xf32> to vector<16x1xf32>
    %184 = vector.broadcast %183 : vector<16x1xf32> to vector<16x16xf32>
    %185 = arith.subf %181, %184 : vector<16x16xf32>
    %186 = math.exp %185 : vector<16x16xf32>
    %cst_92 = arith.constant dense<0.000000e+00> : vector<16xf32>
    %187 = vector.multi_reduction <add>, %186, %cst_92 [1] : vector<16x16xf32> to vector<16xf32>
    %188 = vector.shape_cast %187 : vector<16xf32> to vector<16x1xf32>
    %189 = tpu.reciprocal %188 {approx = true} : vector<16x1xf32> -> vector<16x1xf32>
    %190 = vector.broadcast %189 : vector<16x1xf32> to vector<16x16xf32>
    %191 = arith.mulf %186, %190 : vector<16x16xf32>
    %cst_93 = arith.constant dense<0.000000e+00> : vector<16x4xf32>
    %192 = tpu.matmul %191, %177, %cst_93 {dimension_numbers = #tpu.dot_dimension_numbers<[1], [0], [0], [1], [0, 0, 1, 1], [], []>} : vector<16x16xf32>, vector<16x4xf32>, vector<16x4xf32> -> vector<16x4xf32>
    %193 = tpu.concatenate %174, %192 in 1 : vector<16x4xf32>, vector<16x4xf32> -> vector<16x8xf32>
    %194 = arith.truncf %193 : vector<16x8xf32> to vector<16x8xbf16>
    %cst_94 = arith.constant dense<0.000000e+00> : vector<16x8xf32>
    %195 = tpu.matmul %194, %137, %cst_94 {dimension_numbers = #tpu.dot_dimension_numbers<[1], [0], [0], [1], [0, 0, 1, 1], [], []>} : vector<16x8xbf16>, vector<8x8xbf16>, vector<16x8xf32> -> vector<16x8xf32>
    %196 = vector.broadcast %139 : vector<1x8xf32> to vector<16x8xf32>
    %197 = arith.addf %195, %196 : vector<16x8xf32>
    %198 = arith.addf %131, %197 : vector<16x8xf32>
    %cst_95 = arith.constant dense<0.000000e+00> : vector<16xf32>
    %199 = vector.multi_reduction <add>, %198, %cst_95 [1] : vector<16x8xf32> to vector<16xf32>
    %200 = vector.shape_cast %199 : vector<16xf32> to vector<16x1xf32>
    %cst_96 = arith.constant 8.000000e+00 : f32
    %201 = vector.broadcast %cst_96 : f32 to vector<16x1xf32>
    %202 = arith.divf %200, %201 : vector<16x1xf32>
    %203 = vector.broadcast %202 : vector<16x1xf32> to vector<16x8xf32>
    %204 = arith.subf %198, %203 : vector<16x8xf32>
    %205 = arith.mulf %204, %204 : vector<16x8xf32>
    %cst_97 = arith.constant dense<0.000000e+00> : vector<16xf32>
    %206 = vector.multi_reduction <add>, %205, %cst_97 [1] : vector<16x8xf32> to vector<16xf32>
    %207 = vector.shape_cast %206 : vector<16xf32> to vector<16x1xf32>
    %cst_98 = arith.constant 8.000000e+00 : f32
    %208 = vector.broadcast %cst_98 : f32 to vector<16x1xf32>
    %209 = arith.divf %207, %208 : vector<16x1xf32>
    %cst_99 = arith.constant 9.99999974E-6 : f32
    %210 = vector.broadcast %cst_99 : f32 to vector<16x1xf32>
    %211 = arith.addf %209, %210 : vector<16x1xf32>
    %212 = math.rsqrt %211 : vector<16x1xf32>
    %213 = vector.broadcast %212 : vector<16x1xf32> to vector<16x8xf32>
    %214 = arith.mulf %204, %213 : vector<16x8xf32>
    %215 = vector.broadcast %141 : vector<1x8xf32> to vector<16x8xf32>
    %216 = arith.mulf %214, %215 : vector<16x8xf32>
    %217 = vector.broadcast %143 : vector<1x8xf32> to vector<16x8xf32>
    %218 = arith.addf %216, %217 : vector<16x8xf32>
    %c1_100 = arith.constant 1 : index
    %c0_101 = arith.constant 0 : index
    %c0_102 = arith.constant 0 : index
    %219 = vector.load %arg8[%c1_100, %c0_101, %c0_102] : memref<2x8x32xbf16, #tpu.memory_space<vmem>>, vector<1x8x32xbf16>
    %220 = vector.shape_cast %219 : vector<1x8x32xbf16> to vector<8x32xbf16>
    %c1_103 = arith.constant 1 : index
    %c0_104 = arith.constant 0 : index
    %c0_105 = arith.constant 0 : index
    %221 = vector.load %arg9[%c1_103, %c0_104, %c0_105] : memref<2x1x32xf32, #tpu.memory_space<vmem>>, vector<1x1x32xf32>
    %222 = vector.shape_cast %221 : vector<1x1x32xf32> to vector<1x32xf32>
    %c1_106 = arith.constant 1 : index
    %c0_107 = arith.constant 0 : index
    %c0_108 = arith.constant 0 : index
    %223 = vector.load %arg10[%c1_106, %c0_107, %c0_108] : memref<2x32x8xbf16, #tpu.memory_space<vmem>>, vector<1x32x8xbf16>
    %224 = vector.shape_cast %223 : vector<1x32x8xbf16> to vector<32x8xbf16>
    %c1_109 = arith.constant 1 : index
    %c0_110 = arith.constant 0 : index
    %c0_111 = arith.constant 0 : index
    %225 = vector.load %arg11[%c1_109, %c0_110, %c0_111] : memref<2x1x8xf32, #tpu.memory_space<vmem>>, vector<1x1x8xf32>
    %226 = vector.shape_cast %225 : vector<1x1x8xf32> to vector<1x8xf32>
    %c1_112 = arith.constant 1 : index
    %c0_113 = arith.constant 0 : index
    %c0_114 = arith.constant 0 : index
    %227 = vector.load %arg12[%c1_112, %c0_113, %c0_114] : memref<2x1x8xf32, #tpu.memory_space<vmem>>, vector<1x1x8xf32>
    %228 = vector.shape_cast %227 : vector<1x1x8xf32> to vector<1x8xf32>
    %c1_115 = arith.constant 1 : index
    %c0_116 = arith.constant 0 : index
    %c0_117 = arith.constant 0 : index
    %229 = vector.load %arg13[%c1_115, %c0_116, %c0_117] : memref<2x1x8xf32, #tpu.memory_space<vmem>>, vector<1x1x8xf32>
    %230 = vector.shape_cast %229 : vector<1x1x8xf32> to vector<1x8xf32>
    %231 = arith.truncf %218 : vector<16x8xf32> to vector<16x8xbf16>
    %cst_118 = arith.constant dense<0.000000e+00> : vector<16x32xf32>
    %232 = tpu.matmul %231, %220, %cst_118 {dimension_numbers = #tpu.dot_dimension_numbers<[1], [0], [0], [1], [0, 0, 1, 1], [], []>} : vector<16x8xbf16>, vector<8x32xbf16>, vector<16x32xf32> -> vector<16x32xf32>
    %233 = vector.broadcast %222 : vector<1x32xf32> to vector<16x32xf32>
    %234 = arith.addf %232, %233 : vector<16x32xf32>
    %cst_119 = arith.constant 0.000000e+00 : f32
    %235 = vector.broadcast %cst_119 : f32 to vector<16x32xf32>
    %236 = arith.maximumf %234, %235 : vector<16x32xf32>
    %237 = arith.truncf %236 : vector<16x32xf32> to vector<16x32xbf16>
    %cst_120 = arith.constant dense<0.000000e+00> : vector<16x8xf32>
    %238 = tpu.matmul %237, %224, %cst_120 {dimension_numbers = #tpu.dot_dimension_numbers<[1], [0], [0], [1], [0, 0, 1, 1], [], []>} : vector<16x32xbf16>, vector<32x8xbf16>, vector<16x8xf32> -> vector<16x8xf32>
    %239 = vector.broadcast %226 : vector<1x8xf32> to vector<16x8xf32>
    %240 = arith.addf %238, %239 : vector<16x8xf32>
    %241 = arith.addf %218, %240 : vector<16x8xf32>
    %cst_121 = arith.constant dense<0.000000e+00> : vector<16xf32>
    %242 = vector.multi_reduction <add>, %241, %cst_121 [1] : vector<16x8xf32> to vector<16xf32>
    %243 = vector.shape_cast %242 : vector<16xf32> to vector<16x1xf32>
    %cst_122 = arith.constant 8.000000e+00 : f32
    %244 = vector.broadcast %cst_122 : f32 to vector<16x1xf32>
    %245 = arith.divf %243, %244 : vector<16x1xf32>
    %246 = vector.broadcast %245 : vector<16x1xf32> to vector<16x8xf32>
    %247 = arith.subf %241, %246 : vector<16x8xf32>
    %248 = arith.mulf %247, %247 : vector<16x8xf32>
    %cst_123 = arith.constant dense<0.000000e+00> : vector<16xf32>
    %249 = vector.multi_reduction <add>, %248, %cst_123 [1] : vector<16x8xf32> to vector<16xf32>
    %250 = vector.shape_cast %249 : vector<16xf32> to vector<16x1xf32>
    %cst_124 = arith.constant 8.000000e+00 : f32
    %251 = vector.broadcast %cst_124 : f32 to vector<16x1xf32>
    %252 = arith.divf %250, %251 : vector<16x1xf32>
    %cst_125 = arith.constant 9.99999974E-6 : f32
    %253 = vector.broadcast %cst_125 : f32 to vector<16x1xf32>
    %254 = arith.addf %252, %253 : vector<16x1xf32>
    %255 = math.rsqrt %254 : vector<16x1xf32>
    %256 = vector.broadcast %255 : vector<16x1xf32> to vector<16x8xf32>
    %257 = arith.mulf %247, %256 : vector<16x8xf32>
    %258 = vector.broadcast %228 : vector<1x8xf32> to vector<16x8xf32>
    %259 = arith.mulf %257, %258 : vector<16x8xf32>
    %260 = vector.broadcast %230 : vector<1x8xf32> to vector<16x8xf32>
    %261 = arith.addf %259, %260 : vector<16x8xf32>
    %c0_126 = arith.constant 0 : index
    %c0_127 = arith.constant 0 : index
    %262 = vector.load %arg14[%c0_126, %c0_127] : memref<1x8xf32, #tpu.memory_space<vmem>>, vector<1x8xf32>
    %c0_128 = arith.constant 0 : index
    %c0_129 = arith.constant 0 : index
    %263 = vector.load %arg15[%c0_128, %c0_129] : memref<1x8xf32, #tpu.memory_space<vmem>>, vector<1x8xf32>
    %cst_130 = arith.constant dense<0.000000e+00> : vector<16xf32>
    %264 = vector.multi_reduction <add>, %261, %cst_130 [1] : vector<16x8xf32> to vector<16xf32>
    %265 = vector.shape_cast %264 : vector<16xf32> to vector<16x1xf32>
    %cst_131 = arith.constant 8.000000e+00 : f32
    %266 = vector.broadcast %cst_131 : f32 to vector<16x1xf32>
    %267 = arith.divf %265, %266 : vector<16x1xf32>
    %268 = vector.broadcast %267 : vector<16x1xf32> to vector<16x8xf32>
    %269 = arith.subf %261, %268 : vector<16x8xf32>
    %270 = arith.mulf %269, %269 : vector<16x8xf32>
    %cst_132 = arith.constant dense<0.000000e+00> : vector<16xf32>
    %271 = vector.multi_reduction <add>, %270, %cst_132 [1] : vector<16x8xf32> to vector<16xf32>
    %272 = vector.shape_cast %271 : vector<16xf32> to vector<16x1xf32>
    %cst_133 = arith.constant 8.000000e+00 : f32
    %273 = vector.broadcast %cst_133 : f32 to vector<16x1xf32>
    %274 = arith.divf %272, %273 : vector<16x1xf32>
    %cst_134 = arith.constant 9.99999974E-6 : f32
    %275 = vector.broadcast %cst_134 : f32 to vector<16x1xf32>
    %276 = arith.addf %274, %275 : vector<16x1xf32>
    %277 = math.rsqrt %276 : vector<16x1xf32>
    %278 = vector.broadcast %277 : vector<16x1xf32> to vector<16x8xf32>
    %279 = arith.mulf %269, %278 : vector<16x8xf32>
    %280 = vector.broadcast %262 : vector<1x8xf32> to vector<16x8xf32>
    %281 = arith.mulf %279, %280 : vector<16x8xf32>
    %282 = vector.broadcast %263 : vector<1x8xf32> to vector<16x8xf32>
    %283 = arith.addf %281, %282 : vector<16x8xf32>
    %c0_135 = arith.constant 0 : index
    %c0_136 = arith.constant 0 : index
    %c0_137 = arith.constant 0 : index
    %284 = vector.load %arg16[%c0_135, %c0_136, %c0_137] : memref<1x16x8xf32, #tpu.memory_space<vmem>>, vector<1x16x8xf32>
    %285 = vector.shape_cast %284 : vector<1x16x8xf32> to vector<16x8xf32>
    %286 = vector.shape_cast %283 : vector<16x8xf32> to vector<1x16x8xf32>
    tpu.vector_store %arg16[%c0_135, %c0_136, %c0_137], %286 {strides = array<i32>} : memref<1x16x8xf32, #tpu.memory_space<vmem>>, vector<1x16x8xf32>,
    return
  }
  func.func @transform_0(%arg0: i32) -> (i32, i32, i32) {
    %c0_i32 = arith.constant 0 : i32
    %c0_i32_0 = arith.constant 0 : i32
    %c0_i32_1 = arith.constant 0 : i32
    %c0_i32_2 = arith.constant 0 : i32
    return %c0_i32, %c0_i32_0, %c0_i32_1 : i32, i32, i32
  }
  func.func @transform_1(%arg0: i32) -> (i32, i32, i32) {
    %c0_i32 = arith.constant 0 : i32
    %c0_i32_0 = arith.constant 0 : i32
    %c0_i32_1 = arith.constant 0 : i32
    %c0_i32_2 = arith.constant 0 : i32
    return %c0_i32, %c0_i32_0, %c0_i32_1 : i32, i32, i32
  }
  func.func @transform_2(%arg0: i32) -> (i32, i32, i32) {
    %c0_i32 = arith.constant 0 : i32
    %c0_i32_0 = arith.constant 0 : i32
    %c0_i32_1 = arith.constant 0 : i32
    %c0_i32_2 = arith.constant 0 : i32
    return %c0_i32, %c0_i32_0, %c0_i32_1 : i32, i32, i32
  }
  func.func @transform_3(%arg0: i32) -> (i32, i32, i32) {
    %c0_i32 = arith.constant 0 : i32
    %c0_i32_0 = arith.constant 0 : i32
    %c0_i32_1 = arith.constant 0 : i32
    %c0_i32_2 = arith.constant 0 : i32
    return %c0_i32, %c0_i32_0, %c0_i32_1 : i32, i32, i32
  }
  func.func @transform_4(%arg0: i32) -> (i32, i32, i32) {
    %c0_i32 = arith.constant 0 : i32
    %c0_i32_0 = arith.constant 0 : i32
    %c0_i32_1 = arith.constant 0 : i32
    %c0_i32_2 = arith.constant 0 : i32
    return %c0_i32, %c0_i32_0, %c0_i32_1 : i32, i32, i32
  }
  func.func @transform_5(%arg0: i32) -> (i32, i32, i32) {
    %c0_i32 = arith.constant 0 : i32
    %c0_i32_0 = arith.constant 0 : i32
    %c0_i32_1 = arith.constant 0 : i32
    %c0_i32_2 = arith.constant 0 : i32
    return %c0_i32, %c0_i32_0, %c0_i32_1 : i32, i32, i32
  }
  func.func @transform_6(%arg0: i32) -> (i32, i32, i32) {
    %c0_i32 = arith.constant 0 : i32
    %c0_i32_0 = arith.constant 0 : i32
    %c0_i32_1 = arith.constant 0 : i32
    %c0_i32_2 = arith.constant 0 : i32
    return %c0_i32, %c0_i32_0, %c0_i32_1 : i32, i32, i32
  }
  func.func @transform_7(%arg0: i32) -> (i32, i32, i32) {
    %c0_i32 = arith.constant 0 : i32
    %c0_i32_0 = arith.constant 0 : i32
    %c0_i32_1 = arith.constant 0 : i32
    %c0_i32_2 = arith.constant 0 : i32
    return %c0_i32, %c0_i32_0, %c0_i32_1 : i32, i32, i32
  }
  func.func @transform_8(%arg0: i32) -> (i32, i32, i32) {
    %c0_i32 = arith.constant 0 : i32
    %c0_i32_0 = arith.constant 0 : i32
    %c0_i32_1 = arith.constant 0 : i32
    %c0_i32_2 = arith.constant 0 : i32
    return %c0_i32, %c0_i32_0, %c0_i32_1 : i32, i32, i32
  }
  func.func @transform_9(%arg0: i32) -> (i32, i32, i32) {
    %c0_i32 = arith.constant 0 : i32
    %c0_i32_0 = arith.constant 0 : i32
    %c0_i32_1 = arith.constant 0 : i32
    %c0_i32_2 = arith.constant 0 : i32
    return %c0_i32, %c0_i32_0, %c0_i32_1 : i32, i32, i32
  }
  func.func @transform_10(%arg0: i32) -> (i32, i32, i32) {
    %c0_i32 = arith.constant 0 : i32
    %c0_i32_0 = arith.constant 0 : i32
    %c0_i32_1 = arith.constant 0 : i32
    %c0_i32_2 = arith.constant 0 : i32
    return %c0_i32, %c0_i32_0, %c0_i32_1 : i32, i32, i32
  }
  func.func @transform_11(%arg0: i32) -> (i32, i32, i32) {
    %c0_i32 = arith.constant 0 : i32
    %c0_i32_0 = arith.constant 0 : i32
    %c0_i32_1 = arith.constant 0 : i32
    %c0_i32_2 = arith.constant 0 : i32
    return %c0_i32, %c0_i32_0, %c0_i32_1 : i32, i32, i32
  }
  func.func @transform_12(%arg0: i32) -> (i32, i32, i32) {
    %c0_i32 = arith.constant 0 : i32
    %c0_i32_0 = arith.constant 0 : i32
    %c0_i32_1 = arith.constant 0 : i32
    %c0_i32_2 = arith.constant 0 : i32
    return %c0_i32, %c0_i32_0, %c0_i32_1 : i32, i32, i32
  }
  func.func @transform_13(%arg0: i32) -> (i32, i32) {
    %c0_i32 = arith.constant 0 : i32
    %c0_i32_0 = arith.constant 0 : i32
    %c0_i32_1 = arith.constant 0 : i32
    return %c0_i32, %c0_i32_0 : i32, i32
  }
  func.func @transform_14(%arg0: i32) -> (i32, i32) {
    %c0_i32 = arith.constant 0 : i32
    %c0_i32_0 = arith.constant 0 : i32
    %c0_i32_1 = arith.constant 0 : i32
    return %c0_i32, %c0_i32_0 : i32, i32
  }
  func.func @transform_15(%arg0: i32) -> (i32, i32, i32) {
    %c0_i32 = arith.constant 0 : i32
    %c0_i32_0 = arith.constant 0 : i32
    %c0_i32_1 = arith.constant 0 : i32
    %c0_i32_2 = arith.constant 0 : i32
    return %c0_i32, %c0_i32_0, %c0_i32_1 : i32, i32, i32
  }
}

</mosaic_0001>

<llo_original>
// kernel: transformer_forward.2
$region0: #{transformer_forward.2}
  #allocation0 [shape = 'u32[]', space=smem, size = 0x4, offset = 0x4, fixed_abs, tag = 'smem constant byte address 0x4 - core index']
  #allocation1 [shape = 'u32[144,128]{1,0:T(1,128)}', space=vmem, size = 0x12000, scoped, tag = 'internal scratch']
  %s0 = inlined_call_operand.vmem [shape: f32[1,16,8], index: 0, kind: input, shape index: {}]
  %s1 = inlined_call_operand.vmem [shape: bf16[2,8,24], index: 1, kind: input, shape index: {}]
  %s2 = inlined_call_operand.vmem [shape: f32[2,1,24], index: 2, kind: input, shape index: {}]
  %s3 = inlined_call_operand.vmem [shape: bf16[2,8,8], index: 3, kind: input, shape index: {}]
  %s4 = inlined_call_operand.vmem [shape: f32[2,1,8], index: 4, kind: input, shape index: {}]
  %s5 = inlined_call_operand.vmem [shape: f32[2,1,8], index: 5, kind: input, shape index: {}]
  %s6 = inlined_call_operand.vmem [shape: f32[2,1,8], index: 6, kind: input, shape index: {}]
  %s7 = inlined_call_operand.vmem [shape: bf16[2,8,32], index: 7, kind: input, shape index: {}]
  %s8 = inlined_call_operand.vmem [shape: f32[2,1,32], index: 8, kind: input, shape index: {}]
  %s9 = inlined_call_operand.vmem [shape: bf16[2,32,8], index: 9, kind: input, shape index: {}]
  %s10 = inlined_call_operand.vmem [shape: f32[2,1,8], index: 10, kind: input, shape index: {}]
  %s11 = inlined_call_operand.vmem [shape: f32[2,1,8], index: 11, kind: input, shape index: {}]
  %s12 = inlined_call_operand.vmem [shape: f32[2,1,8], index: 12, kind: input, shape index: {}]
  %s13 = inlined_call_operand.vmem [shape: f32[1,8], index: 13, kind: input, shape index: {}]
  %s14 = inlined_call_operand.vmem [shape: f32[1,8], index: 14, kind: input, shape index: {}]
  %s15 = inlined_call_operand.vmem [shape: f32[1,16,8], index: 15, kind: output, shape index: {}]
  %s16 = sld [smem:[#allocation0]]
  $region70: #{transformer_forward.2} parent=0
    _
  %s18 = ssub.s32 1, %s16
  %s19 = scalar_select 0, %s18, %s16
  // Predicated region
  $region2: #{transformer_forward.2} parent=0 // pred_check
    _
  $region3: #{transformer_forward.2} parent=0 // pred_check_branch
    %21 = sbr.rel (0) target = $region5
  $region4: #{transformer_forward.2} parent=0 // pred_region
    _
  $region5: #{transformer_forward.2} parent=0 // pred_fallthru
    _
  // Predicated region
  $region6: #{transformer_forward.2} parent=0 // pred_check
    _
  $region7: #{transformer_forward.2} parent=0 // pred_check_branch
    %23 = sbr.rel (0) target = $region9
  $region8: #{transformer_forward.2} parent=0 // pred_region
    _
  $region9: #{transformer_forward.2} parent=0 // pred_fallthru
    _
  // Predicated region
  $region10: #{transformer_forward.2} parent=0 // pred_check
    _
  $region11: #{transformer_forward.2} parent=0 // pred_check_branch
    %25 = sbr.rel (0) target = $region13
  $region12: #{transformer_forward.2} parent=0 // pred_region
    _
  $region13: #{transformer_forward.2} parent=0 // pred_fallthru
    _
  // Predicated region
  $region14: #{transformer_forward.2} parent=0 // pred_check
    _
  $region15: #{transformer_forward.2} parent=0 // pred_check_branch
    %27 = sbr.rel (0) target = $region17
  $region16: #{transformer_forward.2} parent=0 // pred_region
    _
  $region17: #{transformer_forward.2} parent=0 // pred_fallthru
    _
  // Predicated region
  $region18: #{transformer_forward.2} parent=0 // pred_check
    _
  $region19: #{transformer_forward.2} parent=0 // pred_check_branch
    %29 = sbr.rel (0) target = $region21
  $region20: #{transformer_forward.2} parent=0 // pred_region
    _
  $region21: #{transformer_forward.2} parent=0 // pred_fallthru
    _
  // Predicated region
  $region22: #{transformer_forward.2} parent=0 // pred_check
    _
  $region23: #{transformer_forward.2} parent=0 // pred_check_branch
    %31 = sbr.rel (0) target = $region25
  $region24: #{transformer_forward.2} parent=0 // pred_region
    _
  $region25: #{transformer_forward.2} parent=0 // pred_fallthru
    _
  // Predicated region
  $region26: #{transformer_forward.2} parent=0 // pred_check
    _
  $region27: #{transformer_forward.2} parent=0 // pred_check_branch
    %33 = sbr.rel (0) target = $region29
  $region28: #{transformer_forward.2} parent=0 // pred_region
    _
  $region29: #{transformer_forward.2} parent=0 // pred_fallthru
    _
  // Predicated region
  $region30: #{transformer_forward.2} parent=0 // pred_check
    _
  $region31: #{transformer_forward.2} parent=0 // pred_check_branch
    %35 = sbr.rel (0) target = $region33
  $region32: #{transformer_forward.2} parent=0 // pred_region
    _
  $region33: #{transformer_forward.2} parent=0 // pred_fallthru
    _
  // Predicated region
  $region34: #{transformer_forward.2} parent=0 // pred_check
    _
  $region35: #{transformer_forward.2} parent=0 // pred_check_branch
    %37 = sbr.rel (0) target = $region37
  $region36: #{transformer_forward.2} parent=0 // pred_region
    _
  $region37: #{transformer_forward.2} parent=0 // pred_fallthru
    _
  // Predicated region
  $region38: #{transformer_forward.2} parent=0 // pred_check
    _
  $region39: #{transformer_forward.2} parent=0 // pred_check_branch
    %39 = sbr.rel (0) target = $region41
  $region40: #{transformer_forward.2} parent=0 // pred_region
    _
  $region41: #{transformer_forward.2} parent=0 // pred_fallthru
    _
  // Predicated region
  $region42: #{transformer_forward.2} parent=0 // pred_check
    _
  $region43: #{transformer_forward.2} parent=0 // pred_check_branch
    %41 = sbr.rel (0) target = $region45
  $region44: #{transformer_forward.2} parent=0 // pred_region
    _
  $region45: #{transformer_forward.2} parent=0 // pred_fallthru
    _
  // Predicated region
  $region46: #{transformer_forward.2} parent=0 // pred_check
    _
  $region47: #{transformer_forward.2} parent=0 // pred_check_branch
    %43 = sbr.rel (0) target = $region49
  $region48: #{transformer_forward.2} parent=0 // pred_region
    _
  $region49: #{transformer_forward.2} parent=0 // pred_fallthru
    _
  // Predicated region
  $region50: #{transformer_forward.2} parent=0 // pred_check
    _
  $region51: #{transformer_forward.2} parent=0 // pred_check_branch
    %45 = sbr.rel (0) target = $region53
  $region52: #{transformer_forward.2} parent=0 // pred_region
    _
  $region53: #{transformer_forward.2} parent=0 // pred_fallthru
    _
  // Predicated region
  $region54: #{transformer_forward.2} parent=0 // pred_check
    _
  $region55: #{transformer_forward.2} parent=0 // pred_check_branch
    %47 = sbr.rel (0) target = $region57
  $region56: #{transformer_forward.2} parent=0 // pred_region
    _
  $region57: #{transformer_forward.2} parent=0 // pred_fallthru
    _
  // Predicated region
  $region58: #{transformer_forward.2} parent=0 // pred_check
    _
  $region59: #{transformer_forward.2} parent=0 // pred_check_branch
    %49 = sbr.rel (0) target = $region61
  $region60: #{transformer_forward.2} parent=0 // pred_region
    _
  $region61: #{transformer_forward.2} parent=0 // pred_fallthru
    _
  %v51 = vld [vmem:[%s0] sm:$0xff]
  %v52 = vld [vmem:[%s0 + $0x8] sm:$0xff]
  %v53 = vld [vmem:[%s1] sm:$0xf]
  %v54 = vld [vmem:[%s2] sm:$0x1]
  %v55 = vld [vmem:[%s3] sm:$0xf]
  %v56 = vld [vmem:[%s4] sm:$0x1]
  %v57 = vld [vmem:[%s5] sm:$0x1]
  %v58 = vld [vmem:[%s6] sm:$0x1]
  %v59 = vpack.c.bf16 %v52, %v51
  %v61 = vlaneseq
  %v62 = vshrl.u32 %v61, 7
  %v63 = vsub.s32 0, %v62
  %v64 = vrot.slane %v54, %v63
  %vm66 = vcmask 64512
  %v68 = vsel %vm66, %v59, 0
  %vm70 = vcmask 1043456
  %v72 = vsel %vm70, %v53, 0
  %74 = vmatprep.subr.bf16.mxu0 0
  %75 = vmatpush1.bf16.msra.mxu0 %v72
  %76 = vmatprep.subr.bf16.mxu0 0
  %77 = vmatpush1.bf16.msra.mxu0 0
  %78 = vmatprep.subr.bf16.mxu0 0
  %79 = vmatpush1.bf16.msra.mxu0 0
  %80 = vmatprep.subr.bf16.mxu0 0
  %81 = vmatpush1.bf16.msra.mxu0 0
  %82 = vmatprep.subr.bf16.mxu0 0
  %83 = vmatpush1.bf16.msra.mxu0 0
  %84 = vmatprep.subr.bf16.mxu0 0
  %85 = vmatpush1.bf16.msra.mxu0 0
  %86 = vmatprep.subr.bf16.mxu0 0
  %87 = vmatpush1.bf16.msra.mxu0 0
  %88 = vmatprep.subr.bf16.mxu0 0
  %89 = vmatpush1.bf16.msra.mxu0 0
  %90 = vmatprep.subr.bf16.mxu0 0
  %91 = vmatpush1.bf16.msra.mxu0 0
  %92 = vmatprep.subr.bf16.mxu0 0
  %93 = vmatpush1.bf16.msra.mxu0 0
  %94 = vmatprep.subr.bf16.mxu0 0
  %95 = vmatpush1.bf16.msra.mxu0 0
  %96 = vmatprep.subr.bf16.mxu0 0
  %97 = vmatpush1.bf16.msra.mxu0 0
  %98 = vmatprep.subr.bf16.mxu0 0
  %99 = vmatpush1.bf16.msra.mxu0 0
  %100 = vmatprep.subr.bf16.mxu0 0
  %101 = vmatpush1.bf16.msra.mxu0 0
  %102 = vmatprep.subr.bf16.mxu0 0
  %103 = vmatpush1.bf16.msra.mxu0 0
  %104 = vmatprep.subr.bf16.mxu0 0
  %105 = vmatpush1.bf16.msra.mxu0 0
  %106 = vmatprep.mubr.bf16.mxu0 0
  %107 = vmatmul.mubr.bf16.gmra.mrb[0].mxu0 %v68
  %v108 = vpop.f32.mrb[0].mxu0
  %v109 = vadd.f32 %v64, %v108
  %v110 = vpop.f32.mrb[0].mxu0
  %v111 = vpop.f32.mrb[0].mxu0
  %v112 = vadd.f32 %v64, %v111
  %v113 = vpop.f32.mrb[0].mxu0
  %114 = vdwg.mxu0
  %v115 = vlaneseq
  %v116 = vshrl.u32 %v115, 7
  %v117 = vadd.s32 %v116, 8
  %v118 = vlaneseq
  %v119 = vand.u32 %v118, 127
  %vm120 = vcmp.gt.s32.totalorder %v119, %v116
  %vm121 = vcmp.gt.s32.totalorder %v119, %v117
  %v122 = vsel %vm120, -1e+30, 0.0
  %v123 = vsel %vm121, -1e+30, 0.0
  %126 = vrot.lane.b32.xlu0 %v109, 120
  %v127 = vpop.permute.xlu0 %126
  %128 = vrot.lane.b32.xlu0 %v112, 120
  %v129 = vpop.permute.xlu0 %128
  %vm130 = vcmask 31744
  %v131 = vsel %vm130, %v109, 0
  %v133 = vsel %vm130, %v112, 0
  %v135 = vsel %vm130, %v127, 0
  %v137 = vsel %vm130, %v129, 0
  %139 = vmatprep.subr.mxu0 0.0
  %140 = vmatpush1.xpose.msra.mxu0 %v135
  %141 = vmatprep.subr.mxu0 0.0
  %142 = vmatpush1.xpose.msra.mxu0 %v137
  %143 = vmatprep.subr.mxu0 0.0
  %144 = vmatpush1.xpose.msra.mxu0 0.0
  %145 = vmatprep.subr.mxu0 0.0
  %146 = vmatpush1.xpose.msra.mxu0 0.0
  %147 = vmatprep.subr.mxu0 0.0
  %148 = vmatpush1.xpose.msra.mxu0 0.0
  %149 = vmatprep.subr.mxu0 0.0
  %150 = vmatpush1.xpose.msra.mxu0 0.0
  %151 = vmatprep.subr.mxu0 0.0
  %152 = vmatpush1.xpose.msra.mxu0 0.0
  %153 = vmatprep.subr.mxu0 0.0
  %154 = vmatpush1.xpose.msra.mxu0 0.0
  %155 = vmatprep.subr.mxu0 0.0
  %156 = vmatpush1.xpose.msra.mxu0 0.0
  %157 = vmatprep.subr.mxu0 0.0
  %158 = vmatpush1.xpose.msra.mxu0 0.0
  %159 = vmatprep.subr.mxu0 0.0
  %160 = vmatpush1.xpose.msra.mxu0 0.0
  %161 = vmatprep.subr.mxu0 0.0
  %162 = vmatpush1.xpose.msra.mxu0 0.0
  %163 = vmatprep.subr.mxu0 0.0
  %164 = vmatpush1.xpose.msra.mxu0 0.0
  %165 = vmatprep.subr.mxu0 0.0
  %166 = vmatpush1.xpose.msra.mxu0 0.0
  %167 = vmatprep.subr.mxu0 0.0
  %168 = vmatpush1.xpose.msra.mxu0 0.0
  %169 = vmatprep.subr.mxu0 0.0
  %170 = vmatpush1.xpose.msra.mxu0 0.0
  %171 = vmatprep.subr.mxu0 0.0
  %172 = vmatpush1.xpose.msra.mxu0 0.0
  %173 = vmatprep.subr.mxu0 0.0
  %174 = vmatpush1.xpose.msra.mxu0 0.0
  %175 = vmatprep.subr.mxu0 0.0
  %176 = vmatpush1.xpose.msra.mxu0 0.0
  %177 = vmatprep.subr.mxu0 0.0
  %178 = vmatpush1.xpose.msra.mxu0 0.0
  %179 = vmatprep.subr.mxu0 0.0
  %180 = vmatpush1.xpose.msra.mxu0 0.0
  %181 = vmatprep.subr.mxu0 0.0
  %182 = vmatpush1.xpose.msra.mxu0 0.0
  %183 = vmatprep.subr.mxu0 0.0
  %184 = vmatpush1.xpose.msra.mxu0 0.0
  %185 = vmatprep.subr.mxu0 0.0
  %186 = vmatpush1.xpose.msra.mxu0 0.0
  %187 = vmatprep.subr.mxu0 0.0
  %188 = vmatpush1.xpose.msra.mxu0 0.0
  %189 = vmatprep.subr.mxu0 0.0
  %190 = vmatpush1.xpose.msra.mxu0 0.0
  %191 = vmatprep.subr.mxu0 0.0
  %192 = vmatpush1.xpose.msra.mxu0 0.0
  %193 = vmatprep.subr.mxu0 0.0
  %194 = vmatpush1.xpose.msra.mxu0 0.0
  %195 = vmatprep.subr.mxu0 0.0
  %196 = vmatpush1.xpose.msra.mxu0 0.0
  %197 = vmatprep.subr.mxu0 0.0
  %198 = vmatpush1.xpose.msra.mxu0 0.0
  %199 = vmatprep.subr.mxu0 0.0
  %200 = vmatpush1.xpose.msra.mxu0 0.0
  %201 = vmatprep.subr.mxu0 0.0
  %202 = vmatpush1.xpose.msra.mxu0 0.0
  %203 = vmatprep.mubr.f32.mxu0 0.0
  %204 = vmatmul.mubr.f32.gmra.mrb[0].mxu0 %v131
  %v205 = vpop.f32.mrb[0].mxu0
  %v206 = vadd.f32 0.0, %v205
  %v207 = vpop.f32.mrb[0].mxu0
  %208 = vmatprep.mubr.f32.mxu0 0.0
  %209 = vmatmul.mubr.f32.gmra.mrb[0].mxu0 %v133
  %v210 = vpop.f32.mrb[0].mxu0
  %v211 = vadd.f32 0.0, %v210
  %v212 = vpop.f32.mrb[0].mxu0
  %213 = vdwg.mxu0
  %v214 = vmul.f32 %v206, 0.5
  %v215 = vmul.f32 %v211, 0.5
  %v216 = vadd.f32 %v214, %v122
  %v217 = vadd.f32 %v215, %v123
  %vm218 = vcmask 130048
  %v219 = vsel %vm218, %v216, -inf
  %220 = vmax.xlane.f32.xlu0 %v219
  %v221 = vpop.xlane.xlu0 %220
  %v222 = vsel %vm218, %v217, -inf
  %223 = vmax.xlane.f32.xlu0 %v222
  %v224 = vpop.xlane.xlu0 %223
  %v225 = vsub.f32 %v216, %v221
  %v226 = vsub.f32 %v217, %v224
  %v227 = vmul.f32 %v225, 1.442695
  %v228 = vpow.pop %v227
  %v229 = vmul.f32 %v226, 1.442695
  %v230 = vpow.pop %v229
  %v231 = vsel %vm218, %v228, 0.0
  %232 = vadd.xlane.f32.xlu0 %v231
  %v233 = vpop.xlane.xlu0 %232
  %v234 = vsel %vm218, %v230, 0.0
  %235 = vadd.xlane.f32.xlu0 %v234
  %v236 = vpop.xlane.xlu0 %235
  %v237 = vrcp.pop %v233
  %v238 = vrcp.pop %v236
  %v239 = vmul.f32 %v228, %v237
  %v240 = vmul.f32 %v230, %v238
  %241 = vrot.lane.b32.xlu0 %v109, 112
  %v242 = vpop.permute.xlu0 %241
  %243 = vrot.lane.b32.xlu0 %v112, 112
  %v244 = vpop.permute.xlu0 %243
  %v248 = vsel %vm218, %v239, 0
  %v251 = vsel %vm218, %v240, 0
  %253 = vmatprep.subr.mxu0 0.0
  %254 = vmatpush1.msra.mxu0 %v242
  %255 = vmatprep.subr.mxu0 0.0
  %256 = vmatpush1.msra.mxu0 %v244
  %257 = vmatprep.subr.mxu0 0.0
  %258 = vmatpush1.msra.mxu0 0.0
  %259 = vmatprep.subr.mxu0 0.0
  %260 = vmatpush1.msra.mxu0 0.0
  %261 = vmatprep.subr.mxu0 0.0
  %262 = vmatpush1.msra.mxu0 0.0
  %263 = vmatprep.subr.mxu0 0.0
  %264 = vmatpush1.msra.mxu0 0.0
  %265 = vmatprep.subr.mxu0 0.0
  %266 = vmatpush1.msra.mxu0 0.0
  %267 = vmatprep.subr.mxu0 0.0
  %268 = vmatpush1.msra.mxu0 0.0
  %269 = vmatprep.subr.mxu0 0.0
  %270 = vmatpush1.msra.mxu0 0.0
  %271 = vmatprep.subr.mxu0 0.0
  %272 = vmatpush1.msra.mxu0 0.0
  %273 = vmatprep.subr.mxu0 0.0
  %274 = vmatpush1.msra.mxu0 0.0
  %275 = vmatprep.subr.mxu0 0.0
  %276 = vmatpush1.msra.mxu0 0.0
  %277 = vmatprep.subr.mxu0 0.0
  %278 = vmatpush1.msra.mxu0 0.0
  %279 = vmatprep.subr.mxu0 0.0
  %280 = vmatpush1.msra.mxu0 0.0
  %281 = vmatprep.subr.mxu0 0.0
  %282 = vmatpush1.msra.mxu0 0.0
  %283 = vmatprep.subr.mxu0 0.0
  %284 = vmatpush1.msra.mxu0 0.0
  %285 = vmatprep.subr.mxu0 0.0
  %286 = vmatpush1.msra.mxu0 0.0
  %287 = vmatprep.subr.mxu0 0.0
  %288 = vmatpush1.msra.mxu0 0.0
  %289 = vmatprep.subr.mxu0 0.0
  %290 = vmatpush1.msra.mxu0 0.0
  %291 = vmatprep.subr.mxu0 0.0
  %292 = vmatpush1.msra.mxu0 0.0
  %293 = vmatprep.subr.mxu0 0.0
  %294 = vmatpush1.msra.mxu0 0.0
  %295 = vmatprep.subr.mxu0 0.0
  %296 = vmatpush1.msra.mxu0 0.0
  %297 = vmatprep.subr.mxu0 0.0
  %298 = vmatpush1.msra.mxu0 0.0
  %299 = vmatprep.subr.mxu0 0.0
  %300 = vmatpush1.msra.mxu0 0.0
  %301 = vmatprep.subr.mxu0 0.0
  %302 = vmatpush1.msra.mxu0 0.0
  %303 = vmatprep.subr.mxu0 0.0
  %304 = vmatpush1.msra.mxu0 0.0
  %305 = vmatprep.subr.mxu0 0.0
  %306 = vmatpush1.msra.mxu0 0.0
  %307 = vmatprep.subr.mxu0 0.0
  %308 = vmatpush1.msra.mxu0 0.0
  %309 = vmatprep.subr.mxu0 0.0
  %310 = vmatpush1.msra.mxu0 0.0
  %311 = vmatprep.subr.mxu0 0.0
  %312 = vmatpush1.msra.mxu0 0.0
  %313 = vmatprep.subr.mxu0 0.0
  %314 = vmatpush1.msra.mxu0 0.0
  %315 = vmatprep.subr.mxu0 0.0
  %316 = vmatpush1.msra.mxu0 0.0
  %317 = vmatprep.mubr.f32.mxu0 0.0
  %318 = vmatmul.mubr.f32.gmra.mrb[0].mxu0 %v248
  %v319 = vpop.f32.mrb[0].mxu0
  %v320 = vadd.f32 0.0, %v319
  %v321 = vpop.f32.mrb[0].mxu0
  %322 = vmatprep.mubr.f32.mxu0 0.0
  %323 = vmatmul.mubr.f32.gmra.mrb[0].mxu0 %v251
  %v324 = vpop.f32.mrb[0].mxu0
  %v325 = vadd.f32 0.0, %v324
  %v326 = vpop.f32.mrb[0].mxu0
  %327 = vdwg.mxu0
  %328 = vrot.lane.b32.xlu0 %v109, 124
  %v329 = vpop.permute.xlu0 %328
  %330 = vrot.lane.b32.xlu0 %v112, 124
  %v331 = vpop.permute.xlu0 %330
  %332 = vrot.lane.b32.xlu0 %v109, 116
  %v333 = vpop.permute.xlu0 %332
  %334 = vrot.lane.b32.xlu0 %v112, 116
  %v335 = vpop.permute.xlu0 %334
  %v336 = vsel %vm130, %v329, 0
  %v338 = vsel %vm130, %v331, 0
  %v340 = vsel %vm130, %v333, 0
  %v342 = vsel %vm130, %v335, 0
  %344 = vmatprep.subr.mxu0 0.0
  %345 = vmatpush1.xpose.msra.mxu0 %v340
  %346 = vmatprep.subr.mxu0 0.0
  %347 = vmatpush1.xpose.msra.mxu0 %v342
  %348 = vmatprep.subr.mxu0 0.0
  %349 = vmatpush1.xpose.msra.mxu0 0.0
  %350 = vmatprep.subr.mxu0 0.0
  %351 = vmatpush1.xpose.msra.mxu0 0.0
  %352 = vmatprep.subr.mxu0 0.0
  %353 = vmatpush1.xpose.msra.mxu0 0.0
  %354 = vmatprep.subr.mxu0 0.0
  %355 = vmatpush1.xpose.msra.mxu0 0.0
  %356 = vmatprep.subr.mxu0 0.0
  %357 = vmatpush1.xpose.msra.mxu0 0.0
  %358 = vmatprep.subr.mxu0 0.0
  %359 = vmatpush1.xpose.msra.mxu0 0.0
  %360 = vmatprep.subr.mxu0 0.0
  %361 = vmatpush1.xpose.msra.mxu0 0.0
  %362 = vmatprep.subr.mxu0 0.0
  %363 = vmatpush1.xpose.msra.mxu0 0.0
  %364 = vmatprep.subr.mxu0 0.0
  %365 = vmatpush1.xpose.msra.mxu0 0.0
  %366 = vmatprep.subr.mxu0 0.0
  %367 = vmatpush1.xpose.msra.mxu0 0.0
  %368 = vmatprep.subr.mxu0 0.0
  %369 = vmatpush1.xpose.msra.mxu0 0.0
  %370 = vmatprep.subr.mxu0 0.0
  %371 = vmatpush1.xpose.msra.mxu0 0.0
  %372 = vmatprep.subr.mxu0 0.0
  %373 = vmatpush1.xpose.msra.mxu0 0.0
  %374 = vmatprep.subr.mxu0 0.0
  %375 = vmatpush1.xpose.msra.mxu0 0.0
  %376 = vmatprep.subr.mxu0 0.0
  %377 = vmatpush1.xpose.msra.mxu0 0.0
  %378 = vmatprep.subr.mxu0 0.0
  %379 = vmatpush1.xpose.msra.mxu0 0.0
  %380 = vmatprep.subr.mxu0 0.0
  %381 = vmatpush1.xpose.msra.mxu0 0.0
  %382 = vmatprep.subr.mxu0 0.0
  %383 = vmatpush1.xpose.msra.mxu0 0.0
  %384 = vmatprep.subr.mxu0 0.0
  %385 = vmatpush1.xpose.msra.mxu0 0.0
  %386 = vmatprep.subr.mxu0 0.0
  %387 = vmatpush1.xpose.msra.mxu0 0.0
  %388 = vmatprep.subr.mxu0 0.0
  %389 = vmatpush1.xpose.msra.mxu0 0.0
  %390 = vmatprep.subr.mxu0 0.0
  %391 = vmatpush1.xpose.msra.mxu0 0.0
  %392 = vmatprep.subr.mxu0 0.0
  %393 = vmatpush1.xpose.msra.mxu0 0.0
  %394 = vmatprep.subr.mxu0 0.0
  %395 = vmatpush1.xpose.msra.mxu0 0.0
  %396 = vmatprep.subr.mxu0 0.0
  %397 = vmatpush1.xpose.msra.mxu0 0.0
  %398 = vmatprep.subr.mxu0 0.0
  %399 = vmatpush1.xpose.msra.mxu0 0.0
  %400 = vmatprep.subr.mxu0 0.0
  %401 = vmatpush1.xpose.msra.mxu0 0.0
  %402 = vmatprep.subr.mxu0 0.0
  %403 = vmatpush1.xpose.msra.mxu0 0.0
  %404 = vmatprep.subr.mxu0 0.0
  %405 = vmatpush1.xpose.msra.mxu0 0.0
  %406 = vmatprep.subr.mxu0 0.0
  %407 = vmatpush1.xpose.msra.mxu0 0.0
  %408 = vmatprep.mubr.f32.mxu0 0.0
  %409 = vmatmul.mubr.f32.gmra.mrb[0].mxu0 %v336
  %v410 = vpop.f32.mrb[0].mxu0
  %v411 = vadd.f32 0.0, %v410
  %v412 = vpop.f32.mrb[0].mxu0
  %413 = vmatprep.mubr.f32.mxu0 0.0
  %414 = vmatmul.mubr.f32.gmra.mrb[0].mxu0 %v338
  %v415 = vpop.f32.mrb[0].mxu0
  %v416 = vadd.f32 0.0, %v415
  %v417 = vpop.f32.mrb[0].mxu0
  %418 = vdwg.mxu0
  %v419 = vmul.f32 %v411, 0.5
  %v420 = vmul.f32 %v416, 0.5
  %v421 = vadd.f32 %v419, %v122
  %v422 = vadd.f32 %v420, %v123
  %v423 = vsel %vm218, %v421, -inf
  %424 = vmax.xlane.f32.xlu0 %v423
  %v425 = vpop.xlane.xlu0 %424
  %v426 = vsel %vm218, %v422, -inf
  %427 = vmax.xlane.f32.xlu0 %v426
  %v428 = vpop.xlane.xlu0 %427
  %v429 = vsub.f32 %v421, %v425
  %v430 = vsub.f32 %v422, %v428
  %v431 = vmul.f32 %v429, 1.442695
  %v432 = vpow.pop %v431
  %v433 = vmul.f32 %v430, 1.442695
  %v434 = vpow.pop %v433
  %v435 = vsel %vm218, %v432, 0.0
  %436 = vadd.xlane.f32.xlu0 %v435
  %v437 = vpop.xlane.xlu0 %436
  %v438 = vsel %vm218, %v434, 0.0
  %439 = vadd.xlane.f32.xlu0 %v438
  %v440 = vpop.xlane.xlu0 %439
  %v441 = vrcp.pop %v437
  %v442 = vrcp.pop %v440
  %v443 = vmul.f32 %v432, %v441
  %v444 = vmul.f32 %v434, %v442
  %445 = vrot.lane.b32.xlu0 %v109, 108
  %v446 = vpop.permute.xlu0 %445
  %447 = vrot.lane.b32.xlu0 %v112, 108
  %v448 = vpop.permute.xlu0 %447
  %v452 = vsel %vm218, %v443, 0
  %v455 = vsel %vm218, %v444, 0
  %457 = vmatprep.subr.mxu0 0.0
  %458 = vmatpush1.msra.mxu0 %v446
  %459 = vmatprep.subr.mxu0 0.0
  %460 = vmatpush1.msra.mxu0 %v448
  %461 = vmatprep.subr.mxu0 0.0
  %462 = vmatpush1.msra.mxu0 0.0
  %463 = vmatprep.subr.mxu0 0.0
  %464 = vmatpush1.msra.mxu0 0.0
  %465 = vmatprep.subr.mxu0 0.0
  %466 = vmatpush1.msra.mxu0 0.0
  %467 = vmatprep.subr.mxu0 0.0
  %468 = vmatpush1.msra.mxu0 0.0
  %469 = vmatprep.subr.mxu0 0.0
  %470 = vmatpush1.msra.mxu0 0.0
  %471 = vmatprep.subr.mxu0 0.0
  %472 = vmatpush1.msra.mxu0 0.0
  %473 = vmatprep.subr.mxu0 0.0
  %474 = vmatpush1.msra.mxu0 0.0
  %475 = vmatprep.subr.mxu0 0.0
  %476 = vmatpush1.msra.mxu0 0.0
  %477 = vmatprep.subr.mxu0 0.0
  %478 = vmatpush1.msra.mxu0 0.0
  %479 = vmatprep.subr.mxu0 0.0
  %480 = vmatpush1.msra.mxu0 0.0
  %481 = vmatprep.subr.mxu0 0.0
  %482 = vmatpush1.msra.mxu0 0.0
  %483 = vmatprep.subr.mxu0 0.0
  %484 = vmatpush1.msra.mxu0 0.0
  %485 = vmatprep.subr.mxu0 0.0
  %486 = vmatpush1.msra.mxu0 0.0
  %487 = vmatprep.subr.mxu0 0.0
  %488 = vmatpush1.msra.mxu0 0.0
  %489 = vmatprep.subr.mxu0 0.0
  %490 = vmatpush1.msra.mxu0 0.0
  %491 = vmatprep.subr.mxu0 0.0
  %492 = vmatpush1.msra.mxu0 0.0
  %493 = vmatprep.subr.mxu0 0.0
  %494 = vmatpush1.msra.mxu0 0.0
  %495 = vmatprep.subr.mxu0 0.0
  %496 = vmatpush1.msra.mxu0 0.0
  %497 = vmatprep.subr.mxu0 0.0
  %498 = vmatpush1.msra.mxu0 0.0
  %499 = vmatprep.subr.mxu0 0.0
  %500 = vmatpush1.msra.mxu0 0.0
  %501 = vmatprep.subr.mxu0 0.0
  %502 = vmatpush1.msra.mxu0 0.0
  %503 = vmatprep.subr.mxu0 0.0
  %504 = vmatpush1.msra.mxu0 0.0
  %505 = vmatprep.subr.mxu0 0.0
  %506 = vmatpush1.msra.mxu0 0.0
  %507 = vmatprep.subr.mxu0 0.0
  %508 = vmatpush1.msra.mxu0 0.0
  %509 = vmatprep.subr.mxu0 0.0
  %510 = vmatpush1.msra.mxu0 0.0
  %511 = vmatprep.subr.mxu0 0.0
  %512 = vmatpush1.msra.mxu0 0.0
  %513 = vmatprep.subr.mxu0 0.0
  %514 = vmatpush1.msra.mxu0 0.0
  %515 = vmatprep.subr.mxu0 0.0
  %516 = vmatpush1.msra.mxu0 0.0
  %517 = vmatprep.subr.mxu0 0.0
  %518 = vmatpush1.msra.mxu0 0.0
  %519 = vmatprep.subr.mxu0 0.0
  %520 = vmatpush1.msra.mxu0 0.0
  %521 = vmatprep.mubr.f32.mxu0 0.0
  %522 = vmatmul.mubr.f32.gmra.mrb[0].mxu0 %v452
  %v523 = vpop.f32.mrb[0].mxu0
  %v524 = vadd.f32 0.0, %v523
  %v525 = vpop.f32.mrb[0].mxu0
  %526 = vmatprep.mubr.f32.mxu0 0.0
  %527 = vmatmul.mubr.f32.gmra.mrb[0].mxu0 %v455
  %v528 = vpop.f32.mrb[0].mxu0
  %v529 = vadd.f32 0.0, %v528
  %v530 = vpop.f32.mrb[0].mxu0
  %531 = vdwg.mxu0
  %534 = vrot.lane.b32.xlu0 %v524, 4
  %v535 = vpop.permute.xlu0 %534
  %536 = vrot.lane.b32.xlu0 %v529, 4
  %v537 = vpop.permute.xlu0 %536
  %v540 = vsel %vm130, %v320, %v535
  %v541 = vsel %vm130, %v325, %v537
  %v542 = vpack.c.bf16 %v541, %v540
  %v544 = vlaneseq
  %v545 = vshrl.u32 %v544, 7
  %v546 = vsub.s32 0, %v545
  %v547 = vrot.slane %v56, %v546
  %v550 = vsel %vm66, %v542, 0
  %v553 = vsel %vm70, %v55, 0
  %555 = vmatprep.subr.bf16.mxu0 0
  %556 = vmatpush1.bf16.msra.mxu0 %v553
  %557 = vmatprep.subr.bf16.mxu0 0
  %558 = vmatpush1.bf16.msra.mxu0 0
  %559 = vmatprep.subr.bf16.mxu0 0
  %560 = vmatpush1.bf16.msra.mxu0 0
  %561 = vmatprep.subr.bf16.mxu0 0
  %562 = vmatpush1.bf16.msra.mxu0 0
  %563 = vmatprep.subr.bf16.mxu0 0
  %564 = vmatpush1.bf16.msra.mxu0 0
  %565 = vmatprep.subr.bf16.mxu0 0
  %566 = vmatpush1.bf16.msra.mxu0 0
  %567 = vmatprep.subr.bf16.mxu0 0
  %568 = vmatpush1.bf16.msra.mxu0 0
  %569 = vmatprep.subr.bf16.mxu0 0
  %570 = vmatpush1.bf16.msra.mxu0 0
  %571 = vmatprep.subr.bf16.mxu0 0
  %572 = vmatpush1.bf16.msra.mxu0 0
  %573 = vmatprep.subr.bf16.mxu0 0
  %574 = vmatpush1.bf16.msra.mxu0 0
  %575 = vmatprep.subr.bf16.mxu0 0
  %576 = vmatpush1.bf16.msra.mxu0 0
  %577 = vmatprep.subr.bf16.mxu0 0
  %578 = vmatpush1.bf16.msra.mxu0 0
  %579 = vmatprep.subr.bf16.mxu0 0
  %580 = vmatpush1.bf16.msra.mxu0 0
  %581 = vmatprep.subr.bf16.mxu0 0
  %582 = vmatpush1.bf16.msra.mxu0 0
  %583 = vmatprep.subr.bf16.mxu0 0
  %584 = vmatpush1.bf16.msra.mxu0 0
  %585 = vmatprep.subr.bf16.mxu0 0
  %586 = vmatpush1.bf16.msra.mxu0 0
  %587 = vmatprep.mubr.bf16.mxu0 0
  %588 = vmatmul.mubr.bf16.gmra.mrb[0].mxu0 %v550
  %v589 = vpop.f32.mrb[0].mxu0
  %v590 = vadd.f32 %v547, %v589
  %v591 = vpop.f32.mrb[0].mxu0
  %v592 = vpop.f32.mrb[0].mxu0
  %v593 = vadd.f32 %v547, %v592
  %v594 = vpop.f32.mrb[0].mxu0
  %595 = vdwg.mxu0
  %v596 = vadd.f32 %v51, %v590
  %v597 = vadd.f32 %v52, %v593
  %v598 = vsel %vm66, %v596, 0.0
  %599 = vadd.xlane.f32.xlu0 %v598
  %v600 = vpop.xlane.xlu0 %599
  %v601 = vsel %vm66, %v597, 0.0
  %602 = vadd.xlane.f32.xlu0 %v601
  %v603 = vpop.xlane.xlu0 %602
  %v604 = vrcp.pop 8.0
  %v605 = vmul.f32 %v600, %v604
  %v606 = vmul.f32 %v603, %v604
  %v607 = vsub.f32 %v596, %v605
  %v608 = vsub.f32 %v597, %v606
  %v609 = vmul.f32 %v607, %v607
  %v610 = vmul.f32 %v608, %v608
  %v611 = vsel %vm66, %v609, 0.0
  %612 = vadd.xlane.f32.xlu0 %v611
  %v613 = vpop.xlane.xlu0 %612
  %v614 = vsel %vm66, %v610, 0.0
  %615 = vadd.xlane.f32.xlu0 %v614
  %v616 = vpop.xlane.xlu0 %615
  %v617 = vmul.f32 %v613, %v604
  %v618 = vmul.f32 %v616, %v604
  %v619 = vadd.f32 %v617, 1e-05
  %v620 = vadd.f32 %v618, 1e-05
  %v621 = vrsqrt.pop %v619
  %v622 = vrsqrt.pop %v620
  %v623 = vmul.f32 %v607, %v621
  %v624 = vmul.f32 %v608, %v622
  %v626 = vlaneseq
  %v627 = vshrl.u32 %v626, 7
  %v628 = vsub.s32 0, %v627
  %v629 = vrot.slane %v57, %v628
  %v631 = vmul.f32 %v623, %v629
  %v632 = vmul.f32 %v624, %v629
  %v634 = vlaneseq
  %v635 = vshrl.u32 %v634, 7
  %v636 = vsub.s32 0, %v635
  %v637 = vrot.slane %v58, %v636
  %v639 = vadd.f32 %v631, %v637
  %v640 = vadd.f32 %v632, %v637
  %v641 = vld [vmem:[%s7] sm:$0xf]
  %v642 = vld [vmem:[%s8] sm:$0x1]
  %v643 = vld [vmem:[%s9] sm:$0xf]
  %v644 = vld [vmem:[%s9 + $0x4] sm:$0xf]
  %v645 = vld [vmem:[%s9 + $0x8] sm:$0xf]
  %v646 = vld [vmem:[%s9 + $0xc] sm:$0xf]
  %v647 = vld [vmem:[%s10] sm:$0x1]
  %v648 = vld [vmem:[%s11] sm:$0x1]
  %v649 = vld [vmem:[%s12] sm:$0x1]
  %v650 = vpack.c.bf16 %v640, %v639
  %v652 = vlaneseq
  %v653 = vshrl.u32 %v652, 7
  %v654 = vsub.s32 0, %v653
  %v655 = vrot.slane %v642, %v654
  %v658 = vsel %vm66, %v650, 0
  %v661 = vsel %vm70, %v641, 0
  %663 = vmatprep.subr.bf16.mxu0 0
  %664 = vmatpush1.bf16.msra.mxu0 %v661
  %665 = vmatprep.subr.bf16.mxu0 0
  %666 = vmatpush1.bf16.msra.mxu0 0
  %667 = vmatprep.subr.bf16.mxu0 0
  %668 = vmatpush1.bf16.msra.mxu0 0
  %669 = vmatprep.subr.bf16.mxu0 0
  %670 = vmatpush1.bf16.msra.mxu0 0
  %671 = vmatprep.subr.bf16.mxu0 0
  %672 = vmatpush1.bf16.msra.mxu0 0
  %673 = vmatprep.subr.bf16.mxu0 0
  %674 = vmatpush1.bf16.msra.mxu0 0
  %675 = vmatprep.subr.bf16.mxu0 0
  %676 = vmatpush1.bf16.msra.mxu0 0
  %677 = vmatprep.subr.bf16.mxu0 0
  %678 = vmatpush1.bf16.msra.mxu0 0
  %679 = vmatprep.subr.bf16.mxu0 0
  %680 = vmatpush1.bf16.msra.mxu0 0
  %681 = vmatprep.subr.bf16.mxu0 0
  %682 = vmatpush1.bf16.msra.mxu0 0
  %683 = vmatprep.subr.bf16.mxu0 0
  %684 = vmatpush1.bf16.msra.mxu0 0
  %685 = vmatprep.subr.bf16.mxu0 0
  %686 = vmatpush1.bf16.msra.mxu0 0
  %687 = vmatprep.subr.bf16.mxu0 0
  %688 = vmatpush1.bf16.msra.mxu0 0
  %689 = vmatprep.subr.bf16.mxu0 0
  %690 = vmatpush1.bf16.msra.mxu0 0
  %691 = vmatprep.subr.bf16.mxu0 0
  %692 = vmatpush1.bf16.msra.mxu0 0
  %693 = vmatprep.subr.bf16.mxu0 0
  %694 = vmatpush1.bf16.msra.mxu0 0
  %695 = vmatprep.mubr.bf16.mxu0 0
  %696 = vmatmul.mubr.bf16.gmra.mrb[0].mxu0 %v658
  %v697 = vpop.f32.mrb[0].mxu0
  %v698 = vadd.f32 %v655, %v697
  %v699 = vpop.f32.mrb[0].mxu0
  %v700 = vpop.f32.mrb[0].mxu0
  %v701 = vadd.f32 %v655, %v700
  %v702 = vpop.f32.mrb[0].mxu0
  %703 = vdwg.mxu0
  %v704 = vmax.f32 %v698, 0.0
  %v705 = vmax.f32 %v701, 0.0
  %v706 = vpack.c.bf16 %v705, %v704
  %v708 = vlaneseq
  %v709 = vshrl.u32 %v708, 7
  %v710 = vsub.s32 0, %v709
  %v711 = vrot.slane %v647, %v710
  %v717 = vunpack.c.l.b16 %v643
  %v718 = vunpack.c.l.b16 %v644
  %v719 = vunpack.c.l.b16 %v645
  %v720 = vunpack.c.l.b16 %v646
  %v721 = vpack.c.b16 %v718, %v717
  %v722 = vpack.c.b16 %v720, %v719
  %vm725 = vcmask 261120
  %v727 = vsel %vm725, %v706, 0
  %729 = vmatprep.subr.bf16.mxu0 0
  %730 = vmatpush1.bf16.msra.mxu0 %v721
  %731 = vmatprep.subr.bf16.mxu0 0
  %732 = vmatpush1.bf16.msra.mxu0 %v722
  %733 = vmatprep.subr.bf16.mxu0 0
  %734 = vmatpush1.bf16.msra.mxu0 0
  %735 = vmatprep.subr.bf16.mxu0 0
  %736 = vmatpush1.bf16.msra.mxu0 0
  %737 = vmatprep.subr.bf16.mxu0 0
  %738 = vmatpush1.bf16.msra.mxu0 0
  %739 = vmatprep.subr.bf16.mxu0 0
  %740 = vmatpush1.bf16.msra.mxu0 0
  %741 = vmatprep.subr.bf16.mxu0 0
  %742 = vmatpush1.bf16.msra.mxu0 0
  %743 = vmatprep.subr.bf16.mxu0 0
  %744 = vmatpush1.bf16.msra.mxu0 0
  %745 = vmatprep.subr.bf16.mxu0 0
  %746 = vmatpush1.bf16.msra.mxu0 0
  %747 = vmatprep.subr.bf16.mxu0 0
  %748 = vmatpush1.bf16.msra.mxu0 0
  %749 = vmatprep.subr.bf16.mxu0 0
  %750 = vmatpush1.bf16.msra.mxu0 0
  %751 = vmatprep.subr.bf16.mxu0 0
  %752 = vmatpush1.bf16.msra.mxu0 0
  %753 = vmatprep.subr.bf16.mxu0 0
  %754 = vmatpush1.bf16.msra.mxu0 0
  %755 = vmatprep.subr.bf16.mxu0 0
  %756 = vmatpush1.bf16.msra.mxu0 0
  %757 = vmatprep.subr.bf16.mxu0 0
  %758 = vmatpush1.bf16.msra.mxu0 0
  %759 = vmatprep.subr.bf16.mxu0 0
  %760 = vmatpush1.bf16.msra.mxu0 0
  %761 = vmatprep.mubr.bf16.mxu0 0
  %762 = vmatmul.mubr.bf16.gmra.mrb[0].mxu0 %v727
  %v763 = vpop.f32.mrb[0].mxu0
  %v764 = vadd.f32 %v711, %v763
  %v765 = vpop.f32.mrb[0].mxu0
  %v766 = vpop.f32.mrb[0].mxu0
  %v767 = vadd.f32 %v711, %v766
  %v768 = vpop.f32.mrb[0].mxu0
  %769 = vdwg.mxu0
  %v770 = vadd.f32 %v639, %v764
  %v771 = vadd.f32 %v640, %v767
  %v772 = vsel %vm66, %v770, 0.0
  %773 = vadd.xlane.f32.xlu0 %v772
  %v774 = vpop.xlane.xlu0 %773
  %v775 = vsel %vm66, %v771, 0.0
  %776 = vadd.xlane.f32.xlu0 %v775
  %v777 = vpop.xlane.xlu0 %776
  %v778 = vmul.f32 %v774, %v604
  %v779 = vmul.f32 %v777, %v604
  %v780 = vsub.f32 %v770, %v778
  %v781 = vsub.f32 %v771, %v779
  %v782 = vmul.f32 %v780, %v780
  %v783 = vmul.f32 %v781, %v781
  %v784 = vsel %vm66, %v782, 0.0
  %785 = vadd.xlane.f32.xlu0 %v784
  %v786 = vpop.xlane.xlu0 %785
  %v787 = vsel %vm66, %v783, 0.0
  %788 = vadd.xlane.f32.xlu0 %v787
  %v789 = vpop.xlane.xlu0 %788
  %v790 = vmul.f32 %v786, %v604
  %v791 = vmul.f32 %v789, %v604
  %v792 = vadd.f32 %v790, 1e-05
  %v793 = vadd.f32 %v791, 1e-05
  %v794 = vrsqrt.pop %v792
  %v795 = vrsqrt.pop %v793
  %v796 = vmul.f32 %v780, %v794
  %v797 = vmul.f32 %v781, %v795
  %v799 = vlaneseq
  %v800 = vshrl.u32 %v799, 7
  %v801 = vsub.s32 0, %v800
  %v802 = vrot.slane %v648, %v801
  %v804 = vmul.f32 %v796, %v802
  %v805 = vmul.f32 %v797, %v802
  %v807 = vlaneseq
  %v808 = vshrl.u32 %v807, 7
  %v809 = vsub.s32 0, %v808
  %v810 = vrot.slane %v649, %v809
  %v812 = vadd.f32 %v804, %v810
  %v813 = vadd.f32 %v805, %v810
  %s814 = scalar_lea.vmem %s1, 4
  %v815 = vld [vmem:[%s814] sm:$0xf]
  %s816 = scalar_lea.vmem %s2, 1
  %v817 = vld [vmem:[%s816] sm:$0x1]
  %s818 = scalar_lea.vmem %s3, 4
  %v819 = vld [vmem:[%s818] sm:$0xf]
  %s820 = scalar_lea.vmem %s4, 1
  %v821 = vld [vmem:[%s820] sm:$0x1]
  %s822 = scalar_lea.vmem %s5, 1
  %v823 = vld [vmem:[%s822] sm:$0x1]
  %s824 = scalar_lea.vmem %s6, 1
  %v825 = vld [vmem:[%s824] sm:$0x1]
  %v826 = vpack.c.bf16 %v813, %v812
  %v828 = vlaneseq
  %v829 = vshrl.u32 %v828, 7
  %v830 = vsub.s32 0, %v829
  %v831 = vrot.slane %v817, %v830
  %v834 = vsel %vm66, %v826, 0
  %v837 = vsel %vm70, %v815, 0
  %839 = vmatprep.subr.bf16.mxu0 0
  %840 = vmatpush1.bf16.msra.mxu0 %v837
  %841 = vmatprep.subr.bf16.mxu0 0
  %842 = vmatpush1.bf16.msra.mxu0 0
  %843 = vmatprep.subr.bf16.mxu0 0
  %844 = vmatpush1.bf16.msra.mxu0 0
  %845 = vmatprep.subr.bf16.mxu0 0
  %846 = vmatpush1.bf16.msra.mxu0 0
  %847 = vmatprep.subr.bf16.mxu0 0
  %848 = vmatpush1.bf16.msra.mxu0 0
  %849 = vmatprep.subr.bf16.mxu0 0
  %850 = vmatpush1.bf16.msra.mxu0 0
  %851 = vmatprep.subr.bf16.mxu0 0
  %852 = vmatpush1.bf16.msra.mxu0 0
  %853 = vmatprep.subr.bf16.mxu0 0
  %854 = vmatpush1.bf16.msra.mxu0 0
  %855 = vmatprep.subr.bf16.mxu0 0
  %856 = vmatpush1.bf16.msra.mxu0 0
  %857 = vmatprep.subr.bf16.mxu0 0
  %858 = vmatpush1.bf16.msra.mxu0 0
  %859 = vmatprep.subr.bf16.mxu0 0
  %860 = vmatpush1.bf16.msra.mxu0 0
  %861 = vmatprep.subr.bf16.mxu0 0
  %862 = vmatpush1.bf16.msra.mxu0 0
  %863 = vmatprep.subr.bf16.mxu0 0
  %864 = vmatpush1.bf16.msra.mxu0 0
  %865 = vmatprep.subr.bf16.mxu0 0
  %866 = vmatpush1.bf16.msra.mxu0 0
  %867 = vmatprep.subr.bf16.mxu0 0
  %868 = vmatpush1.bf16.msra.mxu0 0
  %869 = vmatprep.subr.bf16.mxu0 0
  %870 = vmatpush1.bf16.msra.mxu0 0
  %871 = vmatprep.mubr.bf16.mxu0 0
  %872 = vmatmul.mubr.bf16.gmra.mrb[0].mxu0 %v834
  %v873 = vpop.f32.mrb[0].mxu0
  %v874 = vadd.f32 %v831, %v873
  %v875 = vpop.f32.mrb[0].mxu0
  %v876 = vpop.f32.mrb[0].mxu0
  %v877 = vadd.f32 %v831, %v876
  %v878 = vpop.f32.mrb[0].mxu0
  %879 = vdwg.mxu0
  %882 = vrot.lane.b32.xlu0 %v874, 120
  %v883 = vpop.permute.xlu0 %882
  %884 = vrot.lane.b32.xlu0 %v877, 120
  %v885 = vpop.permute.xlu0 %884
  %v886 = vsel %vm130, %v874, 0
  %v888 = vsel %vm130, %v877, 0
  %v890 = vsel %vm130, %v883, 0
  %v892 = vsel %vm130, %v885, 0
  %894 = vmatprep.subr.mxu0 0.0
  %895 = vmatpush1.xpose.msra.mxu0 %v890
  %896 = vmatprep.subr.mxu0 0.0
  %897 = vmatpush1.xpose.msra.mxu0 %v892
  %898 = vmatprep.subr.mxu0 0.0
  %899 = vmatpush1.xpose.msra.mxu0 0.0
  %900 = vmatprep.subr.mxu0 0.0
  %901 = vmatpush1.xpose.msra.mxu0 0.0
  %902 = vmatprep.subr.mxu0 0.0
  %903 = vmatpush1.xpose.msra.mxu0 0.0
  %904 = vmatprep.subr.mxu0 0.0
  %905 = vmatpush1.xpose.msra.mxu0 0.0
  %906 = vmatprep.subr.mxu0 0.0
  %907 = vmatpush1.xpose.msra.mxu0 0.0
  %908 = vmatprep.subr.mxu0 0.0
  %909 = vmatpush1.xpose.msra.mxu0 0.0
  %910 = vmatprep.subr.mxu0 0.0
  %911 = vmatpush1.xpose.msra.mxu0 0.0
  %912 = vmatprep.subr.mxu0 0.0
  %913 = vmatpush1.xpose.msra.mxu0 0.0
  %914 = vmatprep.subr.mxu0 0.0
  %915 = vmatpush1.xpose.msra.mxu0 0.0
  %916 = vmatprep.subr.mxu0 0.0
  %917 = vmatpush1.xpose.msra.mxu0 0.0
  %918 = vmatprep.subr.mxu0 0.0
  %919 = vmatpush1.xpose.msra.mxu0 0.0
  %920 = vmatprep.subr.mxu0 0.0
  %921 = vmatpush1.xpose.msra.mxu0 0.0
  %922 = vmatprep.subr.mxu0 0.0
  %923 = vmatpush1.xpose.msra.mxu0 0.0
  %924 = vmatprep.subr.mxu0 0.0
  %925 = vmatpush1.xpose.msra.mxu0 0.0
  %926 = vmatprep.subr.mxu0 0.0
  %927 = vmatpush1.xpose.msra.mxu0 0.0
  %928 = vmatprep.subr.mxu0 0.0
  %929 = vmatpush1.xpose.msra.mxu0 0.0
  %930 = vmatprep.subr.mxu0 0.0
  %931 = vmatpush1.xpose.msra.mxu0 0.0
  %932 = vmatprep.subr.mxu0 0.0
  %933 = vmatpush1.xpose.msra.mxu0 0.0
  %934 = vmatprep.subr.mxu0 0.0
  %935 = vmatpush1.xpose.msra.mxu0 0.0
  %936 = vmatprep.subr.mxu0 0.0
  %937 = vmatpush1.xpose.msra.mxu0 0.0
  %938 = vmatprep.subr.mxu0 0.0
  %939 = vmatpush1.xpose.msra.mxu0 0.0
  %940 = vmatprep.subr.mxu0 0.0
  %941 = vmatpush1.xpose.msra.mxu0 0.0
  %942 = vmatprep.subr.mxu0 0.0
  %943 = vmatpush1.xpose.msra.mxu0 0.0
  %944 = vmatprep.subr.mxu0 0.0
  %945 = vmatpush1.xpose.msra.mxu0 0.0
  %946 = vmatprep.subr.mxu0 0.0
  %947 = vmatpush1.xpose.msra.mxu0 0.0
  %948 = vmatprep.subr.mxu0 0.0
  %949 = vmatpush1.xpose.msra.mxu0 0.0
  %950 = vmatprep.subr.mxu0 0.0
  %951 = vmatpush1.xpose.msra.mxu0 0.0
  %952 = vmatprep.subr.mxu0 0.0
  %953 = vmatpush1.xpose.msra.mxu0 0.0
  %954 = vmatprep.subr.mxu0 0.0
  %955 = vmatpush1.xpose.msra.mxu0 0.0
  %956 = vmatprep.subr.mxu0 0.0
  %957 = vmatpush1.xpose.msra.mxu0 0.0
  %958 = vmatprep.mubr.f32.mxu0 0.0
  %959 = vmatmul.mubr.f32.gmra.mrb[0].mxu0 %v886
  %v960 = vpop.f32.mrb[0].mxu0
  %v961 = vadd.f32 0.0, %v960
  %v962 = vpop.f32.mrb[0].mxu0
  %963 = vmatprep.mubr.f32.mxu0 0.0
  %964 = vmatmul.mubr.f32.gmra.mrb[0].mxu0 %v888
  %v965 = vpop.f32.mrb[0].mxu0
  %v966 = vadd.f32 0.0, %v965
  %v967 = vpop.f32.mrb[0].mxu0
  %968 = vdwg.mxu0
  %v969 = vmul.f32 %v961, 0.5
  %v970 = vmul.f32 %v966, 0.5
  %v971 = vadd.f32 %v969, %v122
  %v972 = vadd.f32 %v970, %v123
  %v973 = vsel %vm218, %v971, -inf
  %974 = vmax.xlane.f32.xlu0 %v973
  %v975 = vpop.xlane.xlu0 %974
  %v976 = vsel %vm218, %v972, -inf
  %977 = vmax.xlane.f32.xlu0 %v976
  %v978 = vpop.xlane.xlu0 %977
  %v979 = vsub.f32 %v971, %v975
  %v980 = vsub.f32 %v972, %v978
  %v981 = vmul.f32 %v979, 1.442695
  %v982 = vpow.pop %v981
  %v983 = vmul.f32 %v980, 1.442695
  %v984 = vpow.pop %v983
  %v985 = vsel %vm218, %v982, 0.0
  %986 = vadd.xlane.f32.xlu0 %v985
  %v987 = vpop.xlane.xlu0 %986
  %v988 = vsel %vm218, %v984, 0.0
  %989 = vadd.xlane.f32.xlu0 %v988
  %v990 = vpop.xlane.xlu0 %989
  %v991 = vrcp.pop %v987
  %v992 = vrcp.pop %v990
  %v993 = vmul.f32 %v982, %v991
  %v994 = vmul.f32 %v984, %v992
  %995 = vrot.lane.b32.xlu0 %v874, 112
  %v996 = vpop.permute.xlu0 %995
  %997 = vrot.lane.b32.xlu0 %v877, 112
  %v998 = vpop.permute.xlu0 %997
  %v1002 = vsel %vm218, %v993, 0
  %v1005 = vsel %vm218, %v994, 0
  %1007 = vmatprep.subr.mxu0 0.0
  %1008 = vmatpush1.msra.mxu0 %v996
  %1009 = vmatprep.subr.mxu0 0.0
  %1010 = vmatpush1.msra.mxu0 %v998
  %1011 = vmatprep.subr.mxu0 0.0
  %1012 = vmatpush1.msra.mxu0 0.0
  %1013 = vmatprep.subr.mxu0 0.0
  %1014 = vmatpush1.msra.mxu0 0.0
  %1015 = vmatprep.subr.mxu0 0.0
  %1016 = vmatpush1.msra.mxu0 0.0
  %1017 = vmatprep.subr.mxu0 0.0
  %1018 = vmatpush1.msra.mxu0 0.0
  %1019 = vmatprep.subr.mxu0 0.0
  %1020 = vmatpush1.msra.mxu0 0.0
  %1021 = vmatprep.subr.mxu0 0.0
  %1022 = vmatpush1.msra.mxu0 0.0
  %1023 = vmatprep.subr.mxu0 0.0
  %1024 = vmatpush1.msra.mxu0 0.0
  %1025 = vmatprep.subr.mxu0 0.0
  %1026 = vmatpush1.msra.mxu0 0.0
  %1027 = vmatprep.subr.mxu0 0.0
  %1028 = vmatpush1.msra.mxu0 0.0
  %1029 = vmatprep.subr.mxu0 0.0
  %1030 = vmatpush1.msra.mxu0 0.0
  %1031 = vmatprep.subr.mxu0 0.0
  %1032 = vmatpush1.msra.mxu0 0.0
  %1033 = vmatprep.subr.mxu0 0.0
  %1034 = vmatpush1.msra.mxu0 0.0
  %1035 = vmatprep.subr.mxu0 0.0
  %1036 = vmatpush1.msra.mxu0 0.0
  %1037 = vmatprep.subr.mxu0 0.0
  %1038 = vmatpush1.msra.mxu0 0.0
  %1039 = vmatprep.subr.mxu0 0.0
  %1040 = vmatpush1.msra.mxu0 0.0
  %1041 = vmatprep.subr.mxu0 0.0
  %1042 = vmatpush1.msra.mxu0 0.0
  %1043 = vmatprep.subr.mxu0 0.0
  %1044 = vmatpush1.msra.mxu0 0.0
  %1045 = vmatprep.subr.mxu0 0.0
  %1046 = vmatpush1.msra.mxu0 0.0
  %1047 = vmatprep.subr.mxu0 0.0
  %1048 = vmatpush1.msra.mxu0 0.0
  %1049 = vmatprep.subr.mxu0 0.0
  %1050 = vmatpush1.msra.mxu0 0.0
  %1051 = vmatprep.subr.mxu0 0.0
  %1052 = vmatpush1.msra.mxu0 0.0
  %1053 = vmatprep.subr.mxu0 0.0
  %1054 = vmatpush1.msra.mxu0 0.0
  %1055 = vmatprep.subr.mxu0 0.0
  %1056 = vmatpush1.msra.mxu0 0.0
  %1057 = vmatprep.subr.mxu0 0.0
  %1058 = vmatpush1.msra.mxu0 0.0
  %1059 = vmatprep.subr.mxu0 0.0
  %1060 = vmatpush1.msra.mxu0 0.0
  %1061 = vmatprep.subr.mxu0 0.0
  %1062 = vmatpush1.msra.mxu0 0.0
  %1063 = vmatprep.subr.mxu0 0.0
  %1064 = vmatpush1.msra.mxu0 0.0
  %1065 = vmatprep.subr.mxu0 0.0
  %1066 = vmatpush1.msra.mxu0 0.0
  %1067 = vmatprep.subr.mxu0 0.0
  %1068 = vmatpush1.msra.mxu0 0.0
  %1069 = vmatprep.subr.mxu0 0.0
  %1070 = vmatpush1.msra.mxu0 0.0
  %1071 = vmatprep.mubr.f32.mxu0 0.0
  %1072 = vmatmul.mubr.f32.gmra.mrb[0].mxu0 %v1002
  %v1073 = vpop.f32.mrb[0].mxu0
  %v1074 = vadd.f32 0.0, %v1073
  %v1075 = vpop.f32.mrb[0].mxu0
  %1076 = vmatprep.mubr.f32.mxu0 0.0
  %1077 = vmatmul.mubr.f32.gmra.mrb[0].mxu0 %v1005
  %v1078 = vpop.f32.mrb[0].mxu0
  %v1079 = vadd.f32 0.0, %v1078
  %v1080 = vpop.f32.mrb[0].mxu0
  %1081 = vdwg.mxu0
  %1082 = vrot.lane.b32.xlu0 %v874, 124
  %v1083 = vpop.permute.xlu0 %1082
  %1084 = vrot.lane.b32.xlu0 %v877, 124
  %v1085 = vpop.permute.xlu0 %1084
  %1086 = vrot.lane.b32.xlu0 %v874, 116
  %v1087 = vpop.permute.xlu0 %1086
  %1088 = vrot.lane.b32.xlu0 %v877, 116
  %v1089 = vpop.permute.xlu0 %1088
  %v1090 = vsel %vm130, %v1083, 0
  %v1092 = vsel %vm130, %v1085, 0
  %v1094 = vsel %vm130, %v1087, 0
  %v1096 = vsel %vm130, %v1089, 0
  %1098 = vmatprep.subr.mxu0 0.0
  %1099 = vmatpush1.xpose.msra.mxu0 %v1094
  %1100 = vmatprep.subr.mxu0 0.0
  %1101 = vmatpush1.xpose.msra.mxu0 %v1096
  %1102 = vmatprep.subr.mxu0 0.0
  %1103 = vmatpush1.xpose.msra.mxu0 0.0
  %1104 = vmatprep.subr.mxu0 0.0
  %1105 = vmatpush1.xpose.msra.mxu0 0.0
  %1106 = vmatprep.subr.mxu0 0.0
  %1107 = vmatpush1.xpose.msra.mxu0 0.0
  %1108 = vmatprep.subr.mxu0 0.0
  %1109 = vmatpush1.xpose.msra.mxu0 0.0
  %1110 = vmatprep.subr.mxu0 0.0
  %1111 = vmatpush1.xpose.msra.mxu0 0.0
  %1112 = vmatprep.subr.mxu0 0.0
  %1113 = vmatpush1.xpose.msra.mxu0 0.0
  %1114 = vmatprep.subr.mxu0 0.0
  %1115 = vmatpush1.xpose.msra.mxu0 0.0
  %1116 = vmatprep.subr.mxu0 0.0
  %1117 = vmatpush1.xpose.msra.mxu0 0.0
  %1118 = vmatprep.subr.mxu0 0.0
  %1119 = vmatpush1.xpose.msra.mxu0 0.0
  %1120 = vmatprep.subr.mxu0 0.0
  %1121 = vmatpush1.xpose.msra.mxu0 0.0
  %1122 = vmatprep.subr.mxu0 0.0
  %1123 = vmatpush1.xpose.msra.mxu0 0.0
  %1124 = vmatprep.subr.mxu0 0.0
  %1125 = vmatpush1.xpose.msra.mxu0 0.0
  %1126 = vmatprep.subr.mxu0 0.0
  %1127 = vmatpush1.xpose.msra.mxu0 0.0
  %1128 = vmatprep.subr.mxu0 0.0
  %1129 = vmatpush1.xpose.msra.mxu0 0.0
  %1130 = vmatprep.subr.mxu0 0.0
  %1131 = vmatpush1.xpose.msra.mxu0 0.0
  %1132 = vmatprep.subr.mxu0 0.0
  %1133 = vmatpush1.xpose.msra.mxu0 0.0
  %1134 = vmatprep.subr.mxu0 0.0
  %1135 = vmatpush1.xpose.msra.mxu0 0.0
  %1136 = vmatprep.subr.mxu0 0.0
  %1137 = vmatpush1.xpose.msra.mxu0 0.0
  %1138 = vmatprep.subr.mxu0 0.0
  %1139 = vmatpush1.xpose.msra.mxu0 0.0
  %1140 = vmatprep.subr.mxu0 0.0
  %1141 = vmatpush1.xpose.msra.mxu0 0.0
  %1142 = vmatprep.subr.mxu0 0.0
  %1143 = vmatpush1.xpose.msra.mxu0 0.0
  %1144 = vmatprep.subr.mxu0 0.0
  %1145 = vmatpush1.xpose.msra.mxu0 0.0
  %1146 = vmatprep.subr.mxu0 0.0
  %1147 = vmatpush1.xpose.msra.mxu0 0.0
  %1148 = vmatprep.subr.mxu0 0.0
  %1149 = vmatpush1.xpose.msra.mxu0 0.0
  %1150 = vmatprep.subr.mxu0 0.0
  %1151 = vmatpush1.xpose.msra.mxu0 0.0
  %1152 = vmatprep.subr.mxu0 0.0
  %1153 = vmatpush1.xpose.msra.mxu0 0.0
  %1154 = vmatprep.subr.mxu0 0.0
  %1155 = vmatpush1.xpose.msra.mxu0 0.0
  %1156 = vmatprep.subr.mxu0 0.0
  %1157 = vmatpush1.xpose.msra.mxu0 0.0
  %1158 = vmatprep.subr.mxu0 0.0
  %1159 = vmatpush1.xpose.msra.mxu0 0.0
  %1160 = vmatprep.subr.mxu0 0.0
  %1161 = vmatpush1.xpose.msra.mxu0 0.0
  %1162 = vmatprep.mubr.f32.mxu0 0.0
  %1163 = vmatmul.mubr.f32.gmra.mrb[0].mxu0 %v1090
  %v1164 = vpop.f32.mrb[0].mxu0
  %v1165 = vadd.f32 0.0, %v1164
  %v1166 = vpop.f32.mrb[0].mxu0
  %1167 = vmatprep.mubr.f32.mxu0 0.0
  %1168 = vmatmul.mubr.f32.gmra.mrb[0].mxu0 %v1092
  %v1169 = vpop.f32.mrb[0].mxu0
  %v1170 = vadd.f32 0.0, %v1169
  %v1171 = vpop.f32.mrb[0].mxu0
  %1172 = vdwg.mxu0
  %v1173 = vmul.f32 %v1165, 0.5
  %v1174 = vmul.f32 %v1170, 0.5
  %v1175 = vadd.f32 %v1173, %v122
  %v1176 = vadd.f32 %v1174, %v123
  %v1177 = vsel %vm218, %v1175, -inf
  %1178 = vmax.xlane.f32.xlu0 %v1177
  %v1179 = vpop.xlane.xlu0 %1178
  %v1180 = vsel %vm218, %v1176, -inf
  %1181 = vmax.xlane.f32.xlu0 %v1180
  %v1182 = vpop.xlane.xlu0 %1181
  %v1183 = vsub.f32 %v1175, %v1179
  %v1184 = vsub.f32 %v1176, %v1182
  %v1185 = vmul.f32 %v1183, 1.442695
  %v1186 = vpow.pop %v1185
  %v1187 = vmul.f32 %v1184, 1.442695
  %v1188 = vpow.pop %v1187
  %v1189 = vsel %vm218, %v1186, 0.0
  %1190 = vadd.xlane.f32.xlu0 %v1189
  %v1191 = vpop.xlane.xlu0 %1190
  %v1192 = vsel %vm218, %v1188, 0.0
  %1193 = vadd.xlane.f32.xlu0 %v1192
  %v1194 = vpop.xlane.xlu0 %1193
  %v1195 = vrcp.pop %v1191
  %v1196 = vrcp.pop %v1194
  %v1197 = vmul.f32 %v1186, %v1195
  %v1198 = vmul.f32 %v1188, %v1196
  %1199 = vrot.lane.b32.xlu0 %v874, 108
  %v1200 = vpop.permute.xlu0 %1199
  %1201 = vrot.lane.b32.xlu0 %v877, 108
  %v1202 = vpop.permute.xlu0 %1201
  %v1206 = vsel %vm218, %v1197, 0
  %v1209 = vsel %vm218, %v1198, 0
  %1211 = vmatprep.subr.mxu0 0.0
  %1212 = vmatpush1.msra.mxu0 %v1200
  %1213 = vmatprep.subr.mxu0 0.0
  %1214 = vmatpush1.msra.mxu0 %v1202
  %1215 = vmatprep.subr.mxu0 0.0
  %1216 = vmatpush1.msra.mxu0 0.0
  %1217 = vmatprep.subr.mxu0 0.0
  %1218 = vmatpush1.msra.mxu0 0.0
  %1219 = vmatprep.subr.mxu0 0.0
  %1220 = vmatpush1.msra.mxu0 0.0
  %1221 = vmatprep.subr.mxu0 0.0
  %1222 = vmatpush1.msra.mxu0 0.0
  %1223 = vmatprep.subr.mxu0 0.0
  %1224 = vmatpush1.msra.mxu0 0.0
  %1225 = vmatprep.subr.mxu0 0.0
  %1226 = vmatpush1.msra.mxu0 0.0
  %1227 = vmatprep.subr.mxu0 0.0
  %1228 = vmatpush1.msra.mxu0 0.0
  %1229 = vmatprep.subr.mxu0 0.0
  %1230 = vmatpush1.msra.mxu0 0.0
  %1231 = vmatprep.subr.mxu0 0.0
  %1232 = vmatpush1.msra.mxu0 0.0
  %1233 = vmatprep.subr.mxu0 0.0
  %1234 = vmatpush1.msra.mxu0 0.0
  %1235 = vmatprep.subr.mxu0 0.0
  %1236 = vmatpush1.msra.mxu0 0.0
  %1237 = vmatprep.subr.mxu0 0.0
  %1238 = vmatpush1.msra.mxu0 0.0
  %1239 = vmatprep.subr.mxu0 0.0
  %1240 = vmatpush1.msra.mxu0 0.0
  %1241 = vmatprep.subr.mxu0 0.0
  %1242 = vmatpush1.msra.mxu0 0.0
  %1243 = vmatprep.subr.mxu0 0.0
  %1244 = vmatpush1.msra.mxu0 0.0
  %1245 = vmatprep.subr.mxu0 0.0
  %1246 = vmatpush1.msra.mxu0 0.0
  %1247 = vmatprep.subr.mxu0 0.0
  %1248 = vmatpush1.msra.mxu0 0.0
  %1249 = vmatprep.subr.mxu0 0.0
  %1250 = vmatpush1.msra.mxu0 0.0
  %1251 = vmatprep.subr.mxu0 0.0
  %1252 = vmatpush1.msra.mxu0 0.0
  %1253 = vmatprep.subr.mxu0 0.0
  %1254 = vmatpush1.msra.mxu0 0.0
  %1255 = vmatprep.subr.mxu0 0.0
  %1256 = vmatpush1.msra.mxu0 0.0
  %1257 = vmatprep.subr.mxu0 0.0
  %1258 = vmatpush1.msra.mxu0 0.0
  %1259 = vmatprep.subr.mxu0 0.0
  %1260 = vmatpush1.msra.mxu0 0.0
  %1261 = vmatprep.subr.mxu0 0.0
  %1262 = vmatpush1.msra.mxu0 0.0
  %1263 = vmatprep.subr.mxu0 0.0
  %1264 = vmatpush1.msra.mxu0 0.0
  %1265 = vmatprep.subr.mxu0 0.0
  %1266 = vmatpush1.msra.mxu0 0.0
  %1267 = vmatprep.subr.mxu0 0.0
  %1268 = vmatpush1.msra.mxu0 0.0
  %1269 = vmatprep.subr.mxu0 0.0
  %1270 = vmatpush1.msra.mxu0 0.0
  %1271 = vmatprep.subr.mxu0 0.0
  %1272 = vmatpush1.msra.mxu0 0.0
  %1273 = vmatprep.subr.mxu0 0.0
  %1274 = vmatpush1.msra.mxu0 0.0
  %1275 = vmatprep.mubr.f32.mxu0 0.0
  %1276 = vmatmul.mubr.f32.gmra.mrb[0].mxu0 %v1206
  %v1277 = vpop.f32.mrb[0].mxu0
  %v1278 = vadd.f32 0.0, %v1277
  %v1279 = vpop.f32.mrb[0].mxu0
  %1280 = vmatprep.mubr.f32.mxu0 0.0
  %1281 = vmatmul.mubr.f32.gmra.mrb[0].mxu0 %v1209
  %v1282 = vpop.f32.mrb[0].mxu0
  %v1283 = vadd.f32 0.0, %v1282
  %v1284 = vpop.f32.mrb[0].mxu0
  %1285 = vdwg.mxu0
  %1288 = vrot.lane.b32.xlu0 %v1278, 4
  %v1289 = vpop.permute.xlu0 %1288
  %1290 = vrot.lane.b32.xlu0 %v1283, 4
  %v1291 = vpop.permute.xlu0 %1290
  %v1294 = vsel %vm130, %v1074, %v1289
  %v1295 = vsel %vm130, %v1079, %v1291
  %v1296 = vpack.c.bf16 %v1295, %v1294
  %v1298 = vlaneseq
  %v1299 = vshrl.u32 %v1298, 7
  %v1300 = vsub.s32 0, %v1299
  %v1301 = vrot.slane %v821, %v1300
  %v1304 = vsel %vm66, %v1296, 0
  %v1307 = vsel %vm70, %v819, 0
  %1309 = vmatprep.subr.bf16.mxu0 0
  %1310 = vmatpush1.bf16.msra.mxu0 %v1307
  %1311 = vmatprep.subr.bf16.mxu0 0
  %1312 = vmatpush1.bf16.msra.mxu0 0
  %1313 = vmatprep.subr.bf16.mxu0 0
  %1314 = vmatpush1.bf16.msra.mxu0 0
  %1315 = vmatprep.subr.bf16.mxu0 0
  %1316 = vmatpush1.bf16.msra.mxu0 0
  %1317 = vmatprep.subr.bf16.mxu0 0
  %1318 = vmatpush1.bf16.msra.mxu0 0
  %1319 = vmatprep.subr.bf16.mxu0 0
  %1320 = vmatpush1.bf16.msra.mxu0 0
  %1321 = vmatprep.subr.bf16.mxu0 0
  %1322 = vmatpush1.bf16.msra.mxu0 0
  %1323 = vmatprep.subr.bf16.mxu0 0
  %1324 = vmatpush1.bf16.msra.mxu0 0
  %1325 = vmatprep.subr.bf16.mxu0 0
  %1326 = vmatpush1.bf16.msra.mxu0 0
  %1327 = vmatprep.subr.bf16.mxu0 0
  %1328 = vmatpush1.bf16.msra.mxu0 0
  %1329 = vmatprep.subr.bf16.mxu0 0
  %1330 = vmatpush1.bf16.msra.mxu0 0
  %1331 = vmatprep.subr.bf16.mxu0 0
  %1332 = vmatpush1.bf16.msra.mxu0 0
  %1333 = vmatprep.subr.bf16.mxu0 0
  %1334 = vmatpush1.bf16.msra.mxu0 0
  %1335 = vmatprep.subr.bf16.mxu0 0
  %1336 = vmatpush1.bf16.msra.mxu0 0
  %1337 = vmatprep.subr.bf16.mxu0 0
  %1338 = vmatpush1.bf16.msra.mxu0 0
  %1339 = vmatprep.subr.bf16.mxu0 0
  %1340 = vmatpush1.bf16.msra.mxu0 0
  %1341 = vmatprep.mubr.bf16.mxu0 0
  %1342 = vmatmul.mubr.bf16.gmra.mrb[0].mxu0 %v1304
  %v1343 = vpop.f32.mrb[0].mxu0
  %v1344 = vadd.f32 %v1301, %v1343
  %v1345 = vpop.f32.mrb[0].mxu0
  %v1346 = vpop.f32.mrb[0].mxu0
  %v1347 = vadd.f32 %v1301, %v1346
  %v1348 = vpop.f32.mrb[0].mxu0
  %1349 = vdwg.mxu0
  %v1350 = vadd.f32 %v812, %v1344
  %v1351 = vadd.f32 %v813, %v1347
  %v1352 = vsel %vm66, %v1350, 0.0
  %1353 = vadd.xlane.f32.xlu0 %v1352
  %v1354 = vpop.xlane.xlu0 %1353
  %v1355 = vsel %vm66, %v1351, 0.0
  %1356 = vadd.xlane.f32.xlu0 %v1355
  %v1357 = vpop.xlane.xlu0 %1356
  %v1358 = vmul.f32 %v1354, %v604
  %v1359 = vmul.f32 %v1357, %v604
  %v1360 = vsub.f32 %v1350, %v1358
  %v1361 = vsub.f32 %v1351, %v1359
  %v1362 = vmul.f32 %v1360, %v1360
  %v1363 = vmul.f32 %v1361, %v1361
  %v1364 = vsel %vm66, %v1362, 0.0
  %1365 = vadd.xlane.f32.xlu0 %v1364
  %v1366 = vpop.xlane.xlu0 %1365
  %v1367 = vsel %vm66, %v1363, 0.0
  %1368 = vadd.xlane.f32.xlu0 %v1367
  %v1369 = vpop.xlane.xlu0 %1368
  %v1370 = vmul.f32 %v1366, %v604
  %v1371 = vmul.f32 %v1369, %v604
  %v1372 = vadd.f32 %v1370, 1e-05
  %v1373 = vadd.f32 %v1371, 1e-05
  %v1374 = vrsqrt.pop %v1372
  %v1375 = vrsqrt.pop %v1373
  %v1376 = vmul.f32 %v1360, %v1374
  %v1377 = vmul.f32 %v1361, %v1375
  %v1379 = vlaneseq
  %v1380 = vshrl.u32 %v1379, 7
  %v1381 = vsub.s32 0, %v1380
  %v1382 = vrot.slane %v823, %v1381
  %v1384 = vmul.f32 %v1376, %v1382
  %v1385 = vmul.f32 %v1377, %v1382
  %v1387 = vlaneseq
  %v1388 = vshrl.u32 %v1387, 7
  %v1389 = vsub.s32 0, %v1388
  %v1390 = vrot.slane %v825, %v1389
  %v1392 = vadd.f32 %v1384, %v1390
  %v1393 = vadd.f32 %v1385, %v1390
  %s1394 = scalar_lea.vmem %s7, 4
  %v1395 = vld [vmem:[%s1394] sm:$0xf]
  %s1396 = scalar_lea.vmem %s8, 1
  %v1397 = vld [vmem:[%s1396] sm:$0x1]
  %s1398 = scalar_lea.vmem %s9, 16
  %v1399 = vld [vmem:[%s1398] sm:$0xf]
  %v1400 = vld [vmem:[%s1398 + $0x4] sm:$0xf]
  %v1401 = vld [vmem:[%s1398 + $0x8] sm:$0xf]
  %v1402 = vld [vmem:[%s1398 + $0xc] sm:$0xf]
  %s1403 = scalar_lea.vmem %s10, 1
  %v1404 = vld [vmem:[%s1403] sm:$0x1]
  %s1405 = scalar_lea.vmem %s11, 1
  %v1406 = vld [vmem:[%s1405] sm:$0x1]
  %s1407 = scalar_lea.vmem %s12, 1
  %v1408 = vld [vmem:[%s1407] sm:$0x1]
  %v1409 = vpack.c.bf16 %v1393, %v1392
  %v1411 = vlaneseq
  %v1412 = vshrl.u32 %v1411, 7
  %v1413 = vsub.s32 0, %v1412
  %v1414 = vrot.slane %v1397, %v1413
  %v1417 = vsel %vm66, %v1409, 0
  %v1420 = vsel %vm70, %v1395, 0
  %1422 = vmatprep.subr.bf16.mxu0 0
  %1423 = vmatpush1.bf16.msra.mxu0 %v1420
  %1424 = vmatprep.subr.bf16.mxu0 0
  %1425 = vmatpush1.bf16.msra.mxu0 0
  %1426 = vmatprep.subr.bf16.mxu0 0
  %1427 = vmatpush1.bf16.msra.mxu0 0
  %1428 = vmatprep.subr.bf16.mxu0 0
  %1429 = vmatpush1.bf16.msra.mxu0 0
  %1430 = vmatprep.subr.bf16.mxu0 0
  %1431 = vmatpush1.bf16.msra.mxu0 0
  %1432 = vmatprep.subr.bf16.mxu0 0
  %1433 = vmatpush1.bf16.msra.mxu0 0
  %1434 = vmatprep.subr.bf16.mxu0 0
  %1435 = vmatpush1.bf16.msra.mxu0 0
  %1436 = vmatprep.subr.bf16.mxu0 0
  %1437 = vmatpush1.bf16.msra.mxu0 0
  %1438 = vmatprep.subr.bf16.mxu0 0
  %1439 = vmatpush1.bf16.msra.mxu0 0
  %1440 = vmatprep.subr.bf16.mxu0 0
  %1441 = vmatpush1.bf16.msra.mxu0 0
  %1442 = vmatprep.subr.bf16.mxu0 0
  %1443 = vmatpush1.bf16.msra.mxu0 0
  %1444 = vmatprep.subr.bf16.mxu0 0
  %1445 = vmatpush1.bf16.msra.mxu0 0
  %1446 = vmatprep.subr.bf16.mxu0 0
  %1447 = vmatpush1.bf16.msra.mxu0 0
  %1448 = vmatprep.subr.bf16.mxu0 0
  %1449 = vmatpush1.bf16.msra.mxu0 0
  %1450 = vmatprep.subr.bf16.mxu0 0
  %1451 = vmatpush1.bf16.msra.mxu0 0
  %1452 = vmatprep.subr.bf16.mxu0 0
  %1453 = vmatpush1.bf16.msra.mxu0 0
  %1454 = vmatprep.mubr.bf16.mxu0 0
  %1455 = vmatmul.mubr.bf16.gmra.mrb[0].mxu0 %v1417
  %v1456 = vpop.f32.mrb[0].mxu0
  %v1457 = vadd.f32 %v1414, %v1456
  %v1458 = vpop.f32.mrb[0].mxu0
  %v1459 = vpop.f32.mrb[0].mxu0
  %v1460 = vadd.f32 %v1414, %v1459
  %v1461 = vpop.f32.mrb[0].mxu0
  %1462 = vdwg.mxu0
  %v1463 = vmax.f32 %v1457, 0.0
  %v1464 = vmax.f32 %v1460, 0.0
  %v1465 = vpack.c.bf16 %v1464, %v1463
  %v1467 = vlaneseq
  %v1468 = vshrl.u32 %v1467, 7
  %v1469 = vsub.s32 0, %v1468
  %v1470 = vrot.slane %v1404, %v1469
  %v1476 = vunpack.c.l.b16 %v1399
  %v1477 = vunpack.c.l.b16 %v1400
  %v1478 = vunpack.c.l.b16 %v1401
  %v1479 = vunpack.c.l.b16 %v1402
  %v1480 = vpack.c.b16 %v1477, %v1476
  %v1481 = vpack.c.b16 %v1479, %v1478
  %v1485 = vsel %vm725, %v1465, 0
  %1487 = vmatprep.subr.bf16.mxu0 0
  %1488 = vmatpush1.bf16.msra.mxu0 %v1480
  %1489 = vmatprep.subr.bf16.mxu0 0
  %1490 = vmatpush1.bf16.msra.mxu0 %v1481
  %1491 = vmatprep.subr.bf16.mxu0 0
  %1492 = vmatpush1.bf16.msra.mxu0 0
  %1493 = vmatprep.subr.bf16.mxu0 0
  %1494 = vmatpush1.bf16.msra.mxu0 0
  %1495 = vmatprep.subr.bf16.mxu0 0
  %1496 = vmatpush1.bf16.msra.mxu0 0
  %1497 = vmatprep.subr.bf16.mxu0 0
  %1498 = vmatpush1.bf16.msra.mxu0 0
  %1499 = vmatprep.subr.bf16.mxu0 0
  %1500 = vmatpush1.bf16.msra.mxu0 0
  %1501 = vmatprep.subr.bf16.mxu0 0
  %1502 = vmatpush1.bf16.msra.mxu0 0
  %1503 = vmatprep.subr.bf16.mxu0 0
  %1504 = vmatpush1.bf16.msra.mxu0 0
  %1505 = vmatprep.subr.bf16.mxu0 0
  %1506 = vmatpush1.bf16.msra.mxu0 0
  %1507 = vmatprep.subr.bf16.mxu0 0
  %1508 = vmatpush1.bf16.msra.mxu0 0
  %1509 = vmatprep.subr.bf16.mxu0 0
  %1510 = vmatpush1.bf16.msra.mxu0 0
  %1511 = vmatprep.subr.bf16.mxu0 0
  %1512 = vmatpush1.bf16.msra.mxu0 0
  %1513 = vmatprep.subr.bf16.mxu0 0
  %1514 = vmatpush1.bf16.msra.mxu0 0
  %1515 = vmatprep.subr.bf16.mxu0 0
  %1516 = vmatpush1.bf16.msra.mxu0 0
  %1517 = vmatprep.subr.bf16.mxu0 0
  %1518 = vmatpush1.bf16.msra.mxu0 0
  %1519 = vmatprep.mubr.bf16.mxu0 0
  %1520 = vmatmul.mubr.bf16.gmra.mrb[0].mxu0 %v1485
  %v1521 = vpop.f32.mrb[0].mxu0
  %v1522 = vadd.f32 %v1470, %v1521
  %v1523 = vpop.f32.mrb[0].mxu0
  %v1524 = vpop.f32.mrb[0].mxu0
  %v1525 = vadd.f32 %v1470, %v1524
  %v1526 = vpop.f32.mrb[0].mxu0
  %1527 = vdwg.mxu0
  %v1528 = vadd.f32 %v1392, %v1522
  %v1529 = vadd.f32 %v1393, %v1525
  %v1530 = vsel %vm66, %v1528, 0.0
  %1531 = vadd.xlane.f32.xlu0 %v1530
  %v1532 = vpop.xlane.xlu0 %1531
  %v1533 = vsel %vm66, %v1529, 0.0
  %1534 = vadd.xlane.f32.xlu0 %v1533
  %v1535 = vpop.xlane.xlu0 %1534
  %v1536 = vmul.f32 %v1532, %v604
  %v1537 = vmul.f32 %v1535, %v604
  %v1538 = vsub.f32 %v1528, %v1536
  %v1539 = vsub.f32 %v1529, %v1537
  %v1540 = vmul.f32 %v1538, %v1538
  %v1541 = vmul.f32 %v1539, %v1539
  %v1542 = vsel %vm66, %v1540, 0.0
  %1543 = vadd.xlane.f32.xlu0 %v1542
  %v1544 = vpop.xlane.xlu0 %1543
  %v1545 = vsel %vm66, %v1541, 0.0
  %1546 = vadd.xlane.f32.xlu0 %v1545
  %v1547 = vpop.xlane.xlu0 %1546
  %v1548 = vmul.f32 %v1544, %v604
  %v1549 = vmul.f32 %v1547, %v604
  %v1550 = vadd.f32 %v1548, 1e-05
  %v1551 = vadd.f32 %v1549, 1e-05
  %v1552 = vrsqrt.pop %v1550
  %v1553 = vrsqrt.pop %v1551
  %v1554 = vmul.f32 %v1538, %v1552
  %v1555 = vmul.f32 %v1539, %v1553
  %v1557 = vlaneseq
  %v1558 = vshrl.u32 %v1557, 7
  %v1559 = vsub.s32 0, %v1558
  %v1560 = vrot.slane %v1406, %v1559
  %v1562 = vmul.f32 %v1554, %v1560
  %v1563 = vmul.f32 %v1555, %v1560
  %v1565 = vlaneseq
  %v1566 = vshrl.u32 %v1565, 7
  %v1567 = vsub.s32 0, %v1566
  %v1568 = vrot.slane %v1408, %v1567
  %v1570 = vadd.f32 %v1562, %v1568
  %v1571 = vadd.f32 %v1563, %v1568
  %v1572 = vld [vmem:[%s13] sm:$0x1]
  %v1573 = vld [vmem:[%s14] sm:$0x1]
  %v1574 = vsel %vm66, %v1570, 0.0
  %1575 = vadd.xlane.f32.xlu0 %v1574
  %v1576 = vpop.xlane.xlu0 %1575
  %v1577 = vsel %vm66, %v1571, 0.0
  %1578 = vadd.xlane.f32.xlu0 %v1577
  %v1579 = vpop.xlane.xlu0 %1578
  %v1580 = vmul.f32 %v1576, %v604
  %v1581 = vmul.f32 %v1579, %v604
  %v1582 = vsub.f32 %v1570, %v1580
  %v1583 = vsub.f32 %v1571, %v1581
  %v1584 = vmul.f32 %v1582, %v1582
  %v1585 = vmul.f32 %v1583, %v1583
  %v1586 = vsel %vm66, %v1584, 0.0
  %1587 = vadd.xlane.f32.xlu0 %v1586
  %v1588 = vpop.xlane.xlu0 %1587
  %v1589 = vsel %vm66, %v1585, 0.0
  %1590 = vadd.xlane.f32.xlu0 %v1589
  %v1591 = vpop.xlane.xlu0 %1590
  %v1592 = vmul.f32 %v1588, %v604
  %v1593 = vmul.f32 %v1591, %v604
  %v1594 = vadd.f32 %v1592, 1e-05
  %v1595 = vadd.f32 %v1593, 1e-05
  %v1596 = vrsqrt.pop %v1594
  %v1597 = vrsqrt.pop %v1595
  %v1598 = vmul.f32 %v1582, %v1596
  %v1599 = vmul.f32 %v1583, %v1597
  %v1601 = vlaneseq
  %v1602 = vshrl.u32 %v1601, 7
  %v1603 = vsub.s32 0, %v1602
  %v1604 = vrot.slane %v1572, %v1603
  %v1606 = vmul.f32 %v1598, %v1604
  %v1607 = vmul.f32 %v1599, %v1604
  %v1609 = vlaneseq
  %v1610 = vshrl.u32 %v1609, 7
  %v1611 = vsub.s32 0, %v1610
  %v1612 = vrot.slane %v1573, %v1611
  %v1614 = vadd.f32 %v1606, %v1612
  %v1615 = vadd.f32 %v1607, %v1612
  %1616 = vst.msk [vmem:[%s15] sm:$0xff] %vm66, %v1614
  %1617 = vst.msk [vmem:[%s15 + $0x8] sm:$0xff] %vm66, %v1615
  // Predicated region
  $region62: #{transformer_forward.2} parent=0 // pred_check
    _
  $region63: #{transformer_forward.2} parent=0 // pred_check_branch
    %1619 = sbr.rel (0) target = $region65
  $region64: #{transformer_forward.2} parent=0 // pred_region
    _
  $region65: #{transformer_forward.2} parent=0 // pred_fallthru
    _
  // Predicated region
  $region66: #{transformer_forward.2} parent=0 // pred_check
    _
  $region67: #{transformer_forward.2} parent=0 // pred_check_branch
    %1621 = sbr.rel (0) target = $region69
  $region68: #{transformer_forward.2} parent=0 // pred_region
    _
  $region69: #{transformer_forward.2} parent=0 // pred_fallthru
    _

// kernel: transformer_forward.3
$region0: #{transformer_forward.3}
  #allocation0 [shape = 'u32[]', space=smem, size = 0x4, offset = 0x4, fixed_abs, tag = 'smem constant byte address 0x4 - core index']
  #allocation1 [shape = 'u32[144,128]{1,0:T(1,128)}', space=vmem, size = 0x12000, scoped, tag = 'internal scratch']
  %s0 = inlined_call_operand.vmem [shape: f32[2,8,8], index: 0, kind: input, shape index: {}]
  %s1 = inlined_call_operand.vmem [shape: f32[1,16,8], index: 1, kind: input, shape index: {}]
  %s2 = inlined_call_operand.vmem [shape: bf16[2,8,24], index: 2, kind: input, shape index: {}]
  %s3 = inlined_call_operand.vmem [shape: f32[2,1,24], index: 3, kind: input, shape index: {}]
  %s4 = inlined_call_operand.vmem [shape: bf16[2,8,8], index: 4, kind: input, shape index: {}]
  %s5 = inlined_call_operand.vmem [shape: f32[2,1,8], index: 5, kind: input, shape index: {}]
  %s6 = inlined_call_operand.vmem [shape: f32[2,1,8], index: 6, kind: input, shape index: {}]
  %s7 = inlined_call_operand.vmem [shape: f32[2,1,8], index: 7, kind: input, shape index: {}]
  %s8 = inlined_call_operand.vmem [shape: bf16[2,8,8], index: 8, kind: input, shape index: {}]
  %s9 = inlined_call_operand.vmem [shape: f32[2,1,8], index: 9, kind: input, shape index: {}]
  %s10 = inlined_call_operand.vmem [shape: bf16[2,8,16], index: 10, kind: input, shape index: {}]
  %s11 = inlined_call_operand.vmem [shape: f32[2,1,16], index: 11, kind: input, shape index: {}]
  %s12 = inlined_call_operand.vmem [shape: bf16[2,8,8], index: 12, kind: input, shape index: {}]
  %s13 = inlined_call_operand.vmem [shape: f32[2,1,8], index: 13, kind: input, shape index: {}]
  %s14 = inlined_call_operand.vmem [shape: f32[2,1,8], index: 14, kind: input, shape index: {}]
  %s15 = inlined_call_operand.vmem [shape: f32[2,1,8], index: 15, kind: input, shape index: {}]
  %s16 = inlined_call_operand.vmem [shape: bf16[2,8,32], index: 16, kind: input, shape index: {}]
  %s17 = inlined_call_operand.vmem [shape: f32[2,1,32], index: 17, kind: input, shape index: {}]
  %s18 = inlined_call_operand.vmem [shape: bf16[2,32,8], index: 18, kind: input, shape index: {}]
  %s19 = inlined_call_operand.vmem [shape: f32[2,1,8], index: 19, kind: input, shape index: {}]
  %s20 = inlined_call_operand.vmem [shape: f32[2,1,8], index: 20, kind: input, shape index: {}]
  %s21 = inlined_call_operand.vmem [shape: f32[2,1,8], index: 21, kind: input, shape index: {}]
  %s22 = inlined_call_operand.vmem [shape: f32[1,8], index: 22, kind: input, shape index: {}]
  %s23 = inlined_call_operand.vmem [shape: f32[1,8], index: 23, kind: input, shape index: {}]
  %s24 = inlined_call_operand.hbm [shape: f32[2,8,8], index: 24, kind: output, shape index: {}]
  %s25 = sld [smem:[#allocation0]]
  $region129: #{transformer_forward.3} parent=0
    _
  %s27 = ssub.s32 1, %s25
  %s28 = scalar_select 0, %s27, %s25
  $region1: #{transformer_forward.3} parent=0
    #allocation2 [shape = 'u8[8192]{0}', space=vmem, size = 0x2000, scoped, tag = 'output window, operand 0']
    #allocation3 [shape = 's32[2]{0}', space=sflag, size = 0x8, scoped, tag = 'scoped memory for transformer_forward.3']
    %29 = vsyncpa [#allocation3], 0
    %s30 = scalar_lea.sflag [#allocation3], 1
    %31 = vsyncpa %s30, 0
    loop: start=0, step=1, limit=4
    $region2: #{transformer_forward.3} parent=1 // loop_pre_header
      _
    $region3: #{transformer_forward.3} parent=1 // loop_header
      %s33 = sphi 0, %s37
      %p34 = scmp.ge.s32.totalorder %s33, 4
      %s43 = sphi 0, %s45
      %s46 = sphi 0, %s43
      %s47 = sphi 0, %s46
      %s63 = sphi 0, %s47
      %s67 = sphi 0, %s67
      %s69 = sphi 0, %s67
      %s70 = sphi 0, %s69
      %s84 = sphi 0, %s70
      %s88 = sphi 0, %s88
      %s90 = sphi 0, %s88
      %s91 = sphi 0, %s90
      %s105 = sphi 0, %s91
      %s109 = sphi 0, %s109
      %s111 = sphi 0, %s109
      %s112 = sphi 0, %s111
      %s126 = sphi 0, %s112
      %s130 = sphi 0, %s130
      %s132 = sphi 0, %s130
      %s133 = sphi 0, %s132
      %s147 = sphi 0, %s133
      %s151 = sphi 0, %s151
      %s153 = sphi 0, %s151
      %s154 = sphi 0, %s153
      %s168 = sphi 0, %s154
      %s172 = sphi 0, %s172
      %s174 = sphi 0, %s172
      %s175 = sphi 0, %s174
      %s189 = sphi 0, %s175
      %s193 = sphi 0, %s193
      %s195 = sphi 0, %s193
      %s196 = sphi 0, %s195
      %s210 = sphi 0, %s196
      %s214 = sphi 0, %s214
      %s216 = sphi 0, %s214
      %s217 = sphi 0, %s216
      %s231 = sphi 0, %s217
      %s235 = sphi 0, %s235
      %s237 = sphi 0, %s235
      %s238 = sphi 0, %s237
      %s252 = sphi 0, %s238
      %s256 = sphi 0, %s256
      %s258 = sphi 0, %s256
      %s259 = sphi 0, %s258
      %s273 = sphi 0, %s259
      %s277 = sphi 0, %s277
      %s279 = sphi 0, %s277
      %s280 = sphi 0, %s279
      %s294 = sphi 0, %s280
      %s298 = sphi 0, %s298
      %s300 = sphi 0, %s298
      %s301 = sphi 0, %s300
      %s315 = sphi 0, %s301
      %s319 = sphi 0, %s319
      %s321 = sphi 0, %s319
      %s322 = sphi 0, %s321
      %s336 = sphi 0, %s322
      %s340 = sphi 0, %s340
      %s342 = sphi 0, %s340
      %s343 = sphi 0, %s342
      %s357 = sphi 0, %s343
      %s361 = sphi 0, %s361
      %s363 = sphi 0, %s361
      %s364 = sphi 0, %s363
      %s378 = sphi 0, %s364
      %s382 = sphi 0, %s382
      %s384 = sphi 0, %s382
      %s385 = sphi 0, %s384
      %s399 = sphi 0, %s385
      %s403 = sphi 0, %s403
      %s405 = sphi 0, %s403
      %s406 = sphi 0, %s405
      %s420 = sphi 0, %s406
      %s424 = sphi 0, %s424
      %s426 = sphi 0, %s424
      %s427 = sphi 0, %s426
      %s441 = sphi 0, %s427
      %s445 = sphi 0, %s445
      %s447 = sphi 0, %s445
      %s448 = sphi 0, %s447
      %s462 = sphi 0, %s448
      %s466 = sphi 0, %s466
      %s468 = sphi 0, %s466
      %s469 = sphi 0, %s468
      %s483 = sphi 0, %s469
      %s487 = sphi 0, %s487
      %s489 = sphi 0, %s487
      %s490 = sphi 0, %s489
      %s504 = sphi 0, %s490
      %s508 = sphi 0, %s508
      %s510 = sphi 0, %s508
      %s511 = sphi 0, %s510
      %s525 = sphi 0, %s511
      %s529 = sphi 0, %s529
      %s531 = sphi 0, %s529
      %s532 = sphi 0, %s531
      %s546 = sphi 0, %s532
      %s552 = sphi 0, %s554
      %s555 = sphi 0, %s552
      %s556 = sphi 0, %s555
      %s572 = sphi 0, %s556
    $region4: #{transformer_forward.3} parent=1 // loop_header_branch
      %36 = sbr.rel (%p34) target = $region8
    $region5: #{transformer_forward.3} parent=1 // loop_body
      %s38 = ssub.s32 %s33, 1
      %s39 = ssub.s32 %s33, 2
      %s40 = sadd.s32 %s33, 1
      %s41 = ssub.s32 %s33, %s40
      %p42 = scmp.eq.s32.totalorder %s41, 0
      %s44 = sadd.s32 %s43, 1
      %s45 = scalar_select %p42, %s43, %s44
      %p48 = pneg %p42
      %p49 = scmp.eq.s32.totalorder %s33, 1
      %p50 = por %p48, %p49
      %p51 = scmp.ne.s32.totalorder %s43, %s46
      %p52 = scmp.eq.s32.totalorder %s33, 0
      %p53 = por %p51, %p52
      %p54 = scmp.ne.s32.totalorder %s43, %s46
      %p55 = scmp.eq.s32.totalorder %s38, 1
      %p56 = por %p54, %p55
      %p57 = scmp.ne.s32.totalorder %s46, %s47
      %p58 = scmp.eq.s32.totalorder %s38, 0
      %p59 = por %p57, %p58
      %p60 = scmp.ne.s32.totalorder %s46, %s47
      %p61 = scmp.eq.s32.totalorder %s39, 1
      %p62 = por %p60, %p61
      %p64 = scmp.ne.s32.totalorder %s47, %s63
      %p65 = scmp.eq.s32.totalorder %s39, 0
      %p66 = por %p64, %p65
      %s68 = sadd.s32 %s67, 1
      %p71 = scmp.eq.s32.totalorder %s33, 1
      %p72 = scmp.ne.s32.totalorder %s67, %s69
      %p73 = scmp.eq.s32.totalorder %s33, 0
      %p74 = por %p72, %p73
      %p75 = scmp.ne.s32.totalorder %s67, %s69
      %p76 = scmp.eq.s32.totalorder %s38, 1
      %p77 = por %p75, %p76
      %p78 = scmp.ne.s32.totalorder %s69, %s70
      %p79 = scmp.eq.s32.totalorder %s38, 0
      %p80 = por %p78, %p79
      %p81 = scmp.ne.s32.totalorder %s69, %s70
      %p82 = scmp.eq.s32.totalorder %s39, 1
      %p83 = por %p81, %p82
      %p85 = scmp.ne.s32.totalorder %s70, %s84
      %p86 = scmp.eq.s32.totalorder %s39, 0
      %p87 = por %p85, %p86
      %s89 = sadd.s32 %s88, 1
      %p92 = scmp.eq.s32.totalorder %s33, 1
      %p93 = scmp.ne.s32.totalorder %s88, %s90
      %p94 = scmp.eq.s32.totalorder %s33, 0
      %p95 = por %p93, %p94
      %p96 = scmp.ne.s32.totalorder %s88, %s90
      %p97 = scmp.eq.s32.totalorder %s38, 1
      %p98 = por %p96, %p97
      %p99 = scmp.ne.s32.totalorder %s90, %s91
      %p100 = scmp.eq.s32.totalorder %s38, 0
      %p101 = por %p99, %p100
      %p102 = scmp.ne.s32.totalorder %s90, %s91
      %p103 = scmp.eq.s32.totalorder %s39, 1
      %p104 = por %p102, %p103
      %p106 = scmp.ne.s32.totalorder %s91, %s105
      %p107 = scmp.eq.s32.totalorder %s39, 0
      %p108 = por %p106, %p107
      %s110 = sadd.s32 %s109, 1
      %p113 = scmp.eq.s32.totalorder %s33, 1
      %p114 = scmp.ne.s32.totalorder %s109, %s111
      %p115 = scmp.eq.s32.totalorder %s33, 0
      %p116 = por %p114, %p115
      %p117 = scmp.ne.s32.totalorder %s109, %s111
      %p118 = scmp.eq.s32.totalorder %s38, 1
      %p119 = por %p117, %p118
      %p120 = scmp.ne.s32.totalorder %s111, %s112
      %p121 = scmp.eq.s32.totalorder %s38, 0
      %p122 = por %p120, %p121
      %p123 = scmp.ne.s32.totalorder %s111, %s112
      %p124 = scmp.eq.s32.totalorder %s39, 1
      %p125 = por %p123, %p124
      %p127 = scmp.ne.s32.totalorder %s112, %s126
      %p128 = scmp.eq.s32.totalorder %s39, 0
      %p129 = por %p127, %p128
      %s131 = sadd.s32 %s130, 1
      %p134 = scmp.eq.s32.totalorder %s33, 1
      %p135 = scmp.ne.s32.totalorder %s130, %s132
      %p136 = scmp.eq.s32.totalorder %s33, 0
      %p137 = por %p135, %p136
      %p138 = scmp.ne.s32.totalorder %s130, %s132
      %p139 = scmp.eq.s32.totalorder %s38, 1
      %p140 = por %p138, %p139
      %p141 = scmp.ne.s32.totalorder %s132, %s133
      %p142 = scmp.eq.s32.totalorder %s38, 0
      %p143 = por %p141, %p142
      %p144 = scmp.ne.s32.totalorder %s132, %s133
      %p145 = scmp.eq.s32.totalorder %s39, 1
      %p146 = por %p144, %p145
      %p148 = scmp.ne.s32.totalorder %s133, %s147
      %p149 = scmp.eq.s32.totalorder %s39, 0
      %p150 = por %p148, %p149
      %s152 = sadd.s32 %s151, 1
      %p155 = scmp.eq.s32.totalorder %s33, 1
      %p156 = scmp.ne.s32.totalorder %s151, %s153
      %p157 = scmp.eq.s32.totalorder %s33, 0
      %p158 = por %p156, %p157
      %p159 = scmp.ne.s32.totalorder %s151, %s153
      %p160 = scmp.eq.s32.totalorder %s38, 1
      %p161 = por %p159, %p160
      %p162 = scmp.ne.s32.totalorder %s153, %s154
      %p163 = scmp.eq.s32.totalorder %s38, 0
      %p164 = por %p162, %p163
      %p165 = scmp.ne.s32.totalorder %s153, %s154
      %p166 = scmp.eq.s32.totalorder %s39, 1
      %p167 = por %p165, %p166
      %p169 = scmp.ne.s32.totalorder %s154, %s168
      %p170 = scmp.eq.s32.totalorder %s39, 0
      %p171 = por %p169, %p170
      %s173 = sadd.s32 %s172, 1
      %p176 = scmp.eq.s32.totalorder %s33, 1
      %p177 = scmp.ne.s32.totalorder %s172, %s174
      %p178 = scmp.eq.s32.totalorder %s33, 0
      %p179 = por %p177, %p178
      %p180 = scmp.ne.s32.totalorder %s172, %s174
      %p181 = scmp.eq.s32.totalorder %s38, 1
      %p182 = por %p180, %p181
      %p183 = scmp.ne.s32.totalorder %s174, %s175
      %p184 = scmp.eq.s32.totalorder %s38, 0
      %p185 = por %p183, %p184
      %p186 = scmp.ne.s32.totalorder %s174, %s175
      %p187 = scmp.eq.s32.totalorder %s39, 1
      %p188 = por %p186, %p187
      %p190 = scmp.ne.s32.totalorder %s175, %s189
      %p191 = scmp.eq.s32.totalorder %s39, 0
      %p192 = por %p190, %p191
      %s194 = sadd.s32 %s193, 1
      %p197 = scmp.eq.s32.totalorder %s33, 1
      %p198 = scmp.ne.s32.totalorder %s193, %s195
      %p199 = scmp.eq.s32.totalorder %s33, 0
      %p200 = por %p198, %p199
      %p201 = scmp.ne.s32.totalorder %s193, %s195
      %p202 = scmp.eq.s32.totalorder %s38, 1
      %p203 = por %p201, %p202
      %p204 = scmp.ne.s32.totalorder %s195, %s196
      %p205 = scmp.eq.s32.totalorder %s38, 0
      %p206 = por %p204, %p205
      %p207 = scmp.ne.s32.totalorder %s195, %s196
      %p208 = scmp.eq.s32.totalorder %s39, 1
      %p209 = por %p207, %p208
      %p211 = scmp.ne.s32.totalorder %s196, %s210
      %p212 = scmp.eq.s32.totalorder %s39, 0
      %p213 = por %p211, %p212
      %s215 = sadd.s32 %s214, 1
      %p218 = scmp.eq.s32.totalorder %s33, 1
      %p219 = scmp.ne.s32.totalorder %s214, %s216
      %p220 = scmp.eq.s32.totalorder %s33, 0
      %p221 = por %p219, %p220
      %p222 = scmp.ne.s32.totalorder %s214, %s216
      %p223 = scmp.eq.s32.totalorder %s38, 1
      %p224 = por %p222, %p223
      %p225 = scmp.ne.s32.totalorder %s216, %s217
      %p226 = scmp.eq.s32.totalorder %s38, 0
      %p227 = por %p225, %p226
      %p228 = scmp.ne.s32.totalorder %s216, %s217
      %p229 = scmp.eq.s32.totalorder %s39, 1
      %p230 = por %p228, %p229
      %p232 = scmp.ne.s32.totalorder %s217, %s231
      %p233 = scmp.eq.s32.totalorder %s39, 0
      %p234 = por %p232, %p233
      %s236 = sadd.s32 %s235, 1
      %p239 = scmp.eq.s32.totalorder %s33, 1
      %p240 = scmp.ne.s32.totalorder %s235, %s237
      %p241 = scmp.eq.s32.totalorder %s33, 0
      %p242 = por %p240, %p241
      %p243 = scmp.ne.s32.totalorder %s235, %s237
      %p244 = scmp.eq.s32.totalorder %s38, 1
      %p245 = por %p243, %p244
      %p246 = scmp.ne.s32.totalorder %s237, %s238
      %p247 = scmp.eq.s32.totalorder %s38, 0
      %p248 = por %p246, %p247
      %p249 = scmp.ne.s32.totalorder %s237, %s238
      %p250 = scmp.eq.s32.totalorder %s39, 1
      %p251 = por %p249, %p250
      %p253 = scmp.ne.s32.totalorder %s238, %s252
      %p254 = scmp.eq.s32.totalorder %s39, 0
      %p255 = por %p253, %p254
      %s257 = sadd.s32 %s256, 1
      %p260 = scmp.eq.s32.totalorder %s33, 1
      %p261 = scmp.ne.s32.totalorder %s256, %s258
      %p262 = scmp.eq.s32.totalorder %s33, 0
      %p263 = por %p261, %p262
      %p264 = scmp.ne.s32.totalorder %s256, %s258
      %p265 = scmp.eq.s32.totalorder %s38, 1
      %p266 = por %p264, %p265
      %p267 = scmp.ne.s32.totalorder %s258, %s259
      %p268 = scmp.eq.s32.totalorder %s38, 0
      %p269 = por %p267, %p268
      %p270 = scmp.ne.s32.totalorder %s258, %s259
      %p271 = scmp.eq.s32.totalorder %s39, 1
      %p272 = por %p270, %p271
      %p274 = scmp.ne.s32.totalorder %s259, %s273
      %p275 = scmp.eq.s32.totalorder %s39, 0
      %p276 = por %p274, %p275
      %s278 = sadd.s32 %s277, 1
      %p281 = scmp.eq.s32.totalorder %s33, 1
      %p282 = scmp.ne.s32.totalorder %s277, %s279
      %p283 = scmp.eq.s32.totalorder %s33, 0
      %p284 = por %p282, %p283
      %p285 = scmp.ne.s32.totalorder %s277, %s279
      %p286 = scmp.eq.s32.totalorder %s38, 1
      %p287 = por %p285, %p286
      %p288 = scmp.ne.s32.totalorder %s279, %s280
      %p289 = scmp.eq.s32.totalorder %s38, 0
      %p290 = por %p288, %p289
      %p291 = scmp.ne.s32.totalorder %s279, %s280
      %p292 = scmp.eq.s32.totalorder %s39, 1
      %p293 = por %p291, %p292
      %p295 = scmp.ne.s32.totalorder %s280, %s294
      %p296 = scmp.eq.s32.totalorder %s39, 0
      %p297 = por %p295, %p296
      %s299 = sadd.s32 %s298, 1
      %p302 = scmp.eq.s32.totalorder %s33, 1
      %p303 = scmp.ne.s32.totalorder %s298, %s300
      %p304 = scmp.eq.s32.totalorder %s33, 0
      %p305 = por %p303, %p304
      %p306 = scmp.ne.s32.totalorder %s298, %s300
      %p307 = scmp.eq.s32.totalorder %s38, 1
      %p308 = por %p306, %p307
      %p309 = scmp.ne.s32.totalorder %s300, %s301
      %p310 = scmp.eq.s32.totalorder %s38, 0
      %p311 = por %p309, %p310
      %p312 = scmp.ne.s32.totalorder %s300, %s301
      %p313 = scmp.eq.s32.totalorder %s39, 1
      %p314 = por %p312, %p313
      %p316 = scmp.ne.s32.totalorder %s301, %s315
      %p317 = scmp.eq.s32.totalorder %s39, 0
      %p318 = por %p316, %p317
      %s320 = sadd.s32 %s319, 1
      %p323 = scmp.eq.s32.totalorder %s33, 1
      %p324 = scmp.ne.s32.totalorder %s319, %s321
      %p325 = scmp.eq.s32.totalorder %s33, 0
      %p326 = por %p324, %p325
      %p327 = scmp.ne.s32.totalorder %s319, %s321
      %p328 = scmp.eq.s32.totalorder %s38, 1
      %p329 = por %p327, %p328
      %p330 = scmp.ne.s32.totalorder %s321, %s322
      %p331 = scmp.eq.s32.totalorder %s38, 0
      %p332 = por %p330, %p331
      %p333 = scmp.ne.s32.totalorder %s321, %s322
      %p334 = scmp.eq.s32.totalorder %s39, 1
      %p335 = por %p333, %p334
      %p337 = scmp.ne.s32.totalorder %s322, %s336
      %p338 = scmp.eq.s32.totalorder %s39, 0
      %p339 = por %p337, %p338
      %s341 = sadd.s32 %s340, 1
      %p344 = scmp.eq.s32.totalorder %s33, 1
      %p345 = scmp.ne.s32.totalorder %s340, %s342
      %p346 = scmp.eq.s32.totalorder %s33, 0
      %p347 = por %p345, %p346
      %p348 = scmp.ne.s32.totalorder %s340, %s342
      %p349 = scmp.eq.s32.totalorder %s38, 1
      %p350 = por %p348, %p349
      %p351 = scmp.ne.s32.totalorder %s342, %s343
      %p352 = scmp.eq.s32.totalorder %s38, 0
      %p353 = por %p351, %p352
      %p354 = scmp.ne.s32.totalorder %s342, %s343
      %p355 = scmp.eq.s32.totalorder %s39, 1
      %p356 = por %p354, %p355
      %p358 = scmp.ne.s32.totalorder %s343, %s357
      %p359 = scmp.eq.s32.totalorder %s39, 0
      %p360 = por %p358, %p359
      %s362 = sadd.s32 %s361, 1
      %p365 = scmp.eq.s32.totalorder %s33, 1
      %p366 = scmp.ne.s32.totalorder %s361, %s363
      %p367 = scmp.eq.s32.totalorder %s33, 0
      %p368 = por %p366, %p367
      %p369 = scmp.ne.s32.totalorder %s361, %s363
      %p370 = scmp.eq.s32.totalorder %s38, 1
      %p371 = por %p369, %p370
      %p372 = scmp.ne.s32.totalorder %s363, %s364
      %p373 = scmp.eq.s32.totalorder %s38, 0
      %p374 = por %p372, %p373
      %p375 = scmp.ne.s32.totalorder %s363, %s364
      %p376 = scmp.eq.s32.totalorder %s39, 1
      %p377 = por %p375, %p376
      %p379 = scmp.ne.s32.totalorder %s364, %s378
      %p380 = scmp.eq.s32.totalorder %s39, 0
      %p381 = por %p379, %p380
      %s383 = sadd.s32 %s382, 1
      %p386 = scmp.eq.s32.totalorder %s33, 1
      %p387 = scmp.ne.s32.totalorder %s382, %s384
      %p388 = scmp.eq.s32.totalorder %s33, 0
      %p389 = por %p387, %p388
      %p390 = scmp.ne.s32.totalorder %s382, %s384
      %p391 = scmp.eq.s32.totalorder %s38, 1
      %p392 = por %p390, %p391
      %p393 = scmp.ne.s32.totalorder %s384, %s385
      %p394 = scmp.eq.s32.totalorder %s38, 0
      %p395 = por %p393, %p394
      %p396 = scmp.ne.s32.totalorder %s384, %s385
      %p397 = scmp.eq.s32.totalorder %s39, 1
      %p398 = por %p396, %p397
      %p400 = scmp.ne.s32.totalorder %s385, %s399
      %p401 = scmp.eq.s32.totalorder %s39, 0
      %p402 = por %p400, %p401
      %s404 = sadd.s32 %s403, 1
      %p407 = scmp.eq.s32.totalorder %s33, 1
      %p408 = scmp.ne.s32.totalorder %s403, %s405
      %p409 = scmp.eq.s32.totalorder %s33, 0
      %p410 = por %p408, %p409
      %p411 = scmp.ne.s32.totalorder %s403, %s405
      %p412 = scmp.eq.s32.totalorder %s38, 1
      %p413 = por %p411, %p412
      %p414 = scmp.ne.s32.totalorder %s405, %s406
      %p415 = scmp.eq.s32.totalorder %s38, 0
      %p416 = por %p414, %p415
      %p417 = scmp.ne.s32.totalorder %s405, %s406
      %p418 = scmp.eq.s32.totalorder %s39, 1
      %p419 = por %p417, %p418
      %p421 = scmp.ne.s32.totalorder %s406, %s420
      %p422 = scmp.eq.s32.totalorder %s39, 0
      %p423 = por %p421, %p422
      %s425 = sadd.s32 %s424, 1
      %p428 = scmp.eq.s32.totalorder %s33, 1
      %p429 = scmp.ne.s32.totalorder %s424, %s426
      %p430 = scmp.eq.s32.totalorder %s33, 0
      %p431 = por %p429, %p430
      %p432 = scmp.ne.s32.totalorder %s424, %s426
      %p433 = scmp.eq.s32.totalorder %s38, 1
      %p434 = por %p432, %p433
      %p435 = scmp.ne.s32.totalorder %s426, %s427
      %p436 = scmp.eq.s32.totalorder %s38, 0
      %p437 = por %p435, %p436
      %p438 = scmp.ne.s32.totalorder %s426, %s427
      %p439 = scmp.eq.s32.totalorder %s39, 1
      %p440 = por %p438, %p439
      %p442 = scmp.ne.s32.totalorder %s427, %s441
      %p443 = scmp.eq.s32.totalorder %s39, 0
      %p444 = por %p442, %p443
      %s446 = sadd.s32 %s445, 1
      %p449 = scmp.eq.s32.totalorder %s33, 1
      %p450 = scmp.ne.s32.totalorder %s445, %s447
      %p451 = scmp.eq.s32.totalorder %s33, 0
      %p452 = por %p450, %p451
      %p453 = scmp.ne.s32.totalorder %s445, %s447
      %p454 = scmp.eq.s32.totalorder %s38, 1
      %p455 = por %p453, %p454
      %p456 = scmp.ne.s32.totalorder %s447, %s448
      %p457 = scmp.eq.s32.totalorder %s38, 0
      %p458 = por %p456, %p457
      %p459 = scmp.ne.s32.totalorder %s447, %s448
      %p460 = scmp.eq.s32.totalorder %s39, 1
      %p461 = por %p459, %p460
      %p463 = scmp.ne.s32.totalorder %s448, %s462
      %p464 = scmp.eq.s32.totalorder %s39, 0
      %p465 = por %p463, %p464
      %s467 = sadd.s32 %s466, 1
      %p470 = scmp.eq.s32.totalorder %s33, 1
      %p471 = scmp.ne.s32.totalorder %s466, %s468
      %p472 = scmp.eq.s32.totalorder %s33, 0
      %p473 = por %p471, %p472
      %p474 = scmp.ne.s32.totalorder %s466, %s468
      %p475 = scmp.eq.s32.totalorder %s38, 1
      %p476 = por %p474, %p475
      %p477 = scmp.ne.s32.totalorder %s468, %s469
      %p478 = scmp.eq.s32.totalorder %s38, 0
      %p479 = por %p477, %p478
      %p480 = scmp.ne.s32.totalorder %s468, %s469
      %p481 = scmp.eq.s32.totalorder %s39, 1
      %p482 = por %p480, %p481
      %p484 = scmp.ne.s32.totalorder %s469, %s483
      %p485 = scmp.eq.s32.totalorder %s39, 0
      %p486 = por %p484, %p485
      %s488 = sadd.s32 %s487, 1
      %p491 = scmp.eq.s32.totalorder %s33, 1
      %p492 = scmp.ne.s32.totalorder %s487, %s489
      %p493 = scmp.eq.s32.totalorder %s33, 0
      %p494 = por %p492, %p493
      %p495 = scmp.ne.s32.totalorder %s487, %s489
      %p496 = scmp.eq.s32.totalorder %s38, 1
      %p497 = por %p495, %p496
      %p498 = scmp.ne.s32.totalorder %s489, %s490
      %p499 = scmp.eq.s32.totalorder %s38, 0
      %p500 = por %p498, %p499
      %p501 = scmp.ne.s32.totalorder %s489, %s490
      %p502 = scmp.eq.s32.totalorder %s39, 1
      %p503 = por %p501, %p502
      %p505 = scmp.ne.s32.totalorder %s490, %s504
      %p506 = scmp.eq.s32.totalorder %s39, 0
      %p507 = por %p505, %p506
      %s509 = sadd.s32 %s508, 1
      %p512 = scmp.eq.s32.totalorder %s33, 1
      %p513 = scmp.ne.s32.totalorder %s508, %s510
      %p514 = scmp.eq.s32.totalorder %s33, 0
      %p515 = por %p513, %p514
      %p516 = scmp.ne.s32.totalorder %s508, %s510
      %p517 = scmp.eq.s32.totalorder %s38, 1
      %p518 = por %p516, %p517
      %p519 = scmp.ne.s32.totalorder %s510, %s511
      %p520 = scmp.eq.s32.totalorder %s38, 0
      %p521 = por %p519, %p520
      %p522 = scmp.ne.s32.totalorder %s510, %s511
      %p523 = scmp.eq.s32.totalorder %s39, 1
      %p524 = por %p522, %p523
      %p526 = scmp.ne.s32.totalorder %s511, %s525
      %p527 = scmp.eq.s32.totalorder %s39, 0
      %p528 = por %p526, %p527
      %s530 = sadd.s32 %s529, 1
      %p533 = scmp.eq.s32.totalorder %s33, 1
      %p534 = scmp.ne.s32.totalorder %s529, %s531
      %p535 = scmp.eq.s32.totalorder %s33, 0
      %p536 = por %p534, %p535
      %p537 = scmp.ne.s32.totalorder %s529, %s531
      %p538 = scmp.eq.s32.totalorder %s38, 1
      %p539 = por %p537, %p538
      %p540 = scmp.ne.s32.totalorder %s531, %s532
      %p541 = scmp.eq.s32.totalorder %s38, 0
      %p542 = por %p540, %p541
      %p543 = scmp.ne.s32.totalorder %s531, %s532
      %p544 = scmp.eq.s32.totalorder %s39, 1
      %p545 = por %p543, %p544
      %p547 = scmp.ne.s32.totalorder %s532, %s546
      %p548 = scmp.eq.s32.totalorder %s39, 0
      %p549 = por %p547, %p548
      %s550 = ssub.s32 %s33, %s40
      %p551 = scmp.eq.s32.totalorder %s550, 0
      %s553 = sadd.s32 %s552, 1
      %s554 = scalar_select %p551, %s552, %s553
      %p557 = pneg %p551
      %p558 = scmp.eq.s32.totalorder %s33, 1
      %p559 = por %p557, %p558
      %p560 = scmp.ne.s32.totalorder %s552, %s555
      %p561 = scmp.eq.s32.totalorder %s33, 0
      %p562 = por %p560, %p561
      %p563 = scmp.ne.s32.totalorder %s552, %s555
      %p564 = scmp.eq.s32.totalorder %s38, 1
      %p565 = por %p563, %p564
      %p566 = scmp.ne.s32.totalorder %s555, %s556
      %p567 = scmp.eq.s32.totalorder %s38, 0
      %p568 = por %p566, %p567
      %p569 = scmp.ne.s32.totalorder %s555, %s556
      %p570 = scmp.eq.s32.totalorder %s39, 1
      %p571 = por %p569, %p570
      %p573 = scmp.ne.s32.totalorder %s556, %s572
      %p574 = scmp.eq.s32.totalorder %s39, 0
      %p575 = por %p573, %p574
      %p576 = scmp.le.s32.totalorder 1, %s33
      %p577 = scmp.lt.s32.totalorder %s33, 3
      %p578 = pnand %p576, %p577
      %p579 = pneg %p578
      // Predicated region
      $region9: #{transformer_forward.3} parent=5 // pred_check
        _
      $region10: #{transformer_forward.3} parent=5 // pred_check_branch
        %581 = sbr.rel (%p578) target = $region12
      $region11: #{transformer_forward.3} parent=5 // pred_region
        %s582 = ssub.s32 %s33, 1
        // Predicated region
        $region13: #{transformer_forward.3} parent=11 // pred_check
          %p583 = pneg %p80
        $region14: #{transformer_forward.3} parent=11 // pred_check_branch
          %585 = sbr.rel (%p583) target = $region16
        $region15: #{transformer_forward.3} parent=11 // pred_region
          _
        $region16: #{transformer_forward.3} parent=11 // pred_fallthru
          _
        // Predicated region
        $region17: #{transformer_forward.3} parent=11 // pred_check
          %p586 = pneg %p101
        $region18: #{transformer_forward.3} parent=11 // pred_check_branch
          %588 = sbr.rel (%p586) target = $region20
        $region19: #{transformer_forward.3} parent=11 // pred_region
          _
        $region20: #{transformer_forward.3} parent=11 // pred_fallthru
          _
        // Predicated region
        $region21: #{transformer_forward.3} parent=11 // pred_check
          %p589 = pneg %p122
        $region22: #{transformer_forward.3} parent=11 // pred_check_branch
          %591 = sbr.rel (%p589) target = $region24
        $region23: #{transformer_forward.3} parent=11 // pred_region
          _
        $region24: #{transformer_forward.3} parent=11 // pred_fallthru
          _
        // Predicated region
        $region25: #{transformer_forward.3} parent=11 // pred_check
          %p592 = pneg %p143
        $region26: #{transformer_forward.3} parent=11 // pred_check_branch
          %594 = sbr.rel (%p592) target = $region28
        $region27: #{transformer_forward.3} parent=11 // pred_region
          _
        $region28: #{transformer_forward.3} parent=11 // pred_fallthru
          _
        // Predicated region
        $region29: #{transformer_forward.3} parent=11 // pred_check
          %p595 = pneg %p164
        $region30: #{transformer_forward.3} parent=11 // pred_check_branch
          %597 = sbr.rel (%p595) target = $region32
        $region31: #{transformer_forward.3} parent=11 // pred_region
          _
        $region32: #{transformer_forward.3} parent=11 // pred_fallthru
          _
        // Predicated region
        $region33: #{transformer_forward.3} parent=11 // pred_check
          %p598 = pneg %p185
        $region34: #{transformer_forward.3} parent=11 // pred_check_branch
          %600 = sbr.rel (%p598) target = $region36
        $region35: #{transformer_forward.3} parent=11 // pred_region
          _
        $region36: #{transformer_forward.3} parent=11 // pred_fallthru
          _
        // Predicated region
        $region37: #{transformer_forward.3} parent=11 // pred_check
          %p601 = pneg %p206
        $region38: #{transformer_forward.3} parent=11 // pred_check_branch
          %603 = sbr.rel (%p601) target = $region40
        $region39: #{transformer_forward.3} parent=11 // pred_region
          _
        $region40: #{transformer_forward.3} parent=11 // pred_fallthru
          _
        // Predicated region
        $region41: #{transformer_forward.3} parent=11 // pred_check
          %p604 = pneg %p227
        $region42: #{transformer_forward.3} parent=11 // pred_check_branch
          %606 = sbr.rel (%p604) target = $region44
        $region43: #{transformer_forward.3} parent=11 // pred_region
          _
        $region44: #{transformer_forward.3} parent=11 // pred_fallthru
          _
        // Predicated region
        $region45: #{transformer_forward.3} parent=11 // pred_check
          %p607 = pneg %p248
        $region46: #{transformer_forward.3} parent=11 // pred_check_branch
          %609 = sbr.rel (%p607) target = $region48
        $region47: #{transformer_forward.3} parent=11 // pred_region
          _
        $region48: #{transformer_forward.3} parent=11 // pred_fallthru
          _
        // Predicated region
        $region49: #{transformer_forward.3} parent=11 // pred_check
          %p610 = pneg %p269
        $region50: #{transformer_forward.3} parent=11 // pred_check_branch
          %612 = sbr.rel (%p610) target = $region52
        $region51: #{transformer_forward.3} parent=11 // pred_region
          _
        $region52: #{transformer_forward.3} parent=11 // pred_fallthru
          _
        // Predicated region
        $region53: #{transformer_forward.3} parent=11 // pred_check
          %p613 = pneg %p290
        $region54: #{transformer_forward.3} parent=11 // pred_check_branch
          %615 = sbr.rel (%p613) target = $region56
        $region55: #{transformer_forward.3} parent=11 // pred_region
          _
        $region56: #{transformer_forward.3} parent=11 // pred_fallthru
          _
        // Predicated region
        $region57: #{transformer_forward.3} parent=11 // pred_check
          %p616 = pneg %p311
        $region58: #{transformer_forward.3} parent=11 // pred_check_branch
          %618 = sbr.rel (%p616) target = $region60
        $region59: #{transformer_forward.3} parent=11 // pred_region
          _
        $region60: #{transformer_forward.3} parent=11 // pred_fallthru
          _
        // Predicated region
        $region61: #{transformer_forward.3} parent=11 // pred_check
          %p619 = pneg %p332
        $region62: #{transformer_forward.3} parent=11 // pred_check_branch
          %621 = sbr.rel (%p619) target = $region64
        $region63: #{transformer_forward.3} parent=11 // pred_region
          _
        $region64: #{transformer_forward.3} parent=11 // pred_fallthru
          _
        // Predicated region
        $region65: #{transformer_forward.3} parent=11 // pred_check
          %p622 = pneg %p353
        $region66: #{transformer_forward.3} parent=11 // pred_check_branch
          %624 = sbr.rel (%p622) target = $region68
        $region67: #{transformer_forward.3} parent=11 // pred_region
          _
        $region68: #{transformer_forward.3} parent=11 // pred_fallthru
          _
        // Predicated region
        $region69: #{transformer_forward.3} parent=11 // pred_check
          %p625 = pneg %p374
        $region70: #{transformer_forward.3} parent=11 // pred_check_branch
          %627 = sbr.rel (%p625) target = $region72
        $region71: #{transformer_forward.3} parent=11 // pred_region
          _
        $region72: #{transformer_forward.3} parent=11 // pred_fallthru
          _
        // Predicated region
        $region73: #{transformer_forward.3} parent=11 // pred_check
          %p628 = pneg %p395
        $region74: #{transformer_forward.3} parent=11 // pred_check_branch
          %630 = sbr.rel (%p628) target = $region76
        $region75: #{transformer_forward.3} parent=11 // pred_region
          _
        $region76: #{transformer_forward.3} parent=11 // pred_fallthru
          _
        // Predicated region
        $region77: #{transformer_forward.3} parent=11 // pred_check
          %p631 = pneg %p416
        $region78: #{transformer_forward.3} parent=11 // pred_check_branch
          %633 = sbr.rel (%p631) target = $region80
        $region79: #{transformer_forward.3} parent=11 // pred_region
          _
        $region80: #{transformer_forward.3} parent=11 // pred_fallthru
          _
        // Predicated region
        $region81: #{transformer_forward.3} parent=11 // pred_check
          %p634 = pneg %p437
        $region82: #{transformer_forward.3} parent=11 // pred_check_branch
          %636 = sbr.rel (%p634) target = $region84
        $region83: #{transformer_forward.3} parent=11 // pred_region
          _
        $region84: #{transformer_forward.3} parent=11 // pred_fallthru
          _
        // Predicated region
        $region85: #{transformer_forward.3} parent=11 // pred_check
          %p637 = pneg %p458
        $region86: #{transformer_forward.3} parent=11 // pred_check_branch
          %639 = sbr.rel (%p637) target = $region88
        $region87: #{transformer_forward.3} parent=11 // pred_region
          _
        $region88: #{transformer_forward.3} parent=11 // pred_fallthru
          _
        // Predicated region
        $region89: #{transformer_forward.3} parent=11 // pred_check
          %p640 = pneg %p479
        $region90: #{transformer_forward.3} parent=11 // pred_check_branch
          %642 = sbr.rel (%p640) target = $region92
        $region91: #{transformer_forward.3} parent=11 // pred_region
          _
        $region92: #{transformer_forward.3} parent=11 // pred_fallthru
          _
        // Predicated region
        $region93: #{transformer_forward.3} parent=11 // pred_check
          %p643 = pneg %p500
        $region94: #{transformer_forward.3} parent=11 // pred_check_branch
          %645 = sbr.rel (%p643) target = $region96
        $region95: #{transformer_forward.3} parent=11 // pred_region
          _
        $region96: #{transformer_forward.3} parent=11 // pred_fallthru
          _
        // Predicated region
        $region97: #{transformer_forward.3} parent=11 // pred_check
          %p646 = pneg %p521
        $region98: #{transformer_forward.3} parent=11 // pred_check_branch
          %648 = sbr.rel (%p646) target = $region100
        $region99: #{transformer_forward.3} parent=11 // pred_region
          _
        $region100: #{transformer_forward.3} parent=11 // pred_fallthru
          _
        // Predicated region
        $region101: #{transformer_forward.3} parent=11 // pred_check
          %p649 = pneg %p542
        $region102: #{transformer_forward.3} parent=11 // pred_check_branch
          %651 = sbr.rel (%p649) target = $region104
        $region103: #{transformer_forward.3} parent=11 // pred_region
          _
        $region104: #{transformer_forward.3} parent=11 // pred_fallthru
          _
      $region12: #{transformer_forward.3} parent=5 // pred_fallthru
        _
      %p652 = scmp.lt.s32.totalorder %s33, 2
      // Predicated region
      $region105: #{transformer_forward.3} parent=5 // pred_check
        %p653 = pneg %p652
      $region106: #{transformer_forward.3} parent=5 // pred_check_branch
        %655 = sbr.rel (%p653) target = $region108
      $region107: #{transformer_forward.3} parent=5 // pred_region
        // Predicated region
        $region109: #{transformer_forward.3} parent=107 // pred_check
          %p656 = pneg %p53
        $region110: #{transformer_forward.3} parent=107 // pred_check_branch
          %658 = sbr.rel (%p656) target = $region112
        $region111: #{transformer_forward.3} parent=107 // pred_region
          %p659 = scmp.lt.s32.totalorder %s33, 1
          %s660 = scalar_select %p659, %s33, 1
          %s661 = smul.addr %s660, 8
          %s662 = scalar_lea.vmem %s0, %s661
        $region112: #{transformer_forward.3} parent=107 // pred_fallthru
          _
      $region108: #{transformer_forward.3} parent=5 // pred_fallthru
        _
      %p663 = scmp.le.s32.totalorder 1, %s33
      %p664 = scmp.lt.s32.totalorder %s33, 3
      %p665 = pnand %p663, %p664
      %p666 = pneg %p665
      // Predicated region
      $region113: #{transformer_forward.3} parent=5 // pred_check
        _
      $region114: #{transformer_forward.3} parent=5 // pred_check_branch
        %668 = sbr.rel (%p665) target = $region116
      $region115: #{transformer_forward.3} parent=5 // pred_region
        %s669 = ssub.s32 %s33, 1
        %p670 = scmp.lt.s32.totalorder %s38, 1
        %s671 = scalar_select %p670, %s38, 1
        %s672 = smul.addr %s671, 8
        %s673 = scalar_lea.vmem %s0, %s672
        %p674 = pneg %p59
        %p675 = pneg %p56
        %p676 = pneg %p80
        %p677 = pneg %p77
        %p678 = pneg %p101
        %p679 = pneg %p98
        %p680 = pneg %p122
        %p681 = pneg %p119
        %p682 = pneg %p143
        %p683 = pneg %p140
        %p684 = pneg %p164
        %p685 = pneg %p161
        %p686 = pneg %p185
        %p687 = pneg %p182
        %p688 = pneg %p206
        %p689 = pneg %p203
        %p690 = pneg %p227
        %p691 = pneg %p224
        %p692 = pneg %p248
        %p693 = pneg %p245
        %p694 = pneg %p269
        %p695 = pneg %p266
        %p696 = pneg %p290
        %p697 = pneg %p287
        %p698 = pneg %p311
        %p699 = pneg %p308
        %p700 = pneg %p332
        %p701 = pneg %p329
        %p702 = pneg %p353
        %p703 = pneg %p350
        %p704 = pneg %p374
        %p705 = pneg %p371
        %p706 = pneg %p395
        %p707 = pneg %p392
        %p708 = pneg %p416
        %p709 = pneg %p413
        %p710 = pneg %p437
        %p711 = pneg %p434
        %p712 = pneg %p458
        %p713 = pneg %p455
        %p714 = pneg %p479
        %p715 = pneg %p476
        %p716 = pneg %p500
        %p717 = pneg %p497
        %p718 = pneg %p521
        %p719 = pneg %p518
        %p720 = pneg %p542
        %p721 = pneg %p539
        %p722 = pneg %p568
        %p723 = pneg %p565
        %s724 = sand.u32 %s555, 1
        %s725 = scalar_lea.sflag [#allocation3], %s724
        %s726 = sand.u32 %s555, 1
        %s727 = smul.addr %s726, 8
        %s728 = scalar_lea.vmem [#allocation2], %s727
        %p729 = scmp.lt.s32.totalorder %s38, 1
        %s730 = scalar_select %p729, %s38, 1
        %s731 = smul.addr %s730, 8
        %s732 = scalar_lea.vmem %s0, %s731
        %v734 = vld [vmem:[%s732] sm:$0xff]
        %v735 = vld [vmem:[%s1] sm:$0xff]
        %v736 = vld [vmem:[%s1 + $0x8] sm:$0xff]
        %v737 = vld [vmem:[%s2] sm:$0xf]
        %v738 = vld [vmem:[%s3] sm:$0x1]
        %v739 = vld [vmem:[%s4] sm:$0xf]
        %v740 = vld [vmem:[%s5] sm:$0x1]
        %v741 = vld [vmem:[%s6] sm:$0x1]
        %v742 = vld [vmem:[%s7] sm:$0x1]
        %v743 = vpack.c.bf16 %v734, %v734
        %v745 = vlaneseq
        %v746 = vshrl.u32 %v745, 7
        %v747 = vsub.s32 0, %v746
        %v748 = vrot.slane %v738, %v747
        %vm750 = vcmask 64512
        %v752 = vsel %vm750, %v743, 0
        %vm754 = vcmask 1043456
        %v756 = vsel %vm754, %v737, 0
        %758 = vmatprep.subr.bf16.mxu0 0
        %759 = vmatpush1.bf16.msra.mxu0 %v756
        %760 = vmatprep.subr.bf16.mxu0 0
        %761 = vmatpush1.bf16.msra.mxu0 0
        %762 = vmatprep.subr.bf16.mxu0 0
        %763 = vmatpush1.bf16.msra.mxu0 0
        %764 = vmatprep.subr.bf16.mxu0 0
        %765 = vmatpush1.bf16.msra.mxu0 0
        %766 = vmatprep.subr.bf16.mxu0 0
        %767 = vmatpush1.bf16.msra.mxu0 0
        %768 = vmatprep.subr.bf16.mxu0 0
        %769 = vmatpush1.bf16.msra.mxu0 0
        %770 = vmatprep.subr.bf16.mxu0 0
        %771 = vmatpush1.bf16.msra.mxu0 0
        %772 = vmatprep.subr.bf16.mxu0 0
        %773 = vmatpush1.bf16.msra.mxu0 0
        %774 = vmatprep.subr.bf16.mxu0 0
        %775 = vmatpush1.bf16.msra.mxu0 0
        %776 = vmatprep.subr.bf16.mxu0 0
        %777 = vmatpush1.bf16.msra.mxu0 0
        %778 = vmatprep.subr.bf16.mxu0 0
        %779 = vmatpush1.bf16.msra.mxu0 0
        %780 = vmatprep.subr.bf16.mxu0 0
        %781 = vmatpush1.bf16.msra.mxu0 0
        %782 = vmatprep.subr.bf16.mxu0 0
        %783 = vmatpush1.bf16.msra.mxu0 0
        %784 = vmatprep.subr.bf16.mxu0 0
        %785 = vmatpush1.bf16.msra.mxu0 0
        %786 = vmatprep.subr.bf16.mxu0 0
        %787 = vmatpush1.bf16.msra.mxu0 0
        %788 = vmatprep.subr.bf16.mxu0 0
        %789 = vmatpush1.bf16.msra.mxu0 0
        %790 = vmatprep.mubr.bf16.mxu0 0
        %791 = vmatmul.mubr.bf16.gmra.mrb[0].mxu0 %v752
        %v792 = vpop.f32.mrb[0].mxu0
        %v793 = vadd.f32 %v748, %v792
        %v794 = vpop.f32.mrb[0].mxu0
        %v795 = vpop.f32.mrb[0].mxu0
        %v796 = vpop.f32.mrb[0].mxu0
        %797 = vdwg.mxu0
        %v798 = vlaneseq
        %v799 = vshrl.u32 %v798, 7
        %v800 = vlaneseq
        %v801 = vand.u32 %v800, 127
        %vm802 = vcmp.gt.s32.totalorder %v801, %v799
        %v803 = vsel %vm802, -1e+30, 0.0
        %805 = vrot.lane.b32.xlu0 %v793, 120
        %v806 = vpop.permute.xlu0 %805
        %vm807 = vcmask 31744
        %v808 = vsel %vm807, %v793, 0
        %v810 = vsel %vm807, %v806, 0
        %812 = vmatprep.subr.mxu0 0.0
        %813 = vmatpush1.xpose.msra.mxu0 %v810
        %814 = vmatprep.subr.mxu0 0.0
        %815 = vmatpush1.xpose.msra.mxu0 0.0
        %816 = vmatprep.subr.mxu0 0.0
        %817 = vmatpush1.xpose.msra.mxu0 0.0
        %818 = vmatprep.subr.mxu0 0.0
        %819 = vmatpush1.xpose.msra.mxu0 0.0
        %820 = vmatprep.subr.mxu0 0.0
        %821 = vmatpush1.xpose.msra.mxu0 0.0
        %822 = vmatprep.subr.mxu0 0.0
        %823 = vmatpush1.xpose.msra.mxu0 0.0
        %824 = vmatprep.subr.mxu0 0.0
        %825 = vmatpush1.xpose.msra.mxu0 0.0
        %826 = vmatprep.subr.mxu0 0.0
        %827 = vmatpush1.xpose.msra.mxu0 0.0
        %828 = vmatprep.subr.mxu0 0.0
        %829 = vmatpush1.xpose.msra.mxu0 0.0
        %830 = vmatprep.subr.mxu0 0.0
        %831 = vmatpush1.xpose.msra.mxu0 0.0
        %832 = vmatprep.subr.mxu0 0.0
        %833 = vmatpush1.xpose.msra.mxu0 0.0
        %834 = vmatprep.subr.mxu0 0.0
        %835 = vmatpush1.xpose.msra.mxu0 0.0
        %836 = vmatprep.subr.mxu0 0.0
        %837 = vmatpush1.xpose.msra.mxu0 0.0
        %838 = vmatprep.subr.mxu0 0.0
        %839 = vmatpush1.xpose.msra.mxu0 0.0
        %840 = vmatprep.subr.mxu0 0.0
        %841 = vmatpush1.xpose.msra.mxu0 0.0
        %842 = vmatprep.subr.mxu0 0.0
        %843 = vmatpush1.xpose.msra.mxu0 0.0
        %844 = vmatprep.subr.mxu0 0.0
        %845 = vmatpush1.xpose.msra.mxu0 0.0
        %846 = vmatprep.subr.mxu0 0.0
        %847 = vmatpush1.xpose.msra.mxu0 0.0
        %848 = vmatprep.subr.mxu0 0.0
        %849 = vmatpush1.xpose.msra.mxu0 0.0
        %850 = vmatprep.subr.mxu0 0.0
        %851 = vmatpush1.xpose.msra.mxu0 0.0
        %852 = vmatprep.subr.mxu0 0.0
        %853 = vmatpush1.xpose.msra.mxu0 0.0
        %854 = vmatprep.subr.mxu0 0.0
        %855 = vmatpush1.xpose.msra.mxu0 0.0
        %856 = vmatprep.subr.mxu0 0.0
        %857 = vmatpush1.xpose.msra.mxu0 0.0
        %858 = vmatprep.subr.mxu0 0.0
        %859 = vmatpush1.xpose.msra.mxu0 0.0
        %860 = vmatprep.subr.mxu0 0.0
        %861 = vmatpush1.xpose.msra.mxu0 0.0
        %862 = vmatprep.subr.mxu0 0.0
        %863 = vmatpush1.xpose.msra.mxu0 0.0
        %864 = vmatprep.subr.mxu0 0.0
        %865 = vmatpush1.xpose.msra.mxu0 0.0
        %866 = vmatprep.subr.mxu0 0.0
        %867 = vmatpush1.xpose.msra.mxu0 0.0
        %868 = vmatprep.subr.mxu0 0.0
        %869 = vmatpush1.xpose.msra.mxu0 0.0
        %870 = vmatprep.subr.mxu0 0.0
        %871 = vmatpush1.xpose.msra.mxu0 0.0
        %872 = vmatprep.subr.mxu0 0.0
        %873 = vmatpush1.xpose.msra.mxu0 0.0
        %874 = vmatprep.subr.mxu0 0.0
        %875 = vmatpush1.xpose.msra.mxu0 0.0
        %876 = vmatprep.mubr.f32.mxu0 0.0
        %877 = vmatmul.mubr.f32.gmra.mrb[0].mxu0 %v808
        %v878 = vpop.f32.mrb[0].mxu0
        %v879 = vadd.f32 0.0, %v878
        %v880 = vpop.f32.mrb[0].mxu0
        %881 = vdwg.mxu0
        %v882 = vmul.f32 %v879, 0.5
        %v883 = vadd.f32 %v882, %v803
        %v884 = vsel %vm750, %v883, -inf
        %885 = vmax.xlane.f32.xlu0 %v884
        %v886 = vpop.xlane.xlu0 %885
        %v887 = vsub.f32 %v883, %v886
        %v888 = vmul.f32 %v887, 1.442695
        %v889 = vpow.pop %v888
        %v890 = vsel %vm750, %v889, 0.0
        %891 = vadd.xlane.f32.xlu0 %v890
        %v892 = vpop.xlane.xlu0 %891
        %v893 = vrcp.pop %v892
        %v894 = vmul.f32 %v889, %v893
        %895 = vrot.lane.b32.xlu0 %v793, 112
        %v896 = vpop.permute.xlu0 %895
        %v899 = vsel %vm750, %v894, 0
        %901 = vmatprep.subr.mxu0 0.0
        %902 = vmatpush1.msra.mxu0 %v896
        %903 = vmatprep.subr.mxu0 0.0
        %904 = vmatpush1.msra.mxu0 0.0
        %905 = vmatprep.subr.mxu0 0.0
        %906 = vmatpush1.msra.mxu0 0.0
        %907 = vmatprep.subr.mxu0 0.0
        %908 = vmatpush1.msra.mxu0 0.0
        %909 = vmatprep.subr.mxu0 0.0
        %910 = vmatpush1.msra.mxu0 0.0
        %911 = vmatprep.subr.mxu0 0.0
        %912 = vmatpush1.msra.mxu0 0.0
        %913 = vmatprep.subr.mxu0 0.0
        %914 = vmatpush1.msra.mxu0 0.0
        %915 = vmatprep.subr.mxu0 0.0
        %916 = vmatpush1.msra.mxu0 0.0
        %917 = vmatprep.subr.mxu0 0.0
        %918 = vmatpush1.msra.mxu0 0.0
        %919 = vmatprep.subr.mxu0 0.0
        %920 = vmatpush1.msra.mxu0 0.0
        %921 = vmatprep.subr.mxu0 0.0
        %922 = vmatpush1.msra.mxu0 0.0
        %923 = vmatprep.subr.mxu0 0.0
        %924 = vmatpush1.msra.mxu0 0.0
        %925 = vmatprep.subr.mxu0 0.0
        %926 = vmatpush1.msra.mxu0 0.0
        %927 = vmatprep.subr.mxu0 0.0
        %928 = vmatpush1.msra.mxu0 0.0
        %929 = vmatprep.subr.mxu0 0.0
        %930 = vmatpush1.msra.mxu0 0.0
        %931 = vmatprep.subr.mxu0 0.0
        %932 = vmatpush1.msra.mxu0 0.0
        %933 = vmatprep.subr.mxu0 0.0
        %934 = vmatpush1.msra.mxu0 0.0
        %935 = vmatprep.subr.mxu0 0.0
        %936 = vmatpush1.msra.mxu0 0.0
        %937 = vmatprep.subr.mxu0 0.0
        %938 = vmatpush1.msra.mxu0 0.0
        %939 = vmatprep.subr.mxu0 0.0
        %940 = vmatpush1.msra.mxu0 0.0
        %941 = vmatprep.subr.mxu0 0.0
        %942 = vmatpush1.msra.mxu0 0.0
        %943 = vmatprep.subr.mxu0 0.0
        %944 = vmatpush1.msra.mxu0 0.0
        %945 = vmatprep.subr.mxu0 0.0
        %946 = vmatpush1.msra.mxu0 0.0
        %947 = vmatprep.subr.mxu0 0.0
        %948 = vmatpush1.msra.mxu0 0.0
        %949 = vmatprep.subr.mxu0 0.0
        %950 = vmatpush1.msra.mxu0 0.0
        %951 = vmatprep.subr.mxu0 0.0
        %952 = vmatpush1.msra.mxu0 0.0
        %953 = vmatprep.subr.mxu0 0.0
        %954 = vmatpush1.msra.mxu0 0.0
        %955 = vmatprep.subr.mxu0 0.0
        %956 = vmatpush1.msra.mxu0 0.0
        %957 = vmatprep.subr.mxu0 0.0
        %958 = vmatpush1.msra.mxu0 0.0
        %959 = vmatprep.subr.mxu0 0.0
        %960 = vmatpush1.msra.mxu0 0.0
        %961 = vmatprep.subr.mxu0 0.0
        %962 = vmatpush1.msra.mxu0 0.0
        %963 = vmatprep.subr.mxu0 0.0
        %964 = vmatpush1.msra.mxu0 0.0
        %965 = vmatprep.mubr.f32.mxu0 0.0
        %966 = vmatmul.mubr.f32.gmra.mrb[0].mxu0 %v899
        %v967 = vpop.f32.mrb[0].mxu0
        %v968 = vadd.f32 0.0, %v967
        %v969 = vpop.f32.mrb[0].mxu0
        %970 = vdwg.mxu0
        %971 = vrot.lane.b32.xlu0 %v793, 124
        %v972 = vpop.permute.xlu0 %971
        %973 = vrot.lane.b32.xlu0 %v793, 116
        %v974 = vpop.permute.xlu0 %973
        %v975 = vsel %vm807, %v972, 0
        %v977 = vsel %vm807, %v974, 0
        %979 = vmatprep.subr.mxu0 0.0
        %980 = vmatpush1.xpose.msra.mxu0 %v977
        %981 = vmatprep.subr.mxu0 0.0
        %982 = vmatpush1.xpose.msra.mxu0 0.0
        %983 = vmatprep.subr.mxu0 0.0
        %984 = vmatpush1.xpose.msra.mxu0 0.0
        %985 = vmatprep.subr.mxu0 0.0
        %986 = vmatpush1.xpose.msra.mxu0 0.0
        %987 = vmatprep.subr.mxu0 0.0
        %988 = vmatpush1.xpose.msra.mxu0 0.0
        %989 = vmatprep.subr.mxu0 0.0
        %990 = vmatpush1.xpose.msra.mxu0 0.0
        %991 = vmatprep.subr.mxu0 0.0
        %992 = vmatpush1.xpose.msra.mxu0 0.0
        %993 = vmatprep.subr.mxu0 0.0
        %994 = vmatpush1.xpose.msra.mxu0 0.0
        %995 = vmatprep.subr.mxu0 0.0
        %996 = vmatpush1.xpose.msra.mxu0 0.0
        %997 = vmatprep.subr.mxu0 0.0
        %998 = vmatpush1.xpose.msra.mxu0 0.0
        %999 = vmatprep.subr.mxu0 0.0
        %1000 = vmatpush1.xpose.msra.mxu0 0.0
        %1001 = vmatprep.subr.mxu0 0.0
        %1002 = vmatpush1.xpose.msra.mxu0 0.0
        %1003 = vmatprep.subr.mxu0 0.0
        %1004 = vmatpush1.xpose.msra.mxu0 0.0
        %1005 = vmatprep.subr.mxu0 0.0
        %1006 = vmatpush1.xpose.msra.mxu0 0.0
        %1007 = vmatprep.subr.mxu0 0.0
        %1008 = vmatpush1.xpose.msra.mxu0 0.0
        %1009 = vmatprep.subr.mxu0 0.0
        %1010 = vmatpush1.xpose.msra.mxu0 0.0
        %1011 = vmatprep.subr.mxu0 0.0
        %1012 = vmatpush1.xpose.msra.mxu0 0.0
        %1013 = vmatprep.subr.mxu0 0.0
        %1014 = vmatpush1.xpose.msra.mxu0 0.0
        %1015 = vmatprep.subr.mxu0 0.0
        %1016 = vmatpush1.xpose.msra.mxu0 0.0
        %1017 = vmatprep.subr.mxu0 0.0
        %1018 = vmatpush1.xpose.msra.mxu0 0.0
        %1019 = vmatprep.subr.mxu0 0.0
        %1020 = vmatpush1.xpose.msra.mxu0 0.0
        %1021 = vmatprep.subr.mxu0 0.0
        %1022 = vmatpush1.xpose.msra.mxu0 0.0
        %1023 = vmatprep.subr.mxu0 0.0
        %1024 = vmatpush1.xpose.msra.mxu0 0.0
        %1025 = vmatprep.subr.mxu0 0.0
        %1026 = vmatpush1.xpose.msra.mxu0 0.0
        %1027 = vmatprep.subr.mxu0 0.0
        %1028 = vmatpush1.xpose.msra.mxu0 0.0
        %1029 = vmatprep.subr.mxu0 0.0
        %1030 = vmatpush1.xpose.msra.mxu0 0.0
        %1031 = vmatprep.subr.mxu0 0.0
        %1032 = vmatpush1.xpose.msra.mxu0 0.0
        %1033 = vmatprep.subr.mxu0 0.0
        %1034 = vmatpush1.xpose.msra.mxu0 0.0
        %1035 = vmatprep.subr.mxu0 0.0
        %1036 = vmatpush1.xpose.msra.mxu0 0.0
        %1037 = vmatprep.subr.mxu0 0.0
        %1038 = vmatpush1.xpose.msra.mxu0 0.0
        %1039 = vmatprep.subr.mxu0 0.0
        %1040 = vmatpush1.xpose.msra.mxu0 0.0
        %1041 = vmatprep.subr.mxu0 0.0
        %1042 = vmatpush1.xpose.msra.mxu0 0.0
        %1043 = vmatprep.mubr.f32.mxu0 0.0
        %1044 = vmatmul.mubr.f32.gmra.mrb[0].mxu0 %v975
        %v1045 = vpop.f32.mrb[0].mxu0
        %v1046 = vadd.f32 0.0, %v1045
        %v1047 = vpop.f32.mrb[0].mxu0
        %1048 = vdwg.mxu0
        %v1049 = vmul.f32 %v1046, 0.5
        %v1050 = vadd.f32 %v1049, %v803
        %v1051 = vsel %vm750, %v1050, -inf
        %1052 = vmax.xlane.f32.xlu0 %v1051
        %v1053 = vpop.xlane.xlu0 %1052
        %v1054 = vsub.f32 %v1050, %v1053
        %v1055 = vmul.f32 %v1054, 1.442695
        %v1056 = vpow.pop %v1055
        %v1057 = vsel %vm750, %v1056, 0.0
        %1058 = vadd.xlane.f32.xlu0 %v1057
        %v1059 = vpop.xlane.xlu0 %1058
        %v1060 = vrcp.pop %v1059
        %v1061 = vmul.f32 %v1056, %v1060
        %1062 = vrot.lane.b32.xlu0 %v793, 108
        %v1063 = vpop.permute.xlu0 %1062
        %v1066 = vsel %vm750, %v1061, 0
        %1068 = vmatprep.subr.mxu0 0.0
        %1069 = vmatpush1.msra.mxu0 %v1063
        %1070 = vmatprep.subr.mxu0 0.0
        %1071 = vmatpush1.msra.mxu0 0.0
        %1072 = vmatprep.subr.mxu0 0.0
        %1073 = vmatpush1.msra.mxu0 0.0
        %1074 = vmatprep.subr.mxu0 0.0
        %1075 = vmatpush1.msra.mxu0 0.0
        %1076 = vmatprep.subr.mxu0 0.0
        %1077 = vmatpush1.msra.mxu0 0.0
        %1078 = vmatprep.subr.mxu0 0.0
        %1079 = vmatpush1.msra.mxu0 0.0
        %1080 = vmatprep.subr.mxu0 0.0
        %1081 = vmatpush1.msra.mxu0 0.0
        %1082 = vmatprep.subr.mxu0 0.0
        %1083 = vmatpush1.msra.mxu0 0.0
        %1084 = vmatprep.subr.mxu0 0.0
        %1085 = vmatpush1.msra.mxu0 0.0
        %1086 = vmatprep.subr.mxu0 0.0
        %1087 = vmatpush1.msra.mxu0 0.0
        %1088 = vmatprep.subr.mxu0 0.0
        %1089 = vmatpush1.msra.mxu0 0.0
        %1090 = vmatprep.subr.mxu0 0.0
        %1091 = vmatpush1.msra.mxu0 0.0
        %1092 = vmatprep.subr.mxu0 0.0
        %1093 = vmatpush1.msra.mxu0 0.0
        %1094 = vmatprep.subr.mxu0 0.0
        %1095 = vmatpush1.msra.mxu0 0.0
        %1096 = vmatprep.subr.mxu0 0.0
        %1097 = vmatpush1.msra.mxu0 0.0
        %1098 = vmatprep.subr.mxu0 0.0
        %1099 = vmatpush1.msra.mxu0 0.0
        %1100 = vmatprep.subr.mxu0 0.0
        %1101 = vmatpush1.msra.mxu0 0.0
        %1102 = vmatprep.subr.mxu0 0.0
        %1103 = vmatpush1.msra.mxu0 0.0
        %1104 = vmatprep.subr.mxu0 0.0
        %1105 = vmatpush1.msra.mxu0 0.0
        %1106 = vmatprep.subr.mxu0 0.0
        %1107 = vmatpush1.msra.mxu0 0.0
        %1108 = vmatprep.subr.mxu0 0.0
        %1109 = vmatpush1.msra.mxu0 0.0
        %1110 = vmatprep.subr.mxu0 0.0
        %1111 = vmatpush1.msra.mxu0 0.0
        %1112 = vmatprep.subr.mxu0 0.0
        %1113 = vmatpush1.msra.mxu0 0.0
        %1114 = vmatprep.subr.mxu0 0.0
        %1115 = vmatpush1.msra.mxu0 0.0
        %1116 = vmatprep.subr.mxu0 0.0
        %1117 = vmatpush1.msra.mxu0 0.0
        %1118 = vmatprep.subr.mxu0 0.0
        %1119 = vmatpush1.msra.mxu0 0.0
        %1120 = vmatprep.subr.mxu0 0.0
        %1121 = vmatpush1.msra.mxu0 0.0
        %1122 = vmatprep.subr.mxu0 0.0
        %1123 = vmatpush1.msra.mxu0 0.0
        %1124 = vmatprep.subr.mxu0 0.0
        %1125 = vmatpush1.msra.mxu0 0.0
        %1126 = vmatprep.subr.mxu0 0.0
        %1127 = vmatpush1.msra.mxu0 0.0
        %1128 = vmatprep.subr.mxu0 0.0
        %1129 = vmatpush1.msra.mxu0 0.0
        %1130 = vmatprep.subr.mxu0 0.0
        %1131 = vmatpush1.msra.mxu0 0.0
        %1132 = vmatprep.mubr.f32.mxu0 0.0
        %1133 = vmatmul.mubr.f32.gmra.mrb[0].mxu0 %v1066
        %v1134 = vpop.f32.mrb[0].mxu0
        %v1135 = vadd.f32 0.0, %v1134
        %v1136 = vpop.f32.mrb[0].mxu0
        %1137 = vdwg.mxu0
        %1139 = vrot.lane.b32.xlu0 %v1135, 4
        %v1140 = vpop.permute.xlu0 %1139
        %v1142 = vsel %vm807, %v968, %v1140
        %v1143 = vpack.c.bf16 %v1142, %v1142
        %v1145 = vlaneseq
        %v1146 = vshrl.u32 %v1145, 7
        %v1147 = vsub.s32 0, %v1146
        %v1148 = vrot.slane %v740, %v1147
        %v1151 = vsel %vm750, %v1143, 0
        %v1154 = vsel %vm754, %v739, 0
        %1156 = vmatprep.subr.bf16.mxu0 0
        %1157 = vmatpush1.bf16.msra.mxu0 %v1154
        %1158 = vmatprep.subr.bf16.mxu0 0
        %1159 = vmatpush1.bf16.msra.mxu0 0
        %1160 = vmatprep.subr.bf16.mxu0 0
        %1161 = vmatpush1.bf16.msra.mxu0 0
        %1162 = vmatprep.subr.bf16.mxu0 0
        %1163 = vmatpush1.bf16.msra.mxu0 0
        %1164 = vmatprep.subr.bf16.mxu0 0
        %1165 = vmatpush1.bf16.msra.mxu0 0
        %1166 = vmatprep.subr.bf16.mxu0 0
        %1167 = vmatpush1.bf16.msra.mxu0 0
        %1168 = vmatprep.subr.bf16.mxu0 0
        %1169 = vmatpush1.bf16.msra.mxu0 0
        %1170 = vmatprep.subr.bf16.mxu0 0
        %1171 = vmatpush1.bf16.msra.mxu0 0
        %1172 = vmatprep.subr.bf16.mxu0 0
        %1173 = vmatpush1.bf16.msra.mxu0 0
        %1174 = vmatprep.subr.bf16.mxu0 0
        %1175 = vmatpush1.bf16.msra.mxu0 0
        %1176 = vmatprep.subr.bf16.mxu0 0
        %1177 = vmatpush1.bf16.msra.mxu0 0
        %1178 = vmatprep.subr.bf16.mxu0 0
        %1179 = vmatpush1.bf16.msra.mxu0 0
        %1180 = vmatprep.subr.bf16.mxu0 0
        %1181 = vmatpush1.bf16.msra.mxu0 0
        %1182 = vmatprep.subr.bf16.mxu0 0
        %1183 = vmatpush1.bf16.msra.mxu0 0
        %1184 = vmatprep.subr.bf16.mxu0 0
        %1185 = vmatpush1.bf16.msra.mxu0 0
        %1186 = vmatprep.subr.bf16.mxu0 0
        %1187 = vmatpush1.bf16.msra.mxu0 0
        %1188 = vmatprep.mubr.bf16.mxu0 0
        %1189 = vmatmul.mubr.bf16.gmra.mrb[0].mxu0 %v1151
        %v1190 = vpop.f32.mrb[0].mxu0
        %v1191 = vadd.f32 %v1148, %v1190
        %v1192 = vpop.f32.mrb[0].mxu0
        %v1193 = vpop.f32.mrb[0].mxu0
        %v1194 = vpop.f32.mrb[0].mxu0
        %1195 = vdwg.mxu0
        %v1196 = vadd.f32 %v734, %v1191
        %v1197 = vsel %vm750, %v1196, 0.0
        %1198 = vadd.xlane.f32.xlu0 %v1197
        %v1199 = vpop.xlane.xlu0 %1198
        %v1200 = vrcp.pop 8.0
        %v1201 = vmul.f32 %v1199, %v1200
        %v1202 = vsub.f32 %v1196, %v1201
        %v1203 = vmul.f32 %v1202, %v1202
        %v1204 = vsel %vm750, %v1203, 0.0
        %1205 = vadd.xlane.f32.xlu0 %v1204
        %v1206 = vpop.xlane.xlu0 %1205
        %v1207 = vmul.f32 %v1206, %v1200
        %v1208 = vadd.f32 %v1207, 1e-05
        %v1209 = vrsqrt.pop %v1208
        %v1210 = vmul.f32 %v1202, %v1209
        %v1212 = vlaneseq
        %v1213 = vshrl.u32 %v1212, 7
        %v1214 = vsub.s32 0, %v1213
        %v1215 = vrot.slane %v741, %v1214
        %v1217 = vmul.f32 %v1210, %v1215
        %v1219 = vlaneseq
        %v1220 = vshrl.u32 %v1219, 7
        %v1221 = vsub.s32 0, %v1220
        %v1222 = vrot.slane %v742, %v1221
        %v1224 = vadd.f32 %v1217, %v1222
        %v1225 = vld [vmem:[%s8] sm:$0xf]
        %v1226 = vld [vmem:[%s9] sm:$0x1]
        %v1227 = vld [vmem:[%s10] sm:$0xf]
        %v1228 = vld [vmem:[%s11] sm:$0x1]
        %v1229 = vld [vmem:[%s12] sm:$0xf]
        %v1230 = vld [vmem:[%s13] sm:$0x1]
        %v1231 = vld [vmem:[%s14] sm:$0x1]
        %v1232 = vld [vmem:[%s15] sm:$0x1]
        %v1233 = vpack.c.bf16 %v1224, %v1224
        %v1235 = vlaneseq
        %v1236 = vshrl.u32 %v1235, 7
        %v1237 = vsub.s32 0, %v1236
        %v1238 = vrot.slane %v1226, %v1237
        %v1241 = vsel %vm750, %v1233, 0
        %v1244 = vsel %vm754, %v1225, 0
        %1246 = vmatprep.subr.bf16.mxu0 0
        %1247 = vmatpush1.bf16.msra.mxu0 %v1244
        %1248 = vmatprep.subr.bf16.mxu0 0
        %1249 = vmatpush1.bf16.msra.mxu0 0
        %1250 = vmatprep.subr.bf16.mxu0 0
        %1251 = vmatpush1.bf16.msra.mxu0 0
        %1252 = vmatprep.subr.bf16.mxu0 0
        %1253 = vmatpush1.bf16.msra.mxu0 0
        %1254 = vmatprep.subr.bf16.mxu0 0
        %1255 = vmatpush1.bf16.msra.mxu0 0
        %1256 = vmatprep.subr.bf16.mxu0 0
        %1257 = vmatpush1.bf16.msra.mxu0 0
        %1258 = vmatprep.subr.bf16.mxu0 0
        %1259 = vmatpush1.bf16.msra.mxu0 0
        %1260 = vmatprep.subr.bf16.mxu0 0
        %1261 = vmatpush1.bf16.msra.mxu0 0
        %1262 = vmatprep.subr.bf16.mxu0 0
        %1263 = vmatpush1.bf16.msra.mxu0 0
        %1264 = vmatprep.subr.bf16.mxu0 0
        %1265 = vmatpush1.bf16.msra.mxu0 0
        %1266 = vmatprep.subr.bf16.mxu0 0
        %1267 = vmatpush1.bf16.msra.mxu0 0
        %1268 = vmatprep.subr.bf16.mxu0 0
        %1269 = vmatpush1.bf16.msra.mxu0 0
        %1270 = vmatprep.subr.bf16.mxu0 0
        %1271 = vmatpush1.bf16.msra.mxu0 0
        %1272 = vmatprep.subr.bf16.mxu0 0
        %1273 = vmatpush1.bf16.msra.mxu0 0
        %1274 = vmatprep.subr.bf16.mxu0 0
        %1275 = vmatpush1.bf16.msra.mxu0 0
        %1276 = vmatprep.subr.bf16.mxu0 0
        %1277 = vmatpush1.bf16.msra.mxu0 0
        %1278 = vmatprep.mubr.bf16.mxu0 0
        %1279 = vmatmul.mubr.bf16.gmra.mrb[0].mxu0 %v1241
        %v1280 = vpop.f32.mrb[0].mxu0
        %v1281 = vadd.f32 %v1238, %v1280
        %v1282 = vpop.f32.mrb[0].mxu0
        %v1283 = vpop.f32.mrb[0].mxu0
        %v1284 = vpop.f32.mrb[0].mxu0
        %1285 = vdwg.mxu0
        %v1286 = vpack.c.bf16 %v736, %v735
        %v1288 = vlaneseq
        %v1289 = vshrl.u32 %v1288, 7
        %v1290 = vsub.s32 0, %v1289
        %v1291 = vrot.slane %v1228, %v1290
        %v1294 = vsel %vm750, %v1286, 0
        %v1297 = vsel %vm754, %v1227, 0
        %1299 = vmatprep.subr.bf16.mxu0 0
        %1300 = vmatpush1.bf16.msra.mxu0 %v1297
        %1301 = vmatprep.subr.bf16.mxu0 0
        %1302 = vmatpush1.bf16.msra.mxu0 0
        %1303 = vmatprep.subr.bf16.mxu0 0
        %1304 = vmatpush1.bf16.msra.mxu0 0
        %1305 = vmatprep.subr.bf16.mxu0 0
        %1306 = vmatpush1.bf16.msra.mxu0 0
        %1307 = vmatprep.subr.bf16.mxu0 0
        %1308 = vmatpush1.bf16.msra.mxu0 0
        %1309 = vmatprep.subr.bf16.mxu0 0
        %1310 = vmatpush1.bf16.msra.mxu0 0
        %1311 = vmatprep.subr.bf16.mxu0 0
        %1312 = vmatpush1.bf16.msra.mxu0 0
        %1313 = vmatprep.subr.bf16.mxu0 0
        %1314 = vmatpush1.bf16.msra.mxu0 0
        %1315 = vmatprep.subr.bf16.mxu0 0
        %1316 = vmatpush1.bf16.msra.mxu0 0
        %1317 = vmatprep.subr.bf16.mxu0 0
        %1318 = vmatpush1.bf16.msra.mxu0 0
        %1319 = vmatprep.subr.bf16.mxu0 0
        %1320 = vmatpush1.bf16.msra.mxu0 0
        %1321 = vmatprep.subr.bf16.mxu0 0
        %1322 = vmatpush1.bf16.msra.mxu0 0
        %1323 = vmatprep.subr.bf16.mxu0 0
        %1324 = vmatpush1.bf16.msra.mxu0 0
        %1325 = vmatprep.subr.bf16.mxu0 0
        %1326 = vmatpush1.bf16.msra.mxu0 0
        %1327 = vmatprep.subr.bf16.mxu0 0
        %1328 = vmatpush1.bf16.msra.mxu0 0
        %1329 = vmatprep.subr.bf16.mxu0 0
        %1330 = vmatpush1.bf16.msra.mxu0 0
        %1331 = vmatprep.mubr.bf16.mxu0 0
        %1332 = vmatmul.mubr.bf16.gmra.mrb[0].mxu0 %v1294
        %v1333 = vpop.f32.mrb[0].mxu0
        %v1334 = vadd.f32 %v1291, %v1333
        %v1335 = vpop.f32.mrb[0].mxu0
        %v1336 = vpop.f32.mrb[0].mxu0
        %v1337 = vadd.f32 %v1291, %v1336
        %v1338 = vpop.f32.mrb[0].mxu0
        %1339 = vdwg.mxu0
        %v1341 = vsel %vm807, %v1281, 0
        %v1344 = vsel %vm807, %v1334, 0
        %v1347 = vsel %vm807, %v1337, 0
        %1349 = vmatprep.subr.mxu0 0.0
        %1350 = vmatpush1.xpose.msra.mxu0 %v1344
        %1351 = vmatprep.subr.mxu0 0.0
        %1352 = vmatpush1.xpose.msra.mxu0 %v1347
        %1353 = vmatprep.subr.mxu0 0.0
        %1354 = vmatpush1.xpose.msra.mxu0 0.0
        %1355 = vmatprep.subr.mxu0 0.0
        %1356 = vmatpush1.xpose.msra.mxu0 0.0
        %1357 = vmatprep.subr.mxu0 0.0
        %1358 = vmatpush1.xpose.msra.mxu0 0.0
        %1359 = vmatprep.subr.mxu0 0.0
        %1360 = vmatpush1.xpose.msra.mxu0 0.0
        %1361 = vmatprep.subr.mxu0 0.0
        %1362 = vmatpush1.xpose.msra.mxu0 0.0
        %1363 = vmatprep.subr.mxu0 0.0
        %1364 = vmatpush1.xpose.msra.mxu0 0.0
        %1365 = vmatprep.subr.mxu0 0.0
        %1366 = vmatpush1.xpose.msra.mxu0 0.0
        %1367 = vmatprep.subr.mxu0 0.0
        %1368 = vmatpush1.xpose.msra.mxu0 0.0
        %1369 = vmatprep.subr.mxu0 0.0
        %1370 = vmatpush1.xpose.msra.mxu0 0.0
        %1371 = vmatprep.subr.mxu0 0.0
        %1372 = vmatpush1.xpose.msra.mxu0 0.0
        %1373 = vmatprep.subr.mxu0 0.0
        %1374 = vmatpush1.xpose.msra.mxu0 0.0
        %1375 = vmatprep.subr.mxu0 0.0
        %1376 = vmatpush1.xpose.msra.mxu0 0.0
        %1377 = vmatprep.subr.mxu0 0.0
        %1378 = vmatpush1.xpose.msra.mxu0 0.0
        %1379 = vmatprep.subr.mxu0 0.0
        %1380 = vmatpush1.xpose.msra.mxu0 0.0
        %1381 = vmatprep.subr.mxu0 0.0
        %1382 = vmatpush1.xpose.msra.mxu0 0.0
        %1383 = vmatprep.subr.mxu0 0.0
        %1384 = vmatpush1.xpose.msra.mxu0 0.0
        %1385 = vmatprep.subr.mxu0 0.0
        %1386 = vmatpush1.xpose.msra.mxu0 0.0
        %1387 = vmatprep.subr.mxu0 0.0
        %1388 = vmatpush1.xpose.msra.mxu0 0.0
        %1389 = vmatprep.subr.mxu0 0.0
        %1390 = vmatpush1.xpose.msra.mxu0 0.0
        %1391 = vmatprep.subr.mxu0 0.0
        %1392 = vmatpush1.xpose.msra.mxu0 0.0
        %1393 = vmatprep.subr.mxu0 0.0
        %1394 = vmatpush1.xpose.msra.mxu0 0.0
        %1395 = vmatprep.subr.mxu0 0.0
        %1396 = vmatpush1.xpose.msra.mxu0 0.0
        %1397 = vmatprep.subr.mxu0 0.0
        %1398 = vmatpush1.xpose.msra.mxu0 0.0
        %1399 = vmatprep.subr.mxu0 0.0
        %1400 = vmatpush1.xpose.msra.mxu0 0.0
        %1401 = vmatprep.subr.mxu0 0.0
        %1402 = vmatpush1.xpose.msra.mxu0 0.0
        %1403 = vmatprep.subr.mxu0 0.0
        %1404 = vmatpush1.xpose.msra.mxu0 0.0
        %1405 = vmatprep.subr.mxu0 0.0
        %1406 = vmatpush1.xpose.msra.mxu0 0.0
        %1407 = vmatprep.subr.mxu0 0.0
        %1408 = vmatpush1.xpose.msra.mxu0 0.0
        %1409 = vmatprep.subr.mxu0 0.0
        %1410 = vmatpush1.xpose.msra.mxu0 0.0
        %1411 = vmatprep.subr.mxu0 0.0
        %1412 = vmatpush1.xpose.msra.mxu0 0.0
        %1413 = vmatprep.mubr.f32.mxu0 0.0
        %1414 = vmatmul.mubr.f32.gmra.mrb[0].mxu0 %v1341
        %v1415 = vpop.f32.mrb[0].mxu0
        %v1416 = vadd.f32 0.0, %v1415
        %v1417 = vpop.f32.mrb[0].mxu0
        %1418 = vdwg.mxu0
        %v1419 = vmul.f32 %v1416, 0.5
        %vm1420 = vcmask 130048
        %v1421 = vsel %vm1420, %v1419, -inf
        %1422 = vmax.xlane.f32.xlu0 %v1421
        %v1423 = vpop.xlane.xlu0 %1422
        %v1424 = vsub.f32 %v1419, %v1423
        %v1425 = vmul.f32 %v1424, 1.442695
        %v1426 = vpow.pop %v1425
        %v1427 = vsel %vm1420, %v1426, 0.0
        %1428 = vadd.xlane.f32.xlu0 %v1427
        %v1429 = vpop.xlane.xlu0 %1428
        %v1430 = vrcp.pop %v1429
        %v1431 = vmul.f32 %v1426, %v1430
        %1432 = vrot.lane.b32.xlu0 %v1334, 120
        %v1433 = vpop.permute.xlu0 %1432
        %1434 = vrot.lane.b32.xlu0 %v1337, 120
        %v1435 = vpop.permute.xlu0 %1434
        %v1439 = vsel %vm1420, %v1431, 0
        %1441 = vmatprep.subr.mxu0 0.0
        %1442 = vmatpush1.msra.mxu0 %v1433
        %1443 = vmatprep.subr.mxu0 0.0
        %1444 = vmatpush1.msra.mxu0 %v1435
        %1445 = vmatprep.subr.mxu0 0.0
        %1446 = vmatpush1.msra.mxu0 0.0
        %1447 = vmatprep.subr.mxu0 0.0
        %1448 = vmatpush1.msra.mxu0 0.0
        %1449 = vmatprep.subr.mxu0 0.0
        %1450 = vmatpush1.msra.mxu0 0.0
        %1451 = vmatprep.subr.mxu0 0.0
        %1452 = vmatpush1.msra.mxu0 0.0
        %1453 = vmatprep.subr.mxu0 0.0
        %1454 = vmatpush1.msra.mxu0 0.0
        %1455 = vmatprep.subr.mxu0 0.0
        %1456 = vmatpush1.msra.mxu0 0.0
        %1457 = vmatprep.subr.mxu0 0.0
        %1458 = vmatpush1.msra.mxu0 0.0
        %1459 = vmatprep.subr.mxu0 0.0
        %1460 = vmatpush1.msra.mxu0 0.0
        %1461 = vmatprep.subr.mxu0 0.0
        %1462 = vmatpush1.msra.mxu0 0.0
        %1463 = vmatprep.subr.mxu0 0.0
        %1464 = vmatpush1.msra.mxu0 0.0
        %1465 = vmatprep.subr.mxu0 0.0
        %1466 = vmatpush1.msra.mxu0 0.0
        %1467 = vmatprep.subr.mxu0 0.0
        %1468 = vmatpush1.msra.mxu0 0.0
        %1469 = vmatprep.subr.mxu0 0.0
        %1470 = vmatpush1.msra.mxu0 0.0
        %1471 = vmatprep.subr.mxu0 0.0
        %1472 = vmatpush1.msra.mxu0 0.0
        %1473 = vmatprep.subr.mxu0 0.0
        %1474 = vmatpush1.msra.mxu0 0.0
        %1475 = vmatprep.subr.mxu0 0.0
        %1476 = vmatpush1.msra.mxu0 0.0
        %1477 = vmatprep.subr.mxu0 0.0
        %1478 = vmatpush1.msra.mxu0 0.0
        %1479 = vmatprep.subr.mxu0 0.0
        %1480 = vmatpush1.msra.mxu0 0.0
        %1481 = vmatprep.subr.mxu0 0.0
        %1482 = vmatpush1.msra.mxu0 0.0
        %1483 = vmatprep.subr.mxu0 0.0
        %1484 = vmatpush1.msra.mxu0 0.0
        %1485 = vmatprep.subr.mxu0 0.0
        %1486 = vmatpush1.msra.mxu0 0.0
        %1487 = vmatprep.subr.mxu0 0.0
        %1488 = vmatpush1.msra.mxu0 0.0
        %1489 = vmatprep.subr.mxu0 0.0
        %1490 = vmatpush1.msra.mxu0 0.0
        %1491 = vmatprep.subr.mxu0 0.0
        %1492 = vmatpush1.msra.mxu0 0.0
        %1493 = vmatprep.subr.mxu0 0.0
        %1494 = vmatpush1.msra.mxu0 0.0
        %1495 = vmatprep.subr.mxu0 0.0
        %1496 = vmatpush1.msra.mxu0 0.0
        %1497 = vmatprep.subr.mxu0 0.0
        %1498 = vmatpush1.msra.mxu0 0.0
        %1499 = vmatprep.subr.mxu0 0.0
        %1500 = vmatpush1.msra.mxu0 0.0
        %1501 = vmatprep.subr.mxu0 0.0
        %1502 = vmatpush1.msra.mxu0 0.0
        %1503 = vmatprep.subr.mxu0 0.0
        %1504 = vmatpush1.msra.mxu0 0.0
        %1505 = vmatprep.mubr.f32.mxu0 0.0
        %1506 = vmatmul.mubr.f32.gmra.mrb[0].mxu0 %v1439
        %v1507 = vpop.f32.mrb[0].mxu0
        %v1508 = vadd.f32 0.0, %v1507
        %v1509 = vpop.f32.mrb[0].mxu0
        %1510 = vdwg.mxu0
        %1511 = vrot.lane.b32.xlu0 %v1281, 124
        %v1512 = vpop.permute.xlu0 %1511
        %1513 = vrot.lane.b32.xlu0 %v1334, 124
        %v1514 = vpop.permute.xlu0 %1513
        %1515 = vrot.lane.b32.xlu0 %v1337, 124
        %v1516 = vpop.permute.xlu0 %1515
        %v1517 = vsel %vm807, %v1512, 0
        %v1519 = vsel %vm807, %v1514, 0
        %v1521 = vsel %vm807, %v1516, 0
        %1523 = vmatprep.subr.mxu0 0.0
        %1524 = vmatpush1.xpose.msra.mxu0 %v1519
        %1525 = vmatprep.subr.mxu0 0.0
        %1526 = vmatpush1.xpose.msra.mxu0 %v1521
        %1527 = vmatprep.subr.mxu0 0.0
        %1528 = vmatpush1.xpose.msra.mxu0 0.0
        %1529 = vmatprep.subr.mxu0 0.0
        %1530 = vmatpush1.xpose.msra.mxu0 0.0
        %1531 = vmatprep.subr.mxu0 0.0
        %1532 = vmatpush1.xpose.msra.mxu0 0.0
        %1533 = vmatprep.subr.mxu0 0.0
        %1534 = vmatpush1.xpose.msra.mxu0 0.0
        %1535 = vmatprep.subr.mxu0 0.0
        %1536 = vmatpush1.xpose.msra.mxu0 0.0
        %1537 = vmatprep.subr.mxu0 0.0
        %1538 = vmatpush1.xpose.msra.mxu0 0.0
        %1539 = vmatprep.subr.mxu0 0.0
        %1540 = vmatpush1.xpose.msra.mxu0 0.0
        %1541 = vmatprep.subr.mxu0 0.0
        %1542 = vmatpush1.xpose.msra.mxu0 0.0
        %1543 = vmatprep.subr.mxu0 0.0
        %1544 = vmatpush1.xpose.msra.mxu0 0.0
        %1545 = vmatprep.subr.mxu0 0.0
        %1546 = vmatpush1.xpose.msra.mxu0 0.0
        %1547 = vmatprep.subr.mxu0 0.0
        %1548 = vmatpush1.xpose.msra.mxu0 0.0
        %1549 = vmatprep.subr.mxu0 0.0
        %1550 = vmatpush1.xpose.msra.mxu0 0.0
        %1551 = vmatprep.subr.mxu0 0.0
        %1552 = vmatpush1.xpose.msra.mxu0 0.0
        %1553 = vmatprep.subr.mxu0 0.0
        %1554 = vmatpush1.xpose.msra.mxu0 0.0
        %1555 = vmatprep.subr.mxu0 0.0
        %1556 = vmatpush1.xpose.msra.mxu0 0.0
        %1557 = vmatprep.subr.mxu0 0.0
        %1558 = vmatpush1.xpose.msra.mxu0 0.0
        %1559 = vmatprep.subr.mxu0 0.0
        %1560 = vmatpush1.xpose.msra.mxu0 0.0
        %1561 = vmatprep.subr.mxu0 0.0
        %1562 = vmatpush1.xpose.msra.mxu0 0.0
        %1563 = vmatprep.subr.mxu0 0.0
        %1564 = vmatpush1.xpose.msra.mxu0 0.0
        %1565 = vmatprep.subr.mxu0 0.0
        %1566 = vmatpush1.xpose.msra.mxu0 0.0
        %1567 = vmatprep.subr.mxu0 0.0
        %1568 = vmatpush1.xpose.msra.mxu0 0.0
        %1569 = vmatprep.subr.mxu0 0.0
        %1570 = vmatpush1.xpose.msra.mxu0 0.0
        %1571 = vmatprep.subr.mxu0 0.0
        %1572 = vmatpush1.xpose.msra.mxu0 0.0
        %1573 = vmatprep.subr.mxu0 0.0
        %1574 = vmatpush1.xpose.msra.mxu0 0.0
        %1575 = vmatprep.subr.mxu0 0.0
        %1576 = vmatpush1.xpose.msra.mxu0 0.0
        %1577 = vmatprep.subr.mxu0 0.0
        %1578 = vmatpush1.xpose.msra.mxu0 0.0
        %1579 = vmatprep.subr.mxu0 0.0
        %1580 = vmatpush1.xpose.msra.mxu0 0.0
        %1581 = vmatprep.subr.mxu0 0.0
        %1582 = vmatpush1.xpose.msra.mxu0 0.0
        %1583 = vmatprep.subr.mxu0 0.0
        %1584 = vmatpush1.xpose.msra.mxu0 0.0
        %1585 = vmatprep.subr.mxu0 0.0
        %1586 = vmatpush1.xpose.msra.mxu0 0.0
        %1587 = vmatprep.mubr.f32.mxu0 0.0
        %1588 = vmatmul.mubr.f32.gmra.mrb[0].mxu0 %v1517
        %v1589 = vpop.f32.mrb[0].mxu0
        %v1590 = vadd.f32 0.0, %v1589
        %v1591 = vpop.f32.mrb[0].mxu0
        %1592 = vdwg.mxu0
        %v1593 = vmul.f32 %v1590, 0.5
        %v1594 = vsel %vm1420, %v1593, -inf
        %1595 = vmax.xlane.f32.xlu0 %v1594
        %v1596 = vpop.xlane.xlu0 %1595
        %v1597 = vsub.f32 %v1593, %v1596
        %v1598 = vmul.f32 %v1597, 1.442695
        %v1599 = vpow.pop %v1598
        %v1600 = vsel %vm1420, %v1599, 0.0
        %1601 = vadd.xlane.f32.xlu0 %v1600
        %v1602 = vpop.xlane.xlu0 %1601
        %v1603 = vrcp.pop %v1602
        %v1604 = vmul.f32 %v1599, %v1603
        %1605 = vrot.lane.b32.xlu0 %v1334, 116
        %v1606 = vpop.permute.xlu0 %1605
        %1607 = vrot.lane.b32.xlu0 %v1337, 116
        %v1608 = vpop.permute.xlu0 %1607
        %v1612 = vsel %vm1420, %v1604, 0
        %1614 = vmatprep.subr.mxu0 0.0
        %1615 = vmatpush1.msra.mxu0 %v1606
        %1616 = vmatprep.subr.mxu0 0.0
        %1617 = vmatpush1.msra.mxu0 %v1608
        %1618 = vmatprep.subr.mxu0 0.0
        %1619 = vmatpush1.msra.mxu0 0.0
        %1620 = vmatprep.subr.mxu0 0.0
        %1621 = vmatpush1.msra.mxu0 0.0
        %1622 = vmatprep.subr.mxu0 0.0
        %1623 = vmatpush1.msra.mxu0 0.0
        %1624 = vmatprep.subr.mxu0 0.0
        %1625 = vmatpush1.msra.mxu0 0.0
        %1626 = vmatprep.subr.mxu0 0.0
        %1627 = vmatpush1.msra.mxu0 0.0
        %1628 = vmatprep.subr.mxu0 0.0
        %1629 = vmatpush1.msra.mxu0 0.0
        %1630 = vmatprep.subr.mxu0 0.0
        %1631 = vmatpush1.msra.mxu0 0.0
        %1632 = vmatprep.subr.mxu0 0.0
        %1633 = vmatpush1.msra.mxu0 0.0
        %1634 = vmatprep.subr.mxu0 0.0
        %1635 = vmatpush1.msra.mxu0 0.0
        %1636 = vmatprep.subr.mxu0 0.0
        %1637 = vmatpush1.msra.mxu0 0.0
        %1638 = vmatprep.subr.mxu0 0.0
        %1639 = vmatpush1.msra.mxu0 0.0
        %1640 = vmatprep.subr.mxu0 0.0
        %1641 = vmatpush1.msra.mxu0 0.0
        %1642 = vmatprep.subr.mxu0 0.0
        %1643 = vmatpush1.msra.mxu0 0.0
        %1644 = vmatprep.subr.mxu0 0.0
        %1645 = vmatpush1.msra.mxu0 0.0
        %1646 = vmatprep.subr.mxu0 0.0
        %1647 = vmatpush1.msra.mxu0 0.0
        %1648 = vmatprep.subr.mxu0 0.0
        %1649 = vmatpush1.msra.mxu0 0.0
        %1650 = vmatprep.subr.mxu0 0.0
        %1651 = vmatpush1.msra.mxu0 0.0
        %1652 = vmatprep.subr.mxu0 0.0
        %1653 = vmatpush1.msra.mxu0 0.0
        %1654 = vmatprep.subr.mxu0 0.0
        %1655 = vmatpush1.msra.mxu0 0.0
        %1656 = vmatprep.subr.mxu0 0.0
        %1657 = vmatpush1.msra.mxu0 0.0
        %1658 = vmatprep.subr.mxu0 0.0
        %1659 = vmatpush1.msra.mxu0 0.0
        %1660 = vmatprep.subr.mxu0 0.0
        %1661 = vmatpush1.msra.mxu0 0.0
        %1662 = vmatprep.subr.mxu0 0.0
        %1663 = vmatpush1.msra.mxu0 0.0
        %1664 = vmatprep.subr.mxu0 0.0
        %1665 = vmatpush1.msra.mxu0 0.0
        %1666 = vmatprep.subr.mxu0 0.0
        %1667 = vmatpush1.msra.mxu0 0.0
        %1668 = vmatprep.subr.mxu0 0.0
        %1669 = vmatpush1.msra.mxu0 0.0
        %1670 = vmatprep.subr.mxu0 0.0
        %1671 = vmatpush1.msra.mxu0 0.0
        %1672 = vmatprep.subr.mxu0 0.0
        %1673 = vmatpush1.msra.mxu0 0.0
        %1674 = vmatprep.subr.mxu0 0.0
        %1675 = vmatpush1.msra.mxu0 0.0
        %1676 = vmatprep.subr.mxu0 0.0
        %1677 = vmatpush1.msra.mxu0 0.0
        %1678 = vmatprep.mubr.f32.mxu0 0.0
        %1679 = vmatmul.mubr.f32.gmra.mrb[0].mxu0 %v1612
        %v1680 = vpop.f32.mrb[0].mxu0
        %v1681 = vadd.f32 0.0, %v1680
        %v1682 = vpop.f32.mrb[0].mxu0
        %1683 = vdwg.mxu0
        %1685 = vrot.lane.b32.xlu0 %v1681, 4
        %v1686 = vpop.permute.xlu0 %1685
        %v1688 = vsel %vm807, %v1508, %v1686
        %v1689 = vpack.c.bf16 %v1688, %v1688
        %v1691 = vlaneseq
        %v1692 = vshrl.u32 %v1691, 7
        %v1693 = vsub.s32 0, %v1692
        %v1694 = vrot.slane %v1230, %v1693
        %v1697 = vsel %vm750, %v1689, 0
        %v1700 = vsel %vm754, %v1229, 0
        %1702 = vmatprep.subr.bf16.mxu0 0
        %1703 = vmatpush1.bf16.msra.mxu0 %v1700
        %1704 = vmatprep.subr.bf16.mxu0 0
        %1705 = vmatpush1.bf16.msra.mxu0 0
        %1706 = vmatprep.subr.bf16.mxu0 0
        %1707 = vmatpush1.bf16.msra.mxu0 0
        %1708 = vmatprep.subr.bf16.mxu0 0
        %1709 = vmatpush1.bf16.msra.mxu0 0
        %1710 = vmatprep.subr.bf16.mxu0 0
        %1711 = vmatpush1.bf16.msra.mxu0 0
        %1712 = vmatprep.subr.bf16.mxu0 0
        %1713 = vmatpush1.bf16.msra.mxu0 0
        %1714 = vmatprep.subr.bf16.mxu0 0
        %1715 = vmatpush1.bf16.msra.mxu0 0
        %1716 = vmatprep.subr.bf16.mxu0 0
        %1717 = vmatpush1.bf16.msra.mxu0 0
        %1718 = vmatprep.subr.bf16.mxu0 0
        %1719 = vmatpush1.bf16.msra.mxu0 0
        %1720 = vmatprep.subr.bf16.mxu0 0
        %1721 = vmatpush1.bf16.msra.mxu0 0
        %1722 = vmatprep.subr.bf16.mxu0 0
        %1723 = vmatpush1.bf16.msra.mxu0 0
        %1724 = vmatprep.subr.bf16.mxu0 0
        %1725 = vmatpush1.bf16.msra.mxu0 0
        %1726 = vmatprep.subr.bf16.mxu0 0
        %1727 = vmatpush1.bf16.msra.mxu0 0
        %1728 = vmatprep.subr.bf16.mxu0 0
        %1729 = vmatpush1.bf16.msra.mxu0 0
        %1730 = vmatprep.subr.bf16.mxu0 0
        %1731 = vmatpush1.bf16.msra.mxu0 0
        %1732 = vmatprep.subr.bf16.mxu0 0
        %1733 = vmatpush1.bf16.msra.mxu0 0
        %1734 = vmatprep.mubr.bf16.mxu0 0
        %1735 = vmatmul.mubr.bf16.gmra.mrb[0].mxu0 %v1697
        %v1736 = vpop.f32.mrb[0].mxu0
        %v1737 = vadd.f32 %v1694, %v1736
        %v1738 = vpop.f32.mrb[0].mxu0
        %v1739 = vpop.f32.mrb[0].mxu0
        %v1740 = vpop.f32.mrb[0].mxu0
        %1741 = vdwg.mxu0
        %v1742 = vadd.f32 %v1224, %v1737
        %v1743 = vsel %vm750, %v1742, 0.0
        %1744 = vadd.xlane.f32.xlu0 %v1743
        %v1745 = vpop.xlane.xlu0 %1744
        %v1746 = vmul.f32 %v1745, %v1200
        %v1747 = vsub.f32 %v1742, %v1746
        %v1748 = vmul.f32 %v1747, %v1747
        %v1749 = vsel %vm750, %v1748, 0.0
        %1750 = vadd.xlane.f32.xlu0 %v1749
        %v1751 = vpop.xlane.xlu0 %1750
        %v1752 = vmul.f32 %v1751, %v1200
        %v1753 = vadd.f32 %v1752, 1e-05
        %v1754 = vrsqrt.pop %v1753
        %v1755 = vmul.f32 %v1747, %v1754
        %v1757 = vlaneseq
        %v1758 = vshrl.u32 %v1757, 7
        %v1759 = vsub.s32 0, %v1758
        %v1760 = vrot.slane %v1231, %v1759
        %v1762 = vmul.f32 %v1755, %v1760
        %v1764 = vlaneseq
        %v1765 = vshrl.u32 %v1764, 7
        %v1766 = vsub.s32 0, %v1765
        %v1767 = vrot.slane %v1232, %v1766
        %v1769 = vadd.f32 %v1762, %v1767
        %v1770 = vld [vmem:[%s16] sm:$0xf]
        %v1771 = vld [vmem:[%s17] sm:$0x1]
        %v1772 = vld [vmem:[%s18] sm:$0xf]
        %v1773 = vld [vmem:[%s18 + $0x4] sm:$0xf]
        %v1774 = vld [vmem:[%s18 + $0x8] sm:$0xf]
        %v1775 = vld [vmem:[%s18 + $0xc] sm:$0xf]
        %v1776 = vld [vmem:[%s19] sm:$0x1]
        %v1777 = vld [vmem:[%s20] sm:$0x1]
        %v1778 = vld [vmem:[%s21] sm:$0x1]
        %v1779 = vpack.c.bf16 %v1769, %v1769
        %v1781 = vlaneseq
        %v1782 = vshrl.u32 %v1781, 7
        %v1783 = vsub.s32 0, %v1782
        %v1784 = vrot.slane %v1771, %v1783
        %v1787 = vsel %vm750, %v1779, 0
        %v1790 = vsel %vm754, %v1770, 0
        %1792 = vmatprep.subr.bf16.mxu0 0
        %1793 = vmatpush1.bf16.msra.mxu0 %v1790
        %1794 = vmatprep.subr.bf16.mxu0 0
        %1795 = vmatpush1.bf16.msra.mxu0 0
        %1796 = vmatprep.subr.bf16.mxu0 0
        %1797 = vmatpush1.bf16.msra.mxu0 0
        %1798 = vmatprep.subr.bf16.mxu0 0
        %1799 = vmatpush1.bf16.msra.mxu0 0
        %1800 = vmatprep.subr.bf16.mxu0 0
        %1801 = vmatpush1.bf16.msra.mxu0 0
        %1802 = vmatprep.subr.bf16.mxu0 0
        %1803 = vmatpush1.bf16.msra.mxu0 0
        %1804 = vmatprep.subr.bf16.mxu0 0
        %1805 = vmatpush1.bf16.msra.mxu0 0
        %1806 = vmatprep.subr.bf16.mxu0 0
        %1807 = vmatpush1.bf16.msra.mxu0 0
        %1808 = vmatprep.subr.bf16.mxu0 0
        %1809 = vmatpush1.bf16.msra.mxu0 0
        %1810 = vmatprep.subr.bf16.mxu0 0
        %1811 = vmatpush1.bf16.msra.mxu0 0
        %1812 = vmatprep.subr.bf16.mxu0 0
        %1813 = vmatpush1.bf16.msra.mxu0 0
        %1814 = vmatprep.subr.bf16.mxu0 0
        %1815 = vmatpush1.bf16.msra.mxu0 0
        %1816 = vmatprep.subr.bf16.mxu0 0
        %1817 = vmatpush1.bf16.msra.mxu0 0
        %1818 = vmatprep.subr.bf16.mxu0 0
        %1819 = vmatpush1.bf16.msra.mxu0 0
        %1820 = vmatprep.subr.bf16.mxu0 0
        %1821 = vmatpush1.bf16.msra.mxu0 0
        %1822 = vmatprep.subr.bf16.mxu0 0
        %1823 = vmatpush1.bf16.msra.mxu0 0
        %1824 = vmatprep.mubr.bf16.mxu0 0
        %1825 = vmatmul.mubr.bf16.gmra.mrb[0].mxu0 %v1787
        %v1826 = vpop.f32.mrb[0].mxu0
        %v1827 = vadd.f32 %v1784, %v1826
        %v1828 = vpop.f32.mrb[0].mxu0
        %v1829 = vpop.f32.mrb[0].mxu0
        %v1830 = vpop.f32.mrb[0].mxu0
        %1831 = vdwg.mxu0
        %v1832 = vmax.f32 %v1827, 0.0
        %v1833 = vpack.c.bf16 %v1832, %v1832
        %v1835 = vlaneseq
        %v1836 = vshrl.u32 %v1835, 7
        %v1837 = vsub.s32 0, %v1836
        %v1838 = vrot.slane %v1776, %v1837
        %v1844 = vunpack.c.l.b16 %v1772
        %v1845 = vunpack.c.l.b16 %v1773
        %v1846 = vunpack.c.l.b16 %v1774
        %v1847 = vunpack.c.l.b16 %v1775
        %v1848 = vpack.c.b16 %v1845, %v1844
        %v1849 = vpack.c.b16 %v1847, %v1846
        %vm1852 = vcmask 261120
        %v1854 = vsel %vm1852, %v1833, 0
        %1856 = vmatprep.subr.bf16.mxu0 0
        %1857 = vmatpush1.bf16.msra.mxu0 %v1848
        %1858 = vmatprep.subr.bf16.mxu0 0
        %1859 = vmatpush1.bf16.msra.mxu0 %v1849
        %1860 = vmatprep.subr.bf16.mxu0 0
        %1861 = vmatpush1.bf16.msra.mxu0 0
        %1862 = vmatprep.subr.bf16.mxu0 0
        %1863 = vmatpush1.bf16.msra.mxu0 0
        %1864 = vmatprep.subr.bf16.mxu0 0
        %1865 = vmatpush1.bf16.msra.mxu0 0
        %1866 = vmatprep.subr.bf16.mxu0 0
        %1867 = vmatpush1.bf16.msra.mxu0 0
        %1868 = vmatprep.subr.bf16.mxu0 0
        %1869 = vmatpush1.bf16.msra.mxu0 0
        %1870 = vmatprep.subr.bf16.mxu0 0
        %1871 = vmatpush1.bf16.msra.mxu0 0
        %1872 = vmatprep.subr.bf16.mxu0 0
        %1873 = vmatpush1.bf16.msra.mxu0 0
        %1874 = vmatprep.subr.bf16.mxu0 0
        %1875 = vmatpush1.bf16.msra.mxu0 0
        %1876 = vmatprep.subr.bf16.mxu0 0
        %1877 = vmatpush1.bf16.msra.mxu0 0
        %1878 = vmatprep.subr.bf16.mxu0 0
        %1879 = vmatpush1.bf16.msra.mxu0 0
        %1880 = vmatprep.subr.bf16.mxu0 0
        %1881 = vmatpush1.bf16.msra.mxu0 0
        %1882 = vmatprep.subr.bf16.mxu0 0
        %1883 = vmatpush1.bf16.msra.mxu0 0
        %1884 = vmatprep.subr.bf16.mxu0 0
        %1885 = vmatpush1.bf16.msra.mxu0 0
        %1886 = vmatprep.subr.bf16.mxu0 0
        %1887 = vmatpush1.bf16.msra.mxu0 0
        %1888 = vmatprep.mubr.bf16.mxu0 0
        %1889 = vmatmul.mubr.bf16.gmra.mrb[0].mxu0 %v1854
        %v1890 = vpop.f32.mrb[0].mxu0
        %v1891 = vadd.f32 %v1838, %v1890
        %v1892 = vpop.f32.mrb[0].mxu0
        %v1893 = vpop.f32.mrb[0].mxu0
        %v1894 = vpop.f32.mrb[0].mxu0
        %1895 = vdwg.mxu0
        %v1896 = vadd.f32 %v1769, %v1891
        %v1897 = vsel %vm750, %v1896, 0.0
        %1898 = vadd.xlane.f32.xlu0 %v1897
        %v1899 = vpop.xlane.xlu0 %1898
        %v1900 = vmul.f32 %v1899, %v1200
        %v1901 = vsub.f32 %v1896, %v1900
        %v1902 = vmul.f32 %v1901, %v1901
        %v1903 = vsel %vm750, %v1902, 0.0
        %1904 = vadd.xlane.f32.xlu0 %v1903
        %v1905 = vpop.xlane.xlu0 %1904
        %v1906 = vmul.f32 %v1905, %v1200
        %v1907 = vadd.f32 %v1906, 1e-05
        %v1908 = vrsqrt.pop %v1907
        %v1909 = vmul.f32 %v1901, %v1908
        %v1911 = vlaneseq
        %v1912 = vshrl.u32 %v1911, 7
        %v1913 = vsub.s32 0, %v1912
        %v1914 = vrot.slane %v1777, %v1913
        %v1916 = vmul.f32 %v1909, %v1914
        %v1918 = vlaneseq
        %v1919 = vshrl.u32 %v1918, 7
        %v1920 = vsub.s32 0, %v1919
        %v1921 = vrot.slane %v1778, %v1920
        %v1923 = vadd.f32 %v1916, %v1921
        %s1924 = scalar_lea.vmem %s2, 4
        %v1925 = vld [vmem:[%s1924] sm:$0xf]
        %s1926 = scalar_lea.vmem %s3, 1
        %v1927 = vld [vmem:[%s1926] sm:$0x1]
        %s1928 = scalar_lea.vmem %s4, 4
        %v1929 = vld [vmem:[%s1928] sm:$0xf]
        %s1930 = scalar_lea.vmem %s5, 1
        %v1931 = vld [vmem:[%s1930] sm:$0x1]
        %s1932 = scalar_lea.vmem %s6, 1
        %v1933 = vld [vmem:[%s1932] sm:$0x1]
        %s1934 = scalar_lea.vmem %s7, 1
        %v1935 = vld [vmem:[%s1934] sm:$0x1]
        %v1936 = vpack.c.bf16 %v1923, %v1923
        %v1938 = vlaneseq
        %v1939 = vshrl.u32 %v1938, 7
        %v1940 = vsub.s32 0, %v1939
        %v1941 = vrot.slane %v1927, %v1940
        %v1944 = vsel %vm750, %v1936, 0
        %v1947 = vsel %vm754, %v1925, 0
        %1949 = vmatprep.subr.bf16.mxu0 0
        %1950 = vmatpush1.bf16.msra.mxu0 %v1947
        %1951 = vmatprep.subr.bf16.mxu0 0
        %1952 = vmatpush1.bf16.msra.mxu0 0
        %1953 = vmatprep.subr.bf16.mxu0 0
        %1954 = vmatpush1.bf16.msra.mxu0 0
        %1955 = vmatprep.subr.bf16.mxu0 0
        %1956 = vmatpush1.bf16.msra.mxu0 0
        %1957 = vmatprep.subr.bf16.mxu0 0
        %1958 = vmatpush1.bf16.msra.mxu0 0
        %1959 = vmatprep.subr.bf16.mxu0 0
        %1960 = vmatpush1.bf16.msra.mxu0 0
        %1961 = vmatprep.subr.bf16.mxu0 0
        %1962 = vmatpush1.bf16.msra.mxu0 0
        %1963 = vmatprep.subr.bf16.mxu0 0
        %1964 = vmatpush1.bf16.msra.mxu0 0
        %1965 = vmatprep.subr.bf16.mxu0 0
        %1966 = vmatpush1.bf16.msra.mxu0 0
        %1967 = vmatprep.subr.bf16.mxu0 0
        %1968 = vmatpush1.bf16.msra.mxu0 0
        %1969 = vmatprep.subr.bf16.mxu0 0
        %1970 = vmatpush1.bf16.msra.mxu0 0
        %1971 = vmatprep.subr.bf16.mxu0 0
        %1972 = vmatpush1.bf16.msra.mxu0 0
        %1973 = vmatprep.subr.bf16.mxu0 0
        %1974 = vmatpush1.bf16.msra.mxu0 0
        %1975 = vmatprep.subr.bf16.mxu0 0
        %1976 = vmatpush1.bf16.msra.mxu0 0
        %1977 = vmatprep.subr.bf16.mxu0 0
        %1978 = vmatpush1.bf16.msra.mxu0 0
        %1979 = vmatprep.subr.bf16.mxu0 0
        %1980 = vmatpush1.bf16.msra.mxu0 0
        %1981 = vmatprep.mubr.bf16.mxu0 0
        %1982 = vmatmul.mubr.bf16.gmra.mrb[0].mxu0 %v1944
        %v1983 = vpop.f32.mrb[0].mxu0
        %v1984 = vadd.f32 %v1941, %v1983
        %v1985 = vpop.f32.mrb[0].mxu0
        %v1986 = vpop.f32.mrb[0].mxu0
        %v1987 = vpop.f32.mrb[0].mxu0
        %1988 = vdwg.mxu0
        %1990 = vrot.lane.b32.xlu0 %v1984, 120
        %v1991 = vpop.permute.xlu0 %1990
        %v1992 = vsel %vm807, %v1984, 0
        %v1994 = vsel %vm807, %v1991, 0
        %1996 = vmatprep.subr.mxu0 0.0
        %1997 = vmatpush1.xpose.msra.mxu0 %v1994
        %1998 = vmatprep.subr.mxu0 0.0
        %1999 = vmatpush1.xpose.msra.mxu0 0.0
        %2000 = vmatprep.subr.mxu0 0.0
        %2001 = vmatpush1.xpose.msra.mxu0 0.0
        %2002 = vmatprep.subr.mxu0 0.0
        %2003 = vmatpush1.xpose.msra.mxu0 0.0
        %2004 = vmatprep.subr.mxu0 0.0
        %2005 = vmatpush1.xpose.msra.mxu0 0.0
        %2006 = vmatprep.subr.mxu0 0.0
        %2007 = vmatpush1.xpose.msra.mxu0 0.0
        %2008 = vmatprep.subr.mxu0 0.0
        %2009 = vmatpush1.xpose.msra.mxu0 0.0
        %2010 = vmatprep.subr.mxu0 0.0
        %2011 = vmatpush1.xpose.msra.mxu0 0.0
        %2012 = vmatprep.subr.mxu0 0.0
        %2013 = vmatpush1.xpose.msra.mxu0 0.0
        %2014 = vmatprep.subr.mxu0 0.0
        %2015 = vmatpush1.xpose.msra.mxu0 0.0
        %2016 = vmatprep.subr.mxu0 0.0
        %2017 = vmatpush1.xpose.msra.mxu0 0.0
        %2018 = vmatprep.subr.mxu0 0.0
        %2019 = vmatpush1.xpose.msra.mxu0 0.0
        %2020 = vmatprep.subr.mxu0 0.0
        %2021 = vmatpush1.xpose.msra.mxu0 0.0
        %2022 = vmatprep.subr.mxu0 0.0
        %2023 = vmatpush1.xpose.msra.mxu0 0.0
        %2024 = vmatprep.subr.mxu0 0.0
        %2025 = vmatpush1.xpose.msra.mxu0 0.0
        %2026 = vmatprep.subr.mxu0 0.0
        %2027 = vmatpush1.xpose.msra.mxu0 0.0
        %2028 = vmatprep.subr.mxu0 0.0
        %2029 = vmatpush1.xpose.msra.mxu0 0.0
        %2030 = vmatprep.subr.mxu0 0.0
        %2031 = vmatpush1.xpose.msra.mxu0 0.0
        %2032 = vmatprep.subr.mxu0 0.0
        %2033 = vmatpush1.xpose.msra.mxu0 0.0
        %2034 = vmatprep.subr.mxu0 0.0
        %2035 = vmatpush1.xpose.msra.mxu0 0.0
        %2036 = vmatprep.subr.mxu0 0.0
        %2037 = vmatpush1.xpose.msra.mxu0 0.0
        %2038 = vmatprep.subr.mxu0 0.0
        %2039 = vmatpush1.xpose.msra.mxu0 0.0
        %2040 = vmatprep.subr.mxu0 0.0
        %2041 = vmatpush1.xpose.msra.mxu0 0.0
        %2042 = vmatprep.subr.mxu0 0.0
        %2043 = vmatpush1.xpose.msra.mxu0 0.0
        %2044 = vmatprep.subr.mxu0 0.0
        %2045 = vmatpush1.xpose.msra.mxu0 0.0
        %2046 = vmatprep.subr.mxu0 0.0
        %2047 = vmatpush1.xpose.msra.mxu0 0.0
        %2048 = vmatprep.subr.mxu0 0.0
        %2049 = vmatpush1.xpose.msra.mxu0 0.0
        %2050 = vmatprep.subr.mxu0 0.0
        %2051 = vmatpush1.xpose.msra.mxu0 0.0
        %2052 = vmatprep.subr.mxu0 0.0
        %2053 = vmatpush1.xpose.msra.mxu0 0.0
        %2054 = vmatprep.subr.mxu0 0.0
        %2055 = vmatpush1.xpose.msra.mxu0 0.0
        %2056 = vmatprep.subr.mxu0 0.0
        %2057 = vmatpush1.xpose.msra.mxu0 0.0
        %2058 = vmatprep.subr.mxu0 0.0
        %2059 = vmatpush1.xpose.msra.mxu0 0.0
        %2060 = vmatprep.mubr.f32.mxu0 0.0
        %2061 = vmatmul.mubr.f32.gmra.mrb[0].mxu0 %v1992
        %v2062 = vpop.f32.mrb[0].mxu0
        %v2063 = vadd.f32 0.0, %v2062
        %v2064 = vpop.f32.mrb[0].mxu0
        %2065 = vdwg.mxu0
        %v2066 = vmul.f32 %v2063, 0.5
        %v2067 = vadd.f32 %v2066, %v803
        %v2068 = vsel %vm750, %v2067, -inf
        %2069 = vmax.xlane.f32.xlu0 %v2068
        %v2070 = vpop.xlane.xlu0 %2069
        %v2071 = vsub.f32 %v2067, %v2070
        %v2072 = vmul.f32 %v2071, 1.442695
        %v2073 = vpow.pop %v2072
        %v2074 = vsel %vm750, %v2073, 0.0
        %2075 = vadd.xlane.f32.xlu0 %v2074
        %v2076 = vpop.xlane.xlu0 %2075
        %v2077 = vrcp.pop %v2076
        %v2078 = vmul.f32 %v2073, %v2077
        %2079 = vrot.lane.b32.xlu0 %v1984, 112
        %v2080 = vpop.permute.xlu0 %2079
        %v2083 = vsel %vm750, %v2078, 0
        %2085 = vmatprep.subr.mxu0 0.0
        %2086 = vmatpush1.msra.mxu0 %v2080
        %2087 = vmatprep.subr.mxu0 0.0
        %2088 = vmatpush1.msra.mxu0 0.0
        %2089 = vmatprep.subr.mxu0 0.0
        %2090 = vmatpush1.msra.mxu0 0.0
        %2091 = vmatprep.subr.mxu0 0.0
        %2092 = vmatpush1.msra.mxu0 0.0
        %2093 = vmatprep.subr.mxu0 0.0
        %2094 = vmatpush1.msra.mxu0 0.0
        %2095 = vmatprep.subr.mxu0 0.0
        %2096 = vmatpush1.msra.mxu0 0.0
        %2097 = vmatprep.subr.mxu0 0.0
        %2098 = vmatpush1.msra.mxu0 0.0
        %2099 = vmatprep.subr.mxu0 0.0
        %2100 = vmatpush1.msra.mxu0 0.0
        %2101 = vmatprep.subr.mxu0 0.0
        %2102 = vmatpush1.msra.mxu0 0.0
        %2103 = vmatprep.subr.mxu0 0.0
        %2104 = vmatpush1.msra.mxu0 0.0
        %2105 = vmatprep.subr.mxu0 0.0
        %2106 = vmatpush1.msra.mxu0 0.0
        %2107 = vmatprep.subr.mxu0 0.0
        %2108 = vmatpush1.msra.mxu0 0.0
        %2109 = vmatprep.subr.mxu0 0.0
        %2110 = vmatpush1.msra.mxu0 0.0
        %2111 = vmatprep.subr.mxu0 0.0
        %2112 = vmatpush1.msra.mxu0 0.0
        %2113 = vmatprep.subr.mxu0 0.0
        %2114 = vmatpush1.msra.mxu0 0.0
        %2115 = vmatprep.subr.mxu0 0.0
        %2116 = vmatpush1.msra.mxu0 0.0
        %2117 = vmatprep.subr.mxu0 0.0
        %2118 = vmatpush1.msra.mxu0 0.0
        %2119 = vmatprep.subr.mxu0 0.0
        %2120 = vmatpush1.msra.mxu0 0.0
        %2121 = vmatprep.subr.mxu0 0.0
        %2122 = vmatpush1.msra.mxu0 0.0
        %2123 = vmatprep.subr.mxu0 0.0
        %2124 = vmatpush1.msra.mxu0 0.0
        %2125 = vmatprep.subr.mxu0 0.0
        %2126 = vmatpush1.msra.mxu0 0.0
        %2127 = vmatprep.subr.mxu0 0.0
        %2128 = vmatpush1.msra.mxu0 0.0
        %2129 = vmatprep.subr.mxu0 0.0
        %2130 = vmatpush1.msra.mxu0 0.0
        %2131 = vmatprep.subr.mxu0 0.0
        %2132 = vmatpush1.msra.mxu0 0.0
        %2133 = vmatprep.subr.mxu0 0.0
        %2134 = vmatpush1.msra.mxu0 0.0
        %2135 = vmatprep.subr.mxu0 0.0
        %2136 = vmatpush1.msra.mxu0 0.0
        %2137 = vmatprep.subr.mxu0 0.0
        %2138 = vmatpush1.msra.mxu0 0.0
        %2139 = vmatprep.subr.mxu0 0.0
        %2140 = vmatpush1.msra.mxu0 0.0
        %2141 = vmatprep.subr.mxu0 0.0
        %2142 = vmatpush1.msra.mxu0 0.0
        %2143 = vmatprep.subr.mxu0 0.0
        %2144 = vmatpush1.msra.mxu0 0.0
        %2145 = vmatprep.subr.mxu0 0.0
        %2146 = vmatpush1.msra.mxu0 0.0
        %2147 = vmatprep.subr.mxu0 0.0
        %2148 = vmatpush1.msra.mxu0 0.0
        %2149 = vmatprep.mubr.f32.mxu0 0.0
        %2150 = vmatmul.mubr.f32.gmra.mrb[0].mxu0 %v2083
        %v2151 = vpop.f32.mrb[0].mxu0
        %v2152 = vadd.f32 0.0, %v2151
        %v2153 = vpop.f32.mrb[0].mxu0
        %2154 = vdwg.mxu0
        %2155 = vrot.lane.b32.xlu0 %v1984, 124
        %v2156 = vpop.permute.xlu0 %2155
        %2157 = vrot.lane.b32.xlu0 %v1984, 116
        %v2158 = vpop.permute.xlu0 %2157
        %v2159 = vsel %vm807, %v2156, 0
        %v2161 = vsel %vm807, %v2158, 0
        %2163 = vmatprep.subr.mxu0 0.0
        %2164 = vmatpush1.xpose.msra.mxu0 %v2161
        %2165 = vmatprep.subr.mxu0 0.0
        %2166 = vmatpush1.xpose.msra.mxu0 0.0
        %2167 = vmatprep.subr.mxu0 0.0
        %2168 = vmatpush1.xpose.msra.mxu0 0.0
        %2169 = vmatprep.subr.mxu0 0.0
        %2170 = vmatpush1.xpose.msra.mxu0 0.0
        %2171 = vmatprep.subr.mxu0 0.0
        %2172 = vmatpush1.xpose.msra.mxu0 0.0
        %2173 = vmatprep.subr.mxu0 0.0
        %2174 = vmatpush1.xpose.msra.mxu0 0.0
        %2175 = vmatprep.subr.mxu0 0.0
        %2176 = vmatpush1.xpose.msra.mxu0 0.0
        %2177 = vmatprep.subr.mxu0 0.0
        %2178 = vmatpush1.xpose.msra.mxu0 0.0
        %2179 = vmatprep.subr.mxu0 0.0
        %2180 = vmatpush1.xpose.msra.mxu0 0.0
        %2181 = vmatprep.subr.mxu0 0.0
        %2182 = vmatpush1.xpose.msra.mxu0 0.0
        %2183 = vmatprep.subr.mxu0 0.0
        %2184 = vmatpush1.xpose.msra.mxu0 0.0
        %2185 = vmatprep.subr.mxu0 0.0
        %2186 = vmatpush1.xpose.msra.mxu0 0.0
        %2187 = vmatprep.subr.mxu0 0.0
        %2188 = vmatpush1.xpose.msra.mxu0 0.0
        %2189 = vmatprep.subr.mxu0 0.0
        %2190 = vmatpush1.xpose.msra.mxu0 0.0
        %2191 = vmatprep.subr.mxu0 0.0
        %2192 = vmatpush1.xpose.msra.mxu0 0.0
        %2193 = vmatprep.subr.mxu0 0.0
        %2194 = vmatpush1.xpose.msra.mxu0 0.0
        %2195 = vmatprep.subr.mxu0 0.0
        %2196 = vmatpush1.xpose.msra.mxu0 0.0
        %2197 = vmatprep.subr.mxu0 0.0
        %2198 = vmatpush1.xpose.msra.mxu0 0.0
        %2199 = vmatprep.subr.mxu0 0.0
        %2200 = vmatpush1.xpose.msra.mxu0 0.0
        %2201 = vmatprep.subr.mxu0 0.0
        %2202 = vmatpush1.xpose.msra.mxu0 0.0
        %2203 = vmatprep.subr.mxu0 0.0
        %2204 = vmatpush1.xpose.msra.mxu0 0.0
        %2205 = vmatprep.subr.mxu0 0.0
        %2206 = vmatpush1.xpose.msra.mxu0 0.0
        %2207 = vmatprep.subr.mxu0 0.0
        %2208 = vmatpush1.xpose.msra.mxu0 0.0
        %2209 = vmatprep.subr.mxu0 0.0
        %2210 = vmatpush1.xpose.msra.mxu0 0.0
        %2211 = vmatprep.subr.mxu0 0.0
        %2212 = vmatpush1.xpose.msra.mxu0 0.0
        %2213 = vmatprep.subr.mxu0 0.0
        %2214 = vmatpush1.xpose.msra.mxu0 0.0
        %2215 = vmatprep.subr.mxu0 0.0
        %2216 = vmatpush1.xpose.msra.mxu0 0.0
        %2217 = vmatprep.subr.mxu0 0.0
        %2218 = vmatpush1.xpose.msra.mxu0 0.0
        %2219 = vmatprep.subr.mxu0 0.0
        %2220 = vmatpush1.xpose.msra.mxu0 0.0
        %2221 = vmatprep.subr.mxu0 0.0
        %2222 = vmatpush1.xpose.msra.mxu0 0.0
        %2223 = vmatprep.subr.mxu0 0.0
        %2224 = vmatpush1.xpose.msra.mxu0 0.0
        %2225 = vmatprep.subr.mxu0 0.0
        %2226 = vmatpush1.xpose.msra.mxu0 0.0
        %2227 = vmatprep.mubr.f32.mxu0 0.0
        %2228 = vmatmul.mubr.f32.gmra.mrb[0].mxu0 %v2159
        %v2229 = vpop.f32.mrb[0].mxu0
        %v2230 = vadd.f32 0.0, %v2229
        %v2231 = vpop.f32.mrb[0].mxu0
        %2232 = vdwg.mxu0
        %v2233 = vmul.f32 %v2230, 0.5
        %v2234 = vadd.f32 %v2233, %v803
        %v2235 = vsel %vm750, %v2234, -inf
        %2236 = vmax.xlane.f32.xlu0 %v2235
        %v2237 = vpop.xlane.xlu0 %2236
        %v2238 = vsub.f32 %v2234, %v2237
        %v2239 = vmul.f32 %v2238, 1.442695
        %v2240 = vpow.pop %v2239
        %v2241 = vsel %vm750, %v2240, 0.0
        %2242 = vadd.xlane.f32.xlu0 %v2241
        %v2243 = vpop.xlane.xlu0 %2242
        %v2244 = vrcp.pop %v2243
        %v2245 = vmul.f32 %v2240, %v2244
        %2246 = vrot.lane.b32.xlu0 %v1984, 108
        %v2247 = vpop.permute.xlu0 %2246
        %v2250 = vsel %vm750, %v2245, 0
        %2252 = vmatprep.subr.mxu0 0.0
        %2253 = vmatpush1.msra.mxu0 %v2247
        %2254 = vmatprep.subr.mxu0 0.0
        %2255 = vmatpush1.msra.mxu0 0.0
        %2256 = vmatprep.subr.mxu0 0.0
        %2257 = vmatpush1.msra.mxu0 0.0
        %2258 = vmatprep.subr.mxu0 0.0
        %2259 = vmatpush1.msra.mxu0 0.0
        %2260 = vmatprep.subr.mxu0 0.0
        %2261 = vmatpush1.msra.mxu0 0.0
        %2262 = vmatprep.subr.mxu0 0.0
        %2263 = vmatpush1.msra.mxu0 0.0
        %2264 = vmatprep.subr.mxu0 0.0
        %2265 = vmatpush1.msra.mxu0 0.0
        %2266 = vmatprep.subr.mxu0 0.0
        %2267 = vmatpush1.msra.mxu0 0.0
        %2268 = vmatprep.subr.mxu0 0.0
        %2269 = vmatpush1.msra.mxu0 0.0
        %2270 = vmatprep.subr.mxu0 0.0
        %2271 = vmatpush1.msra.mxu0 0.0
        %2272 = vmatprep.subr.mxu0 0.0
        %2273 = vmatpush1.msra.mxu0 0.0
        %2274 = vmatprep.subr.mxu0 0.0
        %2275 = vmatpush1.msra.mxu0 0.0
        %2276 = vmatprep.subr.mxu0 0.0
        %2277 = vmatpush1.msra.mxu0 0.0
        %2278 = vmatprep.subr.mxu0 0.0
        %2279 = vmatpush1.msra.mxu0 0.0
        %2280 = vmatprep.subr.mxu0 0.0
        %2281 = vmatpush1.msra.mxu0 0.0
        %2282 = vmatprep.subr.mxu0 0.0
        %2283 = vmatpush1.msra.mxu0 0.0
        %2284 = vmatprep.subr.mxu0 0.0
        %2285 = vmatpush1.msra.mxu0 0.0
        %2286 = vmatprep.subr.mxu0 0.0
        %2287 = vmatpush1.msra.mxu0 0.0
        %2288 = vmatprep.subr.mxu0 0.0
        %2289 = vmatpush1.msra.mxu0 0.0
        %2290 = vmatprep.subr.mxu0 0.0
        %2291 = vmatpush1.msra.mxu0 0.0
        %2292 = vmatprep.subr.mxu0 0.0
        %2293 = vmatpush1.msra.mxu0 0.0
        %2294 = vmatprep.subr.mxu0 0.0
        %2295 = vmatpush1.msra.mxu0 0.0
        %2296 = vmatprep.subr.mxu0 0.0
        %2297 = vmatpush1.msra.mxu0 0.0
        %2298 = vmatprep.subr.mxu0 0.0
        %2299 = vmatpush1.msra.mxu0 0.0
        %2300 = vmatprep.subr.mxu0 0.0
        %2301 = vmatpush1.msra.mxu0 0.0
        %2302 = vmatprep.subr.mxu0 0.0
        %2303 = vmatpush1.msra.mxu0 0.0
        %2304 = vmatprep.subr.mxu0 0.0
        %2305 = vmatpush1.msra.mxu0 0.0
        %2306 = vmatprep.subr.mxu0 0.0
        %2307 = vmatpush1.msra.mxu0 0.0
        %2308 = vmatprep.subr.mxu0 0.0
        %2309 = vmatpush1.msra.mxu0 0.0
        %2310 = vmatprep.subr.mxu0 0.0
        %2311 = vmatpush1.msra.mxu0 0.0
        %2312 = vmatprep.subr.mxu0 0.0
        %2313 = vmatpush1.msra.mxu0 0.0
        %2314 = vmatprep.subr.mxu0 0.0
        %2315 = vmatpush1.msra.mxu0 0.0
        %2316 = vmatprep.mubr.f32.mxu0 0.0
        %2317 = vmatmul.mubr.f32.gmra.mrb[0].mxu0 %v2250
        %v2318 = vpop.f32.mrb[0].mxu0
        %v2319 = vadd.f32 0.0, %v2318
        %v2320 = vpop.f32.mrb[0].mxu0
        %2321 = vdwg.mxu0
        %2323 = vrot.lane.b32.xlu0 %v2319, 4
        %v2324 = vpop.permute.xlu0 %2323
        %v2326 = vsel %vm807, %v2152, %v2324
        %v2327 = vpack.c.bf16 %v2326, %v2326
        %v2329 = vlaneseq
        %v2330 = vshrl.u32 %v2329, 7
        %v2331 = vsub.s32 0, %v2330
        %v2332 = vrot.slane %v1931, %v2331
        %v2335 = vsel %vm750, %v2327, 0
        %v2338 = vsel %vm754, %v1929, 0
        %2340 = vmatprep.subr.bf16.mxu0 0
        %2341 = vmatpush1.bf16.msra.mxu0 %v2338
        %2342 = vmatprep.subr.bf16.mxu0 0
        %2343 = vmatpush1.bf16.msra.mxu0 0
        %2344 = vmatprep.subr.bf16.mxu0 0
        %2345 = vmatpush1.bf16.msra.mxu0 0
        %2346 = vmatprep.subr.bf16.mxu0 0
        %2347 = vmatpush1.bf16.msra.mxu0 0
        %2348 = vmatprep.subr.bf16.mxu0 0
        %2349 = vmatpush1.bf16.msra.mxu0 0
        %2350 = vmatprep.subr.bf16.mxu0 0
        %2351 = vmatpush1.bf16.msra.mxu0 0
        %2352 = vmatprep.subr.bf16.mxu0 0
        %2353 = vmatpush1.bf16.msra.mxu0 0
        %2354 = vmatprep.subr.bf16.mxu0 0
        %2355 = vmatpush1.bf16.msra.mxu0 0
        %2356 = vmatprep.subr.bf16.mxu0 0
        %2357 = vmatpush1.bf16.msra.mxu0 0
        %2358 = vmatprep.subr.bf16.mxu0 0
        %2359 = vmatpush1.bf16.msra.mxu0 0
        %2360 = vmatprep.subr.bf16.mxu0 0
        %2361 = vmatpush1.bf16.msra.mxu0 0
        %2362 = vmatprep.subr.bf16.mxu0 0
        %2363 = vmatpush1.bf16.msra.mxu0 0
        %2364 = vmatprep.subr.bf16.mxu0 0
        %2365 = vmatpush1.bf16.msra.mxu0 0
        %2366 = vmatprep.subr.bf16.mxu0 0
        %2367 = vmatpush1.bf16.msra.mxu0 0
        %2368 = vmatprep.subr.bf16.mxu0 0
        %2369 = vmatpush1.bf16.msra.mxu0 0
        %2370 = vmatprep.subr.bf16.mxu0 0
        %2371 = vmatpush1.bf16.msra.mxu0 0
        %2372 = vmatprep.mubr.bf16.mxu0 0
        %2373 = vmatmul.mubr.bf16.gmra.mrb[0].mxu0 %v2335
        %v2374 = vpop.f32.mrb[0].mxu0
        %v2375 = vadd.f32 %v2332, %v2374
        %v2376 = vpop.f32.mrb[0].mxu0
        %v2377 = vpop.f32.mrb[0].mxu0
        %v2378 = vpop.f32.mrb[0].mxu0
        %2379 = vdwg.mxu0
        %v2380 = vadd.f32 %v1923, %v2375
        %v2381 = vsel %vm750, %v2380, 0.0
        %2382 = vadd.xlane.f32.xlu0 %v2381
        %v2383 = vpop.xlane.xlu0 %2382
        %v2384 = vmul.f32 %v2383, %v1200
        %v2385 = vsub.f32 %v2380, %v2384
        %v2386 = vmul.f32 %v2385, %v2385
        %v2387 = vsel %vm750, %v2386, 0.0
        %2388 = vadd.xlane.f32.xlu0 %v2387
        %v2389 = vpop.xlane.xlu0 %2388
        %v2390 = vmul.f32 %v2389, %v1200
        %v2391 = vadd.f32 %v2390, 1e-05
        %v2392 = vrsqrt.pop %v2391
        %v2393 = vmul.f32 %v2385, %v2392
        %v2395 = vlaneseq
        %v2396 = vshrl.u32 %v2395, 7
        %v2397 = vsub.s32 0, %v2396
        %v2398 = vrot.slane %v1933, %v2397
        %v2400 = vmul.f32 %v2393, %v2398
        %v2402 = vlaneseq
        %v2403 = vshrl.u32 %v2402, 7
        %v2404 = vsub.s32 0, %v2403
        %v2405 = vrot.slane %v1935, %v2404
        %v2407 = vadd.f32 %v2400, %v2405
        %s2408 = scalar_lea.vmem %s8, 4
        %v2409 = vld [vmem:[%s2408] sm:$0xf]
        %s2410 = scalar_lea.vmem %s9, 1
        %v2411 = vld [vmem:[%s2410] sm:$0x1]
        %s2412 = scalar_lea.vmem %s10, 4
        %v2413 = vld [vmem:[%s2412] sm:$0xf]
        %s2414 = scalar_lea.vmem %s11, 1
        %v2415 = vld [vmem:[%s2414] sm:$0x1]
        %s2416 = scalar_lea.vmem %s12, 4
        %v2417 = vld [vmem:[%s2416] sm:$0xf]
        %s2418 = scalar_lea.vmem %s13, 1
        %v2419 = vld [vmem:[%s2418] sm:$0x1]
        %s2420 = scalar_lea.vmem %s14, 1
        %v2421 = vld [vmem:[%s2420] sm:$0x1]
        %s2422 = scalar_lea.vmem %s15, 1
        %v2423 = vld [vmem:[%s2422] sm:$0x1]
        %v2424 = vpack.c.bf16 %v2407, %v2407
        %v2426 = vlaneseq
        %v2427 = vshrl.u32 %v2426, 7
        %v2428 = vsub.s32 0, %v2427
        %v2429 = vrot.slane %v2411, %v2428
        %v2432 = vsel %vm750, %v2424, 0
        %v2435 = vsel %vm754, %v2409, 0
        %2437 = vmatprep.subr.bf16.mxu0 0
        %2438 = vmatpush1.bf16.msra.mxu0 %v2435
        %2439 = vmatprep.subr.bf16.mxu0 0
        %2440 = vmatpush1.bf16.msra.mxu0 0
        %2441 = vmatprep.subr.bf16.mxu0 0
        %2442 = vmatpush1.bf16.msra.mxu0 0
        %2443 = vmatprep.subr.bf16.mxu0 0
        %2444 = vmatpush1.bf16.msra.mxu0 0
        %2445 = vmatprep.subr.bf16.mxu0 0
        %2446 = vmatpush1.bf16.msra.mxu0 0
        %2447 = vmatprep.subr.bf16.mxu0 0
        %2448 = vmatpush1.bf16.msra.mxu0 0
        %2449 = vmatprep.subr.bf16.mxu0 0
        %2450 = vmatpush1.bf16.msra.mxu0 0
        %2451 = vmatprep.subr.bf16.mxu0 0
        %2452 = vmatpush1.bf16.msra.mxu0 0
        %2453 = vmatprep.subr.bf16.mxu0 0
        %2454 = vmatpush1.bf16.msra.mxu0 0
        %2455 = vmatprep.subr.bf16.mxu0 0
        %2456 = vmatpush1.bf16.msra.mxu0 0
        %2457 = vmatprep.subr.bf16.mxu0 0
        %2458 = vmatpush1.bf16.msra.mxu0 0
        %2459 = vmatprep.subr.bf16.mxu0 0
        %2460 = vmatpush1.bf16.msra.mxu0 0
        %2461 = vmatprep.subr.bf16.mxu0 0
        %2462 = vmatpush1.bf16.msra.mxu0 0
        %2463 = vmatprep.subr.bf16.mxu0 0
        %2464 = vmatpush1.bf16.msra.mxu0 0
        %2465 = vmatprep.subr.bf16.mxu0 0
        %2466 = vmatpush1.bf16.msra.mxu0 0
        %2467 = vmatprep.subr.bf16.mxu0 0
        %2468 = vmatpush1.bf16.msra.mxu0 0
        %2469 = vmatprep.mubr.bf16.mxu0 0
        %2470 = vmatmul.mubr.bf16.gmra.mrb[0].mxu0 %v2432
        %v2471 = vpop.f32.mrb[0].mxu0
        %v2472 = vadd.f32 %v2429, %v2471
        %v2473 = vpop.f32.mrb[0].mxu0
        %v2474 = vpop.f32.mrb[0].mxu0
        %v2475 = vpop.f32.mrb[0].mxu0
        %2476 = vdwg.mxu0
        %v2478 = vlaneseq
        %v2479 = vshrl.u32 %v2478, 7
        %v2480 = vsub.s32 0, %v2479
        %v2481 = vrot.slane %v2415, %v2480
        %v2484 = vsel %vm754, %v2413, 0
        %2486 = vmatprep.subr.bf16.mxu0 0
        %2487 = vmatpush1.bf16.msra.mxu0 %v2484
        %2488 = vmatprep.subr.bf16.mxu0 0
        %2489 = vmatpush1.bf16.msra.mxu0 0
        %2490 = vmatprep.subr.bf16.mxu0 0
        %2491 = vmatpush1.bf16.msra.mxu0 0
        %2492 = vmatprep.subr.bf16.mxu0 0
        %2493 = vmatpush1.bf16.msra.mxu0 0
        %2494 = vmatprep.subr.bf16.mxu0 0
        %2495 = vmatpush1.bf16.msra.mxu0 0
        %2496 = vmatprep.subr.bf16.mxu0 0
        %2497 = vmatpush1.bf16.msra.mxu0 0
        %2498 = vmatprep.subr.bf16.mxu0 0
        %2499 = vmatpush1.bf16.msra.mxu0 0
        %2500 = vmatprep.subr.bf16.mxu0 0
        %2501 = vmatpush1.bf16.msra.mxu0 0
        %2502 = vmatprep.subr.bf16.mxu0 0
        %2503 = vmatpush1.bf16.msra.mxu0 0
        %2504 = vmatprep.subr.bf16.mxu0 0
        %2505 = vmatpush1.bf16.msra.mxu0 0
        %2506 = vmatprep.subr.bf16.mxu0 0
        %2507 = vmatpush1.bf16.msra.mxu0 0
        %2508 = vmatprep.subr.bf16.mxu0 0
        %2509 = vmatpush1.bf16.msra.mxu0 0
        %2510 = vmatprep.subr.bf16.mxu0 0
        %2511 = vmatpush1.bf16.msra.mxu0 0
        %2512 = vmatprep.subr.bf16.mxu0 0
        %2513 = vmatpush1.bf16.msra.mxu0 0
        %2514 = vmatprep.subr.bf16.mxu0 0
        %2515 = vmatpush1.bf16.msra.mxu0 0
        %2516 = vmatprep.subr.bf16.mxu0 0
        %2517 = vmatpush1.bf16.msra.mxu0 0
        %2518 = vmatprep.mubr.bf16.mxu0 0
        %2519 = vmatmul.mubr.bf16.gmra.mrb[0].mxu0 %v1294
        %v2520 = vpop.f32.mrb[0].mxu0
        %v2521 = vadd.f32 %v2481, %v2520
        %v2522 = vpop.f32.mrb[0].mxu0
        %v2523 = vpop.f32.mrb[0].mxu0
        %v2524 = vadd.f32 %v2481, %v2523
        %v2525 = vpop.f32.mrb[0].mxu0
        %2526 = vdwg.mxu0
        %v2528 = vsel %vm807, %v2472, 0
        %v2531 = vsel %vm807, %v2521, 0
        %v2534 = vsel %vm807, %v2524, 0
        %2536 = vmatprep.subr.mxu0 0.0
        %2537 = vmatpush1.xpose.msra.mxu0 %v2531
        %2538 = vmatprep.subr.mxu0 0.0
        %2539 = vmatpush1.xpose.msra.mxu0 %v2534
        %2540 = vmatprep.subr.mxu0 0.0
        %2541 = vmatpush1.xpose.msra.mxu0 0.0
        %2542 = vmatprep.subr.mxu0 0.0
        %2543 = vmatpush1.xpose.msra.mxu0 0.0
        %2544 = vmatprep.subr.mxu0 0.0
        %2545 = vmatpush1.xpose.msra.mxu0 0.0
        %2546 = vmatprep.subr.mxu0 0.0
        %2547 = vmatpush1.xpose.msra.mxu0 0.0
        %2548 = vmatprep.subr.mxu0 0.0
        %2549 = vmatpush1.xpose.msra.mxu0 0.0
        %2550 = vmatprep.subr.mxu0 0.0
        %2551 = vmatpush1.xpose.msra.mxu0 0.0
        %2552 = vmatprep.subr.mxu0 0.0
        %2553 = vmatpush1.xpose.msra.mxu0 0.0
        %2554 = vmatprep.subr.mxu0 0.0
        %2555 = vmatpush1.xpose.msra.mxu0 0.0
        %2556 = vmatprep.subr.mxu0 0.0
        %2557 = vmatpush1.xpose.msra.mxu0 0.0
        %2558 = vmatprep.subr.mxu0 0.0
        %2559 = vmatpush1.xpose.msra.mxu0 0.0
        %2560 = vmatprep.subr.mxu0 0.0
        %2561 = vmatpush1.xpose.msra.mxu0 0.0
        %2562 = vmatprep.subr.mxu0 0.0
        %2563 = vmatpush1.xpose.msra.mxu0 0.0
        %2564 = vmatprep.subr.mxu0 0.0
        %2565 = vmatpush1.xpose.msra.mxu0 0.0
        %2566 = vmatprep.subr.mxu0 0.0
        %2567 = vmatpush1.xpose.msra.mxu0 0.0
        %2568 = vmatprep.subr.mxu0 0.0
        %2569 = vmatpush1.xpose.msra.mxu0 0.0
        %2570 = vmatprep.subr.mxu0 0.0
        %2571 = vmatpush1.xpose.msra.mxu0 0.0
        %2572 = vmatprep.subr.mxu0 0.0
        %2573 = vmatpush1.xpose.msra.mxu0 0.0
        %2574 = vmatprep.subr.mxu0 0.0
        %2575 = vmatpush1.xpose.msra.mxu0 0.0
        %2576 = vmatprep.subr.mxu0 0.0
        %2577 = vmatpush1.xpose.msra.mxu0 0.0
        %2578 = vmatprep.subr.mxu0 0.0
        %2579 = vmatpush1.xpose.msra.mxu0 0.0
        %2580 = vmatprep.subr.mxu0 0.0
        %2581 = vmatpush1.xpose.msra.mxu0 0.0
        %2582 = vmatprep.subr.mxu0 0.0
        %2583 = vmatpush1.xpose.msra.mxu0 0.0
        %2584 = vmatprep.subr.mxu0 0.0
        %2585 = vmatpush1.xpose.msra.mxu0 0.0
        %2586 = vmatprep.subr.mxu0 0.0
        %2587 = vmatpush1.xpose.msra.mxu0 0.0
        %2588 = vmatprep.subr.mxu0 0.0
        %2589 = vmatpush1.xpose.msra.mxu0 0.0
        %2590 = vmatprep.subr.mxu0 0.0
        %2591 = vmatpush1.xpose.msra.mxu0 0.0
        %2592 = vmatprep.subr.mxu0 0.0
        %2593 = vmatpush1.xpose.msra.mxu0 0.0
        %2594 = vmatprep.subr.mxu0 0.0
        %2595 = vmatpush1.xpose.msra.mxu0 0.0
        %2596 = vmatprep.subr.mxu0 0.0
        %2597 = vmatpush1.xpose.msra.mxu0 0.0
        %2598 = vmatprep.subr.mxu0 0.0
        %2599 = vmatpush1.xpose.msra.mxu0 0.0
        %2600 = vmatprep.mubr.f32.mxu0 0.0
        %2601 = vmatmul.mubr.f32.gmra.mrb[0].mxu0 %v2528
        %v2602 = vpop.f32.mrb[0].mxu0
        %v2603 = vadd.f32 0.0, %v2602
        %v2604 = vpop.f32.mrb[0].mxu0
        %2605 = vdwg.mxu0
        %v2606 = vmul.f32 %v2603, 0.5
        %v2607 = vsel %vm1420, %v2606, -inf
        %2608 = vmax.xlane.f32.xlu0 %v2607
        %v2609 = vpop.xlane.xlu0 %2608
        %v2610 = vsub.f32 %v2606, %v2609
        %v2611 = vmul.f32 %v2610, 1.442695
        %v2612 = vpow.pop %v2611
        %v2613 = vsel %vm1420, %v2612, 0.0
        %2614 = vadd.xlane.f32.xlu0 %v2613
        %v2615 = vpop.xlane.xlu0 %2614
        %v2616 = vrcp.pop %v2615
        %v2617 = vmul.f32 %v2612, %v2616
        %2618 = vrot.lane.b32.xlu0 %v2521, 120
        %v2619 = vpop.permute.xlu0 %2618
        %2620 = vrot.lane.b32.xlu0 %v2524, 120
        %v2621 = vpop.permute.xlu0 %2620
        %v2625 = vsel %vm1420, %v2617, 0
        %2627 = vmatprep.subr.mxu0 0.0
        %2628 = vmatpush1.msra.mxu0 %v2619
        %2629 = vmatprep.subr.mxu0 0.0
        %2630 = vmatpush1.msra.mxu0 %v2621
        %2631 = vmatprep.subr.mxu0 0.0
        %2632 = vmatpush1.msra.mxu0 0.0
        %2633 = vmatprep.subr.mxu0 0.0
        %2634 = vmatpush1.msra.mxu0 0.0
        %2635 = vmatprep.subr.mxu0 0.0
        %2636 = vmatpush1.msra.mxu0 0.0
        %2637 = vmatprep.subr.mxu0 0.0
        %2638 = vmatpush1.msra.mxu0 0.0
        %2639 = vmatprep.subr.mxu0 0.0
        %2640 = vmatpush1.msra.mxu0 0.0
        %2641 = vmatprep.subr.mxu0 0.0
        %2642 = vmatpush1.msra.mxu0 0.0
        %2643 = vmatprep.subr.mxu0 0.0
        %2644 = vmatpush1.msra.mxu0 0.0
        %2645 = vmatprep.subr.mxu0 0.0
        %2646 = vmatpush1.msra.mxu0 0.0
        %2647 = vmatprep.subr.mxu0 0.0
        %2648 = vmatpush1.msra.mxu0 0.0
        %2649 = vmatprep.subr.mxu0 0.0
        %2650 = vmatpush1.msra.mxu0 0.0
        %2651 = vmatprep.subr.mxu0 0.0
        %2652 = vmatpush1.msra.mxu0 0.0
        %2653 = vmatprep.subr.mxu0 0.0
        %2654 = vmatpush1.msra.mxu0 0.0
        %2655 = vmatprep.subr.mxu0 0.0
        %2656 = vmatpush1.msra.mxu0 0.0
        %2657 = vmatprep.subr.mxu0 0.0
        %2658 = vmatpush1.msra.mxu0 0.0
        %2659 = vmatprep.subr.mxu0 0.0
        %2660 = vmatpush1.msra.mxu0 0.0
        %2661 = vmatprep.subr.mxu0 0.0
        %2662 = vmatpush1.msra.mxu0 0.0
        %2663 = vmatprep.subr.mxu0 0.0
        %2664 = vmatpush1.msra.mxu0 0.0
        %2665 = vmatprep.subr.mxu0 0.0
        %2666 = vmatpush1.msra.mxu0 0.0
        %2667 = vmatprep.subr.mxu0 0.0
        %2668 = vmatpush1.msra.mxu0 0.0
        %2669 = vmatprep.subr.mxu0 0.0
        %2670 = vmatpush1.msra.mxu0 0.0
        %2671 = vmatprep.subr.mxu0 0.0
        %2672 = vmatpush1.msra.mxu0 0.0
        %2673 = vmatprep.subr.mxu0 0.0
        %2674 = vmatpush1.msra.mxu0 0.0
        %2675 = vmatprep.subr.mxu0 0.0
        %2676 = vmatpush1.msra.mxu0 0.0
        %2677 = vmatprep.subr.mxu0 0.0
        %2678 = vmatpush1.msra.mxu0 0.0
        %2679 = vmatprep.subr.mxu0 0.0
        %2680 = vmatpush1.msra.mxu0 0.0
        %2681 = vmatprep.subr.mxu0 0.0
        %2682 = vmatpush1.msra.mxu0 0.0
        %2683 = vmatprep.subr.mxu0 0.0
        %2684 = vmatpush1.msra.mxu0 0.0
        %2685 = vmatprep.subr.mxu0 0.0
        %2686 = vmatpush1.msra.mxu0 0.0
        %2687 = vmatprep.subr.mxu0 0.0
        %2688 = vmatpush1.msra.mxu0 0.0
        %2689 = vmatprep.subr.mxu0 0.0
        %2690 = vmatpush1.msra.mxu0 0.0
        %2691 = vmatprep.mubr.f32.mxu0 0.0
        %2692 = vmatmul.mubr.f32.gmra.mrb[0].mxu0 %v2625
        %v2693 = vpop.f32.mrb[0].mxu0
        %v2694 = vadd.f32 0.0, %v2693
        %v2695 = vpop.f32.mrb[0].mxu0
        %2696 = vdwg.mxu0
        %2697 = vrot.lane.b32.xlu0 %v2472, 124
        %v2698 = vpop.permute.xlu0 %2697
        %2699 = vrot.lane.b32.xlu0 %v2521, 124
        %v2700 = vpop.permute.xlu0 %2699
        %2701 = vrot.lane.b32.xlu0 %v2524, 124
        %v2702 = vpop.permute.xlu0 %2701
        %v2703 = vsel %vm807, %v2698, 0
        %v2705 = vsel %vm807, %v2700, 0
        %v2707 = vsel %vm807, %v2702, 0
        %2709 = vmatprep.subr.mxu0 0.0
        %2710 = vmatpush1.xpose.msra.mxu0 %v2705
        %2711 = vmatprep.subr.mxu0 0.0
        %2712 = vmatpush1.xpose.msra.mxu0 %v2707
        %2713 = vmatprep.subr.mxu0 0.0
        %2714 = vmatpush1.xpose.msra.mxu0 0.0
        %2715 = vmatprep.subr.mxu0 0.0
        %2716 = vmatpush1.xpose.msra.mxu0 0.0
        %2717 = vmatprep.subr.mxu0 0.0
        %2718 = vmatpush1.xpose.msra.mxu0 0.0
        %2719 = vmatprep.subr.mxu0 0.0
        %2720 = vmatpush1.xpose.msra.mxu0 0.0
        %2721 = vmatprep.subr.mxu0 0.0
        %2722 = vmatpush1.xpose.msra.mxu0 0.0
        %2723 = vmatprep.subr.mxu0 0.0
        %2724 = vmatpush1.xpose.msra.mxu0 0.0
        %2725 = vmatprep.subr.mxu0 0.0
        %2726 = vmatpush1.xpose.msra.mxu0 0.0
        %2727 = vmatprep.subr.mxu0 0.0
        %2728 = vmatpush1.xpose.msra.mxu0 0.0
        %2729 = vmatprep.subr.mxu0 0.0
        %2730 = vmatpush1.xpose.msra.mxu0 0.0
        %2731 = vmatprep.subr.mxu0 0.0
        %2732 = vmatpush1.xpose.msra.mxu0 0.0
        %2733 = vmatprep.subr.mxu0 0.0
        %2734 = vmatpush1.xpose.msra.mxu0 0.0
        %2735 = vmatprep.subr.mxu0 0.0
        %2736 = vmatpush1.xpose.msra.mxu0 0.0
        %2737 = vmatprep.subr.mxu0 0.0
        %2738 = vmatpush1.xpose.msra.mxu0 0.0
        %2739 = vmatprep.subr.mxu0 0.0
        %2740 = vmatpush1.xpose.msra.mxu0 0.0
        %2741 = vmatprep.subr.mxu0 0.0
        %2742 = vmatpush1.xpose.msra.mxu0 0.0
        %2743 = vmatprep.subr.mxu0 0.0
        %2744 = vmatpush1.xpose.msra.mxu0 0.0
        %2745 = vmatprep.subr.mxu0 0.0
        %2746 = vmatpush1.xpose.msra.mxu0 0.0
        %2747 = vmatprep.subr.mxu0 0.0
        %2748 = vmatpush1.xpose.msra.mxu0 0.0
        %2749 = vmatprep.subr.mxu0 0.0
        %2750 = vmatpush1.xpose.msra.mxu0 0.0
        %2751 = vmatprep.subr.mxu0 0.0
        %2752 = vmatpush1.xpose.msra.mxu0 0.0
        %2753 = vmatprep.subr.mxu0 0.0
        %2754 = vmatpush1.xpose.msra.mxu0 0.0
        %2755 = vmatprep.subr.mxu0 0.0
        %2756 = vmatpush1.xpose.msra.mxu0 0.0
        %2757 = vmatprep.subr.mxu0 0.0
        %2758 = vmatpush1.xpose.msra.mxu0 0.0
        %2759 = vmatprep.subr.mxu0 0.0
        %2760 = vmatpush1.xpose.msra.mxu0 0.0
        %2761 = vmatprep.subr.mxu0 0.0
        %2762 = vmatpush1.xpose.msra.mxu0 0.0
        %2763 = vmatprep.subr.mxu0 0.0
        %2764 = vmatpush1.xpose.msra.mxu0 0.0
        %2765 = vmatprep.subr.mxu0 0.0
        %2766 = vmatpush1.xpose.msra.mxu0 0.0
        %2767 = vmatprep.subr.mxu0 0.0
        %2768 = vmatpush1.xpose.msra.mxu0 0.0
        %2769 = vmatprep.subr.mxu0 0.0
        %2770 = vmatpush1.xpose.msra.mxu0 0.0
        %2771 = vmatprep.subr.mxu0 0.0
        %2772 = vmatpush1.xpose.msra.mxu0 0.0
        %2773 = vmatprep.mubr.f32.mxu0 0.0
        %2774 = vmatmul.mubr.f32.gmra.mrb[0].mxu0 %v2703
        %v2775 = vpop.f32.mrb[0].mxu0
        %v2776 = vadd.f32 0.0, %v2775
        %v2777 = vpop.f32.mrb[0].mxu0
        %2778 = vdwg.mxu0
        %v2779 = vmul.f32 %v2776, 0.5
        %v2780 = vsel %vm1420, %v2779, -inf
        %2781 = vmax.xlane.f32.xlu0 %v2780
        %v2782 = vpop.xlane.xlu0 %2781
        %v2783 = vsub.f32 %v2779, %v2782
        %v2784 = vmul.f32 %v2783, 1.442695
        %v2785 = vpow.pop %v2784
        %v2786 = vsel %vm1420, %v2785, 0.0
        %2787 = vadd.xlane.f32.xlu0 %v2786
        %v2788 = vpop.xlane.xlu0 %2787
        %v2789 = vrcp.pop %v2788
        %v2790 = vmul.f32 %v2785, %v2789
        %2791 = vrot.lane.b32.xlu0 %v2521, 116
        %v2792 = vpop.permute.xlu0 %2791
        %2793 = vrot.lane.b32.xlu0 %v2524, 116
        %v2794 = vpop.permute.xlu0 %2793
        %v2798 = vsel %vm1420, %v2790, 0
        %2800 = vmatprep.subr.mxu0 0.0
        %2801 = vmatpush1.msra.mxu0 %v2792
        %2802 = vmatprep.subr.mxu0 0.0
        %2803 = vmatpush1.msra.mxu0 %v2794
        %2804 = vmatprep.subr.mxu0 0.0
        %2805 = vmatpush1.msra.mxu0 0.0
        %2806 = vmatprep.subr.mxu0 0.0
        %2807 = vmatpush1.msra.mxu0 0.0
        %2808 = vmatprep.subr.mxu0 0.0
        %2809 = vmatpush1.msra.mxu0 0.0
        %2810 = vmatprep.subr.mxu0 0.0
        %2811 = vmatpush1.msra.mxu0 0.0
        %2812 = vmatprep.subr.mxu0 0.0
        %2813 = vmatpush1.msra.mxu0 0.0
        %2814 = vmatprep.subr.mxu0 0.0
        %2815 = vmatpush1.msra.mxu0 0.0
        %2816 = vmatprep.subr.mxu0 0.0
        %2817 = vmatpush1.msra.mxu0 0.0
        %2818 = vmatprep.subr.mxu0 0.0
        %2819 = vmatpush1.msra.mxu0 0.0
        %2820 = vmatprep.subr.mxu0 0.0
        %2821 = vmatpush1.msra.mxu0 0.0
        %2822 = vmatprep.subr.mxu0 0.0
        %2823 = vmatpush1.msra.mxu0 0.0
        %2824 = vmatprep.subr.mxu0 0.0
        %2825 = vmatpush1.msra.mxu0 0.0
        %2826 = vmatprep.subr.mxu0 0.0
        %2827 = vmatpush1.msra.mxu0 0.0
        %2828 = vmatprep.subr.mxu0 0.0
        %2829 = vmatpush1.msra.mxu0 0.0
        %2830 = vmatprep.subr.mxu0 0.0
        %2831 = vmatpush1.msra.mxu0 0.0
        %2832 = vmatprep.subr.mxu0 0.0
        %2833 = vmatpush1.msra.mxu0 0.0
        %2834 = vmatprep.subr.mxu0 0.0
        %2835 = vmatpush1.msra.mxu0 0.0
        %2836 = vmatprep.subr.mxu0 0.0
        %2837 = vmatpush1.msra.mxu0 0.0
        %2838 = vmatprep.subr.mxu0 0.0
        %2839 = vmatpush1.msra.mxu0 0.0
        %2840 = vmatprep.subr.mxu0 0.0
        %2841 = vmatpush1.msra.mxu0 0.0
        %2842 = vmatprep.subr.mxu0 0.0
        %2843 = vmatpush1.msra.mxu0 0.0
        %2844 = vmatprep.subr.mxu0 0.0
        %2845 = vmatpush1.msra.mxu0 0.0
        %2846 = vmatprep.subr.mxu0 0.0
        %2847 = vmatpush1.msra.mxu0 0.0
        %2848 = vmatprep.subr.mxu0 0.0
        %2849 = vmatpush1.msra.mxu0 0.0
        %2850 = vmatprep.subr.mxu0 0.0
        %2851 = vmatpush1.msra.mxu0 0.0
        %2852 = vmatprep.subr.mxu0 0.0
        %2853 = vmatpush1.msra.mxu0 0.0
        %2854 = vmatprep.subr.mxu0 0.0
        %2855 = vmatpush1.msra.mxu0 0.0
        %2856 = vmatprep.subr.mxu0 0.0
        %2857 = vmatpush1.msra.mxu0 0.0
        %2858 = vmatprep.subr.mxu0 0.0
        %2859 = vmatpush1.msra.mxu0 0.0
        %2860 = vmatprep.subr.mxu0 0.0
        %2861 = vmatpush1.msra.mxu0 0.0
        %2862 = vmatprep.subr.mxu0 0.0
        %2863 = vmatpush1.msra.mxu0 0.0
        %2864 = vmatprep.mubr.f32.mxu0 0.0
        %2865 = vmatmul.mubr.f32.gmra.mrb[0].mxu0 %v2798
        %v2866 = vpop.f32.mrb[0].mxu0
        %v2867 = vadd.f32 0.0, %v2866
        %v2868 = vpop.f32.mrb[0].mxu0
        %2869 = vdwg.mxu0
        %2871 = vrot.lane.b32.xlu0 %v2867, 4
        %v2872 = vpop.permute.xlu0 %2871
        %v2874 = vsel %vm807, %v2694, %v2872
        %v2875 = vpack.c.bf16 %v2874, %v2874
        %v2877 = vlaneseq
        %v2878 = vshrl.u32 %v2877, 7
        %v2879 = vsub.s32 0, %v2878
        %v2880 = vrot.slane %v2419, %v2879
        %v2883 = vsel %vm750, %v2875, 0
        %v2886 = vsel %vm754, %v2417, 0
        %2888 = vmatprep.subr.bf16.mxu0 0
        %2889 = vmatpush1.bf16.msra.mxu0 %v2886
        %2890 = vmatprep.subr.bf16.mxu0 0
        %2891 = vmatpush1.bf16.msra.mxu0 0
        %2892 = vmatprep.subr.bf16.mxu0 0
        %2893 = vmatpush1.bf16.msra.mxu0 0
        %2894 = vmatprep.subr.bf16.mxu0 0
        %2895 = vmatpush1.bf16.msra.mxu0 0
        %2896 = vmatprep.subr.bf16.mxu0 0
        %2897 = vmatpush1.bf16.msra.mxu0 0
        %2898 = vmatprep.subr.bf16.mxu0 0
        %2899 = vmatpush1.bf16.msra.mxu0 0
        %2900 = vmatprep.subr.bf16.mxu0 0
        %2901 = vmatpush1.bf16.msra.mxu0 0
        %2902 = vmatprep.subr.bf16.mxu0 0
        %2903 = vmatpush1.bf16.msra.mxu0 0
        %2904 = vmatprep.subr.bf16.mxu0 0
        %2905 = vmatpush1.bf16.msra.mxu0 0
        %2906 = vmatprep.subr.bf16.mxu0 0
        %2907 = vmatpush1.bf16.msra.mxu0 0
        %2908 = vmatprep.subr.bf16.mxu0 0
        %2909 = vmatpush1.bf16.msra.mxu0 0
        %2910 = vmatprep.subr.bf16.mxu0 0
        %2911 = vmatpush1.bf16.msra.mxu0 0
        %2912 = vmatprep.subr.bf16.mxu0 0
        %2913 = vmatpush1.bf16.msra.mxu0 0
        %2914 = vmatprep.subr.bf16.mxu0 0
        %2915 = vmatpush1.bf16.msra.mxu0 0
        %2916 = vmatprep.subr.bf16.mxu0 0
        %2917 = vmatpush1.bf16.msra.mxu0 0
        %2918 = vmatprep.subr.bf16.mxu0 0
        %2919 = vmatpush1.bf16.msra.mxu0 0
        %2920 = vmatprep.mubr.bf16.mxu0 0
        %2921 = vmatmul.mubr.bf16.gmra.mrb[0].mxu0 %v2883
        %v2922 = vpop.f32.mrb[0].mxu0
        %v2923 = vadd.f32 %v2880, %v2922
        %v2924 = vpop.f32.mrb[0].mxu0
        %v2925 = vpop.f32.mrb[0].mxu0
        %v2926 = vpop.f32.mrb[0].mxu0
        %2927 = vdwg.mxu0
        %v2928 = vadd.f32 %v2407, %v2923
        %v2929 = vsel %vm750, %v2928, 0.0
        %2930 = vadd.xlane.f32.xlu0 %v2929
        %v2931 = vpop.xlane.xlu0 %2930
        %v2932 = vmul.f32 %v2931, %v1200
        %v2933 = vsub.f32 %v2928, %v2932
        %v2934 = vmul.f32 %v2933, %v2933
        %v2935 = vsel %vm750, %v2934, 0.0
        %2936 = vadd.xlane.f32.xlu0 %v2935
        %v2937 = vpop.xlane.xlu0 %2936
        %v2938 = vmul.f32 %v2937, %v1200
        %v2939 = vadd.f32 %v2938, 1e-05
        %v2940 = vrsqrt.pop %v2939
        %v2941 = vmul.f32 %v2933, %v2940
        %v2943 = vlaneseq
        %v2944 = vshrl.u32 %v2943, 7
        %v2945 = vsub.s32 0, %v2944
        %v2946 = vrot.slane %v2421, %v2945
        %v2948 = vmul.f32 %v2941, %v2946
        %v2950 = vlaneseq
        %v2951 = vshrl.u32 %v2950, 7
        %v2952 = vsub.s32 0, %v2951
        %v2953 = vrot.slane %v2423, %v2952
        %v2955 = vadd.f32 %v2948, %v2953
        %s2956 = scalar_lea.vmem %s16, 4
        %v2957 = vld [vmem:[%s2956] sm:$0xf]
        %s2958 = scalar_lea.vmem %s17, 1
        %v2959 = vld [vmem:[%s2958] sm:$0x1]
        %s2960 = scalar_lea.vmem %s18, 16
        %v2961 = vld [vmem:[%s2960] sm:$0xf]
        %v2962 = vld [vmem:[%s2960 + $0x4] sm:$0xf]
        %v2963 = vld [vmem:[%s2960 + $0x8] sm:$0xf]
        %v2964 = vld [vmem:[%s2960 + $0xc] sm:$0xf]
        %s2965 = scalar_lea.vmem %s19, 1
        %v2966 = vld [vmem:[%s2965] sm:$0x1]
        %s2967 = scalar_lea.vmem %s20, 1
        %v2968 = vld [vmem:[%s2967] sm:$0x1]
        %s2969 = scalar_lea.vmem %s21, 1
        %v2970 = vld [vmem:[%s2969] sm:$0x1]
        %v2971 = vpack.c.bf16 %v2955, %v2955
        %v2973 = vlaneseq
        %v2974 = vshrl.u32 %v2973, 7
        %v2975 = vsub.s32 0, %v2974
        %v2976 = vrot.slane %v2959, %v2975
        %v2979 = vsel %vm750, %v2971, 0
        %v2982 = vsel %vm754, %v2957, 0
        %2984 = vmatprep.subr.bf16.mxu0 0
        %2985 = vmatpush1.bf16.msra.mxu0 %v2982
        %2986 = vmatprep.subr.bf16.mxu0 0
        %2987 = vmatpush1.bf16.msra.mxu0 0
        %2988 = vmatprep.subr.bf16.mxu0 0
        %2989 = vmatpush1.bf16.msra.mxu0 0
        %2990 = vmatprep.subr.bf16.mxu0 0
        %2991 = vmatpush1.bf16.msra.mxu0 0
        %2992 = vmatprep.subr.bf16.mxu0 0
        %2993 = vmatpush1.bf16.msra.mxu0 0
        %2994 = vmatprep.subr.bf16.mxu0 0
        %2995 = vmatpush1.bf16.msra.mxu0 0
        %2996 = vmatprep.subr.bf16.mxu0 0
        %2997 = vmatpush1.bf16.msra.mxu0 0
        %2998 = vmatprep.subr.bf16.mxu0 0
        %2999 = vmatpush1.bf16.msra.mxu0 0
        %3000 = vmatprep.subr.bf16.mxu0 0
        %3001 = vmatpush1.bf16.msra.mxu0 0
        %3002 = vmatprep.subr.bf16.mxu0 0
        %3003 = vmatpush1.bf16.msra.mxu0 0
        %3004 = vmatprep.subr.bf16.mxu0 0
        %3005 = vmatpush1.bf16.msra.mxu0 0
        %3006 = vmatprep.subr.bf16.mxu0 0
        %3007 = vmatpush1.bf16.msra.mxu0 0
        %3008 = vmatprep.subr.bf16.mxu0 0
        %3009 = vmatpush1.bf16.msra.mxu0 0
        %3010 = vmatprep.subr.bf16.mxu0 0
        %3011 = vmatpush1.bf16.msra.mxu0 0
        %3012 = vmatprep.subr.bf16.mxu0 0
        %3013 = vmatpush1.bf16.msra.mxu0 0
        %3014 = vmatprep.subr.bf16.mxu0 0
        %3015 = vmatpush1.bf16.msra.mxu0 0
        %3016 = vmatprep.mubr.bf16.mxu0 0
        %3017 = vmatmul.mubr.bf16.gmra.mrb[0].mxu0 %v2979
        %v3018 = vpop.f32.mrb[0].mxu0
        %v3019 = vadd.f32 %v2976, %v3018
        %v3020 = vpop.f32.mrb[0].mxu0
        %v3021 = vpop.f32.mrb[0].mxu0
        %v3022 = vpop.f32.mrb[0].mxu0
        %3023 = vdwg.mxu0
        %v3024 = vmax.f32 %v3019, 0.0
        %v3025 = vpack.c.bf16 %v3024, %v3024
        %v3027 = vlaneseq
        %v3028 = vshrl.u32 %v3027, 7
        %v3029 = vsub.s32 0, %v3028
        %v3030 = vrot.slane %v2966, %v3029
        %v3036 = vunpack.c.l.b16 %v2961
        %v3037 = vunpack.c.l.b16 %v2962
        %v3038 = vunpack.c.l.b16 %v2963
        %v3039 = vunpack.c.l.b16 %v2964
        %v3040 = vpack.c.b16 %v3037, %v3036
        %v3041 = vpack.c.b16 %v3039, %v3038
        %v3045 = vsel %vm1852, %v3025, 0
        %3047 = vmatprep.subr.bf16.mxu0 0
        %3048 = vmatpush1.bf16.msra.mxu0 %v3040
        %3049 = vmatprep.subr.bf16.mxu0 0
        %3050 = vmatpush1.bf16.msra.mxu0 %v3041
        %3051 = vmatprep.subr.bf16.mxu0 0
        %3052 = vmatpush1.bf16.msra.mxu0 0
        %3053 = vmatprep.subr.bf16.mxu0 0
        %3054 = vmatpush1.bf16.msra.mxu0 0
        %3055 = vmatprep.subr.bf16.mxu0 0
        %3056 = vmatpush1.bf16.msra.mxu0 0
        %3057 = vmatprep.subr.bf16.mxu0 0
        %3058 = vmatpush1.bf16.msra.mxu0 0
        %3059 = vmatprep.subr.bf16.mxu0 0
        %3060 = vmatpush1.bf16.msra.mxu0 0
        %3061 = vmatprep.subr.bf16.mxu0 0
        %3062 = vmatpush1.bf16.msra.mxu0 0
        %3063 = vmatprep.subr.bf16.mxu0 0
        %3064 = vmatpush1.bf16.msra.mxu0 0
        %3065 = vmatprep.subr.bf16.mxu0 0
        %3066 = vmatpush1.bf16.msra.mxu0 0
        %3067 = vmatprep.subr.bf16.mxu0 0
        %3068 = vmatpush1.bf16.msra.mxu0 0
        %3069 = vmatprep.subr.bf16.mxu0 0
        %3070 = vmatpush1.bf16.msra.mxu0 0
        %3071 = vmatprep.subr.bf16.mxu0 0
        %3072 = vmatpush1.bf16.msra.mxu0 0
        %3073 = vmatprep.subr.bf16.mxu0 0
        %3074 = vmatpush1.bf16.msra.mxu0 0
        %3075 = vmatprep.subr.bf16.mxu0 0
        %3076 = vmatpush1.bf16.msra.mxu0 0
        %3077 = vmatprep.subr.bf16.mxu0 0
        %3078 = vmatpush1.bf16.msra.mxu0 0
        %3079 = vmatprep.mubr.bf16.mxu0 0
        %3080 = vmatmul.mubr.bf16.gmra.mrb[0].mxu0 %v3045
        %v3081 = vpop.f32.mrb[0].mxu0
        %v3082 = vadd.f32 %v3030, %v3081
        %v3083 = vpop.f32.mrb[0].mxu0
        %v3084 = vpop.f32.mrb[0].mxu0
        %v3085 = vpop.f32.mrb[0].mxu0
        %3086 = vdwg.mxu0
        %v3087 = vadd.f32 %v2955, %v3082
        %v3088 = vsel %vm750, %v3087, 0.0
        %3089 = vadd.xlane.f32.xlu0 %v3088
        %v3090 = vpop.xlane.xlu0 %3089
        %v3091 = vmul.f32 %v3090, %v1200
        %v3092 = vsub.f32 %v3087, %v3091
        %v3093 = vmul.f32 %v3092, %v3092
        %v3094 = vsel %vm750, %v3093, 0.0
        %3095 = vadd.xlane.f32.xlu0 %v3094
        %v3096 = vpop.xlane.xlu0 %3095
        %v3097 = vmul.f32 %v3096, %v1200
        %v3098 = vadd.f32 %v3097, 1e-05
        %v3099 = vrsqrt.pop %v3098
        %v3100 = vmul.f32 %v3092, %v3099
        %v3102 = vlaneseq
        %v3103 = vshrl.u32 %v3102, 7
        %v3104 = vsub.s32 0, %v3103
        %v3105 = vrot.slane %v2968, %v3104
        %v3107 = vmul.f32 %v3100, %v3105
        %v3109 = vlaneseq
        %v3110 = vshrl.u32 %v3109, 7
        %v3111 = vsub.s32 0, %v3110
        %v3112 = vrot.slane %v2970, %v3111
        %v3114 = vadd.f32 %v3107, %v3112
        %v3115 = vld [vmem:[%s22] sm:$0x1]
        %v3116 = vld [vmem:[%s23] sm:$0x1]
        %v3117 = vsel %vm750, %v3114, 0.0
        %3118 = vadd.xlane.f32.xlu0 %v3117
        %v3119 = vpop.xlane.xlu0 %3118
        %v3120 = vmul.f32 %v3119, %v1200
        %v3121 = vsub.f32 %v3114, %v3120
        %v3122 = vmul.f32 %v3121, %v3121
        %v3123 = vsel %vm750, %v3122, 0.0
        %3124 = vadd.xlane.f32.xlu0 %v3123
        %v3125 = vpop.xlane.xlu0 %3124
        %v3126 = vmul.f32 %v3125, %v1200
        %v3127 = vadd.f32 %v3126, 1e-05
        %v3128 = vrsqrt.pop %v3127
        %v3129 = vmul.f32 %v3121, %v3128
        %v3131 = vlaneseq
        %v3132 = vshrl.u32 %v3131, 7
        %v3133 = vsub.s32 0, %v3132
        %v3134 = vrot.slane %v3115, %v3133
        %v3136 = vmul.f32 %v3129, %v3134
        %v3138 = vlaneseq
        %v3139 = vshrl.u32 %v3138, 7
        %v3140 = vsub.s32 0, %v3139
        %v3141 = vrot.slane %v3116, %v3140
        %v3143 = vadd.f32 %v3136, %v3141
        %3144 = vst.msk [vmem:[%s728] sm:$0xff] %vm750, %v3143
        %s3145 = sand.u32 %s555, 1
        %s3146 = scalar_lea.sflag [#allocation3], %s3145
        %s3147 = sand.u32 %s555, 1
        %s3148 = smul.addr %s3147, 8
        %s3149 = scalar_lea.vmem [#allocation2], %s3148
        // Predicated region
        $region117: #{transformer_forward.3} parent=115 // pred_check
          %p3150 = pneg %p565
        $region118: #{transformer_forward.3} parent=115 // pred_check_branch
          %3152 = sbr.rel (%p3150) target = $region120
        $region119: #{transformer_forward.3} parent=115 // pred_region
          %s3154 = ssub.s32 128, 128
          %3155 = vsyncadd %s3146, %s3154
          %s3156 = smul.addr %s38, 128
          %s3157 = scalar_lea.hbm %s24, %s3156
          %s3159 = sshll.u32 %s3149, 4
          %s3160 = int_to_ptr.vmem [resolvable:$true] %s3159
          %3162 = dma.vmem_to_hbm [thread:$0]  %s3160, 128, %s3157, %s3146
        $region120: #{transformer_forward.3} parent=115 // pred_fallthru
          _
      $region116: #{transformer_forward.3} parent=5 // pred_fallthru
        _
      %p3163 = scmp.le.s32.totalorder 2, %s33
      // Predicated region
      $region121: #{transformer_forward.3} parent=5 // pred_check
        %p3164 = pneg %p3163
      $region122: #{transformer_forward.3} parent=5 // pred_check_branch
        %3166 = sbr.rel (%p3164) target = $region124
      $region123: #{transformer_forward.3} parent=5 // pred_region
        %s3167 = ssub.s32 %s33, 2
        // Predicated region
        $region125: #{transformer_forward.3} parent=123 // pred_check
          %p3168 = pneg %p571
        $region126: #{transformer_forward.3} parent=123 // pred_check_branch
          %3170 = sbr.rel (%p3168) target = $region128
        $region127: #{transformer_forward.3} parent=123 // pred_region
          %s3171 = sand.u32 %s556, 1
          %s3172 = scalar_lea.sflag [#allocation3], %s3171
          %s3173 = sand.u32 %s556, 1
          %s3174 = smul.addr %s3173, 8
          %s3175 = scalar_lea.vmem [#allocation2], %s3174
          %3176 = dma.done %s3172, 128
        $region128: #{transformer_forward.3} parent=123 // pred_fallthru
          _
      $region124: #{transformer_forward.3} parent=5 // pred_fallthru
        _
    $region6: #{transformer_forward.3} parent=1 // loop_footer
      %s37 = sadd.s32 1, %s33
    $region7: #{transformer_forward.3} parent=1 // loop_footer_branch
      %32 = sbr.rel target = $region3
    $region8: #{transformer_forward.3} parent=1 // loop_exit
      _
    %3177 = vsyncpa [#allocation3], 1
    %s3178 = scalar_lea.sflag [#allocation3], 1
    %3179 = vsyncpa %s3178, 1

</llo_original>
